<compile_context>
chip_gen: v5e
topology: v5e:2x2
jax: 0.10.0
libtpu: 0.0.40
codegen_flags: <defaults>
</compile_context>

<pallas_src>
import functools

import jax
import jax.numpy as jnp
from jax.experimental import pallas as pl
from jax.experimental.pallas import tpu as pltpu


# ----------------------------------------------------------------------------
# VGG16 `features` architecture (torchvision layer indices)
# ----------------------------------------------------------------------------
VGG_CONVS = {
    0: (3, 64), 2: (64, 64),
    5: (64, 128), 7: (128, 128),
    10: (128, 256), 12: (256, 256), 14: (256, 256),
    17: (256, 512), 19: (512, 512), 21: (512, 512),
    24: (512, 512), 26: (512, 512), 28: (512, 512),
}
VGG_POOLS = {4, 9, 16, 23, 30}
LAYER_IDS = [2, 7, 12, 21, 30]          # captured outputs (pre-ReLU convs / pool 30)


def _rup(x, m):
    return (x + m - 1) // m * m


# ----------------------------------------------------------------------------
# Pallas kernel 1: fused implicit-im2col 3x3 conv (bias + optional ReLU)
#
#   grid = (n_images // G, Cout_p // TN), both axes "parallel".
#   a_ref : (G*(H+2), W+2, Cin)  bf16  one group of spatially zero-padded images
#   w_ref : (9, Cin, TN)         bf16  VMEM-resident (constant index_map)
#   b_ref : (1, TN)              f32
#   o_ref : (G*H*W, TN)          f32 (captured) / bf16 (fused-ReLU trunk)
# ----------------------------------------------------------------------------
def _conv3x3_kernel(a_ref, w_ref, b_ref, o_ref, *, g, h, w, relu):
    cin = a_ref.shape[-1]
    tn = o_ref.shape[-1]
    a = a_ref[...].reshape(g, h + 2, w + 2, cin)
    acc = jnp.zeros((g * h * w, tn), jnp.float32)
    for dh in range(3):
        for dw in range(3):
            patch = a[:, dh:dh + h, dw:dw + w, :].reshape(g * h * w, cin)
            acc = acc + jnp.dot(patch, w_ref[dh * 3 + dw],
                                preferred_element_type=jnp.float32)
    r = acc + b_ref[...]
    if relu:
        r = jnp.maximum(r, 0.0)
    o_ref[...] = r.astype(o_ref.dtype)


def _pick_group(n, h, w):
    """Images per block: smallest divisor of n giving >=256 8-aligned M rows."""
    for g in range(1, n + 1):
        if n % g:
            continue
        m = g * h * w
        if m >= 256 and m % 8 == 0:
            return g
    return n            # whole batch in one block (block == full dim, always legal)


@functools.lru_cache(maxsize=None)
def _get_conv_fn(n, g, h, w, cin, cout_p, tn, relu, out_f32):
    out_dtype = jnp.float32 if out_f32 else jnp.bfloat16
    kern = functools.partial(_conv3x3_kernel, g=g, h=h, w=w, relu=relu)
    fn = pl.pallas_call(
        kern,
        out_shape=jax.ShapeDtypeStruct((n * h * w, cout_p), out_dtype),
        grid=(n // g, cout_p // tn),
        in_specs=[
            pl.BlockSpec((g * (h + 2), w + 2, cin), lambda i, j: (i, 0, 0)),
            pl.BlockSpec((9, cin, tn), lambda i, j: (0, 0, j)),
            pl.BlockSpec((1, tn), lambda i, j: (0, j)),
        ],
        out_specs=pl.BlockSpec((g * h * w, tn), lambda i, j: (i, j)),
        compiler_params=pltpu.CompilerParams(
            dimension_semantics=("parallel", "parallel"),
            vmem_limit_bytes=48 * 1024 * 1024),   # v5e's 16 MiB scoped default is too small
    )
    return jax.jit(fn)


def conv3x3(x, w, b, *, relu, out_f32):
    """'same' 3x3 conv, stride 1, fused bias (+ReLU).

    x: (N, H, W, C) NHWC; C may exceed w.shape[2] with zero lane-padding.
    Returns (N, H, W, round_up(Cout, 128)); bf16 when ReLU is fused, else f32.
    """
    cin, cout = w.shape[2], w.shape[3]
    n, h, wd, cin_eff = x.shape
    cout_p = _rup(cout, 128)
    # Zero-pad weight input channels up to the (lane-padded) activation width:
    # the padded activation channels are exactly zero, so this is numerically a
    # no-op and removes the x[..., :cin] slice copy of v2.
    w_p = jnp.pad(w, ((0, 0), (0, 0), (0, cin_eff - cin), (0, cout_p - cout)))
    w_p = w_p.astype(jnp.bfloat16).reshape(9, cin_eff, cout_p)
    b_p = jnp.pad(b.astype(jnp.float32), (0, cout_p - cout)).reshape(1, cout_p)
    # The spatial zero-pad is the only materialized prep (implicit im2col).
    xp = jnp.pad(x.astype(jnp.bfloat16), ((0, 0), (1, 1), (1, 1), (0, 0)))
    a = xp.reshape(n * (h + 2), wd + 2, cin_eff)

    g = _pick_group(n, h, wd)
    tn = cout_p
    if n // g < 2 and cout_p >= 256:
        tn = cout_p // 2          # >= 2 parallel blocks for v7x's two TensorCores
    y = _get_conv_fn(n, g, h, wd, cin_eff, cout_p, tn,
                     bool(relu), bool(out_f32))(a, w_p, b_p)
    return y.reshape(n, h, wd, cout_p)


# ----------------------------------------------------------------------------
# Pallas kernel 2: sum(|first half - second half|) over (2, rows, C) blocks.
# ----------------------------------------------------------------------------
def _absdiff_kernel(a_ref, o_ref):
    a = a_ref[...]
    d = a[0].astype(jnp.float32) - a[1].astype(jnp.float32)
    o_ref[0, 0] = jnp.sum(jnp.abs(d))


@functools.lru_cache(maxsize=None)
def _get_abs_fn(nb, tr, c):
    fn = pl.pallas_call(
        _absdiff_kernel,
        out_shape=jax.ShapeDtypeStruct((nb, 1), jnp.float32),
        grid=(nb,),
        in_specs=[pl.BlockSpec((2, tr, c), lambda i: (0, i, 0))],
        out_specs=pl.BlockSpec((1, 1), lambda i: (i, 0),
                               memory_space=pltpu.MemorySpace.SMEM),
        compiler_params=pltpu.CompilerParams(
            dimension_semantics=("parallel",)),
    )
    return jax.jit(fn)


def abs_mean(f, n_true):
    """mean(|f[:B] - f[B:]|) over n_true real elements.

    f: (2B, H, W, C).  Lane-padded channels are kept: they are exactly zero in
    both halves so they cancel in the numerator; only n_true matters.
    """
    two_b, h, w, c = f.shape
    rows_half = (two_b // 2) * h * w
    a = f.reshape(2, rows_half, c)        # free reshape: first B vs last B images
    nb, tr = 1, rows_half                 # ~>=1024-row tiles, 8-aligned splits
    while nb < 8 and tr % 2 == 0 and (tr // 2) % 8 == 0 and tr // 2 >= 1024:
        nb, tr = nb * 2, tr // 2
    parts = _get_abs_fn(nb, tr, c)(a)
    return jnp.sum(parts) / n_true


# ----------------------------------------------------------------------------
# Pooling (cheap reshape+reduce glue)
# TODO(synk): pooling layers are left to XLA; no dedicated Pallas kernel.
# ----------------------------------------------------------------------------
def maxpool2x2(x):
    n, h, w, c = x.shape
    return x.reshape(n, h // 2, 2, w // 2, 2, c).max(axis=(2, 4))


def avgpool4(x):
    n, h, w, c = x.shape
    return x.reshape(n, h // 4, 4, w // 4, 4, c).mean(axis=(2, 4))


# ----------------------------------------------------------------------------
# _netVGGFeatures.main: run features[0..id_max), capture at layer_ids
# (captured conv outputs are PRE-ReLU, exactly like the PyTorch module)
# ----------------------------------------------------------------------------
def vgg_features(x, params, levels):
    """x: NHWC.  Returns [(feature_lane_padded, true_channels), ...]."""
    layer_ids = LAYER_IDS[:levels]
    id_max = layer_ids[-1] + 1
    outs = []
    z = x
    i = 0
    while i < id_max:
        if i in VGG_CONVS:
            w, b = params[i]
            cout = VGG_CONVS[i][1]
            captured = i in layer_ids
            fuse_relu = (not captured) and (i + 1 < id_max)
            z = conv3x3(z, w, b, relu=fuse_relu, out_f32=captured)
            if captured:
                outs.append((z, cout))
            i += 2 if fuse_relu else 1
        elif i in VGG_POOLS:
            z = maxpool2x2(z)
            if i in layer_ids:
                outs.append((z, z.shape[-1]))
            i += 1
        else:
            # standalone ReLU right after a captured (pre-activation) conv
            z = jnp.maximum(z, 0.0)
            i += 1
    return outs


def net_vgg_features(z_nchw, params, levels):
    """_netVGGFeatures.forward equivalent: NCHW in, list of NCHW features out."""
    x = jnp.transpose(z_nchw, (0, 2, 3, 1))
    outs = vgg_features(x, params, levels)
    return [jnp.transpose(f[..., :c].astype(jnp.float32), (0, 3, 1, 2))
            for f, c in outs]


# ----------------------------------------------------------------------------
# Multi-scale perceptual L1 distance (I1 and I2 batched through the trunk)
# TODO(synk): the ~11 per-level abs-diff reductions could be fused further into
# one pallas_call per scale (heterogeneous shapes); kept per-level here.
# ----------------------------------------------------------------------------
def vgg_ms_distance(I1, I2, params):
    x1 = jnp.transpose(I1, (0, 2, 3, 1))
    x2 = jnp.transpose(I2, (0, 2, 3, 1))
    b = x1.shape[0]
    x = jnp.concatenate([x1, x2], axis=0)      # shared trunk, halves compared later

    def scale_loss(xin, levels):
        feats = vgg_features(xin, params, levels)
        loss = abs_mean(xin, b * xin.shape[1] * xin.shape[2] * xin.shape[3])
        for f, c in feats:
            loss = loss + abs_mean(f, b * f.shape[1] * f.shape[2] * c)
        return loss

    loss = scale_loss(x, 5)
    loss = loss + scale_loss(avgpool4(x), 4)
    return loss


# ----------------------------------------------------------------------------
# Deterministic synthetic VGG16 weights (He init)
# TODO(synk): pretrained ImageNet weights replaced by deterministic random init.
# ----------------------------------------------------------------------------
def init_vgg16_params(key):
    params = {}
    for idx in sorted(VGG_CONVS):
        cin, cout = VGG_CONVS[idx]
        key, kw, kb = jax.random.split(key, 3)
        std = (2.0 / (9 * cin)) ** 0.5
        w = jax.random.normal(kw, (3, 3, cin, cout), jnp.float32) * std
        b = jax.random.normal(kb, (cout,), jnp.float32) * 0.01
        params[idx] = (w, b)
    return params


if __name__ == "__main__":
    key = jax.random.PRNGKey(0)
    kp, k1, k2 = jax.random.split(key, 3)
    params = init_vgg16_params(kp)

    # Smallest spatial size compatible with 5 max-pools and the AvgPool2d(4) branch.
    I1 = jax.random.normal(k1, (2, 3, 32, 32), jnp.float32)
    I2 = jax.random.normal(k2, (2, 3, 32, 32), jnp.float32)

    # _netVGGFeatures.forward (the spec module)
    feats = jax.jit(net_vgg_features, static_argnums=2)(I1, params, 5)
    jax.block_until_ready(feats)

    # Multi-scale VGG distance built on the same kernels
    loss = jax.jit(vgg_ms_distance)(I1, I2, params)
    jax.block_until_ready(loss)

    print("KERNEL_OK")
</pallas_src>

<mosaic_0001>
module attributes {stable_mosaic.version = 11 : i64} {
  func.func @_conv3x3_kernel(%arg0: i32, %arg1: i32, %arg2: memref<34x34x3xbf16, #tpu.memory_space<vmem>>, %arg3: memref<9x3x128xbf16, #tpu.memory_space<vmem>>, %arg4: memref<1x128xf32, #tpu.memory_space<vmem>>, %arg5: memref<1024x128xbf16, #tpu.memory_space<vmem>>) attributes {dimension_semantics = [#tpu.dimension_semantics<parallel>, #tpu.dimension_semantics<parallel>], iteration_bounds = array<i64: 2, 1>, scalar_prefetch = 0 : i64, scratch_operands = 0 : i64, tpu.core_type = #tpu.core_type<tc>, window_params = [{transform_indices = @transform_0, window_bounds = array<i64: 34, 34, 3>}, {transform_indices = @transform_1, window_bounds = array<i64: 9, 3, 128>}, {transform_indices = @transform_2, window_bounds = array<i64: 1, 128>}, {transform_indices = @transform_3, window_bounds = array<i64: 1024, 128>}]} {
    %c0 = arith.constant 0 : index
    %c0_0 = arith.constant 0 : index
    %c0_1 = arith.constant 0 : index
    %0 = vector.load %arg2[%c0, %c0_0, %c0_1] : memref<34x34x3xbf16, #tpu.memory_space<vmem>>, vector<34x34x3xbf16>
    %1 = vector.shape_cast %0 : vector<34x34x3xbf16> to vector<1x34x34x3xbf16>
    %cst = arith.constant 0.000000e+00 : f32
    %2 = vector.broadcast %cst : f32 to vector<1024x128xf32>
    %3 = vector.extract_strided_slice %1 {offsets = [0, 0, 0, 0], sizes = [1, 32, 32, 3], strides = [1, 1, 1, 1]} : vector<1x34x34x3xbf16> to vector<1x32x32x3xbf16>
    %4 = vector.shape_cast %3 : vector<1x32x32x3xbf16> to vector<1024x3xbf16>
    %c0_2 = arith.constant 0 : index
    %c0_3 = arith.constant 0 : index
    %c0_4 = arith.constant 0 : index
    %5 = vector.load %arg3[%c0_2, %c0_3, %c0_4] : memref<9x3x128xbf16, #tpu.memory_space<vmem>>, vector<1x3x128xbf16>
    %6 = vector.shape_cast %5 : vector<1x3x128xbf16> to vector<3x128xbf16>
    %cst_5 = arith.constant dense<0.000000e+00> : vector<1024x128xf32>
    %7 = tpu.matmul %4, %6, %cst_5 {dimension_numbers = #tpu.dot_dimension_numbers<[1], [0], [0], [1], [0, 0, 1, 1], [], []>} : vector<1024x3xbf16>, vector<3x128xbf16>, vector<1024x128xf32> -> vector<1024x128xf32>
    %8 = arith.addf %2, %7 : vector<1024x128xf32>
    %9 = vector.extract_strided_slice %1 {offsets = [0, 0, 1, 0], sizes = [1, 32, 32, 3], strides = [1, 1, 1, 1]} : vector<1x34x34x3xbf16> to vector<1x32x32x3xbf16>
    %10 = vector.shape_cast %9 : vector<1x32x32x3xbf16> to vector<1024x3xbf16>
    %c1 = arith.constant 1 : index
    %c0_6 = arith.constant 0 : index
    %c0_7 = arith.constant 0 : index
    %11 = vector.load %arg3[%c1, %c0_6, %c0_7] : memref<9x3x128xbf16, #tpu.memory_space<vmem>>, vector<1x3x128xbf16>
    %12 = vector.shape_cast %11 : vector<1x3x128xbf16> to vector<3x128xbf16>
    %cst_8 = arith.constant dense<0.000000e+00> : vector<1024x128xf32>
    %13 = tpu.matmul %10, %12, %cst_8 {dimension_numbers = #tpu.dot_dimension_numbers<[1], [0], [0], [1], [0, 0, 1, 1], [], []>} : vector<1024x3xbf16>, vector<3x128xbf16>, vector<1024x128xf32> -> vector<1024x128xf32>
    %14 = arith.addf %8, %13 : vector<1024x128xf32>
    %15 = vector.extract_strided_slice %1 {offsets = [0, 0, 2, 0], sizes = [1, 32, 32, 3], strides = [1, 1, 1, 1]} : vector<1x34x34x3xbf16> to vector<1x32x32x3xbf16>
    %16 = vector.shape_cast %15 : vector<1x32x32x3xbf16> to vector<1024x3xbf16>
    %c2 = arith.constant 2 : index
    %c0_9 = arith.constant 0 : index
    %c0_10 = arith.constant 0 : index
    %17 = vector.load %arg3[%c2, %c0_9, %c0_10] : memref<9x3x128xbf16, #tpu.memory_space<vmem>>, vector<1x3x128xbf16>
    %18 = vector.shape_cast %17 : vector<1x3x128xbf16> to vector<3x128xbf16>
    %cst_11 = arith.constant dense<0.000000e+00> : vector<1024x128xf32>
    %19 = tpu.matmul %16, %18, %cst_11 {dimension_numbers = #tpu.dot_dimension_numbers<[1], [0], [0], [1], [0, 0, 1, 1], [], []>} : vector<1024x3xbf16>, vector<3x128xbf16>, vector<1024x128xf32> -> vector<1024x128xf32>
    %20 = arith.addf %14, %19 : vector<1024x128xf32>
    %21 = vector.extract_strided_slice %1 {offsets = [0, 1, 0, 0], sizes = [1, 32, 32, 3], strides = [1, 1, 1, 1]} : vector<1x34x34x3xbf16> to vector<1x32x32x3xbf16>
    %22 = vector.shape_cast %21 : vector<1x32x32x3xbf16> to vector<1024x3xbf16>
    %c3 = arith.constant 3 : index
    %c0_12 = arith.constant 0 : index
    %c0_13 = arith.constant 0 : index
    %23 = vector.load %arg3[%c3, %c0_12, %c0_13] : memref<9x3x128xbf16, #tpu.memory_space<vmem>>, vector<1x3x128xbf16>
    %24 = vector.shape_cast %23 : vector<1x3x128xbf16> to vector<3x128xbf16>
    %cst_14 = arith.constant dense<0.000000e+00> : vector<1024x128xf32>
    %25 = tpu.matmul %22, %24, %cst_14 {dimension_numbers = #tpu.dot_dimension_numbers<[1], [0], [0], [1], [0, 0, 1, 1], [], []>} : vector<1024x3xbf16>, vector<3x128xbf16>, vector<1024x128xf32> -> vector<1024x128xf32>
    %26 = arith.addf %20, %25 : vector<1024x128xf32>
    %27 = vector.extract_strided_slice %1 {offsets = [0, 1, 1, 0], sizes = [1, 32, 32, 3], strides = [1, 1, 1, 1]} : vector<1x34x34x3xbf16> to vector<1x32x32x3xbf16>
    %28 = vector.shape_cast %27 : vector<1x32x32x3xbf16> to vector<1024x3xbf16>
    %c4 = arith.constant 4 : index
    %c0_15 = arith.constant 0 : index
    %c0_16 = arith.constant 0 : index
    %29 = vector.load %arg3[%c4, %c0_15, %c0_16] : memref<9x3x128xbf16, #tpu.memory_space<vmem>>, vector<1x3x128xbf16>
    %30 = vector.shape_cast %29 : vector<1x3x128xbf16> to vector<3x128xbf16>
    %cst_17 = arith.constant dense<0.000000e+00> : vector<1024x128xf32>
    %31 = tpu.matmul %28, %30, %cst_17 {dimension_numbers = #tpu.dot_dimension_numbers<[1], [0], [0], [1], [0, 0, 1, 1], [], []>} : vector<1024x3xbf16>, vector<3x128xbf16>, vector<1024x128xf32> -> vector<1024x128xf32>
    %32 = arith.addf %26, %31 : vector<1024x128xf32>
    %33 = vector.extract_strided_slice %1 {offsets = [0, 1, 2, 0], sizes = [1, 32, 32, 3], strides = [1, 1, 1, 1]} : vector<1x34x34x3xbf16> to vector<1x32x32x3xbf16>
    %34 = vector.shape_cast %33 : vector<1x32x32x3xbf16> to vector<1024x3xbf16>
    %c5 = arith.constant 5 : index
    %c0_18 = arith.constant 0 : index
    %c0_19 = arith.constant 0 : index
    %35 = vector.load %arg3[%c5, %c0_18, %c0_19] : memref<9x3x128xbf16, #tpu.memory_space<vmem>>, vector<1x3x128xbf16>
    %36 = vector.shape_cast %35 : vector<1x3x128xbf16> to vector<3x128xbf16>
    %cst_20 = arith.constant dense<0.000000e+00> : vector<1024x128xf32>
    %37 = tpu.matmul %34, %36, %cst_20 {dimension_numbers = #tpu.dot_dimension_numbers<[1], [0], [0], [1], [0, 0, 1, 1], [], []>} : vector<1024x3xbf16>, vector<3x128xbf16>, vector<1024x128xf32> -> vector<1024x128xf32>
    %38 = arith.addf %32, %37 : vector<1024x128xf32>
    %39 = vector.extract_strided_slice %1 {offsets = [0, 2, 0, 0], sizes = [1, 32, 32, 3], strides = [1, 1, 1, 1]} : vector<1x34x34x3xbf16> to vector<1x32x32x3xbf16>
    %40 = vector.shape_cast %39 : vector<1x32x32x3xbf16> to vector<1024x3xbf16>
    %c6 = arith.constant 6 : index
    %c0_21 = arith.constant 0 : index
    %c0_22 = arith.constant 0 : index
    %41 = vector.load %arg3[%c6, %c0_21, %c0_22] : memref<9x3x128xbf16, #tpu.memory_space<vmem>>, vector<1x3x128xbf16>
    %42 = vector.shape_cast %41 : vector<1x3x128xbf16> to vector<3x128xbf16>
    %cst_23 = arith.constant dense<0.000000e+00> : vector<1024x128xf32>
    %43 = tpu.matmul %40, %42, %cst_23 {dimension_numbers = #tpu.dot_dimension_numbers<[1], [0], [0], [1], [0, 0, 1, 1], [], []>} : vector<1024x3xbf16>, vector<3x128xbf16>, vector<1024x128xf32> -> vector<1024x128xf32>
    %44 = arith.addf %38, %43 : vector<1024x128xf32>
    %45 = vector.extract_strided_slice %1 {offsets = [0, 2, 1, 0], sizes = [1, 32, 32, 3], strides = [1, 1, 1, 1]} : vector<1x34x34x3xbf16> to vector<1x32x32x3xbf16>
    %46 = vector.shape_cast %45 : vector<1x32x32x3xbf16> to vector<1024x3xbf16>
    %c7 = arith.constant 7 : index
    %c0_24 = arith.constant 0 : index
    %c0_25 = arith.constant 0 : index
    %47 = vector.load %arg3[%c7, %c0_24, %c0_25] : memref<9x3x128xbf16, #tpu.memory_space<vmem>>, vector<1x3x128xbf16>
    %48 = vector.shape_cast %47 : vector<1x3x128xbf16> to vector<3x128xbf16>
    %cst_26 = arith.constant dense<0.000000e+00> : vector<1024x128xf32>
    %49 = tpu.matmul %46, %48, %cst_26 {dimension_numbers = #tpu.dot_dimension_numbers<[1], [0], [0], [1], [0, 0, 1, 1], [], []>} : vector<1024x3xbf16>, vector<3x128xbf16>, vector<1024x128xf32> -> vector<1024x128xf32>
    %50 = arith.addf %44, %49 : vector<1024x128xf32>
    %51 = vector.extract_strided_slice %1 {offsets = [0, 2, 2, 0], sizes = [1, 32, 32, 3], strides = [1, 1, 1, 1]} : vector<1x34x34x3xbf16> to vector<1x32x32x3xbf16>
    %52 = vector.shape_cast %51 : vector<1x32x32x3xbf16> to vector<1024x3xbf16>
    %c8 = arith.constant 8 : index
    %c0_27 = arith.constant 0 : index
    %c0_28 = arith.constant 0 : index
    %53 = vector.load %arg3[%c8, %c0_27, %c0_28] : memref<9x3x128xbf16, #tpu.memory_space<vmem>>, vector<1x3x128xbf16>
    %54 = vector.shape_cast %53 : vector<1x3x128xbf16> to vector<3x128xbf16>
    %cst_29 = arith.constant dense<0.000000e+00> : vector<1024x128xf32>
    %55 = tpu.matmul %52, %54, %cst_29 {dimension_numbers = #tpu.dot_dimension_numbers<[1], [0], [0], [1], [0, 0, 1, 1], [], []>} : vector<1024x3xbf16>, vector<3x128xbf16>, vector<1024x128xf32> -> vector<1024x128xf32>
    %56 = arith.addf %50, %55 : vector<1024x128xf32>
    %c0_30 = arith.constant 0 : index
    %c0_31 = arith.constant 0 : index
    %57 = vector.load %arg4[%c0_30, %c0_31] : memref<1x128xf32, #tpu.memory_space<vmem>>, vector<1x128xf32>
    %58 = vector.broadcast %57 : vector<1x128xf32> to vector<1024x128xf32>
    %59 = arith.addf %56, %58 : vector<1024x128xf32>
    %cst_32 = arith.constant 0.000000e+00 : f32
    %60 = vector.broadcast %cst_32 : f32 to vector<1024x128xf32>
    %61 = arith.maximumf %59, %60 : vector<1024x128xf32>
    %62 = arith.truncf %61 : vector<1024x128xf32> to vector<1024x128xbf16>
    %c0_33 = arith.constant 0 : index
    %c0_34 = arith.constant 0 : index
    %63 = vector.load %arg5[%c0_33, %c0_34] : memref<1024x128xbf16, #tpu.memory_space<vmem>>, vector<1024x128xbf16>
    tpu.vector_store %arg5[%c0_33, %c0_34], %62 {strides = array<i32>} : memref<1024x128xbf16, #tpu.memory_space<vmem>>, vector<1024x128xbf16>,
    return
  }
  func.func @transform_0(%arg0: i32, %arg1: i32) -> (i32, i32, i32) {
    %c0_i32 = arith.constant 0 : i32
    %c0_i32_0 = arith.constant 0 : i32
    %c0_i32_1 = arith.constant 0 : i32
    return %arg0, %c0_i32, %c0_i32_0 : i32, i32, i32
  }
  func.func @transform_1(%arg0: i32, %arg1: i32) -> (i32, i32, i32) {
    %c0_i32 = arith.constant 0 : i32
    %c0_i32_0 = arith.constant 0 : i32
    %c0_i32_1 = arith.constant 0 : i32
    return %c0_i32, %c0_i32_0, %arg1 : i32, i32, i32
  }
  func.func @transform_2(%arg0: i32, %arg1: i32) -> (i32, i32) {
    %c0_i32 = arith.constant 0 : i32
    %c0_i32_0 = arith.constant 0 : i32
    return %c0_i32, %arg1 : i32, i32
  }
  func.func @transform_3(%arg0: i32, %arg1: i32) -> (i32, i32) {
    %c0_i32 = arith.constant 0 : i32
    return %arg0, %arg1 : i32, i32
  }
}

</mosaic_0001>

<llo_original>
// kernel: tpu_custom_call.1
$region0: #{tpu_custom_call.1}
  #allocation0 [shape = 'u32[]', space=smem, size = 0x4, offset = 0x4, fixed_abs, tag = 'smem constant byte address 0x4 - core index']
  #allocation1 [shape = 'u32[72,128]{1,0:T(1,128)}', space=vmem, size = 0x9000, scoped, tag = 'internal scratch']
  %s0 = inlined_call_operand.vmem [shape: bf16[68,34,3], index: 0, kind: input, shape index: {}]
  %s1 = inlined_call_operand.vmem [shape: bf16[9,3,128], index: 1, kind: input, shape index: {}]
  %s2 = inlined_call_operand.vmem [shape: f32[1,128], index: 2, kind: input, shape index: {}]
  %s3 = inlined_call_operand.hbm [shape: bf16[2048,128], index: 3, kind: output, shape index: {}]
  %s4 = sld [smem:[#allocation0]]
  $region45: #{tpu_custom_call.1} parent=0
    _
  %s6 = ssub.s32 1, %s4
  %s7 = scalar_select 0, %s6, %s4
  $region1: #{tpu_custom_call.1} parent=0
    #allocation2 [shape = 'u8[524288]{0}', space=vmem, size = 0x80000, scoped, tag = 'output window, operand 0']
    #allocation3 [shape = 's32[2]{0}', space=sflag, size = 0x8, scoped, tag = 'scoped memory for tpu_custom_call.1']
    %8 = vsyncpa [#allocation3], 0
    %s9 = scalar_lea.sflag [#allocation3], 1
    %10 = vsyncpa %s9, 0
    loop: start=0, step=1, limit=4
    $region2: #{tpu_custom_call.1} parent=1 // loop_pre_header
      _
    $region3: #{tpu_custom_call.1} parent=1 // loop_header
      %s12 = sphi 0, %s16
      %p13 = scmp.ge.s32.totalorder %s12, 4
      %s19 = sphi 0, %s31
      %s20 = sphi 0, %s27
      %s21 = sphi 0, %s19
      %s22 = sphi 0, %s20
      %s23 = sphi 0, %s21
      %s24 = sphi 0, %s22
      %s34 = sphi 0, %s36
      %s37 = sphi 0, %s34
      %s38 = sphi 0, %s37
      %s54 = sphi 0, %s38
      %s60 = sphi 0, %s62
      %s63 = sphi 0, %s60
      %s64 = sphi 0, %s63
      %s80 = sphi 0, %s64
      %s86 = sphi 0, %s88
      %s89 = sphi 0, %s86
      %s90 = sphi 0, %s89
      %s106 = sphi 0, %s90
      %s114 = sphi 0, %s116
      %s117 = sphi 0, %s114
      %s118 = sphi 0, %s117
      %s134 = sphi 0, %s118
    $region4: #{tpu_custom_call.1} parent=1 // loop_header_branch
      %15 = sbr.rel (%p13) target = $region8
    $region5: #{tpu_custom_call.1} parent=1 // loop_body
      %s17 = ssub.s32 %s12, 1
      %s18 = ssub.s32 %s12, 2
      %s25 = sadd.s32 1, %s20
      %p26 = scmp.ge.s32.totalorder %s25, 1
      %s27 = scalar_select %p26, 0, %s25
      %s28 = sadd.s32 1, %s19
      %s29 = scalar_select %p26, %s28, %s19
      %p30 = scmp.ge.s32.totalorder %s29, 2
      %s31 = scalar_select %p30, 0, %s29
      %s32 = ssub.s32 %s19, %s31
      %p33 = scmp.eq.s32.totalorder %s32, 0
      %s35 = sadd.s32 %s34, 1
      %s36 = scalar_select %p33, %s34, %s35
      %p39 = pneg %p33
      %p40 = scmp.eq.s32.totalorder %s12, 1
      %p41 = por %p39, %p40
      %p42 = scmp.ne.s32.totalorder %s34, %s37
      %p43 = scmp.eq.s32.totalorder %s12, 0
      %p44 = por %p42, %p43
      %p45 = scmp.ne.s32.totalorder %s34, %s37
      %p46 = scmp.eq.s32.totalorder %s17, 1
      %p47 = por %p45, %p46
      %p48 = scmp.ne.s32.totalorder %s37, %s38
      %p49 = scmp.eq.s32.totalorder %s17, 0
      %p50 = por %p48, %p49
      %p51 = scmp.ne.s32.totalorder %s37, %s38
      %p52 = scmp.eq.s32.totalorder %s18, 1
      %p53 = por %p51, %p52
      %p55 = scmp.ne.s32.totalorder %s38, %s54
      %p56 = scmp.eq.s32.totalorder %s18, 0
      %p57 = por %p55, %p56
      %s58 = ssub.s32 %s20, %s27
      %p59 = scmp.eq.s32.totalorder %s58, 0
      %s61 = sadd.s32 %s60, 1
      %s62 = scalar_select %p59, %s60, %s61
      %p65 = pneg %p59
      %p66 = scmp.eq.s32.totalorder %s12, 1
      %p67 = por %p65, %p66
      %p68 = scmp.ne.s32.totalorder %s60, %s63
      %p69 = scmp.eq.s32.totalorder %s12, 0
      %p70 = por %p68, %p69
      %p71 = scmp.ne.s32.totalorder %s60, %s63
      %p72 = scmp.eq.s32.totalorder %s17, 1
      %p73 = por %p71, %p72
      %p74 = scmp.ne.s32.totalorder %s63, %s64
      %p75 = scmp.eq.s32.totalorder %s17, 0
      %p76 = por %p74, %p75
      %p77 = scmp.ne.s32.totalorder %s63, %s64
      %p78 = scmp.eq.s32.totalorder %s18, 1
      %p79 = por %p77, %p78
      %p81 = scmp.ne.s32.totalorder %s64, %s80
      %p82 = scmp.eq.s32.totalorder %s18, 0
      %p83 = por %p81, %p82
      %s84 = ssub.s32 %s20, %s27
      %p85 = scmp.eq.s32.totalorder %s84, 0
      %s87 = sadd.s32 %s86, 1
      %s88 = scalar_select %p85, %s86, %s87
      %p91 = pneg %p85
      %p92 = scmp.eq.s32.totalorder %s12, 1
      %p93 = por %p91, %p92
      %p94 = scmp.ne.s32.totalorder %s86, %s89
      %p95 = scmp.eq.s32.totalorder %s12, 0
      %p96 = por %p94, %p95
      %p97 = scmp.ne.s32.totalorder %s86, %s89
      %p98 = scmp.eq.s32.totalorder %s17, 1
      %p99 = por %p97, %p98
      %p100 = scmp.ne.s32.totalorder %s89, %s90
      %p101 = scmp.eq.s32.totalorder %s17, 0
      %p102 = por %p100, %p101
      %p103 = scmp.ne.s32.totalorder %s89, %s90
      %p104 = scmp.eq.s32.totalorder %s18, 1
      %p105 = por %p103, %p104
      %p107 = scmp.ne.s32.totalorder %s90, %s106
      %p108 = scmp.eq.s32.totalorder %s18, 0
      %p109 = por %p107, %p108
      %s110 = ssub.s32 %s19, %s31
      %s111 = ssub.s32 %s20, %s27
      %s112 = sor.u32 %s110, %s111
      %p113 = scmp.eq.s32.totalorder %s112, 0
      %s115 = sadd.s32 %s114, 1
      %s116 = scalar_select %p113, %s114, %s115
      %p119 = pneg %p113
      %p120 = scmp.eq.s32.totalorder %s12, 1
      %p121 = por %p119, %p120
      %p122 = scmp.ne.s32.totalorder %s114, %s117
      %p123 = scmp.eq.s32.totalorder %s12, 0
      %p124 = por %p122, %p123
      %p125 = scmp.ne.s32.totalorder %s114, %s117
      %p126 = scmp.eq.s32.totalorder %s17, 1
      %p127 = por %p125, %p126
      %p128 = scmp.ne.s32.totalorder %s117, %s118
      %p129 = scmp.eq.s32.totalorder %s17, 0
      %p130 = por %p128, %p129
      %p131 = scmp.ne.s32.totalorder %s117, %s118
      %p132 = scmp.eq.s32.totalorder %s18, 1
      %p133 = por %p131, %p132
      %p135 = scmp.ne.s32.totalorder %s118, %s134
      %p136 = scmp.eq.s32.totalorder %s18, 0
      %p137 = por %p135, %p136
      %p138 = scmp.le.s32.totalorder 1, %s12
      %p139 = scmp.lt.s32.totalorder %s12, 3
      %p140 = pnand %p138, %p139
      %p141 = pneg %p140
      // Predicated region
      $region9: #{tpu_custom_call.1} parent=5 // pred_check
        _
      $region10: #{tpu_custom_call.1} parent=5 // pred_check_branch
        %143 = sbr.rel (%p140) target = $region12
      $region11: #{tpu_custom_call.1} parent=5 // pred_region
        %s144 = ssub.s32 %s12, 1
        // Predicated region
        $region13: #{tpu_custom_call.1} parent=11 // pred_check
          %p145 = pneg %p76
        $region14: #{tpu_custom_call.1} parent=11 // pred_check_branch
          %147 = sbr.rel (%p145) target = $region16
        $region15: #{tpu_custom_call.1} parent=11 // pred_region
          %p148 = scmp.lt.s32.totalorder %s22, 0
          %s149 = scalar_select %p148, %s22, 0
          %s150 = smul.addr %s149, 2
          %s151 = scalar_lea.vmem %s1, %s150
        $region16: #{tpu_custom_call.1} parent=11 // pred_fallthru
          _
        // Predicated region
        $region17: #{tpu_custom_call.1} parent=11 // pred_check
          %p152 = pneg %p102
        $region18: #{tpu_custom_call.1} parent=11 // pred_check_branch
          %154 = sbr.rel (%p152) target = $region20
        $region19: #{tpu_custom_call.1} parent=11 // pred_region
          %p155 = scmp.lt.s32.totalorder %s22, 0
          %s156 = scalar_select %p155, %s22, 0
          %s157 = scalar_lea.vmem %s2, %s156
        $region20: #{tpu_custom_call.1} parent=11 // pred_fallthru
          _
      $region12: #{tpu_custom_call.1} parent=5 // pred_fallthru
        _
      %p158 = scmp.lt.s32.totalorder %s12, 2
      // Predicated region
      $region21: #{tpu_custom_call.1} parent=5 // pred_check
        %p159 = pneg %p158
      $region22: #{tpu_custom_call.1} parent=5 // pred_check_branch
        %161 = sbr.rel (%p159) target = $region24
      $region23: #{tpu_custom_call.1} parent=5 // pred_region
        // Predicated region
        $region25: #{tpu_custom_call.1} parent=23 // pred_check
          %p162 = pneg %p44
        $region26: #{tpu_custom_call.1} parent=23 // pred_check_branch
          %164 = sbr.rel (%p162) target = $region28
        $region27: #{tpu_custom_call.1} parent=23 // pred_region
          %s165 = smul.u32 34, %s19
          %p166 = scmp.lt.s32.totalorder %s165, 67
          %s167 = scalar_select %p166, %s165, 67
          %s168 = smul.addr %s167, 5
          %s169 = smul.addr %s168, 4
          %s170 = scalar_lea.vmem %s0, %s169
          %s171 = smul.u32 34, %s19
        $region28: #{tpu_custom_call.1} parent=23 // pred_fallthru
          _
      $region24: #{tpu_custom_call.1} parent=5 // pred_fallthru
        _
      %p172 = scmp.le.s32.totalorder 1, %s12
      %p173 = scmp.lt.s32.totalorder %s12, 3
      %p174 = pnand %p172, %p173
      %p175 = pneg %p174
      // Predicated region
      $region29: #{tpu_custom_call.1} parent=5 // pred_check
        _
      $region30: #{tpu_custom_call.1} parent=5 // pred_check_branch
        %177 = sbr.rel (%p174) target = $region32
      $region31: #{tpu_custom_call.1} parent=5 // pred_region
        %s178 = ssub.s32 %s12, 1
        %s179 = smul.u32 34, %s21
        %p180 = scmp.lt.s32.totalorder %s179, 67
        %s181 = scalar_select %p180, %s179, 67
        %s182 = smul.addr %s181, 5
        %s183 = smul.addr %s182, 4
        %s184 = scalar_lea.vmem %s0, %s183
        %p185 = pneg %p50
        %p186 = pneg %p47
        %p187 = scmp.lt.s32.totalorder %s22, 0
        %s188 = scalar_select %p187, %s22, 0
        %s189 = smul.addr %s188, 2
        %s190 = scalar_lea.vmem %s1, %s189
        %p191 = pneg %p76
        %p192 = pneg %p73
        %p193 = scmp.lt.s32.totalorder %s22, 0
        %s194 = scalar_select %p193, %s22, 0
        %s195 = scalar_lea.vmem %s2, %s194
        %p196 = pneg %p102
        %p197 = pneg %p99
        %p198 = pneg %p130
        %p199 = pneg %p127
        %s200 = sand.u32 %s117, 1
        %s201 = scalar_lea.sflag [#allocation3], %s200
        %s202 = sand.u32 %s117, 1
        %s203 = smul.addr %s202, 512
        %s204 = scalar_lea.vmem [#allocation2], %s203
        %s205 = smul.u32 34, %s21
        %p206 = scmp.lt.s32.totalorder %s205, 67
        %s207 = scalar_select %p206, %s205, 67
        %s208 = smul.addr %s207, 5
        %s209 = smul.addr %s208, 4
        %s210 = scalar_lea.vmem %s0, %s209
        %s211 = smul.u32 34, %s21
        %p212 = scmp.lt.s32.totalorder %s22, 0
        %s213 = scalar_select %p212, %s22, 0
        %s214 = smul.addr %s213, 2
        %s215 = scalar_lea.vmem %s1, %s214
        %p216 = scmp.lt.s32.totalorder %s22, 0
        %s217 = scalar_select %p216, %s22, 0
        %s218 = scalar_lea.vmem %s2, %s217
        %s219 = smul.u32 128, %s21
        %v221 = vld [vmem:[%s210] sm:$0xf]
        %v222 = vld [vmem:[%s210 + $0x4] sm:$0xf]
        %v223 = vld [vmem:[%s210 + $0x8] sm:$0xf]
        %v224 = vld [vmem:[%s210 + $0xc] sm:$0xf]
        %v225 = vld [vmem:[%s210 + $0x10] sm:$0x1]
        %v226 = vld [vmem:[%s210 + $0x14] sm:$0xf]
        %v227 = vld [vmem:[%s210 + $0x18] sm:$0xf]
        %v228 = vld [vmem:[%s210 + $0x1c] sm:$0xf]
        %v229 = vld [vmem:[%s210 + $0x20] sm:$0xf]
        %v230 = vld [vmem:[%s210 + $0x24] sm:$0x1]
        %v231 = vld [vmem:[%s210 + $0x28] sm:$0xf]
        %v232 = vld [vmem:[%s210 + $0x2c] sm:$0xf]
        %v233 = vld [vmem:[%s210 + $0x30] sm:$0xf]
        %v234 = vld [vmem:[%s210 + $0x34] sm:$0xf]
        %v235 = vld [vmem:[%s210 + $0x38] sm:$0x1]
        %v236 = vld [vmem:[%s210 + $0x3c] sm:$0xf]
        %v237 = vld [vmem:[%s210 + $0x40] sm:$0xf]
        %v238 = vld [vmem:[%s210 + $0x44] sm:$0xf]
        %v239 = vld [vmem:[%s210 + $0x48] sm:$0xf]
        %v240 = vld [vmem:[%s210 + $0x4c] sm:$0x1]
        %v241 = vld [vmem:[%s210 + $0x50] sm:$0xf]
        %v242 = vld [vmem:[%s210 + $0x54] sm:$0xf]
        %v243 = vld [vmem:[%s210 + $0x58] sm:$0xf]
        %v244 = vld [vmem:[%s210 + $0x5c] sm:$0xf]
        %v245 = vld [vmem:[%s210 + $0x60] sm:$0x1]
        %v246 = vld [vmem:[%s210 + $0x64] sm:$0xf]
        %v247 = vld [vmem:[%s210 + $0x68] sm:$0xf]
        %v248 = vld [vmem:[%s210 + $0x6c] sm:$0xf]
        %v249 = vld [vmem:[%s210 + $0x70] sm:$0xf]
        %v250 = vld [vmem:[%s210 + $0x74] sm:$0x1]
        %v251 = vld [vmem:[%s210 + $0x78] sm:$0xf]
        %v252 = vld [vmem:[%s210 + $0x7c] sm:$0xf]
        %v253 = vld [vmem:[%s210 + $0x80] sm:$0xf]
        %v254 = vld [vmem:[%s210 + $0x84] sm:$0xf]
        %v255 = vld [vmem:[%s210 + $0x88] sm:$0x1]
        %v256 = vld [vmem:[%s210 + $0x8c] sm:$0xf]
        %v257 = vld [vmem:[%s210 + $0x90] sm:$0xf]
        %v258 = vld [vmem:[%s210 + $0x94] sm:$0xf]
        %v259 = vld [vmem:[%s210 + $0x98] sm:$0xf]
        %v260 = vld [vmem:[%s210 + $0x9c] sm:$0x1]
        %v261 = vld [vmem:[%s210 + $0xa0] sm:$0xf]
        %v262 = vld [vmem:[%s210 + $0xa4] sm:$0xf]
        %v263 = vld [vmem:[%s210 + $0xa8] sm:$0xf]
        %v264 = vld [vmem:[%s210 + $0xac] sm:$0xf]
        %v265 = vld [vmem:[%s210 + $0xb0] sm:$0x1]
        %v266 = vld [vmem:[%s210 + $0xb4] sm:$0xf]
        %v267 = vld [vmem:[%s210 + $0xb8] sm:$0xf]
        %v268 = vld [vmem:[%s210 + $0xbc] sm:$0xf]
        %v269 = vld [vmem:[%s210 + $0xc0] sm:$0xf]
        %v270 = vld [vmem:[%s210 + $0xc4] sm:$0x1]
        %v271 = vld [vmem:[%s210 + $0xc8] sm:$0xf]
        %v272 = vld [vmem:[%s210 + $0xcc] sm:$0xf]
        %v273 = vld [vmem:[%s210 + $0xd0] sm:$0xf]
        %v274 = vld [vmem:[%s210 + $0xd4] sm:$0xf]
        %v275 = vld [vmem:[%s210 + $0xd8] sm:$0x1]
        %v276 = vld [vmem:[%s210 + $0xdc] sm:$0xf]
        %v277 = vld [vmem:[%s210 + $0xe0] sm:$0xf]
        %v278 = vld [vmem:[%s210 + $0xe4] sm:$0xf]
        %v279 = vld [vmem:[%s210 + $0xe8] sm:$0xf]
        %v280 = vld [vmem:[%s210 + $0xec] sm:$0x1]
        %v281 = vld [vmem:[%s210 + $0xf0] sm:$0xf]
        %v282 = vld [vmem:[%s210 + $0xf4] sm:$0xf]
        %v283 = vld [vmem:[%s210 + $0xf8] sm:$0xf]
        %v284 = vld [vmem:[%s210 + $0xfc] sm:$0xf]
        %v285 = vld [vmem:[%s210 + $0x100] sm:$0x1]
        %v286 = vld [vmem:[%s210 + $0x104] sm:$0xf]
        %v287 = vld [vmem:[%s210 + $0x108] sm:$0xf]
        %v288 = vld [vmem:[%s210 + $0x10c] sm:$0xf]
        %v289 = vld [vmem:[%s210 + $0x110] sm:$0xf]
        %v290 = vld [vmem:[%s210 + $0x114] sm:$0x1]
        %v291 = vld [vmem:[%s210 + $0x118] sm:$0xf]
        %v292 = vld [vmem:[%s210 + $0x11c] sm:$0xf]
        %v293 = vld [vmem:[%s210 + $0x120] sm:$0xf]
        %v294 = vld [vmem:[%s210 + $0x124] sm:$0xf]
        %v295 = vld [vmem:[%s210 + $0x128] sm:$0x1]
        %v296 = vld [vmem:[%s210 + $0x12c] sm:$0xf]
        %v297 = vld [vmem:[%s210 + $0x130] sm:$0xf]
        %v298 = vld [vmem:[%s210 + $0x134] sm:$0xf]
        %v299 = vld [vmem:[%s210 + $0x138] sm:$0xf]
        %v300 = vld [vmem:[%s210 + $0x13c] sm:$0x1]
        %v301 = vld [vmem:[%s210 + $0x140] sm:$0xf]
        %v302 = vld [vmem:[%s210 + $0x144] sm:$0xf]
        %v303 = vld [vmem:[%s210 + $0x148] sm:$0xf]
        %v304 = vld [vmem:[%s210 + $0x14c] sm:$0xf]
        %v305 = vld [vmem:[%s210 + $0x150] sm:$0x1]
        %v306 = vld [vmem:[%s210 + $0x154] sm:$0xf]
        %v307 = vld [vmem:[%s210 + $0x158] sm:$0xf]
        %v308 = vld [vmem:[%s210 + $0x15c] sm:$0xf]
        %v309 = vld [vmem:[%s210 + $0x160] sm:$0xf]
        %v310 = vld [vmem:[%s210 + $0x164] sm:$0x1]
        %v311 = vld [vmem:[%s210 + $0x168] sm:$0xf]
        %v312 = vld [vmem:[%s210 + $0x16c] sm:$0xf]
        %v313 = vld [vmem:[%s210 + $0x170] sm:$0xf]
        %v314 = vld [vmem:[%s210 + $0x174] sm:$0xf]
        %v315 = vld [vmem:[%s210 + $0x178] sm:$0x1]
        %v316 = vld [vmem:[%s210 + $0x17c] sm:$0xf]
        %v317 = vld [vmem:[%s210 + $0x180] sm:$0xf]
        %v318 = vld [vmem:[%s210 + $0x184] sm:$0xf]
        %v319 = vld [vmem:[%s210 + $0x188] sm:$0xf]
        %v320 = vld [vmem:[%s210 + $0x18c] sm:$0x1]
        %v321 = vld [vmem:[%s210 + $0x190] sm:$0xf]
        %v322 = vld [vmem:[%s210 + $0x194] sm:$0xf]
        %v323 = vld [vmem:[%s210 + $0x198] sm:$0xf]
        %v324 = vld [vmem:[%s210 + $0x19c] sm:$0xf]
        %v325 = vld [vmem:[%s210 + $0x1a0] sm:$0x1]
        %v326 = vld [vmem:[%s210 + $0x1a4] sm:$0xf]
        %v327 = vld [vmem:[%s210 + $0x1a8] sm:$0xf]
        %v328 = vld [vmem:[%s210 + $0x1ac] sm:$0xf]
        %v329 = vld [vmem:[%s210 + $0x1b0] sm:$0xf]
        %v330 = vld [vmem:[%s210 + $0x1b4] sm:$0x1]
        %v331 = vld [vmem:[%s210 + $0x1b8] sm:$0xf]
        %v332 = vld [vmem:[%s210 + $0x1bc] sm:$0xf]
        %v333 = vld [vmem:[%s210 + $0x1c0] sm:$0xf]
        %v334 = vld [vmem:[%s210 + $0x1c4] sm:$0xf]
        %v335 = vld [vmem:[%s210 + $0x1c8] sm:$0x1]
        %v336 = vld [vmem:[%s210 + $0x1cc] sm:$0xf]
        %v337 = vld [vmem:[%s210 + $0x1d0] sm:$0xf]
        %v338 = vld [vmem:[%s210 + $0x1d4] sm:$0xf]
        %v339 = vld [vmem:[%s210 + $0x1d8] sm:$0xf]
        %v340 = vld [vmem:[%s210 + $0x1dc] sm:$0x1]
        %v341 = vld [vmem:[%s210 + $0x1e0] sm:$0xf]
        %v342 = vld [vmem:[%s210 + $0x1e4] sm:$0xf]
        %v343 = vld [vmem:[%s210 + $0x1e8] sm:$0xf]
        %v344 = vld [vmem:[%s210 + $0x1ec] sm:$0xf]
        %v345 = vld [vmem:[%s210 + $0x1f0] sm:$0x1]
        %v346 = vld [vmem:[%s210 + $0x1f4] sm:$0xf]
        %v347 = vld [vmem:[%s210 + $0x1f8] sm:$0xf]
        %v348 = vld [vmem:[%s210 + $0x1fc] sm:$0xf]
        %v349 = vld [vmem:[%s210 + $0x200] sm:$0xf]
        %v350 = vld [vmem:[%s210 + $0x204] sm:$0x1]
        %v351 = vld [vmem:[%s210 + $0x208] sm:$0xf]
        %v352 = vld [vmem:[%s210 + $0x20c] sm:$0xf]
        %v353 = vld [vmem:[%s210 + $0x210] sm:$0xf]
        %v354 = vld [vmem:[%s210 + $0x214] sm:$0xf]
        %v355 = vld [vmem:[%s210 + $0x218] sm:$0x1]
        %v356 = vld [vmem:[%s210 + $0x21c] sm:$0xf]
        %v357 = vld [vmem:[%s210 + $0x220] sm:$0xf]
        %v358 = vld [vmem:[%s210 + $0x224] sm:$0xf]
        %v359 = vld [vmem:[%s210 + $0x228] sm:$0xf]
        %v360 = vld [vmem:[%s210 + $0x22c] sm:$0x1]
        %v361 = vld [vmem:[%s210 + $0x230] sm:$0xf]
        %v362 = vld [vmem:[%s210 + $0x234] sm:$0xf]
        %v363 = vld [vmem:[%s210 + $0x238] sm:$0xf]
        %v364 = vld [vmem:[%s210 + $0x23c] sm:$0xf]
        %v365 = vld [vmem:[%s210 + $0x240] sm:$0x1]
        %v366 = vld [vmem:[%s210 + $0x244] sm:$0xf]
        %v367 = vld [vmem:[%s210 + $0x248] sm:$0xf]
        %v368 = vld [vmem:[%s210 + $0x24c] sm:$0xf]
        %v369 = vld [vmem:[%s210 + $0x250] sm:$0xf]
        %v370 = vld [vmem:[%s210 + $0x254] sm:$0x1]
        %v371 = vld [vmem:[%s210 + $0x258] sm:$0xf]
        %v372 = vld [vmem:[%s210 + $0x25c] sm:$0xf]
        %v373 = vld [vmem:[%s210 + $0x260] sm:$0xf]
        %v374 = vld [vmem:[%s210 + $0x264] sm:$0xf]
        %v375 = vld [vmem:[%s210 + $0x268] sm:$0x1]
        %v376 = vld [vmem:[%s210 + $0x26c] sm:$0xf]
        %v377 = vld [vmem:[%s210 + $0x270] sm:$0xf]
        %v378 = vld [vmem:[%s210 + $0x274] sm:$0xf]
        %v379 = vld [vmem:[%s210 + $0x278] sm:$0xf]
        %v380 = vld [vmem:[%s210 + $0x27c] sm:$0x1]
        %v381 = vld [vmem:[%s210 + $0x280] sm:$0xf]
        %v382 = vld [vmem:[%s210 + $0x284] sm:$0xf]
        %v383 = vld [vmem:[%s210 + $0x288] sm:$0xf]
        %v384 = vld [vmem:[%s210 + $0x28c] sm:$0xf]
        %v385 = vld [vmem:[%s210 + $0x290] sm:$0x1]
        %v386 = vld [vmem:[%s210 + $0x294] sm:$0xf]
        %v387 = vld [vmem:[%s210 + $0x298] sm:$0xf]
        %v388 = vld [vmem:[%s210 + $0x29c] sm:$0xf]
        %v389 = vld [vmem:[%s210 + $0x2a0] sm:$0xf]
        %v390 = vld [vmem:[%s210 + $0x2a4] sm:$0x1]
        %v391 = vld [vmem:[%s215] sm:$0x3]
        %vm392 = vsmask.f32 3328
        %vm393 = vsmask.f32 7440
        %vm394 = vmor %vm392, %vm393
        %v396 = vshrl.u32 %v221, 16
        %v398 = vrot.slane %v396, 4
        %v399 = vshll.u32 %v221, 16
        %v401 = vrot.slane %v399, 5
        %v402 = vor.u32 %v398, %v401
        %v403 = vrot.slane %v402, 4
        %v405 = vshll.u32 %v222, 16
        %v407 = vrot.slane %v405, 5
        %v408 = vsel %vm394, %v403, %v407
        %v409 = vshrl.u32 %v222, 16
        %v411 = vrot.slane %v409, 4
        %v412 = vor.u32 %v411, %v407
        %v413 = vrot.slane %v412, 4
        %v415 = vshll.u32 %v223, 16
        %v417 = vrot.slane %v415, 5
        %v418 = vsel %vm394, %v413, %v417
        %v419 = vshrl.u32 %v223, 16
        %v421 = vrot.slane %v419, 4
        %v422 = vor.u32 %v421, %v417
        %v423 = vrot.slane %v422, 4
        %v425 = vshll.u32 %v224, 16
        %v427 = vrot.slane %v425, 5
        %v428 = vsel %vm394, %v423, %v427
        %v429 = vshrl.u32 %v224, 16
        %v431 = vrot.slane %v429, 4
        %v432 = vor.u32 %v431, %v427
        %v433 = vrot.slane %v432, 4
        %v435 = vshll.u32 %v225, 16
        %v437 = vrot.slane %v435, 5
        %v438 = vsel %vm394, %v433, %v437
        %v440 = vshrl.u32 %v226, 16
        %v442 = vrot.slane %v440, 4
        %v443 = vshll.u32 %v226, 16
        %v445 = vrot.slane %v443, 5
        %v446 = vor.u32 %v442, %v445
        %v447 = vrot.slane %v446, 4
        %v449 = vshll.u32 %v227, 16
        %v451 = vrot.slane %v449, 5
        %v452 = vsel %vm394, %v447, %v451
        %v453 = vshrl.u32 %v227, 16
        %v455 = vrot.slane %v453, 4
        %v456 = vor.u32 %v455, %v451
        %v457 = vrot.slane %v456, 4
        %v459 = vshll.u32 %v228, 16
        %v461 = vrot.slane %v459, 5
        %v462 = vsel %vm394, %v457, %v461
        %v463 = vshrl.u32 %v228, 16
        %v465 = vrot.slane %v463, 4
        %v466 = vor.u32 %v465, %v461
        %v467 = vrot.slane %v466, 4
        %v469 = vshll.u32 %v229, 16
        %v471 = vrot.slane %v469, 5
        %v472 = vsel %vm394, %v467, %v471
        %v473 = vshrl.u32 %v229, 16
        %v475 = vrot.slane %v473, 4
        %v476 = vor.u32 %v475, %v471
        %v477 = vrot.slane %v476, 4
        %v479 = vshll.u32 %v230, 16
        %v481 = vrot.slane %v479, 5
        %v482 = vsel %vm394, %v477, %v481
        %v484 = vshrl.u32 %v231, 16
        %v486 = vrot.slane %v484, 4
        %v487 = vshll.u32 %v231, 16
        %v489 = vrot.slane %v487, 5
        %v490 = vor.u32 %v486, %v489
        %v491 = vrot.slane %v490, 4
        %v493 = vshll.u32 %v232, 16
        %v495 = vrot.slane %v493, 5
        %v496 = vsel %vm394, %v491, %v495
        %v497 = vshrl.u32 %v232, 16
        %v499 = vrot.slane %v497, 4
        %v500 = vor.u32 %v499, %v495
        %v501 = vrot.slane %v500, 4
        %v503 = vshll.u32 %v233, 16
        %v505 = vrot.slane %v503, 5
        %v506 = vsel %vm394, %v501, %v505
        %v507 = vshrl.u32 %v233, 16
        %v509 = vrot.slane %v507, 4
        %v510 = vor.u32 %v509, %v505
        %v511 = vrot.slane %v510, 4
        %v513 = vshll.u32 %v234, 16
        %v515 = vrot.slane %v513, 5
        %v516 = vsel %vm394, %v511, %v515
        %v517 = vshrl.u32 %v234, 16
        %v519 = vrot.slane %v517, 4
        %v520 = vor.u32 %v519, %v515
        %v521 = vrot.slane %v520, 4
        %v523 = vshll.u32 %v235, 16
        %v525 = vrot.slane %v523, 5
        %v526 = vsel %vm394, %v521, %v525
        %v528 = vshrl.u32 %v236, 16
        %v530 = vrot.slane %v528, 4
        %v531 = vshll.u32 %v236, 16
        %v533 = vrot.slane %v531, 5
        %v534 = vor.u32 %v530, %v533
        %v535 = vrot.slane %v534, 4
        %v537 = vshll.u32 %v237, 16
        %v539 = vrot.slane %v537, 5
        %v540 = vsel %vm394, %v535, %v539
        %v541 = vshrl.u32 %v237, 16
        %v543 = vrot.slane %v541, 4
        %v544 = vor.u32 %v543, %v539
        %v545 = vrot.slane %v544, 4
        %v547 = vshll.u32 %v238, 16
        %v549 = vrot.slane %v547, 5
        %v550 = vsel %vm394, %v545, %v549
        %v551 = vshrl.u32 %v238, 16
        %v553 = vrot.slane %v551, 4
        %v554 = vor.u32 %v553, %v549
        %v555 = vrot.slane %v554, 4
        %v557 = vshll.u32 %v239, 16
        %v559 = vrot.slane %v557, 5
        %v560 = vsel %vm394, %v555, %v559
        %v561 = vshrl.u32 %v239, 16
        %v563 = vrot.slane %v561, 4
        %v564 = vor.u32 %v563, %v559
        %v565 = vrot.slane %v564, 4
        %v567 = vshll.u32 %v240, 16
        %v569 = vrot.slane %v567, 5
        %v570 = vsel %vm394, %v565, %v569
        %v572 = vshrl.u32 %v241, 16
        %v574 = vrot.slane %v572, 4
        %v575 = vshll.u32 %v241, 16
        %v577 = vrot.slane %v575, 5
        %v578 = vor.u32 %v574, %v577
        %v579 = vrot.slane %v578, 4
        %v581 = vshll.u32 %v242, 16
        %v583 = vrot.slane %v581, 5
        %v584 = vsel %vm394, %v579, %v583
        %v585 = vshrl.u32 %v242, 16
        %v587 = vrot.slane %v585, 4
        %v588 = vor.u32 %v587, %v583
        %v589 = vrot.slane %v588, 4
        %v591 = vshll.u32 %v243, 16
        %v593 = vrot.slane %v591, 5
        %v594 = vsel %vm394, %v589, %v593
        %v595 = vshrl.u32 %v243, 16
        %v597 = vrot.slane %v595, 4
        %v598 = vor.u32 %v597, %v593
        %v599 = vrot.slane %v598, 4
        %v601 = vshll.u32 %v244, 16
        %v603 = vrot.slane %v601, 5
        %v604 = vsel %vm394, %v599, %v603
        %v605 = vshrl.u32 %v244, 16
        %v607 = vrot.slane %v605, 4
        %v608 = vor.u32 %v607, %v603
        %v609 = vrot.slane %v608, 4
        %v611 = vshll.u32 %v245, 16
        %v613 = vrot.slane %v611, 5
        %v614 = vsel %vm394, %v609, %v613
        %v616 = vshrl.u32 %v246, 16
        %v618 = vrot.slane %v616, 4
        %v619 = vshll.u32 %v246, 16
        %v621 = vrot.slane %v619, 5
        %v622 = vor.u32 %v618, %v621
        %v623 = vrot.slane %v622, 4
        %v625 = vshll.u32 %v247, 16
        %v627 = vrot.slane %v625, 5
        %v628 = vsel %vm394, %v623, %v627
        %v629 = vshrl.u32 %v247, 16
        %v631 = vrot.slane %v629, 4
        %v632 = vor.u32 %v631, %v627
        %v633 = vrot.slane %v632, 4
        %v635 = vshll.u32 %v248, 16
        %v637 = vrot.slane %v635, 5
        %v638 = vsel %vm394, %v633, %v637
        %v639 = vshrl.u32 %v248, 16
        %v641 = vrot.slane %v639, 4
        %v642 = vor.u32 %v641, %v637
        %v643 = vrot.slane %v642, 4
        %v645 = vshll.u32 %v249, 16
        %v647 = vrot.slane %v645, 5
        %v648 = vsel %vm394, %v643, %v647
        %v649 = vshrl.u32 %v249, 16
        %v651 = vrot.slane %v649, 4
        %v652 = vor.u32 %v651, %v647
        %v653 = vrot.slane %v652, 4
        %v655 = vshll.u32 %v250, 16
        %v657 = vrot.slane %v655, 5
        %v658 = vsel %vm394, %v653, %v657
        %v660 = vshrl.u32 %v251, 16
        %v662 = vrot.slane %v660, 4
        %v663 = vshll.u32 %v251, 16
        %v665 = vrot.slane %v663, 5
        %v666 = vor.u32 %v662, %v665
        %v667 = vrot.slane %v666, 4
        %v669 = vshll.u32 %v252, 16
        %v671 = vrot.slane %v669, 5
        %v672 = vsel %vm394, %v667, %v671
        %v673 = vshrl.u32 %v252, 16
        %v675 = vrot.slane %v673, 4
        %v676 = vor.u32 %v675, %v671
        %v677 = vrot.slane %v676, 4
        %v679 = vshll.u32 %v253, 16
        %v681 = vrot.slane %v679, 5
        %v682 = vsel %vm394, %v677, %v681
        %v683 = vshrl.u32 %v253, 16
        %v685 = vrot.slane %v683, 4
        %v686 = vor.u32 %v685, %v681
        %v687 = vrot.slane %v686, 4
        %v689 = vshll.u32 %v254, 16
        %v691 = vrot.slane %v689, 5
        %v692 = vsel %vm394, %v687, %v691
        %v693 = vshrl.u32 %v254, 16
        %v695 = vrot.slane %v693, 4
        %v696 = vor.u32 %v695, %v691
        %v697 = vrot.slane %v696, 4
        %v699 = vshll.u32 %v255, 16
        %v701 = vrot.slane %v699, 5
        %v702 = vsel %vm394, %v697, %v701
        %v704 = vshrl.u32 %v256, 16
        %v706 = vrot.slane %v704, 4
        %v707 = vshll.u32 %v256, 16
        %v709 = vrot.slane %v707, 5
        %v710 = vor.u32 %v706, %v709
        %v711 = vrot.slane %v710, 4
        %v713 = vshll.u32 %v257, 16
        %v715 = vrot.slane %v713, 5
        %v716 = vsel %vm394, %v711, %v715
        %v717 = vshrl.u32 %v257, 16
        %v719 = vrot.slane %v717, 4
        %v720 = vor.u32 %v719, %v715
        %v721 = vrot.slane %v720, 4
        %v723 = vshll.u32 %v258, 16
        %v725 = vrot.slane %v723, 5
        %v726 = vsel %vm394, %v721, %v725
        %v727 = vshrl.u32 %v258, 16
        %v729 = vrot.slane %v727, 4
        %v730 = vor.u32 %v729, %v725
        %v731 = vrot.slane %v730, 4
        %v733 = vshll.u32 %v259, 16
        %v735 = vrot.slane %v733, 5
        %v736 = vsel %vm394, %v731, %v735
        %v737 = vshrl.u32 %v259, 16
        %v739 = vrot.slane %v737, 4
        %v740 = vor.u32 %v739, %v735
        %v741 = vrot.slane %v740, 4
        %v743 = vshll.u32 %v260, 16
        %v745 = vrot.slane %v743, 5
        %v746 = vsel %vm394, %v741, %v745
        %v748 = vshrl.u32 %v261, 16
        %v750 = vrot.slane %v748, 4
        %v751 = vshll.u32 %v261, 16
        %v753 = vrot.slane %v751, 5
        %v754 = vor.u32 %v750, %v753
        %v755 = vrot.slane %v754, 4
        %v757 = vshll.u32 %v262, 16
        %v759 = vrot.slane %v757, 5
        %v760 = vsel %vm394, %v755, %v759
        %v761 = vshrl.u32 %v262, 16
        %v763 = vrot.slane %v761, 4
        %v764 = vor.u32 %v763, %v759
        %v765 = vrot.slane %v764, 4
        %v767 = vshll.u32 %v263, 16
        %v769 = vrot.slane %v767, 5
        %v770 = vsel %vm394, %v765, %v769
        %v771 = vshrl.u32 %v263, 16
        %v773 = vrot.slane %v771, 4
        %v774 = vor.u32 %v773, %v769
        %v775 = vrot.slane %v774, 4
        %v777 = vshll.u32 %v264, 16
        %v779 = vrot.slane %v777, 5
        %v780 = vsel %vm394, %v775, %v779
        %v781 = vshrl.u32 %v264, 16
        %v783 = vrot.slane %v781, 4
        %v784 = vor.u32 %v783, %v779
        %v785 = vrot.slane %v784, 4
        %v787 = vshll.u32 %v265, 16
        %v789 = vrot.slane %v787, 5
        %v790 = vsel %vm394, %v785, %v789
        %v792 = vshrl.u32 %v266, 16
        %v794 = vrot.slane %v792, 4
        %v795 = vshll.u32 %v266, 16
        %v797 = vrot.slane %v795, 5
        %v798 = vor.u32 %v794, %v797
        %v799 = vrot.slane %v798, 4
        %v801 = vshll.u32 %v267, 16
        %v803 = vrot.slane %v801, 5
        %v804 = vsel %vm394, %v799, %v803
        %v805 = vshrl.u32 %v267, 16
        %v807 = vrot.slane %v805, 4
        %v808 = vor.u32 %v807, %v803
        %v809 = vrot.slane %v808, 4
        %v811 = vshll.u32 %v268, 16
        %v813 = vrot.slane %v811, 5
        %v814 = vsel %vm394, %v809, %v813
        %v815 = vshrl.u32 %v268, 16
        %v817 = vrot.slane %v815, 4
        %v818 = vor.u32 %v817, %v813
        %v819 = vrot.slane %v818, 4
        %v821 = vshll.u32 %v269, 16
        %v823 = vrot.slane %v821, 5
        %v824 = vsel %vm394, %v819, %v823
        %v825 = vshrl.u32 %v269, 16
        %v827 = vrot.slane %v825, 4
        %v828 = vor.u32 %v827, %v823
        %v829 = vrot.slane %v828, 4
        %v831 = vshll.u32 %v270, 16
        %v833 = vrot.slane %v831, 5
        %v834 = vsel %vm394, %v829, %v833
        %v836 = vshrl.u32 %v271, 16
        %v838 = vrot.slane %v836, 4
        %v839 = vshll.u32 %v271, 16
        %v841 = vrot.slane %v839, 5
        %v842 = vor.u32 %v838, %v841
        %v843 = vrot.slane %v842, 4
        %v845 = vshll.u32 %v272, 16
        %v847 = vrot.slane %v845, 5
        %v848 = vsel %vm394, %v843, %v847
        %v849 = vshrl.u32 %v272, 16
        %v851 = vrot.slane %v849, 4
        %v852 = vor.u32 %v851, %v847
        %v853 = vrot.slane %v852, 4
        %v855 = vshll.u32 %v273, 16
        %v857 = vrot.slane %v855, 5
        %v858 = vsel %vm394, %v853, %v857
        %v859 = vshrl.u32 %v273, 16
        %v861 = vrot.slane %v859, 4
        %v862 = vor.u32 %v861, %v857
        %v863 = vrot.slane %v862, 4
        %v865 = vshll.u32 %v274, 16
        %v867 = vrot.slane %v865, 5
        %v868 = vsel %vm394, %v863, %v867
        %v869 = vshrl.u32 %v274, 16
        %v871 = vrot.slane %v869, 4
        %v872 = vor.u32 %v871, %v867
        %v873 = vrot.slane %v872, 4
        %v875 = vshll.u32 %v275, 16
        %v877 = vrot.slane %v875, 5
        %v878 = vsel %vm394, %v873, %v877
        %v880 = vshrl.u32 %v276, 16
        %v882 = vrot.slane %v880, 4
        %v883 = vshll.u32 %v276, 16
        %v885 = vrot.slane %v883, 5
        %v886 = vor.u32 %v882, %v885
        %v887 = vrot.slane %v886, 4
        %v889 = vshll.u32 %v277, 16
        %v891 = vrot.slane %v889, 5
        %v892 = vsel %vm394, %v887, %v891
        %v893 = vshrl.u32 %v277, 16
        %v895 = vrot.slane %v893, 4
        %v896 = vor.u32 %v895, %v891
        %v897 = vrot.slane %v896, 4
        %v899 = vshll.u32 %v278, 16
        %v901 = vrot.slane %v899, 5
        %v902 = vsel %vm394, %v897, %v901
        %v903 = vshrl.u32 %v278, 16
        %v905 = vrot.slane %v903, 4
        %v906 = vor.u32 %v905, %v901
        %v907 = vrot.slane %v906, 4
        %v909 = vshll.u32 %v279, 16
        %v911 = vrot.slane %v909, 5
        %v912 = vsel %vm394, %v907, %v911
        %v913 = vshrl.u32 %v279, 16
        %v915 = vrot.slane %v913, 4
        %v916 = vor.u32 %v915, %v911
        %v917 = vrot.slane %v916, 4
        %v919 = vshll.u32 %v280, 16
        %v921 = vrot.slane %v919, 5
        %v922 = vsel %vm394, %v917, %v921
        %v924 = vshrl.u32 %v281, 16
        %v926 = vrot.slane %v924, 4
        %v927 = vshll.u32 %v281, 16
        %v929 = vrot.slane %v927, 5
        %v930 = vor.u32 %v926, %v929
        %v931 = vrot.slane %v930, 4
        %v933 = vshll.u32 %v282, 16
        %v935 = vrot.slane %v933, 5
        %v936 = vsel %vm394, %v931, %v935
        %v937 = vshrl.u32 %v282, 16
        %v939 = vrot.slane %v937, 4
        %v940 = vor.u32 %v939, %v935
        %v941 = vrot.slane %v940, 4
        %v943 = vshll.u32 %v283, 16
        %v945 = vrot.slane %v943, 5
        %v946 = vsel %vm394, %v941, %v945
        %v947 = vshrl.u32 %v283, 16
        %v949 = vrot.slane %v947, 4
        %v950 = vor.u32 %v949, %v945
        %v951 = vrot.slane %v950, 4
        %v953 = vshll.u32 %v284, 16
        %v955 = vrot.slane %v953, 5
        %v956 = vsel %vm394, %v951, %v955
        %v957 = vshrl.u32 %v284, 16
        %v959 = vrot.slane %v957, 4
        %v960 = vor.u32 %v959, %v955
        %v961 = vrot.slane %v960, 4
        %v963 = vshll.u32 %v285, 16
        %v965 = vrot.slane %v963, 5
        %v966 = vsel %vm394, %v961, %v965
        %v968 = vshrl.u32 %v286, 16
        %v970 = vrot.slane %v968, 4
        %v971 = vshll.u32 %v286, 16
        %v973 = vrot.slane %v971, 5
        %v974 = vor.u32 %v970, %v973
        %v975 = vrot.slane %v974, 4
        %v977 = vshll.u32 %v287, 16
        %v979 = vrot.slane %v977, 5
        %v980 = vsel %vm394, %v975, %v979
        %v981 = vshrl.u32 %v287, 16
        %v983 = vrot.slane %v981, 4
        %v984 = vor.u32 %v983, %v979
        %v985 = vrot.slane %v984, 4
        %v987 = vshll.u32 %v288, 16
        %v989 = vrot.slane %v987, 5
        %v990 = vsel %vm394, %v985, %v989
        %v991 = vshrl.u32 %v288, 16
        %v993 = vrot.slane %v991, 4
        %v994 = vor.u32 %v993, %v989
        %v995 = vrot.slane %v994, 4
        %v997 = vshll.u32 %v289, 16
        %v999 = vrot.slane %v997, 5
        %v1000 = vsel %vm394, %v995, %v999
        %v1001 = vshrl.u32 %v289, 16
        %v1003 = vrot.slane %v1001, 4
        %v1004 = vor.u32 %v1003, %v999
        %v1005 = vrot.slane %v1004, 4
        %v1007 = vshll.u32 %v290, 16
        %v1009 = vrot.slane %v1007, 5
        %v1010 = vsel %vm394, %v1005, %v1009
        %v1012 = vshrl.u32 %v291, 16
        %v1014 = vrot.slane %v1012, 4
        %v1015 = vshll.u32 %v291, 16
        %v1017 = vrot.slane %v1015, 5
        %v1018 = vor.u32 %v1014, %v1017
        %v1019 = vrot.slane %v1018, 4
        %v1021 = vshll.u32 %v292, 16
        %v1023 = vrot.slane %v1021, 5
        %v1024 = vsel %vm394, %v1019, %v1023
        %v1025 = vshrl.u32 %v292, 16
        %v1027 = vrot.slane %v1025, 4
        %v1028 = vor.u32 %v1027, %v1023
        %v1029 = vrot.slane %v1028, 4
        %v1031 = vshll.u32 %v293, 16
        %v1033 = vrot.slane %v1031, 5
        %v1034 = vsel %vm394, %v1029, %v1033
        %v1035 = vshrl.u32 %v293, 16
        %v1037 = vrot.slane %v1035, 4
        %v1038 = vor.u32 %v1037, %v1033
        %v1039 = vrot.slane %v1038, 4
        %v1041 = vshll.u32 %v294, 16
        %v1043 = vrot.slane %v1041, 5
        %v1044 = vsel %vm394, %v1039, %v1043
        %v1045 = vshrl.u32 %v294, 16
        %v1047 = vrot.slane %v1045, 4
        %v1048 = vor.u32 %v1047, %v1043
        %v1049 = vrot.slane %v1048, 4
        %v1051 = vshll.u32 %v295, 16
        %v1053 = vrot.slane %v1051, 5
        %v1054 = vsel %vm394, %v1049, %v1053
        %v1056 = vshrl.u32 %v296, 16
        %v1058 = vrot.slane %v1056, 4
        %v1059 = vshll.u32 %v296, 16
        %v1061 = vrot.slane %v1059, 5
        %v1062 = vor.u32 %v1058, %v1061
        %v1063 = vrot.slane %v1062, 4
        %v1065 = vshll.u32 %v297, 16
        %v1067 = vrot.slane %v1065, 5
        %v1068 = vsel %vm394, %v1063, %v1067
        %v1069 = vshrl.u32 %v297, 16
        %v1071 = vrot.slane %v1069, 4
        %v1072 = vor.u32 %v1071, %v1067
        %v1073 = vrot.slane %v1072, 4
        %v1075 = vshll.u32 %v298, 16
        %v1077 = vrot.slane %v1075, 5
        %v1078 = vsel %vm394, %v1073, %v1077
        %v1079 = vshrl.u32 %v298, 16
        %v1081 = vrot.slane %v1079, 4
        %v1082 = vor.u32 %v1081, %v1077
        %v1083 = vrot.slane %v1082, 4
        %v1085 = vshll.u32 %v299, 16
        %v1087 = vrot.slane %v1085, 5
        %v1088 = vsel %vm394, %v1083, %v1087
        %v1089 = vshrl.u32 %v299, 16
        %v1091 = vrot.slane %v1089, 4
        %v1092 = vor.u32 %v1091, %v1087
        %v1093 = vrot.slane %v1092, 4
        %v1095 = vshll.u32 %v300, 16
        %v1097 = vrot.slane %v1095, 5
        %v1098 = vsel %vm394, %v1093, %v1097
        %v1100 = vshrl.u32 %v301, 16
        %v1102 = vrot.slane %v1100, 4
        %v1103 = vshll.u32 %v301, 16
        %v1105 = vrot.slane %v1103, 5
        %v1106 = vor.u32 %v1102, %v1105
        %v1107 = vrot.slane %v1106, 4
        %v1109 = vshll.u32 %v302, 16
        %v1111 = vrot.slane %v1109, 5
        %v1112 = vsel %vm394, %v1107, %v1111
        %v1113 = vshrl.u32 %v302, 16
        %v1115 = vrot.slane %v1113, 4
        %v1116 = vor.u32 %v1115, %v1111
        %v1117 = vrot.slane %v1116, 4
        %v1119 = vshll.u32 %v303, 16
        %v1121 = vrot.slane %v1119, 5
        %v1122 = vsel %vm394, %v1117, %v1121
        %v1123 = vshrl.u32 %v303, 16
        %v1125 = vrot.slane %v1123, 4
        %v1126 = vor.u32 %v1125, %v1121
        %v1127 = vrot.slane %v1126, 4
        %v1129 = vshll.u32 %v304, 16
        %v1131 = vrot.slane %v1129, 5
        %v1132 = vsel %vm394, %v1127, %v1131
        %v1133 = vshrl.u32 %v304, 16
        %v1135 = vrot.slane %v1133, 4
        %v1136 = vor.u32 %v1135, %v1131
        %v1137 = vrot.slane %v1136, 4
        %v1139 = vshll.u32 %v305, 16
        %v1141 = vrot.slane %v1139, 5
        %v1142 = vsel %vm394, %v1137, %v1141
        %v1144 = vshrl.u32 %v306, 16
        %v1146 = vrot.slane %v1144, 4
        %v1147 = vshll.u32 %v306, 16
        %v1149 = vrot.slane %v1147, 5
        %v1150 = vor.u32 %v1146, %v1149
        %v1151 = vrot.slane %v1150, 4
        %v1153 = vshll.u32 %v307, 16
        %v1155 = vrot.slane %v1153, 5
        %v1156 = vsel %vm394, %v1151, %v1155
        %v1157 = vshrl.u32 %v307, 16
        %v1159 = vrot.slane %v1157, 4
        %v1160 = vor.u32 %v1159, %v1155
        %v1161 = vrot.slane %v1160, 4
        %v1163 = vshll.u32 %v308, 16
        %v1165 = vrot.slane %v1163, 5
        %v1166 = vsel %vm394, %v1161, %v1165
        %v1167 = vshrl.u32 %v308, 16
        %v1169 = vrot.slane %v1167, 4
        %v1170 = vor.u32 %v1169, %v1165
        %v1171 = vrot.slane %v1170, 4
        %v1173 = vshll.u32 %v309, 16
        %v1175 = vrot.slane %v1173, 5
        %v1176 = vsel %vm394, %v1171, %v1175
        %v1177 = vshrl.u32 %v309, 16
        %v1179 = vrot.slane %v1177, 4
        %v1180 = vor.u32 %v1179, %v1175
        %v1181 = vrot.slane %v1180, 4
        %v1183 = vshll.u32 %v310, 16
        %v1185 = vrot.slane %v1183, 5
        %v1186 = vsel %vm394, %v1181, %v1185
        %v1188 = vshrl.u32 %v311, 16
        %v1190 = vrot.slane %v1188, 4
        %v1191 = vshll.u32 %v311, 16
        %v1193 = vrot.slane %v1191, 5
        %v1194 = vor.u32 %v1190, %v1193
        %v1195 = vrot.slane %v1194, 4
        %v1197 = vshll.u32 %v312, 16
        %v1199 = vrot.slane %v1197, 5
        %v1200 = vsel %vm394, %v1195, %v1199
        %v1201 = vshrl.u32 %v312, 16
        %v1203 = vrot.slane %v1201, 4
        %v1204 = vor.u32 %v1203, %v1199
        %v1205 = vrot.slane %v1204, 4
        %v1207 = vshll.u32 %v313, 16
        %v1209 = vrot.slane %v1207, 5
        %v1210 = vsel %vm394, %v1205, %v1209
        %v1211 = vshrl.u32 %v313, 16
        %v1213 = vrot.slane %v1211, 4
        %v1214 = vor.u32 %v1213, %v1209
        %v1215 = vrot.slane %v1214, 4
        %v1217 = vshll.u32 %v314, 16
        %v1219 = vrot.slane %v1217, 5
        %v1220 = vsel %vm394, %v1215, %v1219
        %v1221 = vshrl.u32 %v314, 16
        %v1223 = vrot.slane %v1221, 4
        %v1224 = vor.u32 %v1223, %v1219
        %v1225 = vrot.slane %v1224, 4
        %v1227 = vshll.u32 %v315, 16
        %v1229 = vrot.slane %v1227, 5
        %v1230 = vsel %vm394, %v1225, %v1229
        %v1232 = vshrl.u32 %v316, 16
        %v1234 = vrot.slane %v1232, 4
        %v1235 = vshll.u32 %v316, 16
        %v1237 = vrot.slane %v1235, 5
        %v1238 = vor.u32 %v1234, %v1237
        %v1239 = vrot.slane %v1238, 4
        %v1241 = vshll.u32 %v317, 16
        %v1243 = vrot.slane %v1241, 5
        %v1244 = vsel %vm394, %v1239, %v1243
        %v1245 = vshrl.u32 %v317, 16
        %v1247 = vrot.slane %v1245, 4
        %v1248 = vor.u32 %v1247, %v1243
        %v1249 = vrot.slane %v1248, 4
        %v1251 = vshll.u32 %v318, 16
        %v1253 = vrot.slane %v1251, 5
        %v1254 = vsel %vm394, %v1249, %v1253
        %v1255 = vshrl.u32 %v318, 16
        %v1257 = vrot.slane %v1255, 4
        %v1258 = vor.u32 %v1257, %v1253
        %v1259 = vrot.slane %v1258, 4
        %v1261 = vshll.u32 %v319, 16
        %v1263 = vrot.slane %v1261, 5
        %v1264 = vsel %vm394, %v1259, %v1263
        %v1265 = vshrl.u32 %v319, 16
        %v1267 = vrot.slane %v1265, 4
        %v1268 = vor.u32 %v1267, %v1263
        %v1269 = vrot.slane %v1268, 4
        %v1271 = vshll.u32 %v320, 16
        %v1273 = vrot.slane %v1271, 5
        %v1274 = vsel %vm394, %v1269, %v1273
        %v1276 = vshrl.u32 %v321, 16
        %v1278 = vrot.slane %v1276, 4
        %v1279 = vshll.u32 %v321, 16
        %v1281 = vrot.slane %v1279, 5
        %v1282 = vor.u32 %v1278, %v1281
        %v1283 = vrot.slane %v1282, 4
        %v1285 = vshll.u32 %v322, 16
        %v1287 = vrot.slane %v1285, 5
        %v1288 = vsel %vm394, %v1283, %v1287
        %v1289 = vshrl.u32 %v322, 16
        %v1291 = vrot.slane %v1289, 4
        %v1292 = vor.u32 %v1291, %v1287
        %v1293 = vrot.slane %v1292, 4
        %v1295 = vshll.u32 %v323, 16
        %v1297 = vrot.slane %v1295, 5
        %v1298 = vsel %vm394, %v1293, %v1297
        %v1299 = vshrl.u32 %v323, 16
        %v1301 = vrot.slane %v1299, 4
        %v1302 = vor.u32 %v1301, %v1297
        %v1303 = vrot.slane %v1302, 4
        %v1305 = vshll.u32 %v324, 16
        %v1307 = vrot.slane %v1305, 5
        %v1308 = vsel %vm394, %v1303, %v1307
        %v1309 = vshrl.u32 %v324, 16
        %v1311 = vrot.slane %v1309, 4
        %v1312 = vor.u32 %v1311, %v1307
        %v1313 = vrot.slane %v1312, 4
        %v1315 = vshll.u32 %v325, 16
        %v1317 = vrot.slane %v1315, 5
        %v1318 = vsel %vm394, %v1313, %v1317
        %v1320 = vshrl.u32 %v326, 16
        %v1322 = vrot.slane %v1320, 4
        %v1323 = vshll.u32 %v326, 16
        %v1325 = vrot.slane %v1323, 5
        %v1326 = vor.u32 %v1322, %v1325
        %v1327 = vrot.slane %v1326, 4
        %v1329 = vshll.u32 %v327, 16
        %v1331 = vrot.slane %v1329, 5
        %v1332 = vsel %vm394, %v1327, %v1331
        %v1333 = vshrl.u32 %v327, 16
        %v1335 = vrot.slane %v1333, 4
        %v1336 = vor.u32 %v1335, %v1331
        %v1337 = vrot.slane %v1336, 4
        %v1339 = vshll.u32 %v328, 16
        %v1341 = vrot.slane %v1339, 5
        %v1342 = vsel %vm394, %v1337, %v1341
        %v1343 = vshrl.u32 %v328, 16
        %v1345 = vrot.slane %v1343, 4
        %v1346 = vor.u32 %v1345, %v1341
        %v1347 = vrot.slane %v1346, 4
        %v1349 = vshll.u32 %v329, 16
        %v1351 = vrot.slane %v1349, 5
        %v1352 = vsel %vm394, %v1347, %v1351
        %v1353 = vshrl.u32 %v329, 16
        %v1355 = vrot.slane %v1353, 4
        %v1356 = vor.u32 %v1355, %v1351
        %v1357 = vrot.slane %v1356, 4
        %v1359 = vshll.u32 %v330, 16
        %v1361 = vrot.slane %v1359, 5
        %v1362 = vsel %vm394, %v1357, %v1361
        %v1364 = vshrl.u32 %v331, 16
        %v1366 = vrot.slane %v1364, 4
        %v1367 = vshll.u32 %v331, 16
        %v1369 = vrot.slane %v1367, 5
        %v1370 = vor.u32 %v1366, %v1369
        %v1371 = vrot.slane %v1370, 4
        %v1373 = vshll.u32 %v332, 16
        %v1375 = vrot.slane %v1373, 5
        %v1376 = vsel %vm394, %v1371, %v1375
        %v1377 = vshrl.u32 %v332, 16
        %v1379 = vrot.slane %v1377, 4
        %v1380 = vor.u32 %v1379, %v1375
        %v1381 = vrot.slane %v1380, 4
        %v1383 = vshll.u32 %v333, 16
        %v1385 = vrot.slane %v1383, 5
        %v1386 = vsel %vm394, %v1381, %v1385
        %v1387 = vshrl.u32 %v333, 16
        %v1389 = vrot.slane %v1387, 4
        %v1390 = vor.u32 %v1389, %v1385
        %v1391 = vrot.slane %v1390, 4
        %v1393 = vshll.u32 %v334, 16
        %v1395 = vrot.slane %v1393, 5
        %v1396 = vsel %vm394, %v1391, %v1395
        %v1397 = vshrl.u32 %v334, 16
        %v1399 = vrot.slane %v1397, 4
        %v1400 = vor.u32 %v1399, %v1395
        %v1401 = vrot.slane %v1400, 4
        %v1403 = vshll.u32 %v335, 16
        %v1405 = vrot.slane %v1403, 5
        %v1406 = vsel %vm394, %v1401, %v1405
        %v1408 = vshrl.u32 %v336, 16
        %v1410 = vrot.slane %v1408, 4
        %v1411 = vshll.u32 %v336, 16
        %v1413 = vrot.slane %v1411, 5
        %v1414 = vor.u32 %v1410, %v1413
        %v1415 = vrot.slane %v1414, 4
        %v1417 = vshll.u32 %v337, 16
        %v1419 = vrot.slane %v1417, 5
        %v1420 = vsel %vm394, %v1415, %v1419
        %v1421 = vshrl.u32 %v337, 16
        %v1423 = vrot.slane %v1421, 4
        %v1424 = vor.u32 %v1423, %v1419
        %v1425 = vrot.slane %v1424, 4
        %v1427 = vshll.u32 %v338, 16
        %v1429 = vrot.slane %v1427, 5
        %v1430 = vsel %vm394, %v1425, %v1429
        %v1431 = vshrl.u32 %v338, 16
        %v1433 = vrot.slane %v1431, 4
        %v1434 = vor.u32 %v1433, %v1429
        %v1435 = vrot.slane %v1434, 4
        %v1437 = vshll.u32 %v339, 16
        %v1439 = vrot.slane %v1437, 5
        %v1440 = vsel %vm394, %v1435, %v1439
        %v1441 = vshrl.u32 %v339, 16
        %v1443 = vrot.slane %v1441, 4
        %v1444 = vor.u32 %v1443, %v1439
        %v1445 = vrot.slane %v1444, 4
        %v1447 = vshll.u32 %v340, 16
        %v1449 = vrot.slane %v1447, 5
        %v1450 = vsel %vm394, %v1445, %v1449
        %v1452 = vshrl.u32 %v341, 16
        %v1454 = vrot.slane %v1452, 4
        %v1455 = vshll.u32 %v341, 16
        %v1457 = vrot.slane %v1455, 5
        %v1458 = vor.u32 %v1454, %v1457
        %v1459 = vrot.slane %v1458, 4
        %v1461 = vshll.u32 %v342, 16
        %v1463 = vrot.slane %v1461, 5
        %v1464 = vsel %vm394, %v1459, %v1463
        %v1465 = vshrl.u32 %v342, 16
        %v1467 = vrot.slane %v1465, 4
        %v1468 = vor.u32 %v1467, %v1463
        %v1469 = vrot.slane %v1468, 4
        %v1471 = vshll.u32 %v343, 16
        %v1473 = vrot.slane %v1471, 5
        %v1474 = vsel %vm394, %v1469, %v1473
        %v1475 = vshrl.u32 %v343, 16
        %v1477 = vrot.slane %v1475, 4
        %v1478 = vor.u32 %v1477, %v1473
        %v1479 = vrot.slane %v1478, 4
        %v1481 = vshll.u32 %v344, 16
        %v1483 = vrot.slane %v1481, 5
        %v1484 = vsel %vm394, %v1479, %v1483
        %v1485 = vshrl.u32 %v344, 16
        %v1487 = vrot.slane %v1485, 4
        %v1488 = vor.u32 %v1487, %v1483
        %v1489 = vrot.slane %v1488, 4
        %v1491 = vshll.u32 %v345, 16
        %v1493 = vrot.slane %v1491, 5
        %v1494 = vsel %vm394, %v1489, %v1493
        %v1496 = vshrl.u32 %v346, 16
        %v1498 = vrot.slane %v1496, 4
        %v1499 = vshll.u32 %v346, 16
        %v1501 = vrot.slane %v1499, 5
        %v1502 = vor.u32 %v1498, %v1501
        %v1503 = vrot.slane %v1502, 4
        %v1505 = vshll.u32 %v347, 16
        %v1507 = vrot.slane %v1505, 5
        %v1508 = vsel %vm394, %v1503, %v1507
        %v1509 = vshrl.u32 %v347, 16
        %v1511 = vrot.slane %v1509, 4
        %v1512 = vor.u32 %v1511, %v1507
        %v1513 = vrot.slane %v1512, 4
        %v1515 = vshll.u32 %v348, 16
        %v1517 = vrot.slane %v1515, 5
        %v1518 = vsel %vm394, %v1513, %v1517
        %v1519 = vshrl.u32 %v348, 16
        %v1521 = vrot.slane %v1519, 4
        %v1522 = vor.u32 %v1521, %v1517
        %v1523 = vrot.slane %v1522, 4
        %v1525 = vshll.u32 %v349, 16
        %v1527 = vrot.slane %v1525, 5
        %v1528 = vsel %vm394, %v1523, %v1527
        %v1529 = vshrl.u32 %v349, 16
        %v1531 = vrot.slane %v1529, 4
        %v1532 = vor.u32 %v1531, %v1527
        %v1533 = vrot.slane %v1532, 4
        %v1535 = vshll.u32 %v350, 16
        %v1537 = vrot.slane %v1535, 5
        %v1538 = vsel %vm394, %v1533, %v1537
        %v1540 = vshrl.u32 %v351, 16
        %v1542 = vrot.slane %v1540, 4
        %v1543 = vshll.u32 %v351, 16
        %v1545 = vrot.slane %v1543, 5
        %v1546 = vor.u32 %v1542, %v1545
        %v1547 = vrot.slane %v1546, 4
        %v1549 = vshll.u32 %v352, 16
        %v1551 = vrot.slane %v1549, 5
        %v1552 = vsel %vm394, %v1547, %v1551
        %v1553 = vshrl.u32 %v352, 16
        %v1555 = vrot.slane %v1553, 4
        %v1556 = vor.u32 %v1555, %v1551
        %v1557 = vrot.slane %v1556, 4
        %v1559 = vshll.u32 %v353, 16
        %v1561 = vrot.slane %v1559, 5
        %v1562 = vsel %vm394, %v1557, %v1561
        %v1563 = vshrl.u32 %v353, 16
        %v1565 = vrot.slane %v1563, 4
        %v1566 = vor.u32 %v1565, %v1561
        %v1567 = vrot.slane %v1566, 4
        %v1569 = vshll.u32 %v354, 16
        %v1571 = vrot.slane %v1569, 5
        %v1572 = vsel %vm394, %v1567, %v1571
        %v1573 = vshrl.u32 %v354, 16
        %v1575 = vrot.slane %v1573, 4
        %v1576 = vor.u32 %v1575, %v1571
        %v1577 = vrot.slane %v1576, 4
        %v1579 = vshll.u32 %v355, 16
        %v1581 = vrot.slane %v1579, 5
        %v1582 = vsel %vm394, %v1577, %v1581
        %v1584 = vshrl.u32 %v356, 16
        %v1586 = vrot.slane %v1584, 4
        %v1587 = vshll.u32 %v356, 16
        %v1589 = vrot.slane %v1587, 5
        %v1590 = vor.u32 %v1586, %v1589
        %v1591 = vrot.slane %v1590, 4
        %v1593 = vshll.u32 %v357, 16
        %v1595 = vrot.slane %v1593, 5
        %v1596 = vsel %vm394, %v1591, %v1595
        %v1597 = vshrl.u32 %v357, 16
        %v1599 = vrot.slane %v1597, 4
        %v1600 = vor.u32 %v1599, %v1595
        %v1601 = vrot.slane %v1600, 4
        %v1603 = vshll.u32 %v358, 16
        %v1605 = vrot.slane %v1603, 5
        %v1606 = vsel %vm394, %v1601, %v1605
        %v1607 = vshrl.u32 %v358, 16
        %v1609 = vrot.slane %v1607, 4
        %v1610 = vor.u32 %v1609, %v1605
        %v1611 = vrot.slane %v1610, 4
        %v1613 = vshll.u32 %v359, 16
        %v1615 = vrot.slane %v1613, 5
        %v1616 = vsel %vm394, %v1611, %v1615
        %v1617 = vshrl.u32 %v359, 16
        %v1619 = vrot.slane %v1617, 4
        %v1620 = vor.u32 %v1619, %v1615
        %v1621 = vrot.slane %v1620, 4
        %v1623 = vshll.u32 %v360, 16
        %v1625 = vrot.slane %v1623, 5
        %v1626 = vsel %vm394, %v1621, %v1625
        %v1628 = vshrl.u32 %v361, 16
        %v1630 = vrot.slane %v1628, 4
        %v1631 = vshll.u32 %v361, 16
        %v1633 = vrot.slane %v1631, 5
        %v1634 = vor.u32 %v1630, %v1633
        %v1635 = vrot.slane %v1634, 4
        %v1637 = vshll.u32 %v362, 16
        %v1639 = vrot.slane %v1637, 5
        %v1640 = vsel %vm394, %v1635, %v1639
        %v1641 = vshrl.u32 %v362, 16
        %v1643 = vrot.slane %v1641, 4
        %v1644 = vor.u32 %v1643, %v1639
        %v1645 = vrot.slane %v1644, 4
        %v1647 = vshll.u32 %v363, 16
        %v1649 = vrot.slane %v1647, 5
        %v1650 = vsel %vm394, %v1645, %v1649
        %v1651 = vshrl.u32 %v363, 16
        %v1653 = vrot.slane %v1651, 4
        %v1654 = vor.u32 %v1653, %v1649
        %v1655 = vrot.slane %v1654, 4
        %v1657 = vshll.u32 %v364, 16
        %v1659 = vrot.slane %v1657, 5
        %v1660 = vsel %vm394, %v1655, %v1659
        %v1661 = vshrl.u32 %v364, 16
        %v1663 = vrot.slane %v1661, 4
        %v1664 = vor.u32 %v1663, %v1659
        %v1665 = vrot.slane %v1664, 4
        %v1667 = vshll.u32 %v365, 16
        %v1669 = vrot.slane %v1667, 5
        %v1670 = vsel %vm394, %v1665, %v1669
        %v1672 = vshrl.u32 %v366, 16
        %v1674 = vrot.slane %v1672, 4
        %v1675 = vshll.u32 %v366, 16
        %v1677 = vrot.slane %v1675, 5
        %v1678 = vor.u32 %v1674, %v1677
        %v1679 = vrot.slane %v1678, 4
        %v1681 = vshll.u32 %v367, 16
        %v1683 = vrot.slane %v1681, 5
        %v1684 = vsel %vm394, %v1679, %v1683
        %v1685 = vshrl.u32 %v367, 16
        %v1687 = vrot.slane %v1685, 4
        %v1688 = vor.u32 %v1687, %v1683
        %v1689 = vrot.slane %v1688, 4
        %v1691 = vshll.u32 %v368, 16
        %v1693 = vrot.slane %v1691, 5
        %v1694 = vsel %vm394, %v1689, %v1693
        %v1695 = vshrl.u32 %v368, 16
        %v1697 = vrot.slane %v1695, 4
        %v1698 = vor.u32 %v1697, %v1693
        %v1699 = vrot.slane %v1698, 4
        %v1701 = vshll.u32 %v369, 16
        %v1703 = vrot.slane %v1701, 5
        %v1704 = vsel %vm394, %v1699, %v1703
        %v1705 = vshrl.u32 %v369, 16
        %v1707 = vrot.slane %v1705, 4
        %v1708 = vor.u32 %v1707, %v1703
        %v1709 = vrot.slane %v1708, 4
        %v1711 = vshll.u32 %v370, 16
        %v1713 = vrot.slane %v1711, 5
        %v1714 = vsel %vm394, %v1709, %v1713
        %v1716 = vshrl.u32 %v371, 16
        %v1718 = vrot.slane %v1716, 4
        %v1719 = vshll.u32 %v371, 16
        %v1721 = vrot.slane %v1719, 5
        %v1722 = vor.u32 %v1718, %v1721
        %v1723 = vrot.slane %v1722, 4
        %v1725 = vshll.u32 %v372, 16
        %v1727 = vrot.slane %v1725, 5
        %v1728 = vsel %vm394, %v1723, %v1727
        %v1729 = vshrl.u32 %v372, 16
        %v1731 = vrot.slane %v1729, 4
        %v1732 = vor.u32 %v1731, %v1727
        %v1733 = vrot.slane %v1732, 4
        %v1735 = vshll.u32 %v373, 16
        %v1737 = vrot.slane %v1735, 5
        %v1738 = vsel %vm394, %v1733, %v1737
        %v1739 = vshrl.u32 %v373, 16
        %v1741 = vrot.slane %v1739, 4
        %v1742 = vor.u32 %v1741, %v1737
        %v1743 = vrot.slane %v1742, 4
        %v1745 = vshll.u32 %v374, 16
        %v1747 = vrot.slane %v1745, 5
        %v1748 = vsel %vm394, %v1743, %v1747
        %v1749 = vshrl.u32 %v374, 16
        %v1751 = vrot.slane %v1749, 4
        %v1752 = vor.u32 %v1751, %v1747
        %v1753 = vrot.slane %v1752, 4
        %v1755 = vshll.u32 %v375, 16
        %v1757 = vrot.slane %v1755, 5
        %v1758 = vsel %vm394, %v1753, %v1757
        %v1760 = vshrl.u32 %v376, 16
        %v1762 = vrot.slane %v1760, 4
        %v1763 = vshll.u32 %v376, 16
        %v1765 = vrot.slane %v1763, 5
        %v1766 = vor.u32 %v1762, %v1765
        %v1767 = vrot.slane %v1766, 4
        %v1769 = vshll.u32 %v377, 16
        %v1771 = vrot.slane %v1769, 5
        %v1772 = vsel %vm394, %v1767, %v1771
        %v1773 = vshrl.u32 %v377, 16
        %v1775 = vrot.slane %v1773, 4
        %v1776 = vor.u32 %v1775, %v1771
        %v1777 = vrot.slane %v1776, 4
        %v1779 = vshll.u32 %v378, 16
        %v1781 = vrot.slane %v1779, 5
        %v1782 = vsel %vm394, %v1777, %v1781
        %v1783 = vshrl.u32 %v378, 16
        %v1785 = vrot.slane %v1783, 4
        %v1786 = vor.u32 %v1785, %v1781
        %v1787 = vrot.slane %v1786, 4
        %v1789 = vshll.u32 %v379, 16
        %v1791 = vrot.slane %v1789, 5
        %v1792 = vsel %vm394, %v1787, %v1791
        %v1793 = vshrl.u32 %v379, 16
        %v1795 = vrot.slane %v1793, 4
        %v1796 = vor.u32 %v1795, %v1791
        %v1797 = vrot.slane %v1796, 4
        %v1799 = vshll.u32 %v380, 16
        %v1801 = vrot.slane %v1799, 5
        %v1802 = vsel %vm394, %v1797, %v1801
        %s1803 = scalar_lea.vmem %s215, 2
        %v1804 = vld [vmem:[%s1803] sm:$0x3]
        %v1805 = vunpack.c.l.b16 %v408
        %v1806 = vunpack.c.l.b16 %v418
        %v1807 = vunpack.c.l.b16 %v428
        %v1808 = vunpack.c.l.b16 %v438
        %v1809 = vunpack.c.l.b16 %v452
        %v1810 = vunpack.c.l.b16 %v462
        %v1811 = vunpack.c.l.b16 %v472
        %v1812 = vunpack.c.l.b16 %v482
        %v1813 = vunpack.c.l.b16 %v496
        %v1814 = vunpack.c.l.b16 %v506
        %v1815 = vunpack.c.l.b16 %v516
        %v1816 = vunpack.c.l.b16 %v526
        %v1817 = vunpack.c.l.b16 %v540
        %v1818 = vunpack.c.l.b16 %v550
        %v1819 = vunpack.c.l.b16 %v560
        %v1820 = vunpack.c.l.b16 %v570
        %v1821 = vunpack.c.l.b16 %v584
        %v1822 = vunpack.c.l.b16 %v594
        %v1823 = vunpack.c.l.b16 %v604
        %v1824 = vunpack.c.l.b16 %v614
        %v1825 = vunpack.c.l.b16 %v628
        %v1826 = vunpack.c.l.b16 %v638
        %v1827 = vunpack.c.l.b16 %v648
        %v1828 = vunpack.c.l.b16 %v658
        %v1829 = vunpack.c.l.b16 %v672
        %v1830 = vunpack.c.l.b16 %v682
        %v1831 = vunpack.c.l.b16 %v692
        %v1832 = vunpack.c.l.b16 %v702
        %v1833 = vunpack.c.l.b16 %v716
        %v1834 = vunpack.c.l.b16 %v726
        %v1835 = vunpack.c.l.b16 %v736
        %v1836 = vunpack.c.l.b16 %v746
        %v1837 = vunpack.c.l.b16 %v760
        %v1838 = vunpack.c.l.b16 %v770
        %v1839 = vunpack.c.l.b16 %v780
        %v1840 = vunpack.c.l.b16 %v790
        %v1841 = vunpack.c.l.b16 %v804
        %v1842 = vunpack.c.l.b16 %v814
        %v1843 = vunpack.c.l.b16 %v824
        %v1844 = vunpack.c.l.b16 %v834
        %v1845 = vunpack.c.l.b16 %v848
        %v1846 = vunpack.c.l.b16 %v858
        %v1847 = vunpack.c.l.b16 %v868
        %v1848 = vunpack.c.l.b16 %v878
        %v1849 = vunpack.c.l.b16 %v892
        %v1850 = vunpack.c.l.b16 %v902
        %v1851 = vunpack.c.l.b16 %v912
        %v1852 = vunpack.c.l.b16 %v922
        %v1853 = vunpack.c.l.b16 %v936
        %v1854 = vunpack.c.l.b16 %v946
        %v1855 = vunpack.c.l.b16 %v956
        %v1856 = vunpack.c.l.b16 %v966
        %v1857 = vunpack.c.l.b16 %v980
        %v1858 = vunpack.c.l.b16 %v990
        %v1859 = vunpack.c.l.b16 %v1000
        %v1860 = vunpack.c.l.b16 %v1010
        %v1861 = vunpack.c.l.b16 %v1024
        %v1862 = vunpack.c.l.b16 %v1034
        %v1863 = vunpack.c.l.b16 %v1044
        %v1864 = vunpack.c.l.b16 %v1054
        %v1865 = vunpack.c.l.b16 %v1068
        %v1866 = vunpack.c.l.b16 %v1078
        %v1867 = vunpack.c.l.b16 %v1088
        %v1868 = vunpack.c.l.b16 %v1098
        %v1869 = vunpack.c.l.b16 %v1112
        %v1870 = vunpack.c.l.b16 %v1122
        %v1871 = vunpack.c.l.b16 %v1132
        %v1872 = vunpack.c.l.b16 %v1142
        %v1873 = vunpack.c.l.b16 %v1156
        %v1874 = vunpack.c.l.b16 %v1166
        %v1875 = vunpack.c.l.b16 %v1176
        %v1876 = vunpack.c.l.b16 %v1186
        %v1877 = vunpack.c.l.b16 %v1200
        %v1878 = vunpack.c.l.b16 %v1210
        %v1879 = vunpack.c.l.b16 %v1220
        %v1880 = vunpack.c.l.b16 %v1230
        %v1881 = vunpack.c.l.b16 %v1244
        %v1882 = vunpack.c.l.b16 %v1254
        %v1883 = vunpack.c.l.b16 %v1264
        %v1884 = vunpack.c.l.b16 %v1274
        %v1885 = vunpack.c.l.b16 %v1288
        %v1886 = vunpack.c.l.b16 %v1298
        %v1887 = vunpack.c.l.b16 %v1308
        %v1888 = vunpack.c.l.b16 %v1318
        %v1889 = vunpack.c.l.b16 %v1332
        %v1890 = vunpack.c.l.b16 %v1342
        %v1891 = vunpack.c.l.b16 %v1352
        %v1892 = vunpack.c.l.b16 %v1362
        %v1893 = vunpack.c.l.b16 %v1376
        %v1894 = vunpack.c.l.b16 %v1386
        %v1895 = vunpack.c.l.b16 %v1396
        %v1896 = vunpack.c.l.b16 %v1406
        %v1897 = vunpack.c.l.b16 %v1420
        %v1898 = vunpack.c.l.b16 %v1430
        %v1899 = vunpack.c.l.b16 %v1440
        %v1900 = vunpack.c.l.b16 %v1450
        %v1901 = vunpack.c.l.b16 %v1464
        %v1902 = vunpack.c.l.b16 %v1474
        %v1903 = vunpack.c.l.b16 %v1484
        %v1904 = vunpack.c.l.b16 %v1494
        %v1905 = vunpack.c.l.b16 %v1508
        %v1906 = vunpack.c.l.b16 %v1518
        %v1907 = vunpack.c.l.b16 %v1528
        %v1908 = vunpack.c.l.b16 %v1538
        %v1909 = vunpack.c.l.b16 %v1552
        %v1910 = vunpack.c.l.b16 %v1562
        %v1911 = vunpack.c.l.b16 %v1572
        %v1912 = vunpack.c.l.b16 %v1582
        %v1913 = vunpack.c.l.b16 %v1596
        %v1914 = vunpack.c.l.b16 %v1606
        %v1915 = vunpack.c.l.b16 %v1616
        %v1916 = vunpack.c.l.b16 %v1626
        %v1917 = vunpack.c.l.b16 %v1640
        %v1918 = vunpack.c.l.b16 %v1650
        %v1919 = vunpack.c.l.b16 %v1660
        %v1920 = vunpack.c.l.b16 %v1670
        %v1921 = vunpack.c.l.b16 %v1684
        %v1922 = vunpack.c.l.b16 %v1694
        %v1923 = vunpack.c.l.b16 %v1704
        %v1924 = vunpack.c.l.b16 %v1714
        %v1925 = vunpack.c.l.b16 %v1728
        %v1926 = vunpack.c.l.b16 %v1738
        %v1927 = vunpack.c.l.b16 %v1748
        %v1928 = vunpack.c.l.b16 %v1758
        %v1929 = vunpack.c.l.b16 %v1772
        %v1930 = vunpack.c.l.b16 %v1782
        %v1931 = vunpack.c.l.b16 %v1792
        %v1932 = vunpack.c.l.b16 %v1802
        %v1933 = vpack.c.b16 %v1806, %v1805
        %v1934 = vpack.c.b16 %v1808, %v1807
        %v1935 = vpack.c.b16 %v1810, %v1809
        %v1936 = vpack.c.b16 %v1812, %v1811
        %v1937 = vpack.c.b16 %v1814, %v1813
        %v1938 = vpack.c.b16 %v1816, %v1815
        %v1939 = vpack.c.b16 %v1818, %v1817
        %v1940 = vpack.c.b16 %v1820, %v1819
        %v1941 = vpack.c.b16 %v1822, %v1821
        %v1942 = vpack.c.b16 %v1824, %v1823
        %v1943 = vpack.c.b16 %v1826, %v1825
        %v1944 = vpack.c.b16 %v1828, %v1827
        %v1945 = vpack.c.b16 %v1830, %v1829
        %v1946 = vpack.c.b16 %v1832, %v1831
        %v1947 = vpack.c.b16 %v1834, %v1833
        %v1948 = vpack.c.b16 %v1836, %v1835
        %v1949 = vpack.c.b16 %v1838, %v1837
        %v1950 = vpack.c.b16 %v1840, %v1839
        %v1951 = vpack.c.b16 %v1842, %v1841
        %v1952 = vpack.c.b16 %v1844, %v1843
        %v1953 = vpack.c.b16 %v1846, %v1845
        %v1954 = vpack.c.b16 %v1848, %v1847
        %v1955 = vpack.c.b16 %v1850, %v1849
        %v1956 = vpack.c.b16 %v1852, %v1851
        %v1957 = vpack.c.b16 %v1854, %v1853
        %v1958 = vpack.c.b16 %v1856, %v1855
        %v1959 = vpack.c.b16 %v1858, %v1857
        %v1960 = vpack.c.b16 %v1860, %v1859
        %v1961 = vpack.c.b16 %v1862, %v1861
        %v1962 = vpack.c.b16 %v1864, %v1863
        %v1963 = vpack.c.b16 %v1866, %v1865
        %v1964 = vpack.c.b16 %v1868, %v1867
        %v1965 = vpack.c.b16 %v1870, %v1869
        %v1966 = vpack.c.b16 %v1872, %v1871
        %v1967 = vpack.c.b16 %v1874, %v1873
        %v1968 = vpack.c.b16 %v1876, %v1875
        %v1969 = vpack.c.b16 %v1878, %v1877
        %v1970 = vpack.c.b16 %v1880, %v1879
        %v1971 = vpack.c.b16 %v1882, %v1881
        %v1972 = vpack.c.b16 %v1884, %v1883
        %v1973 = vpack.c.b16 %v1886, %v1885
        %v1974 = vpack.c.b16 %v1888, %v1887
        %v1975 = vpack.c.b16 %v1890, %v1889
        %v1976 = vpack.c.b16 %v1892, %v1891
        %v1977 = vpack.c.b16 %v1894, %v1893
        %v1978 = vpack.c.b16 %v1896, %v1895
        %v1979 = vpack.c.b16 %v1898, %v1897
        %v1980 = vpack.c.b16 %v1900, %v1899
        %v1981 = vpack.c.b16 %v1902, %v1901
        %v1982 = vpack.c.b16 %v1904, %v1903
        %v1983 = vpack.c.b16 %v1906, %v1905
        %v1984 = vpack.c.b16 %v1908, %v1907
        %v1985 = vpack.c.b16 %v1910, %v1909
        %v1986 = vpack.c.b16 %v1912, %v1911
        %v1987 = vpack.c.b16 %v1914, %v1913
        %v1988 = vpack.c.b16 %v1916, %v1915
        %v1989 = vpack.c.b16 %v1918, %v1917
        %v1990 = vpack.c.b16 %v1920, %v1919
        %v1991 = vpack.c.b16 %v1922, %v1921
        %v1992 = vpack.c.b16 %v1924, %v1923
        %v1993 = vpack.c.b16 %v1926, %v1925
        %v1994 = vpack.c.b16 %v1928, %v1927
        %v1995 = vpack.c.b16 %v1930, %v1929
        %v1996 = vpack.c.b16 %v1932, %v1931
        %vm1997 = vcmask 23552
        %v1999 = vsel %vm1997, %v1933, 0
        %v2002 = vsel %vm1997, %v1934, 0
        %v2005 = vsel %vm1997, %v1935, 0
        %v2008 = vsel %vm1997, %v1936, 0
        %v2011 = vsel %vm1997, %v1937, 0
        %v2014 = vsel %vm1997, %v1938, 0
        %v2017 = vsel %vm1997, %v1939, 0
        %v2020 = vsel %vm1997, %v1940, 0
        %v2023 = vsel %vm1997, %v1941, 0
        %v2026 = vsel %vm1997, %v1942, 0
        %v2029 = vsel %vm1997, %v1943, 0
        %v2032 = vsel %vm1997, %v1944, 0
        %v2035 = vsel %vm1997, %v1945, 0
        %v2038 = vsel %vm1997, %v1946, 0
        %v2041 = vsel %vm1997, %v1947, 0
        %v2044 = vsel %vm1997, %v1948, 0
        %v2047 = vsel %vm1997, %v1949, 0
        %v2050 = vsel %vm1997, %v1950, 0
        %v2053 = vsel %vm1997, %v1951, 0
        %v2056 = vsel %vm1997, %v1952, 0
        %v2059 = vsel %vm1997, %v1953, 0
        %v2062 = vsel %vm1997, %v1954, 0
        %v2065 = vsel %vm1997, %v1955, 0
        %v2068 = vsel %vm1997, %v1956, 0
        %v2071 = vsel %vm1997, %v1957, 0
        %v2074 = vsel %vm1997, %v1958, 0
        %v2077 = vsel %vm1997, %v1959, 0
        %v2080 = vsel %vm1997, %v1960, 0
        %v2083 = vsel %vm1997, %v1961, 0
        %v2086 = vsel %vm1997, %v1962, 0
        %v2089 = vsel %vm1997, %v1963, 0
        %v2092 = vsel %vm1997, %v1964, 0
        %v2095 = vsel %vm1997, %v1965, 0
        %v2098 = vsel %vm1997, %v1966, 0
        %v2101 = vsel %vm1997, %v1967, 0
        %v2104 = vsel %vm1997, %v1968, 0
        %v2107 = vsel %vm1997, %v1969, 0
        %v2110 = vsel %vm1997, %v1970, 0
        %v2113 = vsel %vm1997, %v1971, 0
        %v2116 = vsel %vm1997, %v1972, 0
        %v2119 = vsel %vm1997, %v1973, 0
        %v2122 = vsel %vm1997, %v1974, 0
        %v2125 = vsel %vm1997, %v1975, 0
        %v2128 = vsel %vm1997, %v1976, 0
        %v2131 = vsel %vm1997, %v1977, 0
        %v2134 = vsel %vm1997, %v1978, 0
        %v2137 = vsel %vm1997, %v1979, 0
        %v2140 = vsel %vm1997, %v1980, 0
        %v2143 = vsel %vm1997, %v1981, 0
        %v2146 = vsel %vm1997, %v1982, 0
        %v2149 = vsel %vm1997, %v1983, 0
        %v2152 = vsel %vm1997, %v1984, 0
        %v2155 = vsel %vm1997, %v1985, 0
        %v2158 = vsel %vm1997, %v1986, 0
        %v2161 = vsel %vm1997, %v1987, 0
        %v2164 = vsel %vm1997, %v1988, 0
        %v2167 = vsel %vm1997, %v1989, 0
        %v2170 = vsel %vm1997, %v1990, 0
        %v2173 = vsel %vm1997, %v1991, 0
        %v2176 = vsel %vm1997, %v1992, 0
        %v2179 = vsel %vm1997, %v1993, 0
        %v2182 = vsel %vm1997, %v1994, 0
        %v2185 = vsel %vm1997, %v1995, 0
        %v2188 = vsel %vm1997, %v1996, 0
        %vm2190 = vcmask 1040384
        %vm2191 = vcmask 1041408
        %v2192 = vsel %vm2190, 4294967295, 65535
        %v2193 = vsel %vm2191, %v2192, 0
        %v2195 = vand.u32 %v1804, %v2193
        %2197 = vmatpush.bf16.msra.mxu0 0
        %2198 = vmatpush.bf16.msra.mxu0 0
        %2199 = vmatpush.bf16.msra.mxu0 0
        %2200 = vmatpush.bf16.msra.mxu0 0
        %2201 = vmatpush.bf16.msra.mxu0 0
        %2202 = vmatpush.bf16.msra.mxu0 0
        %2203 = vmatpush.bf16.msra.mxu0 0
        %2204 = vmatpush.bf16.msra.mxu0 %v2195
        %2205 = vmatmul.bf16.gmra.mxu0 %v1999
        %v2206 = vpop.f32.mrf.mxu0
        %v2207 = vadd.f32 0.0, %v2206
        %v2208 = vpop.f32.mrf.mxu0
        %v2209 = vadd.f32 0.0, %v2208
        %2210 = vmatmul.bf16.gmra.mxu0 %v2002
        %v2211 = vpop.f32.mrf.mxu0
        %v2212 = vadd.f32 0.0, %v2211
        %v2213 = vpop.f32.mrf.mxu0
        %v2214 = vadd.f32 0.0, %v2213
        %2215 = vmatmul.bf16.gmra.mxu0 %v2005
        %v2216 = vpop.f32.mrf.mxu0
        %v2217 = vadd.f32 0.0, %v2216
        %v2218 = vpop.f32.mrf.mxu0
        %v2219 = vadd.f32 0.0, %v2218
        %2220 = vmatmul.bf16.gmra.mxu0 %v2008
        %v2221 = vpop.f32.mrf.mxu0
        %v2222 = vadd.f32 0.0, %v2221
        %v2223 = vpop.f32.mrf.mxu0
        %v2224 = vadd.f32 0.0, %v2223
        %2225 = vmatmul.bf16.gmra.mxu0 %v2011
        %v2226 = vpop.f32.mrf.mxu0
        %v2227 = vadd.f32 0.0, %v2226
        %v2228 = vpop.f32.mrf.mxu0
        %v2229 = vadd.f32 0.0, %v2228
        %2230 = vmatmul.bf16.gmra.mxu0 %v2014
        %v2231 = vpop.f32.mrf.mxu0
        %v2232 = vadd.f32 0.0, %v2231
        %v2233 = vpop.f32.mrf.mxu0
        %v2234 = vadd.f32 0.0, %v2233
        %2235 = vmatmul.bf16.gmra.mxu0 %v2017
        %v2236 = vpop.f32.mrf.mxu0
        %v2237 = vadd.f32 0.0, %v2236
        %v2238 = vpop.f32.mrf.mxu0
        %v2239 = vadd.f32 0.0, %v2238
        %2240 = vmatmul.bf16.gmra.mxu0 %v2020
        %v2241 = vpop.f32.mrf.mxu0
        %v2242 = vadd.f32 0.0, %v2241
        %v2243 = vpop.f32.mrf.mxu0
        %v2244 = vadd.f32 0.0, %v2243
        %2245 = vmatmul.bf16.gmra.mxu0 %v2023
        %v2246 = vpop.f32.mrf.mxu0
        %v2247 = vadd.f32 0.0, %v2246
        %v2248 = vpop.f32.mrf.mxu0
        %v2249 = vadd.f32 0.0, %v2248
        %2250 = vmatmul.bf16.gmra.mxu0 %v2026
        %v2251 = vpop.f32.mrf.mxu0
        %v2252 = vadd.f32 0.0, %v2251
        %v2253 = vpop.f32.mrf.mxu0
        %v2254 = vadd.f32 0.0, %v2253
        %2255 = vmatmul.bf16.gmra.mxu0 %v2029
        %v2256 = vpop.f32.mrf.mxu0
        %v2257 = vadd.f32 0.0, %v2256
        %v2258 = vpop.f32.mrf.mxu0
        %v2259 = vadd.f32 0.0, %v2258
        %2260 = vmatmul.bf16.gmra.mxu0 %v2032
        %v2261 = vpop.f32.mrf.mxu0
        %v2262 = vadd.f32 0.0, %v2261
        %v2263 = vpop.f32.mrf.mxu0
        %v2264 = vadd.f32 0.0, %v2263
        %2265 = vmatmul.bf16.gmra.mxu0 %v2035
        %v2266 = vpop.f32.mrf.mxu0
        %v2267 = vadd.f32 0.0, %v2266
        %v2268 = vpop.f32.mrf.mxu0
        %v2269 = vadd.f32 0.0, %v2268
        %2270 = vmatmul.bf16.gmra.mxu0 %v2038
        %v2271 = vpop.f32.mrf.mxu0
        %v2272 = vadd.f32 0.0, %v2271
        %v2273 = vpop.f32.mrf.mxu0
        %v2274 = vadd.f32 0.0, %v2273
        %2275 = vmatmul.bf16.gmra.mxu0 %v2041
        %v2276 = vpop.f32.mrf.mxu0
        %v2277 = vadd.f32 0.0, %v2276
        %v2278 = vpop.f32.mrf.mxu0
        %v2279 = vadd.f32 0.0, %v2278
        %2280 = vmatmul.bf16.gmra.mxu0 %v2044
        %v2281 = vpop.f32.mrf.mxu0
        %v2282 = vadd.f32 0.0, %v2281
        %v2283 = vpop.f32.mrf.mxu0
        %v2284 = vadd.f32 0.0, %v2283
        %2285 = vmatmul.bf16.gmra.mxu0 %v2047
        %v2286 = vpop.f32.mrf.mxu0
        %v2287 = vadd.f32 0.0, %v2286
        %v2288 = vpop.f32.mrf.mxu0
        %v2289 = vadd.f32 0.0, %v2288
        %2290 = vmatmul.bf16.gmra.mxu0 %v2050
        %v2291 = vpop.f32.mrf.mxu0
        %v2292 = vadd.f32 0.0, %v2291
        %v2293 = vpop.f32.mrf.mxu0
        %v2294 = vadd.f32 0.0, %v2293
        %2295 = vmatmul.bf16.gmra.mxu0 %v2053
        %v2296 = vpop.f32.mrf.mxu0
        %v2297 = vadd.f32 0.0, %v2296
        %v2298 = vpop.f32.mrf.mxu0
        %v2299 = vadd.f32 0.0, %v2298
        %2300 = vmatmul.bf16.gmra.mxu0 %v2056
        %v2301 = vpop.f32.mrf.mxu0
        %v2302 = vadd.f32 0.0, %v2301
        %v2303 = vpop.f32.mrf.mxu0
        %v2304 = vadd.f32 0.0, %v2303
        %2305 = vmatmul.bf16.gmra.mxu0 %v2059
        %v2306 = vpop.f32.mrf.mxu0
        %v2307 = vadd.f32 0.0, %v2306
        %v2308 = vpop.f32.mrf.mxu0
        %v2309 = vadd.f32 0.0, %v2308
        %2310 = vmatmul.bf16.gmra.mxu0 %v2062
        %v2311 = vpop.f32.mrf.mxu0
        %v2312 = vadd.f32 0.0, %v2311
        %v2313 = vpop.f32.mrf.mxu0
        %v2314 = vadd.f32 0.0, %v2313
        %2315 = vmatmul.bf16.gmra.mxu0 %v2065
        %v2316 = vpop.f32.mrf.mxu0
        %v2317 = vadd.f32 0.0, %v2316
        %v2318 = vpop.f32.mrf.mxu0
        %v2319 = vadd.f32 0.0, %v2318
        %2320 = vmatmul.bf16.gmra.mxu0 %v2068
        %v2321 = vpop.f32.mrf.mxu0
        %v2322 = vadd.f32 0.0, %v2321
        %v2323 = vpop.f32.mrf.mxu0
        %v2324 = vadd.f32 0.0, %v2323
        %2325 = vmatmul.bf16.gmra.mxu0 %v2071
        %v2326 = vpop.f32.mrf.mxu0
        %v2327 = vadd.f32 0.0, %v2326
        %v2328 = vpop.f32.mrf.mxu0
        %v2329 = vadd.f32 0.0, %v2328
        %2330 = vmatmul.bf16.gmra.mxu0 %v2074
        %v2331 = vpop.f32.mrf.mxu0
        %v2332 = vadd.f32 0.0, %v2331
        %v2333 = vpop.f32.mrf.mxu0
        %v2334 = vadd.f32 0.0, %v2333
        %2335 = vmatmul.bf16.gmra.mxu0 %v2077
        %v2336 = vpop.f32.mrf.mxu0
        %v2337 = vadd.f32 0.0, %v2336
        %v2338 = vpop.f32.mrf.mxu0
        %v2339 = vadd.f32 0.0, %v2338
        %2340 = vmatmul.bf16.gmra.mxu0 %v2080
        %v2341 = vpop.f32.mrf.mxu0
        %v2342 = vadd.f32 0.0, %v2341
        %v2343 = vpop.f32.mrf.mxu0
        %v2344 = vadd.f32 0.0, %v2343
        %2345 = vmatmul.bf16.gmra.mxu0 %v2083
        %v2346 = vpop.f32.mrf.mxu0
        %v2347 = vadd.f32 0.0, %v2346
        %v2348 = vpop.f32.mrf.mxu0
        %v2349 = vadd.f32 0.0, %v2348
        %2350 = vmatmul.bf16.gmra.mxu0 %v2086
        %v2351 = vpop.f32.mrf.mxu0
        %v2352 = vadd.f32 0.0, %v2351
        %v2353 = vpop.f32.mrf.mxu0
        %v2354 = vadd.f32 0.0, %v2353
        %2355 = vmatmul.bf16.gmra.mxu0 %v2089
        %v2356 = vpop.f32.mrf.mxu0
        %v2357 = vadd.f32 0.0, %v2356
        %v2358 = vpop.f32.mrf.mxu0
        %v2359 = vadd.f32 0.0, %v2358
        %2360 = vmatmul.bf16.gmra.mxu0 %v2092
        %v2361 = vpop.f32.mrf.mxu0
        %v2362 = vadd.f32 0.0, %v2361
        %v2363 = vpop.f32.mrf.mxu0
        %v2364 = vadd.f32 0.0, %v2363
        %2365 = vmatmul.bf16.gmra.mxu0 %v2095
        %v2366 = vpop.f32.mrf.mxu0
        %v2367 = vadd.f32 0.0, %v2366
        %v2368 = vpop.f32.mrf.mxu0
        %v2369 = vadd.f32 0.0, %v2368
        %2370 = vmatmul.bf16.gmra.mxu0 %v2098
        %v2371 = vpop.f32.mrf.mxu0
        %v2372 = vadd.f32 0.0, %v2371
        %v2373 = vpop.f32.mrf.mxu0
        %v2374 = vadd.f32 0.0, %v2373
        %2375 = vmatmul.bf16.gmra.mxu0 %v2101
        %v2376 = vpop.f32.mrf.mxu0
        %v2377 = vadd.f32 0.0, %v2376
        %v2378 = vpop.f32.mrf.mxu0
        %v2379 = vadd.f32 0.0, %v2378
        %2380 = vmatmul.bf16.gmra.mxu0 %v2104
        %v2381 = vpop.f32.mrf.mxu0
        %v2382 = vadd.f32 0.0, %v2381
        %v2383 = vpop.f32.mrf.mxu0
        %v2384 = vadd.f32 0.0, %v2383
        %2385 = vmatmul.bf16.gmra.mxu0 %v2107
        %v2386 = vpop.f32.mrf.mxu0
        %v2387 = vadd.f32 0.0, %v2386
        %v2388 = vpop.f32.mrf.mxu0
        %v2389 = vadd.f32 0.0, %v2388
        %2390 = vmatmul.bf16.gmra.mxu0 %v2110
        %v2391 = vpop.f32.mrf.mxu0
        %v2392 = vadd.f32 0.0, %v2391
        %v2393 = vpop.f32.mrf.mxu0
        %v2394 = vadd.f32 0.0, %v2393
        %2395 = vmatmul.bf16.gmra.mxu0 %v2113
        %v2396 = vpop.f32.mrf.mxu0
        %v2397 = vadd.f32 0.0, %v2396
        %v2398 = vpop.f32.mrf.mxu0
        %v2399 = vadd.f32 0.0, %v2398
        %2400 = vmatmul.bf16.gmra.mxu0 %v2116
        %v2401 = vpop.f32.mrf.mxu0
        %v2402 = vadd.f32 0.0, %v2401
        %v2403 = vpop.f32.mrf.mxu0
        %v2404 = vadd.f32 0.0, %v2403
        %2405 = vmatmul.bf16.gmra.mxu0 %v2119
        %v2406 = vpop.f32.mrf.mxu0
        %v2407 = vadd.f32 0.0, %v2406
        %v2408 = vpop.f32.mrf.mxu0
        %v2409 = vadd.f32 0.0, %v2408
        %2410 = vmatmul.bf16.gmra.mxu0 %v2122
        %v2411 = vpop.f32.mrf.mxu0
        %v2412 = vadd.f32 0.0, %v2411
        %v2413 = vpop.f32.mrf.mxu0
        %v2414 = vadd.f32 0.0, %v2413
        %2415 = vmatmul.bf16.gmra.mxu0 %v2125
        %v2416 = vpop.f32.mrf.mxu0
        %v2417 = vadd.f32 0.0, %v2416
        %v2418 = vpop.f32.mrf.mxu0
        %v2419 = vadd.f32 0.0, %v2418
        %2420 = vmatmul.bf16.gmra.mxu0 %v2128
        %v2421 = vpop.f32.mrf.mxu0
        %v2422 = vadd.f32 0.0, %v2421
        %v2423 = vpop.f32.mrf.mxu0
        %v2424 = vadd.f32 0.0, %v2423
        %2425 = vmatmul.bf16.gmra.mxu0 %v2131
        %v2426 = vpop.f32.mrf.mxu0
        %v2427 = vadd.f32 0.0, %v2426
        %v2428 = vpop.f32.mrf.mxu0
        %v2429 = vadd.f32 0.0, %v2428
        %2430 = vmatmul.bf16.gmra.mxu0 %v2134
        %v2431 = vpop.f32.mrf.mxu0
        %v2432 = vadd.f32 0.0, %v2431
        %v2433 = vpop.f32.mrf.mxu0
        %v2434 = vadd.f32 0.0, %v2433
        %2435 = vmatmul.bf16.gmra.mxu0 %v2137
        %v2436 = vpop.f32.mrf.mxu0
        %v2437 = vadd.f32 0.0, %v2436
        %v2438 = vpop.f32.mrf.mxu0
        %v2439 = vadd.f32 0.0, %v2438
        %2440 = vmatmul.bf16.gmra.mxu0 %v2140
        %v2441 = vpop.f32.mrf.mxu0
        %v2442 = vadd.f32 0.0, %v2441
        %v2443 = vpop.f32.mrf.mxu0
        %v2444 = vadd.f32 0.0, %v2443
        %2445 = vmatmul.bf16.gmra.mxu0 %v2143
        %v2446 = vpop.f32.mrf.mxu0
        %v2447 = vadd.f32 0.0, %v2446
        %v2448 = vpop.f32.mrf.mxu0
        %v2449 = vadd.f32 0.0, %v2448
        %2450 = vmatmul.bf16.gmra.mxu0 %v2146
        %v2451 = vpop.f32.mrf.mxu0
        %v2452 = vadd.f32 0.0, %v2451
        %v2453 = vpop.f32.mrf.mxu0
        %v2454 = vadd.f32 0.0, %v2453
        %2455 = vmatmul.bf16.gmra.mxu0 %v2149
        %v2456 = vpop.f32.mrf.mxu0
        %v2457 = vadd.f32 0.0, %v2456
        %v2458 = vpop.f32.mrf.mxu0
        %v2459 = vadd.f32 0.0, %v2458
        %2460 = vmatmul.bf16.gmra.mxu0 %v2152
        %v2461 = vpop.f32.mrf.mxu0
        %v2462 = vadd.f32 0.0, %v2461
        %v2463 = vpop.f32.mrf.mxu0
        %v2464 = vadd.f32 0.0, %v2463
        %2465 = vmatmul.bf16.gmra.mxu0 %v2155
        %v2466 = vpop.f32.mrf.mxu0
        %v2467 = vadd.f32 0.0, %v2466
        %v2468 = vpop.f32.mrf.mxu0
        %v2469 = vadd.f32 0.0, %v2468
        %2470 = vmatmul.bf16.gmra.mxu0 %v2158
        %v2471 = vpop.f32.mrf.mxu0
        %v2472 = vadd.f32 0.0, %v2471
        %v2473 = vpop.f32.mrf.mxu0
        %v2474 = vadd.f32 0.0, %v2473
        %2475 = vmatmul.bf16.gmra.mxu0 %v2161
        %v2476 = vpop.f32.mrf.mxu0
        %v2477 = vadd.f32 0.0, %v2476
        %v2478 = vpop.f32.mrf.mxu0
        %v2479 = vadd.f32 0.0, %v2478
        %2480 = vmatmul.bf16.gmra.mxu0 %v2164
        %v2481 = vpop.f32.mrf.mxu0
        %v2482 = vadd.f32 0.0, %v2481
        %v2483 = vpop.f32.mrf.mxu0
        %v2484 = vadd.f32 0.0, %v2483
        %2485 = vmatmul.bf16.gmra.mxu0 %v2167
        %v2486 = vpop.f32.mrf.mxu0
        %v2487 = vadd.f32 0.0, %v2486
        %v2488 = vpop.f32.mrf.mxu0
        %v2489 = vadd.f32 0.0, %v2488
        %2490 = vmatmul.bf16.gmra.mxu0 %v2170
        %v2491 = vpop.f32.mrf.mxu0
        %v2492 = vadd.f32 0.0, %v2491
        %v2493 = vpop.f32.mrf.mxu0
        %v2494 = vadd.f32 0.0, %v2493
        %2495 = vmatmul.bf16.gmra.mxu0 %v2173
        %v2496 = vpop.f32.mrf.mxu0
        %v2497 = vadd.f32 0.0, %v2496
        %v2498 = vpop.f32.mrf.mxu0
        %v2499 = vadd.f32 0.0, %v2498
        %2500 = vmatmul.bf16.gmra.mxu0 %v2176
        %v2501 = vpop.f32.mrf.mxu0
        %v2502 = vadd.f32 0.0, %v2501
        %v2503 = vpop.f32.mrf.mxu0
        %v2504 = vadd.f32 0.0, %v2503
        %2505 = vmatmul.bf16.gmra.mxu0 %v2179
        %v2506 = vpop.f32.mrf.mxu0
        %v2507 = vadd.f32 0.0, %v2506
        %v2508 = vpop.f32.mrf.mxu0
        %v2509 = vadd.f32 0.0, %v2508
        %2510 = vmatmul.bf16.gmra.mxu0 %v2182
        %v2511 = vpop.f32.mrf.mxu0
        %v2512 = vadd.f32 0.0, %v2511
        %v2513 = vpop.f32.mrf.mxu0
        %v2514 = vadd.f32 0.0, %v2513
        %2515 = vmatmul.bf16.gmra.mxu0 %v2185
        %v2516 = vpop.f32.mrf.mxu0
        %v2517 = vadd.f32 0.0, %v2516
        %v2518 = vpop.f32.mrf.mxu0
        %v2519 = vadd.f32 0.0, %v2518
        %2520 = vmatmul.bf16.gmra.mxu0 %v2188
        %v2521 = vpop.f32.mrf.mxu0
        %v2522 = vadd.f32 0.0, %v2521
        %v2523 = vpop.f32.mrf.mxu0
        %v2524 = vadd.f32 0.0, %v2523
        %2525 = vdwg.mxu0
        %v2654 = vunpack.c.l.b16 %v221
        %v2655 = vunpack.c.l.b16 %v222
        %v2656 = vunpack.c.l.b16 %v223
        %v2657 = vunpack.c.l.b16 %v224
        %v2658 = vunpack.c.l.b16 %v226
        %v2659 = vunpack.c.l.b16 %v227
        %v2660 = vunpack.c.l.b16 %v228
        %v2661 = vunpack.c.l.b16 %v229
        %v2662 = vunpack.c.l.b16 %v231
        %v2663 = vunpack.c.l.b16 %v232
        %v2664 = vunpack.c.l.b16 %v233
        %v2665 = vunpack.c.l.b16 %v234
        %v2666 = vunpack.c.l.b16 %v236
        %v2667 = vunpack.c.l.b16 %v237
        %v2668 = vunpack.c.l.b16 %v238
        %v2669 = vunpack.c.l.b16 %v239
        %v2670 = vunpack.c.l.b16 %v241
        %v2671 = vunpack.c.l.b16 %v242
        %v2672 = vunpack.c.l.b16 %v243
        %v2673 = vunpack.c.l.b16 %v244
        %v2674 = vunpack.c.l.b16 %v246
        %v2675 = vunpack.c.l.b16 %v247
        %v2676 = vunpack.c.l.b16 %v248
        %v2677 = vunpack.c.l.b16 %v249
        %v2678 = vunpack.c.l.b16 %v251
        %v2679 = vunpack.c.l.b16 %v252
        %v2680 = vunpack.c.l.b16 %v253
        %v2681 = vunpack.c.l.b16 %v254
        %v2682 = vunpack.c.l.b16 %v256
        %v2683 = vunpack.c.l.b16 %v257
        %v2684 = vunpack.c.l.b16 %v258
        %v2685 = vunpack.c.l.b16 %v259
        %v2686 = vunpack.c.l.b16 %v261
        %v2687 = vunpack.c.l.b16 %v262
        %v2688 = vunpack.c.l.b16 %v263
        %v2689 = vunpack.c.l.b16 %v264
        %v2690 = vunpack.c.l.b16 %v266
        %v2691 = vunpack.c.l.b16 %v267
        %v2692 = vunpack.c.l.b16 %v268
        %v2693 = vunpack.c.l.b16 %v269
        %v2694 = vunpack.c.l.b16 %v271
        %v2695 = vunpack.c.l.b16 %v272
        %v2696 = vunpack.c.l.b16 %v273
        %v2697 = vunpack.c.l.b16 %v274
        %v2698 = vunpack.c.l.b16 %v276
        %v2699 = vunpack.c.l.b16 %v277
        %v2700 = vunpack.c.l.b16 %v278
        %v2701 = vunpack.c.l.b16 %v279
        %v2702 = vunpack.c.l.b16 %v281
        %v2703 = vunpack.c.l.b16 %v282
        %v2704 = vunpack.c.l.b16 %v283
        %v2705 = vunpack.c.l.b16 %v284
        %v2706 = vunpack.c.l.b16 %v286
        %v2707 = vunpack.c.l.b16 %v287
        %v2708 = vunpack.c.l.b16 %v288
        %v2709 = vunpack.c.l.b16 %v289
        %v2710 = vunpack.c.l.b16 %v291
        %v2711 = vunpack.c.l.b16 %v292
        %v2712 = vunpack.c.l.b16 %v293
        %v2713 = vunpack.c.l.b16 %v294
        %v2714 = vunpack.c.l.b16 %v296
        %v2715 = vunpack.c.l.b16 %v297
        %v2716 = vunpack.c.l.b16 %v298
        %v2717 = vunpack.c.l.b16 %v299
        %v2718 = vunpack.c.l.b16 %v301
        %v2719 = vunpack.c.l.b16 %v302
        %v2720 = vunpack.c.l.b16 %v303
        %v2721 = vunpack.c.l.b16 %v304
        %v2722 = vunpack.c.l.b16 %v306
        %v2723 = vunpack.c.l.b16 %v307
        %v2724 = vunpack.c.l.b16 %v308
        %v2725 = vunpack.c.l.b16 %v309
        %v2726 = vunpack.c.l.b16 %v311
        %v2727 = vunpack.c.l.b16 %v312
        %v2728 = vunpack.c.l.b16 %v313
        %v2729 = vunpack.c.l.b16 %v314
        %v2730 = vunpack.c.l.b16 %v316
        %v2731 = vunpack.c.l.b16 %v317
        %v2732 = vunpack.c.l.b16 %v318
        %v2733 = vunpack.c.l.b16 %v319
        %v2734 = vunpack.c.l.b16 %v321
        %v2735 = vunpack.c.l.b16 %v322
        %v2736 = vunpack.c.l.b16 %v323
        %v2737 = vunpack.c.l.b16 %v324
        %v2738 = vunpack.c.l.b16 %v326
        %v2739 = vunpack.c.l.b16 %v327
        %v2740 = vunpack.c.l.b16 %v328
        %v2741 = vunpack.c.l.b16 %v329
        %v2742 = vunpack.c.l.b16 %v331
        %v2743 = vunpack.c.l.b16 %v332
        %v2744 = vunpack.c.l.b16 %v333
        %v2745 = vunpack.c.l.b16 %v334
        %v2746 = vunpack.c.l.b16 %v336
        %v2747 = vunpack.c.l.b16 %v337
        %v2748 = vunpack.c.l.b16 %v338
        %v2749 = vunpack.c.l.b16 %v339
        %v2750 = vunpack.c.l.b16 %v341
        %v2751 = vunpack.c.l.b16 %v342
        %v2752 = vunpack.c.l.b16 %v343
        %v2753 = vunpack.c.l.b16 %v344
        %v2754 = vunpack.c.l.b16 %v346
        %v2755 = vunpack.c.l.b16 %v347
        %v2756 = vunpack.c.l.b16 %v348
        %v2757 = vunpack.c.l.b16 %v349
        %v2758 = vunpack.c.l.b16 %v351
        %v2759 = vunpack.c.l.b16 %v352
        %v2760 = vunpack.c.l.b16 %v353
        %v2761 = vunpack.c.l.b16 %v354
        %v2762 = vunpack.c.l.b16 %v356
        %v2763 = vunpack.c.l.b16 %v357
        %v2764 = vunpack.c.l.b16 %v358
        %v2765 = vunpack.c.l.b16 %v359
        %v2766 = vunpack.c.l.b16 %v361
        %v2767 = vunpack.c.l.b16 %v362
        %v2768 = vunpack.c.l.b16 %v363
        %v2769 = vunpack.c.l.b16 %v364
        %v2770 = vunpack.c.l.b16 %v366
        %v2771 = vunpack.c.l.b16 %v367
        %v2772 = vunpack.c.l.b16 %v368
        %v2773 = vunpack.c.l.b16 %v369
        %v2774 = vunpack.c.l.b16 %v371
        %v2775 = vunpack.c.l.b16 %v372
        %v2776 = vunpack.c.l.b16 %v373
        %v2777 = vunpack.c.l.b16 %v374
        %v2778 = vunpack.c.l.b16 %v376
        %v2779 = vunpack.c.l.b16 %v377
        %v2780 = vunpack.c.l.b16 %v378
        %v2781 = vunpack.c.l.b16 %v379
        %v2782 = vpack.c.b16 %v2655, %v2654
        %v2783 = vpack.c.b16 %v2657, %v2656
        %v2784 = vpack.c.b16 %v2659, %v2658
        %v2785 = vpack.c.b16 %v2661, %v2660
        %v2786 = vpack.c.b16 %v2663, %v2662
        %v2787 = vpack.c.b16 %v2665, %v2664
        %v2788 = vpack.c.b16 %v2667, %v2666
        %v2789 = vpack.c.b16 %v2669, %v2668
        %v2790 = vpack.c.b16 %v2671, %v2670
        %v2791 = vpack.c.b16 %v2673, %v2672
        %v2792 = vpack.c.b16 %v2675, %v2674
        %v2793 = vpack.c.b16 %v2677, %v2676
        %v2794 = vpack.c.b16 %v2679, %v2678
        %v2795 = vpack.c.b16 %v2681, %v2680
        %v2796 = vpack.c.b16 %v2683, %v2682
        %v2797 = vpack.c.b16 %v2685, %v2684
        %v2798 = vpack.c.b16 %v2687, %v2686
        %v2799 = vpack.c.b16 %v2689, %v2688
        %v2800 = vpack.c.b16 %v2691, %v2690
        %v2801 = vpack.c.b16 %v2693, %v2692
        %v2802 = vpack.c.b16 %v2695, %v2694
        %v2803 = vpack.c.b16 %v2697, %v2696
        %v2804 = vpack.c.b16 %v2699, %v2698
        %v2805 = vpack.c.b16 %v2701, %v2700
        %v2806 = vpack.c.b16 %v2703, %v2702
        %v2807 = vpack.c.b16 %v2705, %v2704
        %v2808 = vpack.c.b16 %v2707, %v2706
        %v2809 = vpack.c.b16 %v2709, %v2708
        %v2810 = vpack.c.b16 %v2711, %v2710
        %v2811 = vpack.c.b16 %v2713, %v2712
        %v2812 = vpack.c.b16 %v2715, %v2714
        %v2813 = vpack.c.b16 %v2717, %v2716
        %v2814 = vpack.c.b16 %v2719, %v2718
        %v2815 = vpack.c.b16 %v2721, %v2720
        %v2816 = vpack.c.b16 %v2723, %v2722
        %v2817 = vpack.c.b16 %v2725, %v2724
        %v2818 = vpack.c.b16 %v2727, %v2726
        %v2819 = vpack.c.b16 %v2729, %v2728
        %v2820 = vpack.c.b16 %v2731, %v2730
        %v2821 = vpack.c.b16 %v2733, %v2732
        %v2822 = vpack.c.b16 %v2735, %v2734
        %v2823 = vpack.c.b16 %v2737, %v2736
        %v2824 = vpack.c.b16 %v2739, %v2738
        %v2825 = vpack.c.b16 %v2741, %v2740
        %v2826 = vpack.c.b16 %v2743, %v2742
        %v2827 = vpack.c.b16 %v2745, %v2744
        %v2828 = vpack.c.b16 %v2747, %v2746
        %v2829 = vpack.c.b16 %v2749, %v2748
        %v2830 = vpack.c.b16 %v2751, %v2750
        %v2831 = vpack.c.b16 %v2753, %v2752
        %v2832 = vpack.c.b16 %v2755, %v2754
        %v2833 = vpack.c.b16 %v2757, %v2756
        %v2834 = vpack.c.b16 %v2759, %v2758
        %v2835 = vpack.c.b16 %v2761, %v2760
        %v2836 = vpack.c.b16 %v2763, %v2762
        %v2837 = vpack.c.b16 %v2765, %v2764
        %v2838 = vpack.c.b16 %v2767, %v2766
        %v2839 = vpack.c.b16 %v2769, %v2768
        %v2840 = vpack.c.b16 %v2771, %v2770
        %v2841 = vpack.c.b16 %v2773, %v2772
        %v2842 = vpack.c.b16 %v2775, %v2774
        %v2843 = vpack.c.b16 %v2777, %v2776
        %v2844 = vpack.c.b16 %v2779, %v2778
        %v2845 = vpack.c.b16 %v2781, %v2780
        %v2847 = vsel %vm1997, %v2782, 0
        %v2850 = vsel %vm1997, %v2783, 0
        %v2853 = vsel %vm1997, %v2784, 0
        %v2856 = vsel %vm1997, %v2785, 0
        %v2859 = vsel %vm1997, %v2786, 0
        %v2862 = vsel %vm1997, %v2787, 0
        %v2865 = vsel %vm1997, %v2788, 0
        %v2868 = vsel %vm1997, %v2789, 0
        %v2871 = vsel %vm1997, %v2790, 0
        %v2874 = vsel %vm1997, %v2791, 0
        %v2877 = vsel %vm1997, %v2792, 0
        %v2880 = vsel %vm1997, %v2793, 0
        %v2883 = vsel %vm1997, %v2794, 0
        %v2886 = vsel %vm1997, %v2795, 0
        %v2889 = vsel %vm1997, %v2796, 0
        %v2892 = vsel %vm1997, %v2797, 0
        %v2895 = vsel %vm1997, %v2798, 0
        %v2898 = vsel %vm1997, %v2799, 0
        %v2901 = vsel %vm1997, %v2800, 0
        %v2904 = vsel %vm1997, %v2801, 0
        %v2907 = vsel %vm1997, %v2802, 0
        %v2910 = vsel %vm1997, %v2803, 0
        %v2913 = vsel %vm1997, %v2804, 0
        %v2916 = vsel %vm1997, %v2805, 0
        %v2919 = vsel %vm1997, %v2806, 0
        %v2922 = vsel %vm1997, %v2807, 0
        %v2925 = vsel %vm1997, %v2808, 0
        %v2928 = vsel %vm1997, %v2809, 0
        %v2931 = vsel %vm1997, %v2810, 0
        %v2934 = vsel %vm1997, %v2811, 0
        %v2937 = vsel %vm1997, %v2812, 0
        %v2940 = vsel %vm1997, %v2813, 0
        %v2943 = vsel %vm1997, %v2814, 0
        %v2946 = vsel %vm1997, %v2815, 0
        %v2949 = vsel %vm1997, %v2816, 0
        %v2952 = vsel %vm1997, %v2817, 0
        %v2955 = vsel %vm1997, %v2818, 0
        %v2958 = vsel %vm1997, %v2819, 0
        %v2961 = vsel %vm1997, %v2820, 0
        %v2964 = vsel %vm1997, %v2821, 0
        %v2967 = vsel %vm1997, %v2822, 0
        %v2970 = vsel %vm1997, %v2823, 0
        %v2973 = vsel %vm1997, %v2824, 0
        %v2976 = vsel %vm1997, %v2825, 0
        %v2979 = vsel %vm1997, %v2826, 0
        %v2982 = vsel %vm1997, %v2827, 0
        %v2985 = vsel %vm1997, %v2828, 0
        %v2988 = vsel %vm1997, %v2829, 0
        %v2991 = vsel %vm1997, %v2830, 0
        %v2994 = vsel %vm1997, %v2831, 0
        %v2997 = vsel %vm1997, %v2832, 0
        %v3000 = vsel %vm1997, %v2833, 0
        %v3003 = vsel %vm1997, %v2834, 0
        %v3006 = vsel %vm1997, %v2835, 0
        %v3009 = vsel %vm1997, %v2836, 0
        %v3012 = vsel %vm1997, %v2837, 0
        %v3015 = vsel %vm1997, %v2838, 0
        %v3018 = vsel %vm1997, %v2839, 0
        %v3021 = vsel %vm1997, %v2840, 0
        %v3024 = vsel %vm1997, %v2841, 0
        %v3027 = vsel %vm1997, %v2842, 0
        %v3030 = vsel %vm1997, %v2843, 0
        %v3033 = vsel %vm1997, %v2844, 0
        %v3036 = vsel %vm1997, %v2845, 0
        %v3039 = vand.u32 %v391, %v2193
        %3041 = vmatpush.bf16.msra.mxu0 0
        %3042 = vmatpush.bf16.msra.mxu0 0
        %3043 = vmatpush.bf16.msra.mxu0 0
        %3044 = vmatpush.bf16.msra.mxu0 0
        %3045 = vmatpush.bf16.msra.mxu0 0
        %3046 = vmatpush.bf16.msra.mxu0 0
        %3047 = vmatpush.bf16.msra.mxu0 0
        %3048 = vmatpush.bf16.msra.mxu0 %v3039
        %3049 = vmatmul.bf16.gmra.mxu0 %v2847
        %v3050 = vpop.f32.mrf.mxu0
        %v3051 = vadd.f32 %v2207, %v3050
        %v3052 = vpop.f32.mrf.mxu0
        %v3053 = vadd.f32 %v2209, %v3052
        %3054 = vmatmul.bf16.gmra.mxu0 %v2850
        %v3055 = vpop.f32.mrf.mxu0
        %v3056 = vadd.f32 %v2212, %v3055
        %v3057 = vpop.f32.mrf.mxu0
        %v3058 = vadd.f32 %v2214, %v3057
        %3059 = vmatmul.bf16.gmra.mxu0 %v2853
        %v3060 = vpop.f32.mrf.mxu0
        %v3061 = vadd.f32 %v2217, %v3060
        %v3062 = vpop.f32.mrf.mxu0
        %v3063 = vadd.f32 %v2219, %v3062
        %3064 = vmatmul.bf16.gmra.mxu0 %v2856
        %v3065 = vpop.f32.mrf.mxu0
        %v3066 = vadd.f32 %v2222, %v3065
        %v3067 = vpop.f32.mrf.mxu0
        %v3068 = vadd.f32 %v2224, %v3067
        %3069 = vmatmul.bf16.gmra.mxu0 %v2859
        %v3070 = vpop.f32.mrf.mxu0
        %v3071 = vadd.f32 %v2227, %v3070
        %v3072 = vpop.f32.mrf.mxu0
        %v3073 = vadd.f32 %v2229, %v3072
        %3074 = vmatmul.bf16.gmra.mxu0 %v2862
        %v3075 = vpop.f32.mrf.mxu0
        %v3076 = vadd.f32 %v2232, %v3075
        %v3077 = vpop.f32.mrf.mxu0
        %v3078 = vadd.f32 %v2234, %v3077
        %3079 = vmatmul.bf16.gmra.mxu0 %v2865
        %v3080 = vpop.f32.mrf.mxu0
        %v3081 = vadd.f32 %v2237, %v3080
        %v3082 = vpop.f32.mrf.mxu0
        %v3083 = vadd.f32 %v2239, %v3082
        %3084 = vmatmul.bf16.gmra.mxu0 %v2868
        %v3085 = vpop.f32.mrf.mxu0
        %v3086 = vadd.f32 %v2242, %v3085
        %v3087 = vpop.f32.mrf.mxu0
        %v3088 = vadd.f32 %v2244, %v3087
        %3089 = vmatmul.bf16.gmra.mxu0 %v2871
        %v3090 = vpop.f32.mrf.mxu0
        %v3091 = vadd.f32 %v2247, %v3090
        %v3092 = vpop.f32.mrf.mxu0
        %v3093 = vadd.f32 %v2249, %v3092
        %3094 = vmatmul.bf16.gmra.mxu0 %v2874
        %v3095 = vpop.f32.mrf.mxu0
        %v3096 = vadd.f32 %v2252, %v3095
        %v3097 = vpop.f32.mrf.mxu0
        %v3098 = vadd.f32 %v2254, %v3097
        %3099 = vmatmul.bf16.gmra.mxu0 %v2877
        %v3100 = vpop.f32.mrf.mxu0
        %v3101 = vadd.f32 %v2257, %v3100
        %v3102 = vpop.f32.mrf.mxu0
        %v3103 = vadd.f32 %v2259, %v3102
        %3104 = vmatmul.bf16.gmra.mxu0 %v2880
        %v3105 = vpop.f32.mrf.mxu0
        %v3106 = vadd.f32 %v2262, %v3105
        %v3107 = vpop.f32.mrf.mxu0
        %v3108 = vadd.f32 %v2264, %v3107
        %3109 = vmatmul.bf16.gmra.mxu0 %v2883
        %v3110 = vpop.f32.mrf.mxu0
        %v3111 = vadd.f32 %v2267, %v3110
        %v3112 = vpop.f32.mrf.mxu0
        %v3113 = vadd.f32 %v2269, %v3112
        %3114 = vmatmul.bf16.gmra.mxu0 %v2886
        %v3115 = vpop.f32.mrf.mxu0
        %v3116 = vadd.f32 %v2272, %v3115
        %v3117 = vpop.f32.mrf.mxu0
        %v3118 = vadd.f32 %v2274, %v3117
        %3119 = vmatmul.bf16.gmra.mxu0 %v2889
        %v3120 = vpop.f32.mrf.mxu0
        %v3121 = vadd.f32 %v2277, %v3120
        %v3122 = vpop.f32.mrf.mxu0
        %v3123 = vadd.f32 %v2279, %v3122
        %3124 = vmatmul.bf16.gmra.mxu0 %v2892
        %v3125 = vpop.f32.mrf.mxu0
        %v3126 = vadd.f32 %v2282, %v3125
        %v3127 = vpop.f32.mrf.mxu0
        %v3128 = vadd.f32 %v2284, %v3127
        %3129 = vmatmul.bf16.gmra.mxu0 %v2895
        %v3130 = vpop.f32.mrf.mxu0
        %v3131 = vadd.f32 %v2287, %v3130
        %v3132 = vpop.f32.mrf.mxu0
        %v3133 = vadd.f32 %v2289, %v3132
        %3134 = vmatmul.bf16.gmra.mxu0 %v2898
        %v3135 = vpop.f32.mrf.mxu0
        %v3136 = vadd.f32 %v2292, %v3135
        %v3137 = vpop.f32.mrf.mxu0
        %v3138 = vadd.f32 %v2294, %v3137
        %3139 = vmatmul.bf16.gmra.mxu0 %v2901
        %v3140 = vpop.f32.mrf.mxu0
        %v3141 = vadd.f32 %v2297, %v3140
        %v3142 = vpop.f32.mrf.mxu0
        %v3143 = vadd.f32 %v2299, %v3142
        %3144 = vmatmul.bf16.gmra.mxu0 %v2904
        %v3145 = vpop.f32.mrf.mxu0
        %v3146 = vadd.f32 %v2302, %v3145
        %v3147 = vpop.f32.mrf.mxu0
        %v3148 = vadd.f32 %v2304, %v3147
        %3149 = vmatmul.bf16.gmra.mxu0 %v2907
        %v3150 = vpop.f32.mrf.mxu0
        %v3151 = vadd.f32 %v2307, %v3150
        %v3152 = vpop.f32.mrf.mxu0
        %v3153 = vadd.f32 %v2309, %v3152
        %3154 = vmatmul.bf16.gmra.mxu0 %v2910
        %v3155 = vpop.f32.mrf.mxu0
        %v3156 = vadd.f32 %v2312, %v3155
        %v3157 = vpop.f32.mrf.mxu0
        %v3158 = vadd.f32 %v2314, %v3157
        %3159 = vmatmul.bf16.gmra.mxu0 %v2913
        %v3160 = vpop.f32.mrf.mxu0
        %v3161 = vadd.f32 %v2317, %v3160
        %v3162 = vpop.f32.mrf.mxu0
        %v3163 = vadd.f32 %v2319, %v3162
        %3164 = vmatmul.bf16.gmra.mxu0 %v2916
        %v3165 = vpop.f32.mrf.mxu0
        %v3166 = vadd.f32 %v2322, %v3165
        %v3167 = vpop.f32.mrf.mxu0
        %v3168 = vadd.f32 %v2324, %v3167
        %3169 = vmatmul.bf16.gmra.mxu0 %v2919
        %v3170 = vpop.f32.mrf.mxu0
        %v3171 = vadd.f32 %v2327, %v3170
        %v3172 = vpop.f32.mrf.mxu0
        %v3173 = vadd.f32 %v2329, %v3172
        %3174 = vmatmul.bf16.gmra.mxu0 %v2922
        %v3175 = vpop.f32.mrf.mxu0
        %v3176 = vadd.f32 %v2332, %v3175
        %v3177 = vpop.f32.mrf.mxu0
        %v3178 = vadd.f32 %v2334, %v3177
        %3179 = vmatmul.bf16.gmra.mxu0 %v2925
        %v3180 = vpop.f32.mrf.mxu0
        %v3181 = vadd.f32 %v2337, %v3180
        %v3182 = vpop.f32.mrf.mxu0
        %v3183 = vadd.f32 %v2339, %v3182
        %3184 = vmatmul.bf16.gmra.mxu0 %v2928
        %v3185 = vpop.f32.mrf.mxu0
        %v3186 = vadd.f32 %v2342, %v3185
        %v3187 = vpop.f32.mrf.mxu0
        %v3188 = vadd.f32 %v2344, %v3187
        %3189 = vmatmul.bf16.gmra.mxu0 %v2931
        %v3190 = vpop.f32.mrf.mxu0
        %v3191 = vadd.f32 %v2347, %v3190
        %v3192 = vpop.f32.mrf.mxu0
        %v3193 = vadd.f32 %v2349, %v3192
        %3194 = vmatmul.bf16.gmra.mxu0 %v2934
        %v3195 = vpop.f32.mrf.mxu0
        %v3196 = vadd.f32 %v2352, %v3195
        %v3197 = vpop.f32.mrf.mxu0
        %v3198 = vadd.f32 %v2354, %v3197
        %3199 = vmatmul.bf16.gmra.mxu0 %v2937
        %v3200 = vpop.f32.mrf.mxu0
        %v3201 = vadd.f32 %v2357, %v3200
        %v3202 = vpop.f32.mrf.mxu0
        %v3203 = vadd.f32 %v2359, %v3202
        %3204 = vmatmul.bf16.gmra.mxu0 %v2940
        %v3205 = vpop.f32.mrf.mxu0
        %v3206 = vadd.f32 %v2362, %v3205
        %v3207 = vpop.f32.mrf.mxu0
        %v3208 = vadd.f32 %v2364, %v3207
        %3209 = vmatmul.bf16.gmra.mxu0 %v2943
        %v3210 = vpop.f32.mrf.mxu0
        %v3211 = vadd.f32 %v2367, %v3210
        %v3212 = vpop.f32.mrf.mxu0
        %v3213 = vadd.f32 %v2369, %v3212
        %3214 = vmatmul.bf16.gmra.mxu0 %v2946
        %v3215 = vpop.f32.mrf.mxu0
        %v3216 = vadd.f32 %v2372, %v3215
        %v3217 = vpop.f32.mrf.mxu0
        %v3218 = vadd.f32 %v2374, %v3217
        %3219 = vmatmul.bf16.gmra.mxu0 %v2949
        %v3220 = vpop.f32.mrf.mxu0
        %v3221 = vadd.f32 %v2377, %v3220
        %v3222 = vpop.f32.mrf.mxu0
        %v3223 = vadd.f32 %v2379, %v3222
        %3224 = vmatmul.bf16.gmra.mxu0 %v2952
        %v3225 = vpop.f32.mrf.mxu0
        %v3226 = vadd.f32 %v2382, %v3225
        %v3227 = vpop.f32.mrf.mxu0
        %v3228 = vadd.f32 %v2384, %v3227
        %3229 = vmatmul.bf16.gmra.mxu0 %v2955
        %v3230 = vpop.f32.mrf.mxu0
        %v3231 = vadd.f32 %v2387, %v3230
        %v3232 = vpop.f32.mrf.mxu0
        %v3233 = vadd.f32 %v2389, %v3232
        %3234 = vmatmul.bf16.gmra.mxu0 %v2958
        %v3235 = vpop.f32.mrf.mxu0
        %v3236 = vadd.f32 %v2392, %v3235
        %v3237 = vpop.f32.mrf.mxu0
        %v3238 = vadd.f32 %v2394, %v3237
        %3239 = vmatmul.bf16.gmra.mxu0 %v2961
        %v3240 = vpop.f32.mrf.mxu0
        %v3241 = vadd.f32 %v2397, %v3240
        %v3242 = vpop.f32.mrf.mxu0
        %v3243 = vadd.f32 %v2399, %v3242
        %3244 = vmatmul.bf16.gmra.mxu0 %v2964
        %v3245 = vpop.f32.mrf.mxu0
        %v3246 = vadd.f32 %v2402, %v3245
        %v3247 = vpop.f32.mrf.mxu0
        %v3248 = vadd.f32 %v2404, %v3247
        %3249 = vmatmul.bf16.gmra.mxu0 %v2967
        %v3250 = vpop.f32.mrf.mxu0
        %v3251 = vadd.f32 %v2407, %v3250
        %v3252 = vpop.f32.mrf.mxu0
        %v3253 = vadd.f32 %v2409, %v3252
        %3254 = vmatmul.bf16.gmra.mxu0 %v2970
        %v3255 = vpop.f32.mrf.mxu0
        %v3256 = vadd.f32 %v2412, %v3255
        %v3257 = vpop.f32.mrf.mxu0
        %v3258 = vadd.f32 %v2414, %v3257
        %3259 = vmatmul.bf16.gmra.mxu0 %v2973
        %v3260 = vpop.f32.mrf.mxu0
        %v3261 = vadd.f32 %v2417, %v3260
        %v3262 = vpop.f32.mrf.mxu0
        %v3263 = vadd.f32 %v2419, %v3262
        %3264 = vmatmul.bf16.gmra.mxu0 %v2976
        %v3265 = vpop.f32.mrf.mxu0
        %v3266 = vadd.f32 %v2422, %v3265
        %v3267 = vpop.f32.mrf.mxu0
        %v3268 = vadd.f32 %v2424, %v3267
        %3269 = vmatmul.bf16.gmra.mxu0 %v2979
        %v3270 = vpop.f32.mrf.mxu0
        %v3271 = vadd.f32 %v2427, %v3270
        %v3272 = vpop.f32.mrf.mxu0
        %v3273 = vadd.f32 %v2429, %v3272
        %3274 = vmatmul.bf16.gmra.mxu0 %v2982
        %v3275 = vpop.f32.mrf.mxu0
        %v3276 = vadd.f32 %v2432, %v3275
        %v3277 = vpop.f32.mrf.mxu0
        %v3278 = vadd.f32 %v2434, %v3277
        %3279 = vmatmul.bf16.gmra.mxu0 %v2985
        %v3280 = vpop.f32.mrf.mxu0
        %v3281 = vadd.f32 %v2437, %v3280
        %v3282 = vpop.f32.mrf.mxu0
        %v3283 = vadd.f32 %v2439, %v3282
        %3284 = vmatmul.bf16.gmra.mxu0 %v2988
        %v3285 = vpop.f32.mrf.mxu0
        %v3286 = vadd.f32 %v2442, %v3285
        %v3287 = vpop.f32.mrf.mxu0
        %v3288 = vadd.f32 %v2444, %v3287
        %3289 = vmatmul.bf16.gmra.mxu0 %v2991
        %v3290 = vpop.f32.mrf.mxu0
        %v3291 = vadd.f32 %v2447, %v3290
        %v3292 = vpop.f32.mrf.mxu0
        %v3293 = vadd.f32 %v2449, %v3292
        %3294 = vmatmul.bf16.gmra.mxu0 %v2994
        %v3295 = vpop.f32.mrf.mxu0
        %v3296 = vadd.f32 %v2452, %v3295
        %v3297 = vpop.f32.mrf.mxu0
        %v3298 = vadd.f32 %v2454, %v3297
        %3299 = vmatmul.bf16.gmra.mxu0 %v2997
        %v3300 = vpop.f32.mrf.mxu0
        %v3301 = vadd.f32 %v2457, %v3300
        %v3302 = vpop.f32.mrf.mxu0
        %v3303 = vadd.f32 %v2459, %v3302
        %3304 = vmatmul.bf16.gmra.mxu0 %v3000
        %v3305 = vpop.f32.mrf.mxu0
        %v3306 = vadd.f32 %v2462, %v3305
        %v3307 = vpop.f32.mrf.mxu0
        %v3308 = vadd.f32 %v2464, %v3307
        %3309 = vmatmul.bf16.gmra.mxu0 %v3003
        %v3310 = vpop.f32.mrf.mxu0
        %v3311 = vadd.f32 %v2467, %v3310
        %v3312 = vpop.f32.mrf.mxu0
        %v3313 = vadd.f32 %v2469, %v3312
        %3314 = vmatmul.bf16.gmra.mxu0 %v3006
        %v3315 = vpop.f32.mrf.mxu0
        %v3316 = vadd.f32 %v2472, %v3315
        %v3317 = vpop.f32.mrf.mxu0
        %v3318 = vadd.f32 %v2474, %v3317
        %3319 = vmatmul.bf16.gmra.mxu0 %v3009
        %v3320 = vpop.f32.mrf.mxu0
        %v3321 = vadd.f32 %v2477, %v3320
        %v3322 = vpop.f32.mrf.mxu0
        %v3323 = vadd.f32 %v2479, %v3322
        %3324 = vmatmul.bf16.gmra.mxu0 %v3012
        %v3325 = vpop.f32.mrf.mxu0
        %v3326 = vadd.f32 %v2482, %v3325
        %v3327 = vpop.f32.mrf.mxu0
        %v3328 = vadd.f32 %v2484, %v3327
        %3329 = vmatmul.bf16.gmra.mxu0 %v3015
        %v3330 = vpop.f32.mrf.mxu0
        %v3331 = vadd.f32 %v2487, %v3330
        %v3332 = vpop.f32.mrf.mxu0
        %v3333 = vadd.f32 %v2489, %v3332
        %3334 = vmatmul.bf16.gmra.mxu0 %v3018
        %v3335 = vpop.f32.mrf.mxu0
        %v3336 = vadd.f32 %v2492, %v3335
        %v3337 = vpop.f32.mrf.mxu0
        %v3338 = vadd.f32 %v2494, %v3337
        %3339 = vmatmul.bf16.gmra.mxu0 %v3021
        %v3340 = vpop.f32.mrf.mxu0
        %v3341 = vadd.f32 %v2497, %v3340
        %v3342 = vpop.f32.mrf.mxu0
        %v3343 = vadd.f32 %v2499, %v3342
        %3344 = vmatmul.bf16.gmra.mxu0 %v3024
        %v3345 = vpop.f32.mrf.mxu0
        %v3346 = vadd.f32 %v2502, %v3345
        %v3347 = vpop.f32.mrf.mxu0
        %v3348 = vadd.f32 %v2504, %v3347
        %3349 = vmatmul.bf16.gmra.mxu0 %v3027
        %v3350 = vpop.f32.mrf.mxu0
        %v3351 = vadd.f32 %v2507, %v3350
        %v3352 = vpop.f32.mrf.mxu0
        %v3353 = vadd.f32 %v2509, %v3352
        %3354 = vmatmul.bf16.gmra.mxu0 %v3030
        %v3355 = vpop.f32.mrf.mxu0
        %v3356 = vadd.f32 %v2512, %v3355
        %v3357 = vpop.f32.mrf.mxu0
        %v3358 = vadd.f32 %v2514, %v3357
        %3359 = vmatmul.bf16.gmra.mxu0 %v3033
        %v3360 = vpop.f32.mrf.mxu0
        %v3361 = vadd.f32 %v2517, %v3360
        %v3362 = vpop.f32.mrf.mxu0
        %v3363 = vadd.f32 %v2519, %v3362
        %3364 = vmatmul.bf16.gmra.mxu0 %v3036
        %v3365 = vpop.f32.mrf.mxu0
        %v3366 = vadd.f32 %v2522, %v3365
        %v3367 = vpop.f32.mrf.mxu0
        %v3368 = vadd.f32 %v2524, %v3367
        %3369 = vdwg.mxu0
        %vm3402 = vcmask 1042432
        %vm3403 = vcmask 1046532
        %vm3404 = vmor %vm3402, %vm3403
        %v3405 = vrot.slane %v221, 5
        %v3406 = vrot.slane %v3405, 4
        %v3407 = vrot.slane %v222, 5
        %v3408 = vsel %vm3404, %v3406, %v3407
        %v3409 = vrot.slane %v3407, 4
        %v3410 = vrot.slane %v223, 5
        %v3411 = vsel %vm3404, %v3409, %v3410
        %v3412 = vrot.slane %v3410, 4
        %v3413 = vrot.slane %v224, 5
        %v3414 = vsel %vm3404, %v3412, %v3413
        %v3415 = vrot.slane %v3413, 4
        %v3416 = vrot.slane %v225, 5
        %v3417 = vsel %vm3404, %v3415, %v3416
        %v3418 = vrot.slane %v226, 5
        %v3419 = vrot.slane %v3418, 4
        %v3420 = vrot.slane %v227, 5
        %v3421 = vsel %vm3404, %v3419, %v3420
        %v3422 = vrot.slane %v3420, 4
        %v3423 = vrot.slane %v228, 5
        %v3424 = vsel %vm3404, %v3422, %v3423
        %v3425 = vrot.slane %v3423, 4
        %v3426 = vrot.slane %v229, 5
        %v3427 = vsel %vm3404, %v3425, %v3426
        %v3428 = vrot.slane %v3426, 4
        %v3429 = vrot.slane %v230, 5
        %v3430 = vsel %vm3404, %v3428, %v3429
        %v3431 = vrot.slane %v231, 5
        %v3432 = vrot.slane %v3431, 4
        %v3433 = vrot.slane %v232, 5
        %v3434 = vsel %vm3404, %v3432, %v3433
        %v3435 = vrot.slane %v3433, 4
        %v3436 = vrot.slane %v233, 5
        %v3437 = vsel %vm3404, %v3435, %v3436
        %v3438 = vrot.slane %v3436, 4
        %v3439 = vrot.slane %v234, 5
        %v3440 = vsel %vm3404, %v3438, %v3439
        %v3441 = vrot.slane %v3439, 4
        %v3442 = vrot.slane %v235, 5
        %v3443 = vsel %vm3404, %v3441, %v3442
        %v3444 = vrot.slane %v236, 5
        %v3445 = vrot.slane %v3444, 4
        %v3446 = vrot.slane %v237, 5
        %v3447 = vsel %vm3404, %v3445, %v3446
        %v3448 = vrot.slane %v3446, 4
        %v3449 = vrot.slane %v238, 5
        %v3450 = vsel %vm3404, %v3448, %v3449
        %v3451 = vrot.slane %v3449, 4
        %v3452 = vrot.slane %v239, 5
        %v3453 = vsel %vm3404, %v3451, %v3452
        %v3454 = vrot.slane %v3452, 4
        %v3455 = vrot.slane %v240, 5
        %v3456 = vsel %vm3404, %v3454, %v3455
        %v3457 = vrot.slane %v241, 5
        %v3458 = vrot.slane %v3457, 4
        %v3459 = vrot.slane %v242, 5
        %v3460 = vsel %vm3404, %v3458, %v3459
        %v3461 = vrot.slane %v3459, 4
        %v3462 = vrot.slane %v243, 5
        %v3463 = vsel %vm3404, %v3461, %v3462
        %v3464 = vrot.slane %v3462, 4
        %v3465 = vrot.slane %v244, 5
        %v3466 = vsel %vm3404, %v3464, %v3465
        %v3467 = vrot.slane %v3465, 4
        %v3468 = vrot.slane %v245, 5
        %v3469 = vsel %vm3404, %v3467, %v3468
        %v3470 = vrot.slane %v246, 5
        %v3471 = vrot.slane %v3470, 4
        %v3472 = vrot.slane %v247, 5
        %v3473 = vsel %vm3404, %v3471, %v3472
        %v3474 = vrot.slane %v3472, 4
        %v3475 = vrot.slane %v248, 5
        %v3476 = vsel %vm3404, %v3474, %v3475
        %v3477 = vrot.slane %v3475, 4
        %v3478 = vrot.slane %v249, 5
        %v3479 = vsel %vm3404, %v3477, %v3478
        %v3480 = vrot.slane %v3478, 4
        %v3481 = vrot.slane %v250, 5
        %v3482 = vsel %vm3404, %v3480, %v3481
        %v3483 = vrot.slane %v251, 5
        %v3484 = vrot.slane %v3483, 4
        %v3485 = vrot.slane %v252, 5
        %v3486 = vsel %vm3404, %v3484, %v3485
        %v3487 = vrot.slane %v3485, 4
        %v3488 = vrot.slane %v253, 5
        %v3489 = vsel %vm3404, %v3487, %v3488
        %v3490 = vrot.slane %v3488, 4
        %v3491 = vrot.slane %v254, 5
        %v3492 = vsel %vm3404, %v3490, %v3491
        %v3493 = vrot.slane %v3491, 4
        %v3494 = vrot.slane %v255, 5
        %v3495 = vsel %vm3404, %v3493, %v3494
        %v3496 = vrot.slane %v256, 5
        %v3497 = vrot.slane %v3496, 4
        %v3498 = vrot.slane %v257, 5
        %v3499 = vsel %vm3404, %v3497, %v3498
        %v3500 = vrot.slane %v3498, 4
        %v3501 = vrot.slane %v258, 5
        %v3502 = vsel %vm3404, %v3500, %v3501
        %v3503 = vrot.slane %v3501, 4
        %v3504 = vrot.slane %v259, 5
        %v3505 = vsel %vm3404, %v3503, %v3504
        %v3506 = vrot.slane %v3504, 4
        %v3507 = vrot.slane %v260, 5
        %v3508 = vsel %vm3404, %v3506, %v3507
        %v3509 = vrot.slane %v261, 5
        %v3510 = vrot.slane %v3509, 4
        %v3511 = vrot.slane %v262, 5
        %v3512 = vsel %vm3404, %v3510, %v3511
        %v3513 = vrot.slane %v3511, 4
        %v3514 = vrot.slane %v263, 5
        %v3515 = vsel %vm3404, %v3513, %v3514
        %v3516 = vrot.slane %v3514, 4
        %v3517 = vrot.slane %v264, 5
        %v3518 = vsel %vm3404, %v3516, %v3517
        %v3519 = vrot.slane %v3517, 4
        %v3520 = vrot.slane %v265, 5
        %v3521 = vsel %vm3404, %v3519, %v3520
        %v3522 = vrot.slane %v266, 5
        %v3523 = vrot.slane %v3522, 4
        %v3524 = vrot.slane %v267, 5
        %v3525 = vsel %vm3404, %v3523, %v3524
        %v3526 = vrot.slane %v3524, 4
        %v3527 = vrot.slane %v268, 5
        %v3528 = vsel %vm3404, %v3526, %v3527
        %v3529 = vrot.slane %v3527, 4
        %v3530 = vrot.slane %v269, 5
        %v3531 = vsel %vm3404, %v3529, %v3530
        %v3532 = vrot.slane %v3530, 4
        %v3533 = vrot.slane %v270, 5
        %v3534 = vsel %vm3404, %v3532, %v3533
        %v3535 = vrot.slane %v271, 5
        %v3536 = vrot.slane %v3535, 4
        %v3537 = vrot.slane %v272, 5
        %v3538 = vsel %vm3404, %v3536, %v3537
        %v3539 = vrot.slane %v3537, 4
        %v3540 = vrot.slane %v273, 5
        %v3541 = vsel %vm3404, %v3539, %v3540
        %v3542 = vrot.slane %v3540, 4
        %v3543 = vrot.slane %v274, 5
        %v3544 = vsel %vm3404, %v3542, %v3543
        %v3545 = vrot.slane %v3543, 4
        %v3546 = vrot.slane %v275, 5
        %v3547 = vsel %vm3404, %v3545, %v3546
        %v3548 = vrot.slane %v276, 5
        %v3549 = vrot.slane %v3548, 4
        %v3550 = vrot.slane %v277, 5
        %v3551 = vsel %vm3404, %v3549, %v3550
        %v3552 = vrot.slane %v3550, 4
        %v3553 = vrot.slane %v278, 5
        %v3554 = vsel %vm3404, %v3552, %v3553
        %v3555 = vrot.slane %v3553, 4
        %v3556 = vrot.slane %v279, 5
        %v3557 = vsel %vm3404, %v3555, %v3556
        %v3558 = vrot.slane %v3556, 4
        %v3559 = vrot.slane %v280, 5
        %v3560 = vsel %vm3404, %v3558, %v3559
        %v3561 = vrot.slane %v281, 5
        %v3562 = vrot.slane %v3561, 4
        %v3563 = vrot.slane %v282, 5
        %v3564 = vsel %vm3404, %v3562, %v3563
        %v3565 = vrot.slane %v3563, 4
        %v3566 = vrot.slane %v283, 5
        %v3567 = vsel %vm3404, %v3565, %v3566
        %v3568 = vrot.slane %v3566, 4
        %v3569 = vrot.slane %v284, 5
        %v3570 = vsel %vm3404, %v3568, %v3569
        %v3571 = vrot.slane %v3569, 4
        %v3572 = vrot.slane %v285, 5
        %v3573 = vsel %vm3404, %v3571, %v3572
        %v3574 = vrot.slane %v286, 5
        %v3575 = vrot.slane %v3574, 4
        %v3576 = vrot.slane %v287, 5
        %v3577 = vsel %vm3404, %v3575, %v3576
        %v3578 = vrot.slane %v3576, 4
        %v3579 = vrot.slane %v288, 5
        %v3580 = vsel %vm3404, %v3578, %v3579
        %v3581 = vrot.slane %v3579, 4
        %v3582 = vrot.slane %v289, 5
        %v3583 = vsel %vm3404, %v3581, %v3582
        %v3584 = vrot.slane %v3582, 4
        %v3585 = vrot.slane %v290, 5
        %v3586 = vsel %vm3404, %v3584, %v3585
        %v3587 = vrot.slane %v291, 5
        %v3588 = vrot.slane %v3587, 4
        %v3589 = vrot.slane %v292, 5
        %v3590 = vsel %vm3404, %v3588, %v3589
        %v3591 = vrot.slane %v3589, 4
        %v3592 = vrot.slane %v293, 5
        %v3593 = vsel %vm3404, %v3591, %v3592
        %v3594 = vrot.slane %v3592, 4
        %v3595 = vrot.slane %v294, 5
        %v3596 = vsel %vm3404, %v3594, %v3595
        %v3597 = vrot.slane %v3595, 4
        %v3598 = vrot.slane %v295, 5
        %v3599 = vsel %vm3404, %v3597, %v3598
        %v3600 = vrot.slane %v296, 5
        %v3601 = vrot.slane %v3600, 4
        %v3602 = vrot.slane %v297, 5
        %v3603 = vsel %vm3404, %v3601, %v3602
        %v3604 = vrot.slane %v3602, 4
        %v3605 = vrot.slane %v298, 5
        %v3606 = vsel %vm3404, %v3604, %v3605
        %v3607 = vrot.slane %v3605, 4
        %v3608 = vrot.slane %v299, 5
        %v3609 = vsel %vm3404, %v3607, %v3608
        %v3610 = vrot.slane %v3608, 4
        %v3611 = vrot.slane %v300, 5
        %v3612 = vsel %vm3404, %v3610, %v3611
        %v3613 = vrot.slane %v301, 5
        %v3614 = vrot.slane %v3613, 4
        %v3615 = vrot.slane %v302, 5
        %v3616 = vsel %vm3404, %v3614, %v3615
        %v3617 = vrot.slane %v3615, 4
        %v3618 = vrot.slane %v303, 5
        %v3619 = vsel %vm3404, %v3617, %v3618
        %v3620 = vrot.slane %v3618, 4
        %v3621 = vrot.slane %v304, 5
        %v3622 = vsel %vm3404, %v3620, %v3621
        %v3623 = vrot.slane %v3621, 4
        %v3624 = vrot.slane %v305, 5
        %v3625 = vsel %vm3404, %v3623, %v3624
        %v3626 = vrot.slane %v306, 5
        %v3627 = vrot.slane %v3626, 4
        %v3628 = vrot.slane %v307, 5
        %v3629 = vsel %vm3404, %v3627, %v3628
        %v3630 = vrot.slane %v3628, 4
        %v3631 = vrot.slane %v308, 5
        %v3632 = vsel %vm3404, %v3630, %v3631
        %v3633 = vrot.slane %v3631, 4
        %v3634 = vrot.slane %v309, 5
        %v3635 = vsel %vm3404, %v3633, %v3634
        %v3636 = vrot.slane %v3634, 4
        %v3637 = vrot.slane %v310, 5
        %v3638 = vsel %vm3404, %v3636, %v3637
        %v3639 = vrot.slane %v311, 5
        %v3640 = vrot.slane %v3639, 4
        %v3641 = vrot.slane %v312, 5
        %v3642 = vsel %vm3404, %v3640, %v3641
        %v3643 = vrot.slane %v3641, 4
        %v3644 = vrot.slane %v313, 5
        %v3645 = vsel %vm3404, %v3643, %v3644
        %v3646 = vrot.slane %v3644, 4
        %v3647 = vrot.slane %v314, 5
        %v3648 = vsel %vm3404, %v3646, %v3647
        %v3649 = vrot.slane %v3647, 4
        %v3650 = vrot.slane %v315, 5
        %v3651 = vsel %vm3404, %v3649, %v3650
        %v3652 = vrot.slane %v316, 5
        %v3653 = vrot.slane %v3652, 4
        %v3654 = vrot.slane %v317, 5
        %v3655 = vsel %vm3404, %v3653, %v3654
        %v3656 = vrot.slane %v3654, 4
        %v3657 = vrot.slane %v318, 5
        %v3658 = vsel %vm3404, %v3656, %v3657
        %v3659 = vrot.slane %v3657, 4
        %v3660 = vrot.slane %v319, 5
        %v3661 = vsel %vm3404, %v3659, %v3660
        %v3662 = vrot.slane %v3660, 4
        %v3663 = vrot.slane %v320, 5
        %v3664 = vsel %vm3404, %v3662, %v3663
        %v3665 = vrot.slane %v321, 5
        %v3666 = vrot.slane %v3665, 4
        %v3667 = vrot.slane %v322, 5
        %v3668 = vsel %vm3404, %v3666, %v3667
        %v3669 = vrot.slane %v3667, 4
        %v3670 = vrot.slane %v323, 5
        %v3671 = vsel %vm3404, %v3669, %v3670
        %v3672 = vrot.slane %v3670, 4
        %v3673 = vrot.slane %v324, 5
        %v3674 = vsel %vm3404, %v3672, %v3673
        %v3675 = vrot.slane %v3673, 4
        %v3676 = vrot.slane %v325, 5
        %v3677 = vsel %vm3404, %v3675, %v3676
        %v3678 = vrot.slane %v326, 5
        %v3679 = vrot.slane %v3678, 4
        %v3680 = vrot.slane %v327, 5
        %v3681 = vsel %vm3404, %v3679, %v3680
        %v3682 = vrot.slane %v3680, 4
        %v3683 = vrot.slane %v328, 5
        %v3684 = vsel %vm3404, %v3682, %v3683
        %v3685 = vrot.slane %v3683, 4
        %v3686 = vrot.slane %v329, 5
        %v3687 = vsel %vm3404, %v3685, %v3686
        %v3688 = vrot.slane %v3686, 4
        %v3689 = vrot.slane %v330, 5
        %v3690 = vsel %vm3404, %v3688, %v3689
        %v3691 = vrot.slane %v331, 5
        %v3692 = vrot.slane %v3691, 4
        %v3693 = vrot.slane %v332, 5
        %v3694 = vsel %vm3404, %v3692, %v3693
        %v3695 = vrot.slane %v3693, 4
        %v3696 = vrot.slane %v333, 5
        %v3697 = vsel %vm3404, %v3695, %v3696
        %v3698 = vrot.slane %v3696, 4
        %v3699 = vrot.slane %v334, 5
        %v3700 = vsel %vm3404, %v3698, %v3699
        %v3701 = vrot.slane %v3699, 4
        %v3702 = vrot.slane %v335, 5
        %v3703 = vsel %vm3404, %v3701, %v3702
        %v3704 = vrot.slane %v336, 5
        %v3705 = vrot.slane %v3704, 4
        %v3706 = vrot.slane %v337, 5
        %v3707 = vsel %vm3404, %v3705, %v3706
        %v3708 = vrot.slane %v3706, 4
        %v3709 = vrot.slane %v338, 5
        %v3710 = vsel %vm3404, %v3708, %v3709
        %v3711 = vrot.slane %v3709, 4
        %v3712 = vrot.slane %v339, 5
        %v3713 = vsel %vm3404, %v3711, %v3712
        %v3714 = vrot.slane %v3712, 4
        %v3715 = vrot.slane %v340, 5
        %v3716 = vsel %vm3404, %v3714, %v3715
        %v3717 = vrot.slane %v341, 5
        %v3718 = vrot.slane %v3717, 4
        %v3719 = vrot.slane %v342, 5
        %v3720 = vsel %vm3404, %v3718, %v3719
        %v3721 = vrot.slane %v3719, 4
        %v3722 = vrot.slane %v343, 5
        %v3723 = vsel %vm3404, %v3721, %v3722
        %v3724 = vrot.slane %v3722, 4
        %v3725 = vrot.slane %v344, 5
        %v3726 = vsel %vm3404, %v3724, %v3725
        %v3727 = vrot.slane %v3725, 4
        %v3728 = vrot.slane %v345, 5
        %v3729 = vsel %vm3404, %v3727, %v3728
        %v3730 = vrot.slane %v346, 5
        %v3731 = vrot.slane %v3730, 4
        %v3732 = vrot.slane %v347, 5
        %v3733 = vsel %vm3404, %v3731, %v3732
        %v3734 = vrot.slane %v3732, 4
        %v3735 = vrot.slane %v348, 5
        %v3736 = vsel %vm3404, %v3734, %v3735
        %v3737 = vrot.slane %v3735, 4
        %v3738 = vrot.slane %v349, 5
        %v3739 = vsel %vm3404, %v3737, %v3738
        %v3740 = vrot.slane %v3738, 4
        %v3741 = vrot.slane %v350, 5
        %v3742 = vsel %vm3404, %v3740, %v3741
        %v3743 = vrot.slane %v351, 5
        %v3744 = vrot.slane %v3743, 4
        %v3745 = vrot.slane %v352, 5
        %v3746 = vsel %vm3404, %v3744, %v3745
        %v3747 = vrot.slane %v3745, 4
        %v3748 = vrot.slane %v353, 5
        %v3749 = vsel %vm3404, %v3747, %v3748
        %v3750 = vrot.slane %v3748, 4
        %v3751 = vrot.slane %v354, 5
        %v3752 = vsel %vm3404, %v3750, %v3751
        %v3753 = vrot.slane %v3751, 4
        %v3754 = vrot.slane %v355, 5
        %v3755 = vsel %vm3404, %v3753, %v3754
        %v3756 = vrot.slane %v356, 5
        %v3757 = vrot.slane %v3756, 4
        %v3758 = vrot.slane %v357, 5
        %v3759 = vsel %vm3404, %v3757, %v3758
        %v3760 = vrot.slane %v3758, 4
        %v3761 = vrot.slane %v358, 5
        %v3762 = vsel %vm3404, %v3760, %v3761
        %v3763 = vrot.slane %v3761, 4
        %v3764 = vrot.slane %v359, 5
        %v3765 = vsel %vm3404, %v3763, %v3764
        %v3766 = vrot.slane %v3764, 4
        %v3767 = vrot.slane %v360, 5
        %v3768 = vsel %vm3404, %v3766, %v3767
        %v3769 = vrot.slane %v361, 5
        %v3770 = vrot.slane %v3769, 4
        %v3771 = vrot.slane %v362, 5
        %v3772 = vsel %vm3404, %v3770, %v3771
        %v3773 = vrot.slane %v3771, 4
        %v3774 = vrot.slane %v363, 5
        %v3775 = vsel %vm3404, %v3773, %v3774
        %v3776 = vrot.slane %v3774, 4
        %v3777 = vrot.slane %v364, 5
        %v3778 = vsel %vm3404, %v3776, %v3777
        %v3779 = vrot.slane %v3777, 4
        %v3780 = vrot.slane %v365, 5
        %v3781 = vsel %vm3404, %v3779, %v3780
        %v3782 = vrot.slane %v366, 5
        %v3783 = vrot.slane %v3782, 4
        %v3784 = vrot.slane %v367, 5
        %v3785 = vsel %vm3404, %v3783, %v3784
        %v3786 = vrot.slane %v3784, 4
        %v3787 = vrot.slane %v368, 5
        %v3788 = vsel %vm3404, %v3786, %v3787
        %v3789 = vrot.slane %v3787, 4
        %v3790 = vrot.slane %v369, 5
        %v3791 = vsel %vm3404, %v3789, %v3790
        %v3792 = vrot.slane %v3790, 4
        %v3793 = vrot.slane %v370, 5
        %v3794 = vsel %vm3404, %v3792, %v3793
        %v3795 = vrot.slane %v371, 5
        %v3796 = vrot.slane %v3795, 4
        %v3797 = vrot.slane %v372, 5
        %v3798 = vsel %vm3404, %v3796, %v3797
        %v3799 = vrot.slane %v3797, 4
        %v3800 = vrot.slane %v373, 5
        %v3801 = vsel %vm3404, %v3799, %v3800
        %v3802 = vrot.slane %v3800, 4
        %v3803 = vrot.slane %v374, 5
        %v3804 = vsel %vm3404, %v3802, %v3803
        %v3805 = vrot.slane %v3803, 4
        %v3806 = vrot.slane %v375, 5
        %v3807 = vsel %vm3404, %v3805, %v3806
        %v3808 = vrot.slane %v376, 5
        %v3809 = vrot.slane %v3808, 4
        %v3810 = vrot.slane %v377, 5
        %v3811 = vsel %vm3404, %v3809, %v3810
        %v3812 = vrot.slane %v3810, 4
        %v3813 = vrot.slane %v378, 5
        %v3814 = vsel %vm3404, %v3812, %v3813
        %v3815 = vrot.slane %v3813, 4
        %v3816 = vrot.slane %v379, 5
        %v3817 = vsel %vm3404, %v3815, %v3816
        %v3818 = vrot.slane %v3816, 4
        %v3819 = vrot.slane %v380, 5
        %v3820 = vsel %vm3404, %v3818, %v3819
        %s3821 = scalar_lea.vmem %s215, 4
        %v3822 = vld [vmem:[%s3821] sm:$0x3]
        %v3823 = vunpack.c.l.b16 %v3408
        %v3824 = vunpack.c.l.b16 %v3411
        %v3825 = vunpack.c.l.b16 %v3414
        %v3826 = vunpack.c.l.b16 %v3417
        %v3827 = vunpack.c.l.b16 %v3421
        %v3828 = vunpack.c.l.b16 %v3424
        %v3829 = vunpack.c.l.b16 %v3427
        %v3830 = vunpack.c.l.b16 %v3430
        %v3831 = vunpack.c.l.b16 %v3434
        %v3832 = vunpack.c.l.b16 %v3437
        %v3833 = vunpack.c.l.b16 %v3440
        %v3834 = vunpack.c.l.b16 %v3443
        %v3835 = vunpack.c.l.b16 %v3447
        %v3836 = vunpack.c.l.b16 %v3450
        %v3837 = vunpack.c.l.b16 %v3453
        %v3838 = vunpack.c.l.b16 %v3456
        %v3839 = vunpack.c.l.b16 %v3460
        %v3840 = vunpack.c.l.b16 %v3463
        %v3841 = vunpack.c.l.b16 %v3466
        %v3842 = vunpack.c.l.b16 %v3469
        %v3843 = vunpack.c.l.b16 %v3473
        %v3844 = vunpack.c.l.b16 %v3476
        %v3845 = vunpack.c.l.b16 %v3479
        %v3846 = vunpack.c.l.b16 %v3482
        %v3847 = vunpack.c.l.b16 %v3486
        %v3848 = vunpack.c.l.b16 %v3489
        %v3849 = vunpack.c.l.b16 %v3492
        %v3850 = vunpack.c.l.b16 %v3495
        %v3851 = vunpack.c.l.b16 %v3499
        %v3852 = vunpack.c.l.b16 %v3502
        %v3853 = vunpack.c.l.b16 %v3505
        %v3854 = vunpack.c.l.b16 %v3508
        %v3855 = vunpack.c.l.b16 %v3512
        %v3856 = vunpack.c.l.b16 %v3515
        %v3857 = vunpack.c.l.b16 %v3518
        %v3858 = vunpack.c.l.b16 %v3521
        %v3859 = vunpack.c.l.b16 %v3525
        %v3860 = vunpack.c.l.b16 %v3528
        %v3861 = vunpack.c.l.b16 %v3531
        %v3862 = vunpack.c.l.b16 %v3534
        %v3863 = vunpack.c.l.b16 %v3538
        %v3864 = vunpack.c.l.b16 %v3541
        %v3865 = vunpack.c.l.b16 %v3544
        %v3866 = vunpack.c.l.b16 %v3547
        %v3867 = vunpack.c.l.b16 %v3551
        %v3868 = vunpack.c.l.b16 %v3554
        %v3869 = vunpack.c.l.b16 %v3557
        %v3870 = vunpack.c.l.b16 %v3560
        %v3871 = vunpack.c.l.b16 %v3564
        %v3872 = vunpack.c.l.b16 %v3567
        %v3873 = vunpack.c.l.b16 %v3570
        %v3874 = vunpack.c.l.b16 %v3573
        %v3875 = vunpack.c.l.b16 %v3577
        %v3876 = vunpack.c.l.b16 %v3580
        %v3877 = vunpack.c.l.b16 %v3583
        %v3878 = vunpack.c.l.b16 %v3586
        %v3879 = vunpack.c.l.b16 %v3590
        %v3880 = vunpack.c.l.b16 %v3593
        %v3881 = vunpack.c.l.b16 %v3596
        %v3882 = vunpack.c.l.b16 %v3599
        %v3883 = vunpack.c.l.b16 %v3603
        %v3884 = vunpack.c.l.b16 %v3606
        %v3885 = vunpack.c.l.b16 %v3609
        %v3886 = vunpack.c.l.b16 %v3612
        %v3887 = vunpack.c.l.b16 %v3616
        %v3888 = vunpack.c.l.b16 %v3619
        %v3889 = vunpack.c.l.b16 %v3622
        %v3890 = vunpack.c.l.b16 %v3625
        %v3891 = vunpack.c.l.b16 %v3629
        %v3892 = vunpack.c.l.b16 %v3632
        %v3893 = vunpack.c.l.b16 %v3635
        %v3894 = vunpack.c.l.b16 %v3638
        %v3895 = vunpack.c.l.b16 %v3642
        %v3896 = vunpack.c.l.b16 %v3645
        %v3897 = vunpack.c.l.b16 %v3648
        %v3898 = vunpack.c.l.b16 %v3651
        %v3899 = vunpack.c.l.b16 %v3655
        %v3900 = vunpack.c.l.b16 %v3658
        %v3901 = vunpack.c.l.b16 %v3661
        %v3902 = vunpack.c.l.b16 %v3664
        %v3903 = vunpack.c.l.b16 %v3668
        %v3904 = vunpack.c.l.b16 %v3671
        %v3905 = vunpack.c.l.b16 %v3674
        %v3906 = vunpack.c.l.b16 %v3677
        %v3907 = vunpack.c.l.b16 %v3681
        %v3908 = vunpack.c.l.b16 %v3684
        %v3909 = vunpack.c.l.b16 %v3687
        %v3910 = vunpack.c.l.b16 %v3690
        %v3911 = vunpack.c.l.b16 %v3694
        %v3912 = vunpack.c.l.b16 %v3697
        %v3913 = vunpack.c.l.b16 %v3700
        %v3914 = vunpack.c.l.b16 %v3703
        %v3915 = vunpack.c.l.b16 %v3707
        %v3916 = vunpack.c.l.b16 %v3710
        %v3917 = vunpack.c.l.b16 %v3713
        %v3918 = vunpack.c.l.b16 %v3716
        %v3919 = vunpack.c.l.b16 %v3720
        %v3920 = vunpack.c.l.b16 %v3723
        %v3921 = vunpack.c.l.b16 %v3726
        %v3922 = vunpack.c.l.b16 %v3729
        %v3923 = vunpack.c.l.b16 %v3733
        %v3924 = vunpack.c.l.b16 %v3736
        %v3925 = vunpack.c.l.b16 %v3739
        %v3926 = vunpack.c.l.b16 %v3742
        %v3927 = vunpack.c.l.b16 %v3746
        %v3928 = vunpack.c.l.b16 %v3749
        %v3929 = vunpack.c.l.b16 %v3752
        %v3930 = vunpack.c.l.b16 %v3755
        %v3931 = vunpack.c.l.b16 %v3759
        %v3932 = vunpack.c.l.b16 %v3762
        %v3933 = vunpack.c.l.b16 %v3765
        %v3934 = vunpack.c.l.b16 %v3768
        %v3935 = vunpack.c.l.b16 %v3772
        %v3936 = vunpack.c.l.b16 %v3775
        %v3937 = vunpack.c.l.b16 %v3778
        %v3938 = vunpack.c.l.b16 %v3781
        %v3939 = vunpack.c.l.b16 %v3785
        %v3940 = vunpack.c.l.b16 %v3788
        %v3941 = vunpack.c.l.b16 %v3791
        %v3942 = vunpack.c.l.b16 %v3794
        %v3943 = vunpack.c.l.b16 %v3798
        %v3944 = vunpack.c.l.b16 %v3801
        %v3945 = vunpack.c.l.b16 %v3804
        %v3946 = vunpack.c.l.b16 %v3807
        %v3947 = vunpack.c.l.b16 %v3811
        %v3948 = vunpack.c.l.b16 %v3814
        %v3949 = vunpack.c.l.b16 %v3817
        %v3950 = vunpack.c.l.b16 %v3820
        %v3951 = vpack.c.b16 %v3824, %v3823
        %v3952 = vpack.c.b16 %v3826, %v3825
        %v3953 = vpack.c.b16 %v3828, %v3827
        %v3954 = vpack.c.b16 %v3830, %v3829
        %v3955 = vpack.c.b16 %v3832, %v3831
        %v3956 = vpack.c.b16 %v3834, %v3833
        %v3957 = vpack.c.b16 %v3836, %v3835
        %v3958 = vpack.c.b16 %v3838, %v3837
        %v3959 = vpack.c.b16 %v3840, %v3839
        %v3960 = vpack.c.b16 %v3842, %v3841
        %v3961 = vpack.c.b16 %v3844, %v3843
        %v3962 = vpack.c.b16 %v3846, %v3845
        %v3963 = vpack.c.b16 %v3848, %v3847
        %v3964 = vpack.c.b16 %v3850, %v3849
        %v3965 = vpack.c.b16 %v3852, %v3851
        %v3966 = vpack.c.b16 %v3854, %v3853
        %v3967 = vpack.c.b16 %v3856, %v3855
        %v3968 = vpack.c.b16 %v3858, %v3857
        %v3969 = vpack.c.b16 %v3860, %v3859
        %v3970 = vpack.c.b16 %v3862, %v3861
        %v3971 = vpack.c.b16 %v3864, %v3863
        %v3972 = vpack.c.b16 %v3866, %v3865
        %v3973 = vpack.c.b16 %v3868, %v3867
        %v3974 = vpack.c.b16 %v3870, %v3869
        %v3975 = vpack.c.b16 %v3872, %v3871
        %v3976 = vpack.c.b16 %v3874, %v3873
        %v3977 = vpack.c.b16 %v3876, %v3875
        %v3978 = vpack.c.b16 %v3878, %v3877
        %v3979 = vpack.c.b16 %v3880, %v3879
        %v3980 = vpack.c.b16 %v3882, %v3881
        %v3981 = vpack.c.b16 %v3884, %v3883
        %v3982 = vpack.c.b16 %v3886, %v3885
        %v3983 = vpack.c.b16 %v3888, %v3887
        %v3984 = vpack.c.b16 %v3890, %v3889
        %v3985 = vpack.c.b16 %v3892, %v3891
        %v3986 = vpack.c.b16 %v3894, %v3893
        %v3987 = vpack.c.b16 %v3896, %v3895
        %v3988 = vpack.c.b16 %v3898, %v3897
        %v3989 = vpack.c.b16 %v3900, %v3899
        %v3990 = vpack.c.b16 %v3902, %v3901
        %v3991 = vpack.c.b16 %v3904, %v3903
        %v3992 = vpack.c.b16 %v3906, %v3905
        %v3993 = vpack.c.b16 %v3908, %v3907
        %v3994 = vpack.c.b16 %v3910, %v3909
        %v3995 = vpack.c.b16 %v3912, %v3911
        %v3996 = vpack.c.b16 %v3914, %v3913
        %v3997 = vpack.c.b16 %v3916, %v3915
        %v3998 = vpack.c.b16 %v3918, %v3917
        %v3999 = vpack.c.b16 %v3920, %v3919
        %v4000 = vpack.c.b16 %v3922, %v3921
        %v4001 = vpack.c.b16 %v3924, %v3923
        %v4002 = vpack.c.b16 %v3926, %v3925
        %v4003 = vpack.c.b16 %v3928, %v3927
        %v4004 = vpack.c.b16 %v3930, %v3929
        %v4005 = vpack.c.b16 %v3932, %v3931
        %v4006 = vpack.c.b16 %v3934, %v3933
        %v4007 = vpack.c.b16 %v3936, %v3935
        %v4008 = vpack.c.b16 %v3938, %v3937
        %v4009 = vpack.c.b16 %v3940, %v3939
        %v4010 = vpack.c.b16 %v3942, %v3941
        %v4011 = vpack.c.b16 %v3944, %v3943
        %v4012 = vpack.c.b16 %v3946, %v3945
        %v4013 = vpack.c.b16 %v3948, %v3947
        %v4014 = vpack.c.b16 %v3950, %v3949
        %v4016 = vsel %vm1997, %v3951, 0
        %v4019 = vsel %vm1997, %v3952, 0
        %v4022 = vsel %vm1997, %v3953, 0
        %v4025 = vsel %vm1997, %v3954, 0
        %v4028 = vsel %vm1997, %v3955, 0
        %v4031 = vsel %vm1997, %v3956, 0
        %v4034 = vsel %vm1997, %v3957, 0
        %v4037 = vsel %vm1997, %v3958, 0
        %v4040 = vsel %vm1997, %v3959, 0
        %v4043 = vsel %vm1997, %v3960, 0
        %v4046 = vsel %vm1997, %v3961, 0
        %v4049 = vsel %vm1997, %v3962, 0
        %v4052 = vsel %vm1997, %v3963, 0
        %v4055 = vsel %vm1997, %v3964, 0
        %v4058 = vsel %vm1997, %v3965, 0
        %v4061 = vsel %vm1997, %v3966, 0
        %v4064 = vsel %vm1997, %v3967, 0
        %v4067 = vsel %vm1997, %v3968, 0
        %v4070 = vsel %vm1997, %v3969, 0
        %v4073 = vsel %vm1997, %v3970, 0
        %v4076 = vsel %vm1997, %v3971, 0
        %v4079 = vsel %vm1997, %v3972, 0
        %v4082 = vsel %vm1997, %v3973, 0
        %v4085 = vsel %vm1997, %v3974, 0
        %v4088 = vsel %vm1997, %v3975, 0
        %v4091 = vsel %vm1997, %v3976, 0
        %v4094 = vsel %vm1997, %v3977, 0
        %v4097 = vsel %vm1997, %v3978, 0
        %v4100 = vsel %vm1997, %v3979, 0
        %v4103 = vsel %vm1997, %v3980, 0
        %v4106 = vsel %vm1997, %v3981, 0
        %v4109 = vsel %vm1997, %v3982, 0
        %v4112 = vsel %vm1997, %v3983, 0
        %v4115 = vsel %vm1997, %v3984, 0
        %v4118 = vsel %vm1997, %v3985, 0
        %v4121 = vsel %vm1997, %v3986, 0
        %v4124 = vsel %vm1997, %v3987, 0
        %v4127 = vsel %vm1997, %v3988, 0
        %v4130 = vsel %vm1997, %v3989, 0
        %v4133 = vsel %vm1997, %v3990, 0
        %v4136 = vsel %vm1997, %v3991, 0
        %v4139 = vsel %vm1997, %v3992, 0
        %v4142 = vsel %vm1997, %v3993, 0
        %v4145 = vsel %vm1997, %v3994, 0
        %v4148 = vsel %vm1997, %v3995, 0
        %v4151 = vsel %vm1997, %v3996, 0
        %v4154 = vsel %vm1997, %v3997, 0
        %v4157 = vsel %vm1997, %v3998, 0
        %v4160 = vsel %vm1997, %v3999, 0
        %v4163 = vsel %vm1997, %v4000, 0
        %v4166 = vsel %vm1997, %v4001, 0
        %v4169 = vsel %vm1997, %v4002, 0
        %v4172 = vsel %vm1997, %v4003, 0
        %v4175 = vsel %vm1997, %v4004, 0
        %v4178 = vsel %vm1997, %v4005, 0
        %v4181 = vsel %vm1997, %v4006, 0
        %v4184 = vsel %vm1997, %v4007, 0
        %v4187 = vsel %vm1997, %v4008, 0
        %v4190 = vsel %vm1997, %v4009, 0
        %v4193 = vsel %vm1997, %v4010, 0
        %v4196 = vsel %vm1997, %v4011, 0
        %v4199 = vsel %vm1997, %v4012, 0
        %v4202 = vsel %vm1997, %v4013, 0
        %v4205 = vsel %vm1997, %v4014, 0
        %v4208 = vand.u32 %v3822, %v2193
        %4210 = vmatpush.bf16.msra.mxu0 0
        %4211 = vmatpush.bf16.msra.mxu0 0
        %4212 = vmatpush.bf16.msra.mxu0 0
        %4213 = vmatpush.bf16.msra.mxu0 0
        %4214 = vmatpush.bf16.msra.mxu0 0
        %4215 = vmatpush.bf16.msra.mxu0 0
        %4216 = vmatpush.bf16.msra.mxu0 0
        %4217 = vmatpush.bf16.msra.mxu0 %v4208
        %4218 = vmatmul.bf16.gmra.mxu0 %v4016
        %v4219 = vpop.f32.mrf.mxu0
        %v4220 = vadd.f32 0.0, %v4219
        %v4221 = vpop.f32.mrf.mxu0
        %v4222 = vadd.f32 0.0, %v4221
        %4223 = vmatmul.bf16.gmra.mxu0 %v4019
        %v4224 = vpop.f32.mrf.mxu0
        %v4225 = vadd.f32 0.0, %v4224
        %v4226 = vpop.f32.mrf.mxu0
        %v4227 = vadd.f32 0.0, %v4226
        %4228 = vmatmul.bf16.gmra.mxu0 %v4022
        %v4229 = vpop.f32.mrf.mxu0
        %v4230 = vadd.f32 0.0, %v4229
        %v4231 = vpop.f32.mrf.mxu0
        %v4232 = vadd.f32 0.0, %v4231
        %4233 = vmatmul.bf16.gmra.mxu0 %v4025
        %v4234 = vpop.f32.mrf.mxu0
        %v4235 = vadd.f32 0.0, %v4234
        %v4236 = vpop.f32.mrf.mxu0
        %v4237 = vadd.f32 0.0, %v4236
        %4238 = vmatmul.bf16.gmra.mxu0 %v4028
        %v4239 = vpop.f32.mrf.mxu0
        %v4240 = vadd.f32 0.0, %v4239
        %v4241 = vpop.f32.mrf.mxu0
        %v4242 = vadd.f32 0.0, %v4241
        %4243 = vmatmul.bf16.gmra.mxu0 %v4031
        %v4244 = vpop.f32.mrf.mxu0
        %v4245 = vadd.f32 0.0, %v4244
        %v4246 = vpop.f32.mrf.mxu0
        %v4247 = vadd.f32 0.0, %v4246
        %4248 = vmatmul.bf16.gmra.mxu0 %v4034
        %v4249 = vpop.f32.mrf.mxu0
        %v4250 = vadd.f32 0.0, %v4249
        %v4251 = vpop.f32.mrf.mxu0
        %v4252 = vadd.f32 0.0, %v4251
        %4253 = vmatmul.bf16.gmra.mxu0 %v4037
        %v4254 = vpop.f32.mrf.mxu0
        %v4255 = vadd.f32 0.0, %v4254
        %v4256 = vpop.f32.mrf.mxu0
        %v4257 = vadd.f32 0.0, %v4256
        %4258 = vmatmul.bf16.gmra.mxu0 %v4040
        %v4259 = vpop.f32.mrf.mxu0
        %v4260 = vadd.f32 0.0, %v4259
        %v4261 = vpop.f32.mrf.mxu0
        %v4262 = vadd.f32 0.0, %v4261
        %4263 = vmatmul.bf16.gmra.mxu0 %v4043
        %v4264 = vpop.f32.mrf.mxu0
        %v4265 = vadd.f32 0.0, %v4264
        %v4266 = vpop.f32.mrf.mxu0
        %v4267 = vadd.f32 0.0, %v4266
        %4268 = vmatmul.bf16.gmra.mxu0 %v4046
        %v4269 = vpop.f32.mrf.mxu0
        %v4270 = vadd.f32 0.0, %v4269
        %v4271 = vpop.f32.mrf.mxu0
        %v4272 = vadd.f32 0.0, %v4271
        %4273 = vmatmul.bf16.gmra.mxu0 %v4049
        %v4274 = vpop.f32.mrf.mxu0
        %v4275 = vadd.f32 0.0, %v4274
        %v4276 = vpop.f32.mrf.mxu0
        %v4277 = vadd.f32 0.0, %v4276
        %4278 = vmatmul.bf16.gmra.mxu0 %v4052
        %v4279 = vpop.f32.mrf.mxu0
        %v4280 = vadd.f32 0.0, %v4279
        %v4281 = vpop.f32.mrf.mxu0
        %v4282 = vadd.f32 0.0, %v4281
        %4283 = vmatmul.bf16.gmra.mxu0 %v4055
        %v4284 = vpop.f32.mrf.mxu0
        %v4285 = vadd.f32 0.0, %v4284
        %v4286 = vpop.f32.mrf.mxu0
        %v4287 = vadd.f32 0.0, %v4286
        %4288 = vmatmul.bf16.gmra.mxu0 %v4058
        %v4289 = vpop.f32.mrf.mxu0
        %v4290 = vadd.f32 0.0, %v4289
        %v4291 = vpop.f32.mrf.mxu0
        %v4292 = vadd.f32 0.0, %v4291
        %4293 = vmatmul.bf16.gmra.mxu0 %v4061
        %v4294 = vpop.f32.mrf.mxu0
        %v4295 = vadd.f32 0.0, %v4294
        %v4296 = vpop.f32.mrf.mxu0
        %v4297 = vadd.f32 0.0, %v4296
        %4298 = vmatmul.bf16.gmra.mxu0 %v4064
        %v4299 = vpop.f32.mrf.mxu0
        %v4300 = vadd.f32 0.0, %v4299
        %v4301 = vpop.f32.mrf.mxu0
        %v4302 = vadd.f32 0.0, %v4301
        %4303 = vmatmul.bf16.gmra.mxu0 %v4067
        %v4304 = vpop.f32.mrf.mxu0
        %v4305 = vadd.f32 0.0, %v4304
        %v4306 = vpop.f32.mrf.mxu0
        %v4307 = vadd.f32 0.0, %v4306
        %4308 = vmatmul.bf16.gmra.mxu0 %v4070
        %v4309 = vpop.f32.mrf.mxu0
        %v4310 = vadd.f32 0.0, %v4309
        %v4311 = vpop.f32.mrf.mxu0
        %v4312 = vadd.f32 0.0, %v4311
        %4313 = vmatmul.bf16.gmra.mxu0 %v4073
        %v4314 = vpop.f32.mrf.mxu0
        %v4315 = vadd.f32 0.0, %v4314
        %v4316 = vpop.f32.mrf.mxu0
        %v4317 = vadd.f32 0.0, %v4316
        %4318 = vmatmul.bf16.gmra.mxu0 %v4076
        %v4319 = vpop.f32.mrf.mxu0
        %v4320 = vadd.f32 0.0, %v4319
        %v4321 = vpop.f32.mrf.mxu0
        %v4322 = vadd.f32 0.0, %v4321
        %4323 = vmatmul.bf16.gmra.mxu0 %v4079
        %v4324 = vpop.f32.mrf.mxu0
        %v4325 = vadd.f32 0.0, %v4324
        %v4326 = vpop.f32.mrf.mxu0
        %v4327 = vadd.f32 0.0, %v4326
        %4328 = vmatmul.bf16.gmra.mxu0 %v4082
        %v4329 = vpop.f32.mrf.mxu0
        %v4330 = vadd.f32 0.0, %v4329
        %v4331 = vpop.f32.mrf.mxu0
        %v4332 = vadd.f32 0.0, %v4331
        %4333 = vmatmul.bf16.gmra.mxu0 %v4085
        %v4334 = vpop.f32.mrf.mxu0
        %v4335 = vadd.f32 0.0, %v4334
        %v4336 = vpop.f32.mrf.mxu0
        %v4337 = vadd.f32 0.0, %v4336
        %4338 = vmatmul.bf16.gmra.mxu0 %v4088
        %v4339 = vpop.f32.mrf.mxu0
        %v4340 = vadd.f32 0.0, %v4339
        %v4341 = vpop.f32.mrf.mxu0
        %v4342 = vadd.f32 0.0, %v4341
        %4343 = vmatmul.bf16.gmra.mxu0 %v4091
        %v4344 = vpop.f32.mrf.mxu0
        %v4345 = vadd.f32 0.0, %v4344
        %v4346 = vpop.f32.mrf.mxu0
        %v4347 = vadd.f32 0.0, %v4346
        %4348 = vmatmul.bf16.gmra.mxu0 %v4094
        %v4349 = vpop.f32.mrf.mxu0
        %v4350 = vadd.f32 0.0, %v4349
        %v4351 = vpop.f32.mrf.mxu0
        %v4352 = vadd.f32 0.0, %v4351
        %4353 = vmatmul.bf16.gmra.mxu0 %v4097
        %v4354 = vpop.f32.mrf.mxu0
        %v4355 = vadd.f32 0.0, %v4354
        %v4356 = vpop.f32.mrf.mxu0
        %v4357 = vadd.f32 0.0, %v4356
        %4358 = vmatmul.bf16.gmra.mxu0 %v4100
        %v4359 = vpop.f32.mrf.mxu0
        %v4360 = vadd.f32 0.0, %v4359
        %v4361 = vpop.f32.mrf.mxu0
        %v4362 = vadd.f32 0.0, %v4361
        %4363 = vmatmul.bf16.gmra.mxu0 %v4103
        %v4364 = vpop.f32.mrf.mxu0
        %v4365 = vadd.f32 0.0, %v4364
        %v4366 = vpop.f32.mrf.mxu0
        %v4367 = vadd.f32 0.0, %v4366
        %4368 = vmatmul.bf16.gmra.mxu0 %v4106
        %v4369 = vpop.f32.mrf.mxu0
        %v4370 = vadd.f32 0.0, %v4369
        %v4371 = vpop.f32.mrf.mxu0
        %v4372 = vadd.f32 0.0, %v4371
        %4373 = vmatmul.bf16.gmra.mxu0 %v4109
        %v4374 = vpop.f32.mrf.mxu0
        %v4375 = vadd.f32 0.0, %v4374
        %v4376 = vpop.f32.mrf.mxu0
        %v4377 = vadd.f32 0.0, %v4376
        %4378 = vmatmul.bf16.gmra.mxu0 %v4112
        %v4379 = vpop.f32.mrf.mxu0
        %v4380 = vadd.f32 0.0, %v4379
        %v4381 = vpop.f32.mrf.mxu0
        %v4382 = vadd.f32 0.0, %v4381
        %4383 = vmatmul.bf16.gmra.mxu0 %v4115
        %v4384 = vpop.f32.mrf.mxu0
        %v4385 = vadd.f32 0.0, %v4384
        %v4386 = vpop.f32.mrf.mxu0
        %v4387 = vadd.f32 0.0, %v4386
        %4388 = vmatmul.bf16.gmra.mxu0 %v4118
        %v4389 = vpop.f32.mrf.mxu0
        %v4390 = vadd.f32 0.0, %v4389
        %v4391 = vpop.f32.mrf.mxu0
        %v4392 = vadd.f32 0.0, %v4391
        %4393 = vmatmul.bf16.gmra.mxu0 %v4121
        %v4394 = vpop.f32.mrf.mxu0
        %v4395 = vadd.f32 0.0, %v4394
        %v4396 = vpop.f32.mrf.mxu0
        %v4397 = vadd.f32 0.0, %v4396
        %4398 = vmatmul.bf16.gmra.mxu0 %v4124
        %v4399 = vpop.f32.mrf.mxu0
        %v4400 = vadd.f32 0.0, %v4399
        %v4401 = vpop.f32.mrf.mxu0
        %v4402 = vadd.f32 0.0, %v4401
        %4403 = vmatmul.bf16.gmra.mxu0 %v4127
        %v4404 = vpop.f32.mrf.mxu0
        %v4405 = vadd.f32 0.0, %v4404
        %v4406 = vpop.f32.mrf.mxu0
        %v4407 = vadd.f32 0.0, %v4406
        %4408 = vmatmul.bf16.gmra.mxu0 %v4130
        %v4409 = vpop.f32.mrf.mxu0
        %v4410 = vadd.f32 0.0, %v4409
        %v4411 = vpop.f32.mrf.mxu0
        %v4412 = vadd.f32 0.0, %v4411
        %4413 = vmatmul.bf16.gmra.mxu0 %v4133
        %v4414 = vpop.f32.mrf.mxu0
        %v4415 = vadd.f32 0.0, %v4414
        %v4416 = vpop.f32.mrf.mxu0
        %v4417 = vadd.f32 0.0, %v4416
        %4418 = vmatmul.bf16.gmra.mxu0 %v4136
        %v4419 = vpop.f32.mrf.mxu0
        %v4420 = vadd.f32 0.0, %v4419
        %v4421 = vpop.f32.mrf.mxu0
        %v4422 = vadd.f32 0.0, %v4421
        %4423 = vmatmul.bf16.gmra.mxu0 %v4139
        %v4424 = vpop.f32.mrf.mxu0
        %v4425 = vadd.f32 0.0, %v4424
        %v4426 = vpop.f32.mrf.mxu0
        %v4427 = vadd.f32 0.0, %v4426
        %4428 = vmatmul.bf16.gmra.mxu0 %v4142
        %v4429 = vpop.f32.mrf.mxu0
        %v4430 = vadd.f32 0.0, %v4429
        %v4431 = vpop.f32.mrf.mxu0
        %v4432 = vadd.f32 0.0, %v4431
        %4433 = vmatmul.bf16.gmra.mxu0 %v4145
        %v4434 = vpop.f32.mrf.mxu0
        %v4435 = vadd.f32 0.0, %v4434
        %v4436 = vpop.f32.mrf.mxu0
        %v4437 = vadd.f32 0.0, %v4436
        %4438 = vmatmul.bf16.gmra.mxu0 %v4148
        %v4439 = vpop.f32.mrf.mxu0
        %v4440 = vadd.f32 0.0, %v4439
        %v4441 = vpop.f32.mrf.mxu0
        %v4442 = vadd.f32 0.0, %v4441
        %4443 = vmatmul.bf16.gmra.mxu0 %v4151
        %v4444 = vpop.f32.mrf.mxu0
        %v4445 = vadd.f32 0.0, %v4444
        %v4446 = vpop.f32.mrf.mxu0
        %v4447 = vadd.f32 0.0, %v4446
        %4448 = vmatmul.bf16.gmra.mxu0 %v4154
        %v4449 = vpop.f32.mrf.mxu0
        %v4450 = vadd.f32 0.0, %v4449
        %v4451 = vpop.f32.mrf.mxu0
        %v4452 = vadd.f32 0.0, %v4451
        %4453 = vmatmul.bf16.gmra.mxu0 %v4157
        %v4454 = vpop.f32.mrf.mxu0
        %v4455 = vadd.f32 0.0, %v4454
        %v4456 = vpop.f32.mrf.mxu0
        %v4457 = vadd.f32 0.0, %v4456
        %4458 = vmatmul.bf16.gmra.mxu0 %v4160
        %v4459 = vpop.f32.mrf.mxu0
        %v4460 = vadd.f32 0.0, %v4459
        %v4461 = vpop.f32.mrf.mxu0
        %v4462 = vadd.f32 0.0, %v4461
        %4463 = vmatmul.bf16.gmra.mxu0 %v4163
        %v4464 = vpop.f32.mrf.mxu0
        %v4465 = vadd.f32 0.0, %v4464
        %v4466 = vpop.f32.mrf.mxu0
        %v4467 = vadd.f32 0.0, %v4466
        %4468 = vmatmul.bf16.gmra.mxu0 %v4166
        %v4469 = vpop.f32.mrf.mxu0
        %v4470 = vadd.f32 0.0, %v4469
        %v4471 = vpop.f32.mrf.mxu0
        %v4472 = vadd.f32 0.0, %v4471
        %4473 = vmatmul.bf16.gmra.mxu0 %v4169
        %v4474 = vpop.f32.mrf.mxu0
        %v4475 = vadd.f32 0.0, %v4474
        %v4476 = vpop.f32.mrf.mxu0
        %v4477 = vadd.f32 0.0, %v4476
        %4478 = vmatmul.bf16.gmra.mxu0 %v4172
        %v4479 = vpop.f32.mrf.mxu0
        %v4480 = vadd.f32 0.0, %v4479
        %v4481 = vpop.f32.mrf.mxu0
        %v4482 = vadd.f32 0.0, %v4481
        %4483 = vmatmul.bf16.gmra.mxu0 %v4175
        %v4484 = vpop.f32.mrf.mxu0
        %v4485 = vadd.f32 0.0, %v4484
        %v4486 = vpop.f32.mrf.mxu0
        %v4487 = vadd.f32 0.0, %v4486
        %4488 = vmatmul.bf16.gmra.mxu0 %v4178
        %v4489 = vpop.f32.mrf.mxu0
        %v4490 = vadd.f32 0.0, %v4489
        %v4491 = vpop.f32.mrf.mxu0
        %v4492 = vadd.f32 0.0, %v4491
        %4493 = vmatmul.bf16.gmra.mxu0 %v4181
        %v4494 = vpop.f32.mrf.mxu0
        %v4495 = vadd.f32 0.0, %v4494
        %v4496 = vpop.f32.mrf.mxu0
        %v4497 = vadd.f32 0.0, %v4496
        %4498 = vmatmul.bf16.gmra.mxu0 %v4184
        %v4499 = vpop.f32.mrf.mxu0
        %v4500 = vadd.f32 0.0, %v4499
        %v4501 = vpop.f32.mrf.mxu0
        %v4502 = vadd.f32 0.0, %v4501
        %4503 = vmatmul.bf16.gmra.mxu0 %v4187
        %v4504 = vpop.f32.mrf.mxu0
        %v4505 = vadd.f32 0.0, %v4504
        %v4506 = vpop.f32.mrf.mxu0
        %v4507 = vadd.f32 0.0, %v4506
        %4508 = vmatmul.bf16.gmra.mxu0 %v4190
        %v4509 = vpop.f32.mrf.mxu0
        %v4510 = vadd.f32 0.0, %v4509
        %v4511 = vpop.f32.mrf.mxu0
        %v4512 = vadd.f32 0.0, %v4511
        %4513 = vmatmul.bf16.gmra.mxu0 %v4193
        %v4514 = vpop.f32.mrf.mxu0
        %v4515 = vadd.f32 0.0, %v4514
        %v4516 = vpop.f32.mrf.mxu0
        %v4517 = vadd.f32 0.0, %v4516
        %4518 = vmatmul.bf16.gmra.mxu0 %v4196
        %v4519 = vpop.f32.mrf.mxu0
        %v4520 = vadd.f32 0.0, %v4519
        %v4521 = vpop.f32.mrf.mxu0
        %v4522 = vadd.f32 0.0, %v4521
        %4523 = vmatmul.bf16.gmra.mxu0 %v4199
        %v4524 = vpop.f32.mrf.mxu0
        %v4525 = vadd.f32 0.0, %v4524
        %v4526 = vpop.f32.mrf.mxu0
        %v4527 = vadd.f32 0.0, %v4526
        %4528 = vmatmul.bf16.gmra.mxu0 %v4202
        %v4529 = vpop.f32.mrf.mxu0
        %v4530 = vadd.f32 0.0, %v4529
        %v4531 = vpop.f32.mrf.mxu0
        %v4532 = vadd.f32 0.0, %v4531
        %4533 = vmatmul.bf16.gmra.mxu0 %v4205
        %v4534 = vpop.f32.mrf.mxu0
        %v4535 = vadd.f32 0.0, %v4534
        %v4536 = vpop.f32.mrf.mxu0
        %v4537 = vadd.f32 0.0, %v4536
        %4538 = vdwg.mxu0
        %v4539 = vadd.f32 %v3051, %v4220
        %v4540 = vadd.f32 %v3053, %v4222
        %v4541 = vadd.f32 %v3056, %v4225
        %v4542 = vadd.f32 %v3058, %v4227
        %v4543 = vadd.f32 %v3061, %v4230
        %v4544 = vadd.f32 %v3063, %v4232
        %v4545 = vadd.f32 %v3066, %v4235
        %v4546 = vadd.f32 %v3068, %v4237
        %v4547 = vadd.f32 %v3071, %v4240
        %v4548 = vadd.f32 %v3073, %v4242
        %v4549 = vadd.f32 %v3076, %v4245
        %v4550 = vadd.f32 %v3078, %v4247
        %v4551 = vadd.f32 %v3081, %v4250
        %v4552 = vadd.f32 %v3083, %v4252
        %v4553 = vadd.f32 %v3086, %v4255
        %v4554 = vadd.f32 %v3088, %v4257
        %v4555 = vadd.f32 %v3091, %v4260
        %v4556 = vadd.f32 %v3093, %v4262
        %v4557 = vadd.f32 %v3096, %v4265
        %v4558 = vadd.f32 %v3098, %v4267
        %v4559 = vadd.f32 %v3101, %v4270
        %v4560 = vadd.f32 %v3103, %v4272
        %v4561 = vadd.f32 %v3106, %v4275
        %v4562 = vadd.f32 %v3108, %v4277
        %v4563 = vadd.f32 %v3111, %v4280
        %v4564 = vadd.f32 %v3113, %v4282
        %v4565 = vadd.f32 %v3116, %v4285
        %v4566 = vadd.f32 %v3118, %v4287
        %v4567 = vadd.f32 %v3121, %v4290
        %v4568 = vadd.f32 %v3123, %v4292
        %v4569 = vadd.f32 %v3126, %v4295
        %v4570 = vadd.f32 %v3128, %v4297
        %v4571 = vadd.f32 %v3131, %v4300
        %v4572 = vadd.f32 %v3133, %v4302
        %v4573 = vadd.f32 %v3136, %v4305
        %v4574 = vadd.f32 %v3138, %v4307
        %v4575 = vadd.f32 %v3141, %v4310
        %v4576 = vadd.f32 %v3143, %v4312
        %v4577 = vadd.f32 %v3146, %v4315
        %v4578 = vadd.f32 %v3148, %v4317
        %v4579 = vadd.f32 %v3151, %v4320
        %v4580 = vadd.f32 %v3153, %v4322
        %v4581 = vadd.f32 %v3156, %v4325
        %v4582 = vadd.f32 %v3158, %v4327
        %v4583 = vadd.f32 %v3161, %v4330
        %v4584 = vadd.f32 %v3163, %v4332
        %v4585 = vadd.f32 %v3166, %v4335
        %v4586 = vadd.f32 %v3168, %v4337
        %v4587 = vadd.f32 %v3171, %v4340
        %v4588 = vadd.f32 %v3173, %v4342
        %v4589 = vadd.f32 %v3176, %v4345
        %v4590 = vadd.f32 %v3178, %v4347
        %v4591 = vadd.f32 %v3181, %v4350
        %v4592 = vadd.f32 %v3183, %v4352
        %v4593 = vadd.f32 %v3186, %v4355
        %v4594 = vadd.f32 %v3188, %v4357
        %v4595 = vadd.f32 %v3191, %v4360
        %v4596 = vadd.f32 %v3193, %v4362
        %v4597 = vadd.f32 %v3196, %v4365
        %v4598 = vadd.f32 %v3198, %v4367
        %v4599 = vadd.f32 %v3201, %v4370
        %v4600 = vadd.f32 %v3203, %v4372
        %v4601 = vadd.f32 %v3206, %v4375
        %v4602 = vadd.f32 %v3208, %v4377
        %v4603 = vadd.f32 %v3211, %v4380
        %v4604 = vadd.f32 %v3213, %v4382
        %v4605 = vadd.f32 %v3216, %v4385
        %v4606 = vadd.f32 %v3218, %v4387
        %v4607 = vadd.f32 %v3221, %v4390
        %v4608 = vadd.f32 %v3223, %v4392
        %v4609 = vadd.f32 %v3226, %v4395
        %v4610 = vadd.f32 %v3228, %v4397
        %v4611 = vadd.f32 %v3231, %v4400
        %v4612 = vadd.f32 %v3233, %v4402
        %v4613 = vadd.f32 %v3236, %v4405
        %v4614 = vadd.f32 %v3238, %v4407
        %v4615 = vadd.f32 %v3241, %v4410
        %v4616 = vadd.f32 %v3243, %v4412
        %v4617 = vadd.f32 %v3246, %v4415
        %v4618 = vadd.f32 %v3248, %v4417
        %v4619 = vadd.f32 %v3251, %v4420
        %v4620 = vadd.f32 %v3253, %v4422
        %v4621 = vadd.f32 %v3256, %v4425
        %v4622 = vadd.f32 %v3258, %v4427
        %v4623 = vadd.f32 %v3261, %v4430
        %v4624 = vadd.f32 %v3263, %v4432
        %v4625 = vadd.f32 %v3266, %v4435
        %v4626 = vadd.f32 %v3268, %v4437
        %v4627 = vadd.f32 %v3271, %v4440
        %v4628 = vadd.f32 %v3273, %v4442
        %v4629 = vadd.f32 %v3276, %v4445
        %v4630 = vadd.f32 %v3278, %v4447
        %v4631 = vadd.f32 %v3281, %v4450
        %v4632 = vadd.f32 %v3283, %v4452
        %v4633 = vadd.f32 %v3286, %v4455
        %v4634 = vadd.f32 %v3288, %v4457
        %v4635 = vadd.f32 %v3291, %v4460
        %v4636 = vadd.f32 %v3293, %v4462
        %v4637 = vadd.f32 %v3296, %v4465
        %v4638 = vadd.f32 %v3298, %v4467
        %v4639 = vadd.f32 %v3301, %v4470
        %v4640 = vadd.f32 %v3303, %v4472
        %v4641 = vadd.f32 %v3306, %v4475
        %v4642 = vadd.f32 %v3308, %v4477
        %v4643 = vadd.f32 %v3311, %v4480
        %v4644 = vadd.f32 %v3313, %v4482
        %v4645 = vadd.f32 %v3316, %v4485
        %v4646 = vadd.f32 %v3318, %v4487
        %v4647 = vadd.f32 %v3321, %v4490
        %v4648 = vadd.f32 %v3323, %v4492
        %v4649 = vadd.f32 %v3326, %v4495
        %v4650 = vadd.f32 %v3328, %v4497
        %v4651 = vadd.f32 %v3331, %v4500
        %v4652 = vadd.f32 %v3333, %v4502
        %v4653 = vadd.f32 %v3336, %v4505
        %v4654 = vadd.f32 %v3338, %v4507
        %v4655 = vadd.f32 %v3341, %v4510
        %v4656 = vadd.f32 %v3343, %v4512
        %v4657 = vadd.f32 %v3346, %v4515
        %v4658 = vadd.f32 %v3348, %v4517
        %v4659 = vadd.f32 %v3351, %v4520
        %v4660 = vadd.f32 %v3353, %v4522
        %v4661 = vadd.f32 %v3356, %v4525
        %v4662 = vadd.f32 %v3358, %v4527
        %v4663 = vadd.f32 %v3361, %v4530
        %v4664 = vadd.f32 %v3363, %v4532
        %v4665 = vadd.f32 %v3366, %v4535
        %v4666 = vadd.f32 %v3368, %v4537
        %s4667 = scalar_lea.vmem %s215, 6
        %v4668 = vld [vmem:[%s4667] sm:$0x3]
        %v4673 = vunpack.c.l.b16 %v381
        %v4674 = vunpack.c.l.b16 %v382
        %v4675 = vunpack.c.l.b16 %v383
        %v4676 = vunpack.c.l.b16 %v384
        %v4677 = vpack.c.b16 %v4674, %v4673
        %v4678 = vpack.c.b16 %v4676, %v4675
        %v4680 = vsel %vm1997, %v4677, 0
        %v4683 = vsel %vm1997, %v4678, 0
        %v4686 = vand.u32 %v4668, %v2193
        %4688 = vmatpush.bf16.msra.mxu0 0
        %4689 = vmatpush.bf16.msra.mxu0 0
        %4690 = vmatpush.bf16.msra.mxu0 0
        %4691 = vmatpush.bf16.msra.mxu0 0
        %4692 = vmatpush.bf16.msra.mxu0 0
        %4693 = vmatpush.bf16.msra.mxu0 0
        %4694 = vmatpush.bf16.msra.mxu0 0
        %4695 = vmatpush.bf16.msra.mxu0 %v4686
        %4696 = vmatmul.bf16.gmra.mxu0 %v2853
        %v4697 = vpop.f32.mrf.mxu0
        %v4698 = vadd.f32 0.0, %v4697
        %v4699 = vpop.f32.mrf.mxu0
        %v4700 = vadd.f32 0.0, %v4699
        %4701 = vmatmul.bf16.gmra.mxu0 %v2856
        %v4702 = vpop.f32.mrf.mxu0
        %v4703 = vadd.f32 0.0, %v4702
        %v4704 = vpop.f32.mrf.mxu0
        %v4705 = vadd.f32 0.0, %v4704
        %4706 = vmatmul.bf16.gmra.mxu0 %v2859
        %v4707 = vpop.f32.mrf.mxu0
        %v4708 = vadd.f32 0.0, %v4707
        %v4709 = vpop.f32.mrf.mxu0
        %v4710 = vadd.f32 0.0, %v4709
        %4711 = vmatmul.bf16.gmra.mxu0 %v2862
        %v4712 = vpop.f32.mrf.mxu0
        %v4713 = vadd.f32 0.0, %v4712
        %v4714 = vpop.f32.mrf.mxu0
        %v4715 = vadd.f32 0.0, %v4714
        %4716 = vmatmul.bf16.gmra.mxu0 %v2865
        %v4717 = vpop.f32.mrf.mxu0
        %v4718 = vadd.f32 0.0, %v4717
        %v4719 = vpop.f32.mrf.mxu0
        %v4720 = vadd.f32 0.0, %v4719
        %4721 = vmatmul.bf16.gmra.mxu0 %v2868
        %v4722 = vpop.f32.mrf.mxu0
        %v4723 = vadd.f32 0.0, %v4722
        %v4724 = vpop.f32.mrf.mxu0
        %v4725 = vadd.f32 0.0, %v4724
        %4726 = vmatmul.bf16.gmra.mxu0 %v2871
        %v4727 = vpop.f32.mrf.mxu0
        %v4728 = vadd.f32 0.0, %v4727
        %v4729 = vpop.f32.mrf.mxu0
        %v4730 = vadd.f32 0.0, %v4729
        %4731 = vmatmul.bf16.gmra.mxu0 %v2874
        %v4732 = vpop.f32.mrf.mxu0
        %v4733 = vadd.f32 0.0, %v4732
        %v4734 = vpop.f32.mrf.mxu0
        %v4735 = vadd.f32 0.0, %v4734
        %4736 = vmatmul.bf16.gmra.mxu0 %v2877
        %v4737 = vpop.f32.mrf.mxu0
        %v4738 = vadd.f32 0.0, %v4737
        %v4739 = vpop.f32.mrf.mxu0
        %v4740 = vadd.f32 0.0, %v4739
        %4741 = vmatmul.bf16.gmra.mxu0 %v2880
        %v4742 = vpop.f32.mrf.mxu0
        %v4743 = vadd.f32 0.0, %v4742
        %v4744 = vpop.f32.mrf.mxu0
        %v4745 = vadd.f32 0.0, %v4744
        %4746 = vmatmul.bf16.gmra.mxu0 %v2883
        %v4747 = vpop.f32.mrf.mxu0
        %v4748 = vadd.f32 0.0, %v4747
        %v4749 = vpop.f32.mrf.mxu0
        %v4750 = vadd.f32 0.0, %v4749
        %4751 = vmatmul.bf16.gmra.mxu0 %v2886
        %v4752 = vpop.f32.mrf.mxu0
        %v4753 = vadd.f32 0.0, %v4752
        %v4754 = vpop.f32.mrf.mxu0
        %v4755 = vadd.f32 0.0, %v4754
        %4756 = vmatmul.bf16.gmra.mxu0 %v2889
        %v4757 = vpop.f32.mrf.mxu0
        %v4758 = vadd.f32 0.0, %v4757
        %v4759 = vpop.f32.mrf.mxu0
        %v4760 = vadd.f32 0.0, %v4759
        %4761 = vmatmul.bf16.gmra.mxu0 %v2892
        %v4762 = vpop.f32.mrf.mxu0
        %v4763 = vadd.f32 0.0, %v4762
        %v4764 = vpop.f32.mrf.mxu0
        %v4765 = vadd.f32 0.0, %v4764
        %4766 = vmatmul.bf16.gmra.mxu0 %v2895
        %v4767 = vpop.f32.mrf.mxu0
        %v4768 = vadd.f32 0.0, %v4767
        %v4769 = vpop.f32.mrf.mxu0
        %v4770 = vadd.f32 0.0, %v4769
        %4771 = vmatmul.bf16.gmra.mxu0 %v2898
        %v4772 = vpop.f32.mrf.mxu0
        %v4773 = vadd.f32 0.0, %v4772
        %v4774 = vpop.f32.mrf.mxu0
        %v4775 = vadd.f32 0.0, %v4774
        %4776 = vmatmul.bf16.gmra.mxu0 %v2901
        %v4777 = vpop.f32.mrf.mxu0
        %v4778 = vadd.f32 0.0, %v4777
        %v4779 = vpop.f32.mrf.mxu0
        %v4780 = vadd.f32 0.0, %v4779
        %4781 = vmatmul.bf16.gmra.mxu0 %v2904
        %v4782 = vpop.f32.mrf.mxu0
        %v4783 = vadd.f32 0.0, %v4782
        %v4784 = vpop.f32.mrf.mxu0
        %v4785 = vadd.f32 0.0, %v4784
        %4786 = vmatmul.bf16.gmra.mxu0 %v2907
        %v4787 = vpop.f32.mrf.mxu0
        %v4788 = vadd.f32 0.0, %v4787
        %v4789 = vpop.f32.mrf.mxu0
        %v4790 = vadd.f32 0.0, %v4789
        %4791 = vmatmul.bf16.gmra.mxu0 %v2910
        %v4792 = vpop.f32.mrf.mxu0
        %v4793 = vadd.f32 0.0, %v4792
        %v4794 = vpop.f32.mrf.mxu0
        %v4795 = vadd.f32 0.0, %v4794
        %4796 = vmatmul.bf16.gmra.mxu0 %v2913
        %v4797 = vpop.f32.mrf.mxu0
        %v4798 = vadd.f32 0.0, %v4797
        %v4799 = vpop.f32.mrf.mxu0
        %v4800 = vadd.f32 0.0, %v4799
        %4801 = vmatmul.bf16.gmra.mxu0 %v2916
        %v4802 = vpop.f32.mrf.mxu0
        %v4803 = vadd.f32 0.0, %v4802
        %v4804 = vpop.f32.mrf.mxu0
        %v4805 = vadd.f32 0.0, %v4804
        %4806 = vmatmul.bf16.gmra.mxu0 %v2919
        %v4807 = vpop.f32.mrf.mxu0
        %v4808 = vadd.f32 0.0, %v4807
        %v4809 = vpop.f32.mrf.mxu0
        %v4810 = vadd.f32 0.0, %v4809
        %4811 = vmatmul.bf16.gmra.mxu0 %v2922
        %v4812 = vpop.f32.mrf.mxu0
        %v4813 = vadd.f32 0.0, %v4812
        %v4814 = vpop.f32.mrf.mxu0
        %v4815 = vadd.f32 0.0, %v4814
        %4816 = vmatmul.bf16.gmra.mxu0 %v2925
        %v4817 = vpop.f32.mrf.mxu0
        %v4818 = vadd.f32 0.0, %v4817
        %v4819 = vpop.f32.mrf.mxu0
        %v4820 = vadd.f32 0.0, %v4819
        %4821 = vmatmul.bf16.gmra.mxu0 %v2928
        %v4822 = vpop.f32.mrf.mxu0
        %v4823 = vadd.f32 0.0, %v4822
        %v4824 = vpop.f32.mrf.mxu0
        %v4825 = vadd.f32 0.0, %v4824
        %4826 = vmatmul.bf16.gmra.mxu0 %v2931
        %v4827 = vpop.f32.mrf.mxu0
        %v4828 = vadd.f32 0.0, %v4827
        %v4829 = vpop.f32.mrf.mxu0
        %v4830 = vadd.f32 0.0, %v4829
        %4831 = vmatmul.bf16.gmra.mxu0 %v2934
        %v4832 = vpop.f32.mrf.mxu0
        %v4833 = vadd.f32 0.0, %v4832
        %v4834 = vpop.f32.mrf.mxu0
        %v4835 = vadd.f32 0.0, %v4834
        %4836 = vmatmul.bf16.gmra.mxu0 %v2937
        %v4837 = vpop.f32.mrf.mxu0
        %v4838 = vadd.f32 0.0, %v4837
        %v4839 = vpop.f32.mrf.mxu0
        %v4840 = vadd.f32 0.0, %v4839
        %4841 = vmatmul.bf16.gmra.mxu0 %v2940
        %v4842 = vpop.f32.mrf.mxu0
        %v4843 = vadd.f32 0.0, %v4842
        %v4844 = vpop.f32.mrf.mxu0
        %v4845 = vadd.f32 0.0, %v4844
        %4846 = vmatmul.bf16.gmra.mxu0 %v2943
        %v4847 = vpop.f32.mrf.mxu0
        %v4848 = vadd.f32 0.0, %v4847
        %v4849 = vpop.f32.mrf.mxu0
        %v4850 = vadd.f32 0.0, %v4849
        %4851 = vmatmul.bf16.gmra.mxu0 %v2946
        %v4852 = vpop.f32.mrf.mxu0
        %v4853 = vadd.f32 0.0, %v4852
        %v4854 = vpop.f32.mrf.mxu0
        %v4855 = vadd.f32 0.0, %v4854
        %4856 = vmatmul.bf16.gmra.mxu0 %v2949
        %v4857 = vpop.f32.mrf.mxu0
        %v4858 = vadd.f32 0.0, %v4857
        %v4859 = vpop.f32.mrf.mxu0
        %v4860 = vadd.f32 0.0, %v4859
        %4861 = vmatmul.bf16.gmra.mxu0 %v2952
        %v4862 = vpop.f32.mrf.mxu0
        %v4863 = vadd.f32 0.0, %v4862
        %v4864 = vpop.f32.mrf.mxu0
        %v4865 = vadd.f32 0.0, %v4864
        %4866 = vmatmul.bf16.gmra.mxu0 %v2955
        %v4867 = vpop.f32.mrf.mxu0
        %v4868 = vadd.f32 0.0, %v4867
        %v4869 = vpop.f32.mrf.mxu0
        %v4870 = vadd.f32 0.0, %v4869
        %4871 = vmatmul.bf16.gmra.mxu0 %v2958
        %v4872 = vpop.f32.mrf.mxu0
        %v4873 = vadd.f32 0.0, %v4872
        %v4874 = vpop.f32.mrf.mxu0
        %v4875 = vadd.f32 0.0, %v4874
        %4876 = vmatmul.bf16.gmra.mxu0 %v2961
        %v4877 = vpop.f32.mrf.mxu0
        %v4878 = vadd.f32 0.0, %v4877
        %v4879 = vpop.f32.mrf.mxu0
        %v4880 = vadd.f32 0.0, %v4879
        %4881 = vmatmul.bf16.gmra.mxu0 %v2964
        %v4882 = vpop.f32.mrf.mxu0
        %v4883 = vadd.f32 0.0, %v4882
        %v4884 = vpop.f32.mrf.mxu0
        %v4885 = vadd.f32 0.0, %v4884
        %4886 = vmatmul.bf16.gmra.mxu0 %v2967
        %v4887 = vpop.f32.mrf.mxu0
        %v4888 = vadd.f32 0.0, %v4887
        %v4889 = vpop.f32.mrf.mxu0
        %v4890 = vadd.f32 0.0, %v4889
        %4891 = vmatmul.bf16.gmra.mxu0 %v2970
        %v4892 = vpop.f32.mrf.mxu0
        %v4893 = vadd.f32 0.0, %v4892
        %v4894 = vpop.f32.mrf.mxu0
        %v4895 = vadd.f32 0.0, %v4894
        %4896 = vmatmul.bf16.gmra.mxu0 %v2973
        %v4897 = vpop.f32.mrf.mxu0
        %v4898 = vadd.f32 0.0, %v4897
        %v4899 = vpop.f32.mrf.mxu0
        %v4900 = vadd.f32 0.0, %v4899
        %4901 = vmatmul.bf16.gmra.mxu0 %v2976
        %v4902 = vpop.f32.mrf.mxu0
        %v4903 = vadd.f32 0.0, %v4902
        %v4904 = vpop.f32.mrf.mxu0
        %v4905 = vadd.f32 0.0, %v4904
        %4906 = vmatmul.bf16.gmra.mxu0 %v2979
        %v4907 = vpop.f32.mrf.mxu0
        %v4908 = vadd.f32 0.0, %v4907
        %v4909 = vpop.f32.mrf.mxu0
        %v4910 = vadd.f32 0.0, %v4909
        %4911 = vmatmul.bf16.gmra.mxu0 %v2982
        %v4912 = vpop.f32.mrf.mxu0
        %v4913 = vadd.f32 0.0, %v4912
        %v4914 = vpop.f32.mrf.mxu0
        %v4915 = vadd.f32 0.0, %v4914
        %4916 = vmatmul.bf16.gmra.mxu0 %v2985
        %v4917 = vpop.f32.mrf.mxu0
        %v4918 = vadd.f32 0.0, %v4917
        %v4919 = vpop.f32.mrf.mxu0
        %v4920 = vadd.f32 0.0, %v4919
        %4921 = vmatmul.bf16.gmra.mxu0 %v2988
        %v4922 = vpop.f32.mrf.mxu0
        %v4923 = vadd.f32 0.0, %v4922
        %v4924 = vpop.f32.mrf.mxu0
        %v4925 = vadd.f32 0.0, %v4924
        %4926 = vmatmul.bf16.gmra.mxu0 %v2991
        %v4927 = vpop.f32.mrf.mxu0
        %v4928 = vadd.f32 0.0, %v4927
        %v4929 = vpop.f32.mrf.mxu0
        %v4930 = vadd.f32 0.0, %v4929
        %4931 = vmatmul.bf16.gmra.mxu0 %v2994
        %v4932 = vpop.f32.mrf.mxu0
        %v4933 = vadd.f32 0.0, %v4932
        %v4934 = vpop.f32.mrf.mxu0
        %v4935 = vadd.f32 0.0, %v4934
        %4936 = vmatmul.bf16.gmra.mxu0 %v2997
        %v4937 = vpop.f32.mrf.mxu0
        %v4938 = vadd.f32 0.0, %v4937
        %v4939 = vpop.f32.mrf.mxu0
        %v4940 = vadd.f32 0.0, %v4939
        %4941 = vmatmul.bf16.gmra.mxu0 %v3000
        %v4942 = vpop.f32.mrf.mxu0
        %v4943 = vadd.f32 0.0, %v4942
        %v4944 = vpop.f32.mrf.mxu0
        %v4945 = vadd.f32 0.0, %v4944
        %4946 = vmatmul.bf16.gmra.mxu0 %v3003
        %v4947 = vpop.f32.mrf.mxu0
        %v4948 = vadd.f32 0.0, %v4947
        %v4949 = vpop.f32.mrf.mxu0
        %v4950 = vadd.f32 0.0, %v4949
        %4951 = vmatmul.bf16.gmra.mxu0 %v3006
        %v4952 = vpop.f32.mrf.mxu0
        %v4953 = vadd.f32 0.0, %v4952
        %v4954 = vpop.f32.mrf.mxu0
        %v4955 = vadd.f32 0.0, %v4954
        %4956 = vmatmul.bf16.gmra.mxu0 %v3009
        %v4957 = vpop.f32.mrf.mxu0
        %v4958 = vadd.f32 0.0, %v4957
        %v4959 = vpop.f32.mrf.mxu0
        %v4960 = vadd.f32 0.0, %v4959
        %4961 = vmatmul.bf16.gmra.mxu0 %v3012
        %v4962 = vpop.f32.mrf.mxu0
        %v4963 = vadd.f32 0.0, %v4962
        %v4964 = vpop.f32.mrf.mxu0
        %v4965 = vadd.f32 0.0, %v4964
        %4966 = vmatmul.bf16.gmra.mxu0 %v3015
        %v4967 = vpop.f32.mrf.mxu0
        %v4968 = vadd.f32 0.0, %v4967
        %v4969 = vpop.f32.mrf.mxu0
        %v4970 = vadd.f32 0.0, %v4969
        %4971 = vmatmul.bf16.gmra.mxu0 %v3018
        %v4972 = vpop.f32.mrf.mxu0
        %v4973 = vadd.f32 0.0, %v4972
        %v4974 = vpop.f32.mrf.mxu0
        %v4975 = vadd.f32 0.0, %v4974
        %4976 = vmatmul.bf16.gmra.mxu0 %v3021
        %v4977 = vpop.f32.mrf.mxu0
        %v4978 = vadd.f32 0.0, %v4977
        %v4979 = vpop.f32.mrf.mxu0
        %v4980 = vadd.f32 0.0, %v4979
        %4981 = vmatmul.bf16.gmra.mxu0 %v3024
        %v4982 = vpop.f32.mrf.mxu0
        %v4983 = vadd.f32 0.0, %v4982
        %v4984 = vpop.f32.mrf.mxu0
        %v4985 = vadd.f32 0.0, %v4984
        %4986 = vmatmul.bf16.gmra.mxu0 %v3027
        %v4987 = vpop.f32.mrf.mxu0
        %v4988 = vadd.f32 0.0, %v4987
        %v4989 = vpop.f32.mrf.mxu0
        %v4990 = vadd.f32 0.0, %v4989
        %4991 = vmatmul.bf16.gmra.mxu0 %v3030
        %v4992 = vpop.f32.mrf.mxu0
        %v4993 = vadd.f32 0.0, %v4992
        %v4994 = vpop.f32.mrf.mxu0
        %v4995 = vadd.f32 0.0, %v4994
        %4996 = vmatmul.bf16.gmra.mxu0 %v3033
        %v4997 = vpop.f32.mrf.mxu0
        %v4998 = vadd.f32 0.0, %v4997
        %v4999 = vpop.f32.mrf.mxu0
        %v5000 = vadd.f32 0.0, %v4999
        %5001 = vmatmul.bf16.gmra.mxu0 %v3036
        %v5002 = vpop.f32.mrf.mxu0
        %v5003 = vadd.f32 0.0, %v5002
        %v5004 = vpop.f32.mrf.mxu0
        %v5005 = vadd.f32 0.0, %v5004
        %5006 = vmatmul.bf16.gmra.mxu0 %v4680
        %v5007 = vpop.f32.mrf.mxu0
        %v5008 = vadd.f32 0.0, %v5007
        %v5009 = vpop.f32.mrf.mxu0
        %v5010 = vadd.f32 0.0, %v5009
        %5011 = vmatmul.bf16.gmra.mxu0 %v4683
        %v5012 = vpop.f32.mrf.mxu0
        %v5013 = vadd.f32 0.0, %v5012
        %v5014 = vpop.f32.mrf.mxu0
        %v5015 = vadd.f32 0.0, %v5014
        %5016 = vdwg.mxu0
        %v5017 = vadd.f32 %v4539, %v4698
        %v5018 = vadd.f32 %v4540, %v4700
        %v5019 = vadd.f32 %v4541, %v4703
        %v5020 = vadd.f32 %v4542, %v4705
        %v5021 = vadd.f32 %v4543, %v4708
        %v5022 = vadd.f32 %v4544, %v4710
        %v5023 = vadd.f32 %v4545, %v4713
        %v5024 = vadd.f32 %v4546, %v4715
        %v5025 = vadd.f32 %v4547, %v4718
        %v5026 = vadd.f32 %v4548, %v4720
        %v5027 = vadd.f32 %v4549, %v4723
        %v5028 = vadd.f32 %v4550, %v4725
        %v5029 = vadd.f32 %v4551, %v4728
        %v5030 = vadd.f32 %v4552, %v4730
        %v5031 = vadd.f32 %v4553, %v4733
        %v5032 = vadd.f32 %v4554, %v4735
        %v5033 = vadd.f32 %v4555, %v4738
        %v5034 = vadd.f32 %v4556, %v4740
        %v5035 = vadd.f32 %v4557, %v4743
        %v5036 = vadd.f32 %v4558, %v4745
        %v5037 = vadd.f32 %v4559, %v4748
        %v5038 = vadd.f32 %v4560, %v4750
        %v5039 = vadd.f32 %v4561, %v4753
        %v5040 = vadd.f32 %v4562, %v4755
        %v5041 = vadd.f32 %v4563, %v4758
        %v5042 = vadd.f32 %v4564, %v4760
        %v5043 = vadd.f32 %v4565, %v4763
        %v5044 = vadd.f32 %v4566, %v4765
        %v5045 = vadd.f32 %v4567, %v4768
        %v5046 = vadd.f32 %v4568, %v4770
        %v5047 = vadd.f32 %v4569, %v4773
        %v5048 = vadd.f32 %v4570, %v4775
        %v5049 = vadd.f32 %v4571, %v4778
        %v5050 = vadd.f32 %v4572, %v4780
        %v5051 = vadd.f32 %v4573, %v4783
        %v5052 = vadd.f32 %v4574, %v4785
        %v5053 = vadd.f32 %v4575, %v4788
        %v5054 = vadd.f32 %v4576, %v4790
        %v5055 = vadd.f32 %v4577, %v4793
        %v5056 = vadd.f32 %v4578, %v4795
        %v5057 = vadd.f32 %v4579, %v4798
        %v5058 = vadd.f32 %v4580, %v4800
        %v5059 = vadd.f32 %v4581, %v4803
        %v5060 = vadd.f32 %v4582, %v4805
        %v5061 = vadd.f32 %v4583, %v4808
        %v5062 = vadd.f32 %v4584, %v4810
        %v5063 = vadd.f32 %v4585, %v4813
        %v5064 = vadd.f32 %v4586, %v4815
        %v5065 = vadd.f32 %v4587, %v4818
        %v5066 = vadd.f32 %v4588, %v4820
        %v5067 = vadd.f32 %v4589, %v4823
        %v5068 = vadd.f32 %v4590, %v4825
        %v5069 = vadd.f32 %v4591, %v4828
        %v5070 = vadd.f32 %v4592, %v4830
        %v5071 = vadd.f32 %v4593, %v4833
        %v5072 = vadd.f32 %v4594, %v4835
        %v5073 = vadd.f32 %v4595, %v4838
        %v5074 = vadd.f32 %v4596, %v4840
        %v5075 = vadd.f32 %v4597, %v4843
        %v5076 = vadd.f32 %v4598, %v4845
        %v5077 = vadd.f32 %v4599, %v4848
        %v5078 = vadd.f32 %v4600, %v4850
        %v5079 = vadd.f32 %v4601, %v4853
        %v5080 = vadd.f32 %v4602, %v4855
        %v5081 = vadd.f32 %v4603, %v4858
        %v5082 = vadd.f32 %v4604, %v4860
        %v5083 = vadd.f32 %v4605, %v4863
        %v5084 = vadd.f32 %v4606, %v4865
        %v5085 = vadd.f32 %v4607, %v4868
        %v5086 = vadd.f32 %v4608, %v4870
        %v5087 = vadd.f32 %v4609, %v4873
        %v5088 = vadd.f32 %v4610, %v4875
        %v5089 = vadd.f32 %v4611, %v4878
        %v5090 = vadd.f32 %v4612, %v4880
        %v5091 = vadd.f32 %v4613, %v4883
        %v5092 = vadd.f32 %v4614, %v4885
        %v5093 = vadd.f32 %v4615, %v4888
        %v5094 = vadd.f32 %v4616, %v4890
        %v5095 = vadd.f32 %v4617, %v4893
        %v5096 = vadd.f32 %v4618, %v4895
        %v5097 = vadd.f32 %v4619, %v4898
        %v5098 = vadd.f32 %v4620, %v4900
        %v5099 = vadd.f32 %v4621, %v4903
        %v5100 = vadd.f32 %v4622, %v4905
        %v5101 = vadd.f32 %v4623, %v4908
        %v5102 = vadd.f32 %v4624, %v4910
        %v5103 = vadd.f32 %v4625, %v4913
        %v5104 = vadd.f32 %v4626, %v4915
        %v5105 = vadd.f32 %v4627, %v4918
        %v5106 = vadd.f32 %v4628, %v4920
        %v5107 = vadd.f32 %v4629, %v4923
        %v5108 = vadd.f32 %v4630, %v4925
        %v5109 = vadd.f32 %v4631, %v4928
        %v5110 = vadd.f32 %v4632, %v4930
        %v5111 = vadd.f32 %v4633, %v4933
        %v5112 = vadd.f32 %v4634, %v4935
        %v5113 = vadd.f32 %v4635, %v4938
        %v5114 = vadd.f32 %v4636, %v4940
        %v5115 = vadd.f32 %v4637, %v4943
        %v5116 = vadd.f32 %v4638, %v4945
        %v5117 = vadd.f32 %v4639, %v4948
        %v5118 = vadd.f32 %v4640, %v4950
        %v5119 = vadd.f32 %v4641, %v4953
        %v5120 = vadd.f32 %v4642, %v4955
        %v5121 = vadd.f32 %v4643, %v4958
        %v5122 = vadd.f32 %v4644, %v4960
        %v5123 = vadd.f32 %v4645, %v4963
        %v5124 = vadd.f32 %v4646, %v4965
        %v5125 = vadd.f32 %v4647, %v4968
        %v5126 = vadd.f32 %v4648, %v4970
        %v5127 = vadd.f32 %v4649, %v4973
        %v5128 = vadd.f32 %v4650, %v4975
        %v5129 = vadd.f32 %v4651, %v4978
        %v5130 = vadd.f32 %v4652, %v4980
        %v5131 = vadd.f32 %v4653, %v4983
        %v5132 = vadd.f32 %v4654, %v4985
        %v5133 = vadd.f32 %v4655, %v4988
        %v5134 = vadd.f32 %v4656, %v4990
        %v5135 = vadd.f32 %v4657, %v4993
        %v5136 = vadd.f32 %v4658, %v4995
        %v5137 = vadd.f32 %v4659, %v4998
        %v5138 = vadd.f32 %v4660, %v5000
        %v5139 = vadd.f32 %v4661, %v5003
        %v5140 = vadd.f32 %v4662, %v5005
        %v5141 = vadd.f32 %v4663, %v5008
        %v5142 = vadd.f32 %v4664, %v5010
        %v5143 = vadd.f32 %v4665, %v5013
        %v5144 = vadd.f32 %v4666, %v5015
        %v5146 = vshrl.u32 %v381, 16
        %v5148 = vrot.slane %v5146, 4
        %v5149 = vshll.u32 %v381, 16
        %v5151 = vrot.slane %v5149, 5
        %v5152 = vor.u32 %v5148, %v5151
        %v5153 = vrot.slane %v5152, 4
        %v5155 = vshll.u32 %v382, 16
        %v5157 = vrot.slane %v5155, 5
        %v5158 = vsel %vm394, %v5153, %v5157
        %v5159 = vshrl.u32 %v382, 16
        %v5161 = vrot.slane %v5159, 4
        %v5162 = vor.u32 %v5161, %v5157
        %v5163 = vrot.slane %v5162, 4
        %v5165 = vshll.u32 %v383, 16
        %v5167 = vrot.slane %v5165, 5
        %v5168 = vsel %vm394, %v5163, %v5167
        %v5169 = vshrl.u32 %v383, 16
        %v5171 = vrot.slane %v5169, 4
        %v5172 = vor.u32 %v5171, %v5167
        %v5173 = vrot.slane %v5172, 4
        %v5175 = vshll.u32 %v384, 16
        %v5177 = vrot.slane %v5175, 5
        %v5178 = vsel %vm394, %v5173, %v5177
        %v5179 = vshrl.u32 %v384, 16
        %v5181 = vrot.slane %v5179, 4
        %v5182 = vor.u32 %v5181, %v5177
        %v5183 = vrot.slane %v5182, 4
        %v5185 = vshll.u32 %v385, 16
        %v5187 = vrot.slane %v5185, 5
        %v5188 = vsel %vm394, %v5183, %v5187
        %s5189 = scalar_lea.vmem %s215, 8
        %v5190 = vld [vmem:[%s5189] sm:$0x3]
        %v5191 = vunpack.c.l.b16 %v5158
        %v5192 = vunpack.c.l.b16 %v5168
        %v5193 = vunpack.c.l.b16 %v5178
        %v5194 = vunpack.c.l.b16 %v5188
        %v5195 = vpack.c.b16 %v5192, %v5191
        %v5196 = vpack.c.b16 %v5194, %v5193
        %v5198 = vsel %vm1997, %v5195, 0
        %v5201 = vsel %vm1997, %v5196, 0
        %v5204 = vand.u32 %v5190, %v2193
        %5206 = vmatpush.bf16.msra.mxu0 0
        %5207 = vmatpush.bf16.msra.mxu0 0
        %5208 = vmatpush.bf16.msra.mxu0 0
        %5209 = vmatpush.bf16.msra.mxu0 0
        %5210 = vmatpush.bf16.msra.mxu0 0
        %5211 = vmatpush.bf16.msra.mxu0 0
        %5212 = vmatpush.bf16.msra.mxu0 0
        %5213 = vmatpush.bf16.msra.mxu0 %v5204
        %5214 = vmatmul.bf16.gmra.mxu0 %v2005
        %v5215 = vpop.f32.mrf.mxu0
        %v5216 = vadd.f32 0.0, %v5215
        %v5217 = vpop.f32.mrf.mxu0
        %v5218 = vadd.f32 0.0, %v5217
        %5219 = vmatmul.bf16.gmra.mxu0 %v2008
        %v5220 = vpop.f32.mrf.mxu0
        %v5221 = vadd.f32 0.0, %v5220
        %v5222 = vpop.f32.mrf.mxu0
        %v5223 = vadd.f32 0.0, %v5222
        %5224 = vmatmul.bf16.gmra.mxu0 %v2011
        %v5225 = vpop.f32.mrf.mxu0
        %v5226 = vadd.f32 0.0, %v5225
        %v5227 = vpop.f32.mrf.mxu0
        %v5228 = vadd.f32 0.0, %v5227
        %5229 = vmatmul.bf16.gmra.mxu0 %v2014
        %v5230 = vpop.f32.mrf.mxu0
        %v5231 = vadd.f32 0.0, %v5230
        %v5232 = vpop.f32.mrf.mxu0
        %v5233 = vadd.f32 0.0, %v5232
        %5234 = vmatmul.bf16.gmra.mxu0 %v2017
        %v5235 = vpop.f32.mrf.mxu0
        %v5236 = vadd.f32 0.0, %v5235
        %v5237 = vpop.f32.mrf.mxu0
        %v5238 = vadd.f32 0.0, %v5237
        %5239 = vmatmul.bf16.gmra.mxu0 %v2020
        %v5240 = vpop.f32.mrf.mxu0
        %v5241 = vadd.f32 0.0, %v5240
        %v5242 = vpop.f32.mrf.mxu0
        %v5243 = vadd.f32 0.0, %v5242
        %5244 = vmatmul.bf16.gmra.mxu0 %v2023
        %v5245 = vpop.f32.mrf.mxu0
        %v5246 = vadd.f32 0.0, %v5245
        %v5247 = vpop.f32.mrf.mxu0
        %v5248 = vadd.f32 0.0, %v5247
        %5249 = vmatmul.bf16.gmra.mxu0 %v2026
        %v5250 = vpop.f32.mrf.mxu0
        %v5251 = vadd.f32 0.0, %v5250
        %v5252 = vpop.f32.mrf.mxu0
        %v5253 = vadd.f32 0.0, %v5252
        %5254 = vmatmul.bf16.gmra.mxu0 %v2029
        %v5255 = vpop.f32.mrf.mxu0
        %v5256 = vadd.f32 0.0, %v5255
        %v5257 = vpop.f32.mrf.mxu0
        %v5258 = vadd.f32 0.0, %v5257
        %5259 = vmatmul.bf16.gmra.mxu0 %v2032
        %v5260 = vpop.f32.mrf.mxu0
        %v5261 = vadd.f32 0.0, %v5260
        %v5262 = vpop.f32.mrf.mxu0
        %v5263 = vadd.f32 0.0, %v5262
        %5264 = vmatmul.bf16.gmra.mxu0 %v2035
        %v5265 = vpop.f32.mrf.mxu0
        %v5266 = vadd.f32 0.0, %v5265
        %v5267 = vpop.f32.mrf.mxu0
        %v5268 = vadd.f32 0.0, %v5267
        %5269 = vmatmul.bf16.gmra.mxu0 %v2038
        %v5270 = vpop.f32.mrf.mxu0
        %v5271 = vadd.f32 0.0, %v5270
        %v5272 = vpop.f32.mrf.mxu0
        %v5273 = vadd.f32 0.0, %v5272
        %5274 = vmatmul.bf16.gmra.mxu0 %v2041
        %v5275 = vpop.f32.mrf.mxu0
        %v5276 = vadd.f32 0.0, %v5275
        %v5277 = vpop.f32.mrf.mxu0
        %v5278 = vadd.f32 0.0, %v5277
        %5279 = vmatmul.bf16.gmra.mxu0 %v2044
        %v5280 = vpop.f32.mrf.mxu0
        %v5281 = vadd.f32 0.0, %v5280
        %v5282 = vpop.f32.mrf.mxu0
        %v5283 = vadd.f32 0.0, %v5282
        %5284 = vmatmul.bf16.gmra.mxu0 %v2047
        %v5285 = vpop.f32.mrf.mxu0
        %v5286 = vadd.f32 0.0, %v5285
        %v5287 = vpop.f32.mrf.mxu0
        %v5288 = vadd.f32 0.0, %v5287
        %5289 = vmatmul.bf16.gmra.mxu0 %v2050
        %v5290 = vpop.f32.mrf.mxu0
        %v5291 = vadd.f32 0.0, %v5290
        %v5292 = vpop.f32.mrf.mxu0
        %v5293 = vadd.f32 0.0, %v5292
        %5294 = vmatmul.bf16.gmra.mxu0 %v2053
        %v5295 = vpop.f32.mrf.mxu0
        %v5296 = vadd.f32 0.0, %v5295
        %v5297 = vpop.f32.mrf.mxu0
        %v5298 = vadd.f32 0.0, %v5297
        %5299 = vmatmul.bf16.gmra.mxu0 %v2056
        %v5300 = vpop.f32.mrf.mxu0
        %v5301 = vadd.f32 0.0, %v5300
        %v5302 = vpop.f32.mrf.mxu0
        %v5303 = vadd.f32 0.0, %v5302
        %5304 = vmatmul.bf16.gmra.mxu0 %v2059
        %v5305 = vpop.f32.mrf.mxu0
        %v5306 = vadd.f32 0.0, %v5305
        %v5307 = vpop.f32.mrf.mxu0
        %v5308 = vadd.f32 0.0, %v5307
        %5309 = vmatmul.bf16.gmra.mxu0 %v2062
        %v5310 = vpop.f32.mrf.mxu0
        %v5311 = vadd.f32 0.0, %v5310
        %v5312 = vpop.f32.mrf.mxu0
        %v5313 = vadd.f32 0.0, %v5312
        %5314 = vmatmul.bf16.gmra.mxu0 %v2065
        %v5315 = vpop.f32.mrf.mxu0
        %v5316 = vadd.f32 0.0, %v5315
        %v5317 = vpop.f32.mrf.mxu0
        %v5318 = vadd.f32 0.0, %v5317
        %5319 = vmatmul.bf16.gmra.mxu0 %v2068
        %v5320 = vpop.f32.mrf.mxu0
        %v5321 = vadd.f32 0.0, %v5320
        %v5322 = vpop.f32.mrf.mxu0
        %v5323 = vadd.f32 0.0, %v5322
        %5324 = vmatmul.bf16.gmra.mxu0 %v2071
        %v5325 = vpop.f32.mrf.mxu0
        %v5326 = vadd.f32 0.0, %v5325
        %v5327 = vpop.f32.mrf.mxu0
        %v5328 = vadd.f32 0.0, %v5327
        %5329 = vmatmul.bf16.gmra.mxu0 %v2074
        %v5330 = vpop.f32.mrf.mxu0
        %v5331 = vadd.f32 0.0, %v5330
        %v5332 = vpop.f32.mrf.mxu0
        %v5333 = vadd.f32 0.0, %v5332
        %5334 = vmatmul.bf16.gmra.mxu0 %v2077
        %v5335 = vpop.f32.mrf.mxu0
        %v5336 = vadd.f32 0.0, %v5335
        %v5337 = vpop.f32.mrf.mxu0
        %v5338 = vadd.f32 0.0, %v5337
        %5339 = vmatmul.bf16.gmra.mxu0 %v2080
        %v5340 = vpop.f32.mrf.mxu0
        %v5341 = vadd.f32 0.0, %v5340
        %v5342 = vpop.f32.mrf.mxu0
        %v5343 = vadd.f32 0.0, %v5342
        %5344 = vmatmul.bf16.gmra.mxu0 %v2083
        %v5345 = vpop.f32.mrf.mxu0
        %v5346 = vadd.f32 0.0, %v5345
        %v5347 = vpop.f32.mrf.mxu0
        %v5348 = vadd.f32 0.0, %v5347
        %5349 = vmatmul.bf16.gmra.mxu0 %v2086
        %v5350 = vpop.f32.mrf.mxu0
        %v5351 = vadd.f32 0.0, %v5350
        %v5352 = vpop.f32.mrf.mxu0
        %v5353 = vadd.f32 0.0, %v5352
        %5354 = vmatmul.bf16.gmra.mxu0 %v2089
        %v5355 = vpop.f32.mrf.mxu0
        %v5356 = vadd.f32 0.0, %v5355
        %v5357 = vpop.f32.mrf.mxu0
        %v5358 = vadd.f32 0.0, %v5357
        %5359 = vmatmul.bf16.gmra.mxu0 %v2092
        %v5360 = vpop.f32.mrf.mxu0
        %v5361 = vadd.f32 0.0, %v5360
        %v5362 = vpop.f32.mrf.mxu0
        %v5363 = vadd.f32 0.0, %v5362
        %5364 = vmatmul.bf16.gmra.mxu0 %v2095
        %v5365 = vpop.f32.mrf.mxu0
        %v5366 = vadd.f32 0.0, %v5365
        %v5367 = vpop.f32.mrf.mxu0
        %v5368 = vadd.f32 0.0, %v5367
        %5369 = vmatmul.bf16.gmra.mxu0 %v2098
        %v5370 = vpop.f32.mrf.mxu0
        %v5371 = vadd.f32 0.0, %v5370
        %v5372 = vpop.f32.mrf.mxu0
        %v5373 = vadd.f32 0.0, %v5372
        %5374 = vmatmul.bf16.gmra.mxu0 %v2101
        %v5375 = vpop.f32.mrf.mxu0
        %v5376 = vadd.f32 0.0, %v5375
        %v5377 = vpop.f32.mrf.mxu0
        %v5378 = vadd.f32 0.0, %v5377
        %5379 = vmatmul.bf16.gmra.mxu0 %v2104
        %v5380 = vpop.f32.mrf.mxu0
        %v5381 = vadd.f32 0.0, %v5380
        %v5382 = vpop.f32.mrf.mxu0
        %v5383 = vadd.f32 0.0, %v5382
        %5384 = vmatmul.bf16.gmra.mxu0 %v2107
        %v5385 = vpop.f32.mrf.mxu0
        %v5386 = vadd.f32 0.0, %v5385
        %v5387 = vpop.f32.mrf.mxu0
        %v5388 = vadd.f32 0.0, %v5387
        %5389 = vmatmul.bf16.gmra.mxu0 %v2110
        %v5390 = vpop.f32.mrf.mxu0
        %v5391 = vadd.f32 0.0, %v5390
        %v5392 = vpop.f32.mrf.mxu0
        %v5393 = vadd.f32 0.0, %v5392
        %5394 = vmatmul.bf16.gmra.mxu0 %v2113
        %v5395 = vpop.f32.mrf.mxu0
        %v5396 = vadd.f32 0.0, %v5395
        %v5397 = vpop.f32.mrf.mxu0
        %v5398 = vadd.f32 0.0, %v5397
        %5399 = vmatmul.bf16.gmra.mxu0 %v2116
        %v5400 = vpop.f32.mrf.mxu0
        %v5401 = vadd.f32 0.0, %v5400
        %v5402 = vpop.f32.mrf.mxu0
        %v5403 = vadd.f32 0.0, %v5402
        %5404 = vmatmul.bf16.gmra.mxu0 %v2119
        %v5405 = vpop.f32.mrf.mxu0
        %v5406 = vadd.f32 0.0, %v5405
        %v5407 = vpop.f32.mrf.mxu0
        %v5408 = vadd.f32 0.0, %v5407
        %5409 = vmatmul.bf16.gmra.mxu0 %v2122
        %v5410 = vpop.f32.mrf.mxu0
        %v5411 = vadd.f32 0.0, %v5410
        %v5412 = vpop.f32.mrf.mxu0
        %v5413 = vadd.f32 0.0, %v5412
        %5414 = vmatmul.bf16.gmra.mxu0 %v2125
        %v5415 = vpop.f32.mrf.mxu0
        %v5416 = vadd.f32 0.0, %v5415
        %v5417 = vpop.f32.mrf.mxu0
        %v5418 = vadd.f32 0.0, %v5417
        %5419 = vmatmul.bf16.gmra.mxu0 %v2128
        %v5420 = vpop.f32.mrf.mxu0
        %v5421 = vadd.f32 0.0, %v5420
        %v5422 = vpop.f32.mrf.mxu0
        %v5423 = vadd.f32 0.0, %v5422
        %5424 = vmatmul.bf16.gmra.mxu0 %v2131
        %v5425 = vpop.f32.mrf.mxu0
        %v5426 = vadd.f32 0.0, %v5425
        %v5427 = vpop.f32.mrf.mxu0
        %v5428 = vadd.f32 0.0, %v5427
        %5429 = vmatmul.bf16.gmra.mxu0 %v2134
        %v5430 = vpop.f32.mrf.mxu0
        %v5431 = vadd.f32 0.0, %v5430
        %v5432 = vpop.f32.mrf.mxu0
        %v5433 = vadd.f32 0.0, %v5432
        %5434 = vmatmul.bf16.gmra.mxu0 %v2137
        %v5435 = vpop.f32.mrf.mxu0
        %v5436 = vadd.f32 0.0, %v5435
        %v5437 = vpop.f32.mrf.mxu0
        %v5438 = vadd.f32 0.0, %v5437
        %5439 = vmatmul.bf16.gmra.mxu0 %v2140
        %v5440 = vpop.f32.mrf.mxu0
        %v5441 = vadd.f32 0.0, %v5440
        %v5442 = vpop.f32.mrf.mxu0
        %v5443 = vadd.f32 0.0, %v5442
        %5444 = vmatmul.bf16.gmra.mxu0 %v2143
        %v5445 = vpop.f32.mrf.mxu0
        %v5446 = vadd.f32 0.0, %v5445
        %v5447 = vpop.f32.mrf.mxu0
        %v5448 = vadd.f32 0.0, %v5447
        %5449 = vmatmul.bf16.gmra.mxu0 %v2146
        %v5450 = vpop.f32.mrf.mxu0
        %v5451 = vadd.f32 0.0, %v5450
        %v5452 = vpop.f32.mrf.mxu0
        %v5453 = vadd.f32 0.0, %v5452
        %5454 = vmatmul.bf16.gmra.mxu0 %v2149
        %v5455 = vpop.f32.mrf.mxu0
        %v5456 = vadd.f32 0.0, %v5455
        %v5457 = vpop.f32.mrf.mxu0
        %v5458 = vadd.f32 0.0, %v5457
        %5459 = vmatmul.bf16.gmra.mxu0 %v2152
        %v5460 = vpop.f32.mrf.mxu0
        %v5461 = vadd.f32 0.0, %v5460
        %v5462 = vpop.f32.mrf.mxu0
        %v5463 = vadd.f32 0.0, %v5462
        %5464 = vmatmul.bf16.gmra.mxu0 %v2155
        %v5465 = vpop.f32.mrf.mxu0
        %v5466 = vadd.f32 0.0, %v5465
        %v5467 = vpop.f32.mrf.mxu0
        %v5468 = vadd.f32 0.0, %v5467
        %5469 = vmatmul.bf16.gmra.mxu0 %v2158
        %v5470 = vpop.f32.mrf.mxu0
        %v5471 = vadd.f32 0.0, %v5470
        %v5472 = vpop.f32.mrf.mxu0
        %v5473 = vadd.f32 0.0, %v5472
        %5474 = vmatmul.bf16.gmra.mxu0 %v2161
        %v5475 = vpop.f32.mrf.mxu0
        %v5476 = vadd.f32 0.0, %v5475
        %v5477 = vpop.f32.mrf.mxu0
        %v5478 = vadd.f32 0.0, %v5477
        %5479 = vmatmul.bf16.gmra.mxu0 %v2164
        %v5480 = vpop.f32.mrf.mxu0
        %v5481 = vadd.f32 0.0, %v5480
        %v5482 = vpop.f32.mrf.mxu0
        %v5483 = vadd.f32 0.0, %v5482
        %5484 = vmatmul.bf16.gmra.mxu0 %v2167
        %v5485 = vpop.f32.mrf.mxu0
        %v5486 = vadd.f32 0.0, %v5485
        %v5487 = vpop.f32.mrf.mxu0
        %v5488 = vadd.f32 0.0, %v5487
        %5489 = vmatmul.bf16.gmra.mxu0 %v2170
        %v5490 = vpop.f32.mrf.mxu0
        %v5491 = vadd.f32 0.0, %v5490
        %v5492 = vpop.f32.mrf.mxu0
        %v5493 = vadd.f32 0.0, %v5492
        %5494 = vmatmul.bf16.gmra.mxu0 %v2173
        %v5495 = vpop.f32.mrf.mxu0
        %v5496 = vadd.f32 0.0, %v5495
        %v5497 = vpop.f32.mrf.mxu0
        %v5498 = vadd.f32 0.0, %v5497
        %5499 = vmatmul.bf16.gmra.mxu0 %v2176
        %v5500 = vpop.f32.mrf.mxu0
        %v5501 = vadd.f32 0.0, %v5500
        %v5502 = vpop.f32.mrf.mxu0
        %v5503 = vadd.f32 0.0, %v5502
        %5504 = vmatmul.bf16.gmra.mxu0 %v2179
        %v5505 = vpop.f32.mrf.mxu0
        %v5506 = vadd.f32 0.0, %v5505
        %v5507 = vpop.f32.mrf.mxu0
        %v5508 = vadd.f32 0.0, %v5507
        %5509 = vmatmul.bf16.gmra.mxu0 %v2182
        %v5510 = vpop.f32.mrf.mxu0
        %v5511 = vadd.f32 0.0, %v5510
        %v5512 = vpop.f32.mrf.mxu0
        %v5513 = vadd.f32 0.0, %v5512
        %5514 = vmatmul.bf16.gmra.mxu0 %v2185
        %v5515 = vpop.f32.mrf.mxu0
        %v5516 = vadd.f32 0.0, %v5515
        %v5517 = vpop.f32.mrf.mxu0
        %v5518 = vadd.f32 0.0, %v5517
        %5519 = vmatmul.bf16.gmra.mxu0 %v2188
        %v5520 = vpop.f32.mrf.mxu0
        %v5521 = vadd.f32 0.0, %v5520
        %v5522 = vpop.f32.mrf.mxu0
        %v5523 = vadd.f32 0.0, %v5522
        %5524 = vmatmul.bf16.gmra.mxu0 %v5198
        %v5525 = vpop.f32.mrf.mxu0
        %v5526 = vadd.f32 0.0, %v5525
        %v5527 = vpop.f32.mrf.mxu0
        %v5528 = vadd.f32 0.0, %v5527
        %5529 = vmatmul.bf16.gmra.mxu0 %v5201
        %v5530 = vpop.f32.mrf.mxu0
        %v5531 = vadd.f32 0.0, %v5530
        %v5532 = vpop.f32.mrf.mxu0
        %v5533 = vadd.f32 0.0, %v5532
        %5534 = vdwg.mxu0
        %v5535 = vadd.f32 %v5017, %v5216
        %v5536 = vadd.f32 %v5018, %v5218
        %v5537 = vadd.f32 %v5019, %v5221
        %v5538 = vadd.f32 %v5020, %v5223
        %v5539 = vadd.f32 %v5021, %v5226
        %v5540 = vadd.f32 %v5022, %v5228
        %v5541 = vadd.f32 %v5023, %v5231
        %v5542 = vadd.f32 %v5024, %v5233
        %v5543 = vadd.f32 %v5025, %v5236
        %v5544 = vadd.f32 %v5026, %v5238
        %v5545 = vadd.f32 %v5027, %v5241
        %v5546 = vadd.f32 %v5028, %v5243
        %v5547 = vadd.f32 %v5029, %v5246
        %v5548 = vadd.f32 %v5030, %v5248
        %v5549 = vadd.f32 %v5031, %v5251
        %v5550 = vadd.f32 %v5032, %v5253
        %v5551 = vadd.f32 %v5033, %v5256
        %v5552 = vadd.f32 %v5034, %v5258
        %v5553 = vadd.f32 %v5035, %v5261
        %v5554 = vadd.f32 %v5036, %v5263
        %v5555 = vadd.f32 %v5037, %v5266
        %v5556 = vadd.f32 %v5038, %v5268
        %v5557 = vadd.f32 %v5039, %v5271
        %v5558 = vadd.f32 %v5040, %v5273
        %v5559 = vadd.f32 %v5041, %v5276
        %v5560 = vadd.f32 %v5042, %v5278
        %v5561 = vadd.f32 %v5043, %v5281
        %v5562 = vadd.f32 %v5044, %v5283
        %v5563 = vadd.f32 %v5045, %v5286
        %v5564 = vadd.f32 %v5046, %v5288
        %v5565 = vadd.f32 %v5047, %v5291
        %v5566 = vadd.f32 %v5048, %v5293
        %v5567 = vadd.f32 %v5049, %v5296
        %v5568 = vadd.f32 %v5050, %v5298
        %v5569 = vadd.f32 %v5051, %v5301
        %v5570 = vadd.f32 %v5052, %v5303
        %v5571 = vadd.f32 %v5053, %v5306
        %v5572 = vadd.f32 %v5054, %v5308
        %v5573 = vadd.f32 %v5055, %v5311
        %v5574 = vadd.f32 %v5056, %v5313
        %v5575 = vadd.f32 %v5057, %v5316
        %v5576 = vadd.f32 %v5058, %v5318
        %v5577 = vadd.f32 %v5059, %v5321
        %v5578 = vadd.f32 %v5060, %v5323
        %v5579 = vadd.f32 %v5061, %v5326
        %v5580 = vadd.f32 %v5062, %v5328
        %v5581 = vadd.f32 %v5063, %v5331
        %v5582 = vadd.f32 %v5064, %v5333
        %v5583 = vadd.f32 %v5065, %v5336
        %v5584 = vadd.f32 %v5066, %v5338
        %v5585 = vadd.f32 %v5067, %v5341
        %v5586 = vadd.f32 %v5068, %v5343
        %v5587 = vadd.f32 %v5069, %v5346
        %v5588 = vadd.f32 %v5070, %v5348
        %v5589 = vadd.f32 %v5071, %v5351
        %v5590 = vadd.f32 %v5072, %v5353
        %v5591 = vadd.f32 %v5073, %v5356
        %v5592 = vadd.f32 %v5074, %v5358
        %v5593 = vadd.f32 %v5075, %v5361
        %v5594 = vadd.f32 %v5076, %v5363
        %v5595 = vadd.f32 %v5077, %v5366
        %v5596 = vadd.f32 %v5078, %v5368
        %v5597 = vadd.f32 %v5079, %v5371
        %v5598 = vadd.f32 %v5080, %v5373
        %v5599 = vadd.f32 %v5081, %v5376
        %v5600 = vadd.f32 %v5082, %v5378
        %v5601 = vadd.f32 %v5083, %v5381
        %v5602 = vadd.f32 %v5084, %v5383
        %v5603 = vadd.f32 %v5085, %v5386
        %v5604 = vadd.f32 %v5086, %v5388
        %v5605 = vadd.f32 %v5087, %v5391
        %v5606 = vadd.f32 %v5088, %v5393
        %v5607 = vadd.f32 %v5089, %v5396
        %v5608 = vadd.f32 %v5090, %v5398
        %v5609 = vadd.f32 %v5091, %v5401
        %v5610 = vadd.f32 %v5092, %v5403
        %v5611 = vadd.f32 %v5093, %v5406
        %v5612 = vadd.f32 %v5094, %v5408
        %v5613 = vadd.f32 %v5095, %v5411
        %v5614 = vadd.f32 %v5096, %v5413
        %v5615 = vadd.f32 %v5097, %v5416
        %v5616 = vadd.f32 %v5098, %v5418
        %v5617 = vadd.f32 %v5099, %v5421
        %v5618 = vadd.f32 %v5100, %v5423
        %v5619 = vadd.f32 %v5101, %v5426
        %v5620 = vadd.f32 %v5102, %v5428
        %v5621 = vadd.f32 %v5103, %v5431
        %v5622 = vadd.f32 %v5104, %v5433
        %v5623 = vadd.f32 %v5105, %v5436
        %v5624 = vadd.f32 %v5106, %v5438
        %v5625 = vadd.f32 %v5107, %v5441
        %v5626 = vadd.f32 %v5108, %v5443
        %v5627 = vadd.f32 %v5109, %v5446
        %v5628 = vadd.f32 %v5110, %v5448
        %v5629 = vadd.f32 %v5111, %v5451
        %v5630 = vadd.f32 %v5112, %v5453
        %v5631 = vadd.f32 %v5113, %v5456
        %v5632 = vadd.f32 %v5114, %v5458
        %v5633 = vadd.f32 %v5115, %v5461
        %v5634 = vadd.f32 %v5116, %v5463
        %v5635 = vadd.f32 %v5117, %v5466
        %v5636 = vadd.f32 %v5118, %v5468
        %v5637 = vadd.f32 %v5119, %v5471
        %v5638 = vadd.f32 %v5120, %v5473
        %v5639 = vadd.f32 %v5121, %v5476
        %v5640 = vadd.f32 %v5122, %v5478
        %v5641 = vadd.f32 %v5123, %v5481
        %v5642 = vadd.f32 %v5124, %v5483
        %v5643 = vadd.f32 %v5125, %v5486
        %v5644 = vadd.f32 %v5126, %v5488
        %v5645 = vadd.f32 %v5127, %v5491
        %v5646 = vadd.f32 %v5128, %v5493
        %v5647 = vadd.f32 %v5129, %v5496
        %v5648 = vadd.f32 %v5130, %v5498
        %v5649 = vadd.f32 %v5131, %v5501
        %v5650 = vadd.f32 %v5132, %v5503
        %v5651 = vadd.f32 %v5133, %v5506
        %v5652 = vadd.f32 %v5134, %v5508
        %v5653 = vadd.f32 %v5135, %v5511
        %v5654 = vadd.f32 %v5136, %v5513
        %v5655 = vadd.f32 %v5137, %v5516
        %v5656 = vadd.f32 %v5138, %v5518
        %v5657 = vadd.f32 %v5139, %v5521
        %v5658 = vadd.f32 %v5140, %v5523
        %v5659 = vadd.f32 %v5141, %v5526
        %v5660 = vadd.f32 %v5142, %v5528
        %v5661 = vadd.f32 %v5143, %v5531
        %v5662 = vadd.f32 %v5144, %v5533
        %v5664 = vrot.slane %v381, 5
        %v5665 = vrot.slane %v5664, 4
        %v5666 = vrot.slane %v382, 5
        %v5667 = vsel %vm3404, %v5665, %v5666
        %v5668 = vrot.slane %v5666, 4
        %v5669 = vrot.slane %v383, 5
        %v5670 = vsel %vm3404, %v5668, %v5669
        %v5671 = vrot.slane %v5669, 4
        %v5672 = vrot.slane %v384, 5
        %v5673 = vsel %vm3404, %v5671, %v5672
        %v5674 = vrot.slane %v5672, 4
        %v5675 = vrot.slane %v385, 5
        %v5676 = vsel %vm3404, %v5674, %v5675
        %s5677 = scalar_lea.vmem %s215, 10
        %v5678 = vld [vmem:[%s5677] sm:$0x3]
        %v5679 = vunpack.c.l.b16 %v5667
        %v5680 = vunpack.c.l.b16 %v5670
        %v5681 = vunpack.c.l.b16 %v5673
        %v5682 = vunpack.c.l.b16 %v5676
        %v5683 = vpack.c.b16 %v5680, %v5679
        %v5684 = vpack.c.b16 %v5682, %v5681
        %v5686 = vsel %vm1997, %v5683, 0
        %v5689 = vsel %vm1997, %v5684, 0
        %v5692 = vand.u32 %v5678, %v2193
        %5694 = vmatpush.bf16.msra.mxu0 0
        %5695 = vmatpush.bf16.msra.mxu0 0
        %5696 = vmatpush.bf16.msra.mxu0 0
        %5697 = vmatpush.bf16.msra.mxu0 0
        %5698 = vmatpush.bf16.msra.mxu0 0
        %5699 = vmatpush.bf16.msra.mxu0 0
        %5700 = vmatpush.bf16.msra.mxu0 0
        %5701 = vmatpush.bf16.msra.mxu0 %v5692
        %5702 = vmatmul.bf16.gmra.mxu0 %v4022
        %v5703 = vpop.f32.mrf.mxu0
        %v5704 = vadd.f32 0.0, %v5703
        %v5705 = vpop.f32.mrf.mxu0
        %v5706 = vadd.f32 0.0, %v5705
        %5707 = vmatmul.bf16.gmra.mxu0 %v4025
        %v5708 = vpop.f32.mrf.mxu0
        %v5709 = vadd.f32 0.0, %v5708
        %v5710 = vpop.f32.mrf.mxu0
        %v5711 = vadd.f32 0.0, %v5710
        %5712 = vmatmul.bf16.gmra.mxu0 %v4028
        %v5713 = vpop.f32.mrf.mxu0
        %v5714 = vadd.f32 0.0, %v5713
        %v5715 = vpop.f32.mrf.mxu0
        %v5716 = vadd.f32 0.0, %v5715
        %5717 = vmatmul.bf16.gmra.mxu0 %v4031
        %v5718 = vpop.f32.mrf.mxu0
        %v5719 = vadd.f32 0.0, %v5718
        %v5720 = vpop.f32.mrf.mxu0
        %v5721 = vadd.f32 0.0, %v5720
        %5722 = vmatmul.bf16.gmra.mxu0 %v4034
        %v5723 = vpop.f32.mrf.mxu0
        %v5724 = vadd.f32 0.0, %v5723
        %v5725 = vpop.f32.mrf.mxu0
        %v5726 = vadd.f32 0.0, %v5725
        %5727 = vmatmul.bf16.gmra.mxu0 %v4037
        %v5728 = vpop.f32.mrf.mxu0
        %v5729 = vadd.f32 0.0, %v5728
        %v5730 = vpop.f32.mrf.mxu0
        %v5731 = vadd.f32 0.0, %v5730
        %5732 = vmatmul.bf16.gmra.mxu0 %v4040
        %v5733 = vpop.f32.mrf.mxu0
        %v5734 = vadd.f32 0.0, %v5733
        %v5735 = vpop.f32.mrf.mxu0
        %v5736 = vadd.f32 0.0, %v5735
        %5737 = vmatmul.bf16.gmra.mxu0 %v4043
        %v5738 = vpop.f32.mrf.mxu0
        %v5739 = vadd.f32 0.0, %v5738
        %v5740 = vpop.f32.mrf.mxu0
        %v5741 = vadd.f32 0.0, %v5740
        %5742 = vmatmul.bf16.gmra.mxu0 %v4046
        %v5743 = vpop.f32.mrf.mxu0
        %v5744 = vadd.f32 0.0, %v5743
        %v5745 = vpop.f32.mrf.mxu0
        %v5746 = vadd.f32 0.0, %v5745
        %5747 = vmatmul.bf16.gmra.mxu0 %v4049
        %v5748 = vpop.f32.mrf.mxu0
        %v5749 = vadd.f32 0.0, %v5748
        %v5750 = vpop.f32.mrf.mxu0
        %v5751 = vadd.f32 0.0, %v5750
        %5752 = vmatmul.bf16.gmra.mxu0 %v4052
        %v5753 = vpop.f32.mrf.mxu0
        %v5754 = vadd.f32 0.0, %v5753
        %v5755 = vpop.f32.mrf.mxu0
        %v5756 = vadd.f32 0.0, %v5755
        %5757 = vmatmul.bf16.gmra.mxu0 %v4055
        %v5758 = vpop.f32.mrf.mxu0
        %v5759 = vadd.f32 0.0, %v5758
        %v5760 = vpop.f32.mrf.mxu0
        %v5761 = vadd.f32 0.0, %v5760
        %5762 = vmatmul.bf16.gmra.mxu0 %v4058
        %v5763 = vpop.f32.mrf.mxu0
        %v5764 = vadd.f32 0.0, %v5763
        %v5765 = vpop.f32.mrf.mxu0
        %v5766 = vadd.f32 0.0, %v5765
        %5767 = vmatmul.bf16.gmra.mxu0 %v4061
        %v5768 = vpop.f32.mrf.mxu0
        %v5769 = vadd.f32 0.0, %v5768
        %v5770 = vpop.f32.mrf.mxu0
        %v5771 = vadd.f32 0.0, %v5770
        %5772 = vmatmul.bf16.gmra.mxu0 %v4064
        %v5773 = vpop.f32.mrf.mxu0
        %v5774 = vadd.f32 0.0, %v5773
        %v5775 = vpop.f32.mrf.mxu0
        %v5776 = vadd.f32 0.0, %v5775
        %5777 = vmatmul.bf16.gmra.mxu0 %v4067
        %v5778 = vpop.f32.mrf.mxu0
        %v5779 = vadd.f32 0.0, %v5778
        %v5780 = vpop.f32.mrf.mxu0
        %v5781 = vadd.f32 0.0, %v5780
        %5782 = vmatmul.bf16.gmra.mxu0 %v4070
        %v5783 = vpop.f32.mrf.mxu0
        %v5784 = vadd.f32 0.0, %v5783
        %v5785 = vpop.f32.mrf.mxu0
        %v5786 = vadd.f32 0.0, %v5785
        %5787 = vmatmul.bf16.gmra.mxu0 %v4073
        %v5788 = vpop.f32.mrf.mxu0
        %v5789 = vadd.f32 0.0, %v5788
        %v5790 = vpop.f32.mrf.mxu0
        %v5791 = vadd.f32 0.0, %v5790
        %5792 = vmatmul.bf16.gmra.mxu0 %v4076
        %v5793 = vpop.f32.mrf.mxu0
        %v5794 = vadd.f32 0.0, %v5793
        %v5795 = vpop.f32.mrf.mxu0
        %v5796 = vadd.f32 0.0, %v5795
        %5797 = vmatmul.bf16.gmra.mxu0 %v4079
        %v5798 = vpop.f32.mrf.mxu0
        %v5799 = vadd.f32 0.0, %v5798
        %v5800 = vpop.f32.mrf.mxu0
        %v5801 = vadd.f32 0.0, %v5800
        %5802 = vmatmul.bf16.gmra.mxu0 %v4082
        %v5803 = vpop.f32.mrf.mxu0
        %v5804 = vadd.f32 0.0, %v5803
        %v5805 = vpop.f32.mrf.mxu0
        %v5806 = vadd.f32 0.0, %v5805
        %5807 = vmatmul.bf16.gmra.mxu0 %v4085
        %v5808 = vpop.f32.mrf.mxu0
        %v5809 = vadd.f32 0.0, %v5808
        %v5810 = vpop.f32.mrf.mxu0
        %v5811 = vadd.f32 0.0, %v5810
        %5812 = vmatmul.bf16.gmra.mxu0 %v4088
        %v5813 = vpop.f32.mrf.mxu0
        %v5814 = vadd.f32 0.0, %v5813
        %v5815 = vpop.f32.mrf.mxu0
        %v5816 = vadd.f32 0.0, %v5815
        %5817 = vmatmul.bf16.gmra.mxu0 %v4091
        %v5818 = vpop.f32.mrf.mxu0
        %v5819 = vadd.f32 0.0, %v5818
        %v5820 = vpop.f32.mrf.mxu0
        %v5821 = vadd.f32 0.0, %v5820
        %5822 = vmatmul.bf16.gmra.mxu0 %v4094
        %v5823 = vpop.f32.mrf.mxu0
        %v5824 = vadd.f32 0.0, %v5823
        %v5825 = vpop.f32.mrf.mxu0
        %v5826 = vadd.f32 0.0, %v5825
        %5827 = vmatmul.bf16.gmra.mxu0 %v4097
        %v5828 = vpop.f32.mrf.mxu0
        %v5829 = vadd.f32 0.0, %v5828
        %v5830 = vpop.f32.mrf.mxu0
        %v5831 = vadd.f32 0.0, %v5830
        %5832 = vmatmul.bf16.gmra.mxu0 %v4100
        %v5833 = vpop.f32.mrf.mxu0
        %v5834 = vadd.f32 0.0, %v5833
        %v5835 = vpop.f32.mrf.mxu0
        %v5836 = vadd.f32 0.0, %v5835
        %5837 = vmatmul.bf16.gmra.mxu0 %v4103
        %v5838 = vpop.f32.mrf.mxu0
        %v5839 = vadd.f32 0.0, %v5838
        %v5840 = vpop.f32.mrf.mxu0
        %v5841 = vadd.f32 0.0, %v5840
        %5842 = vmatmul.bf16.gmra.mxu0 %v4106
        %v5843 = vpop.f32.mrf.mxu0
        %v5844 = vadd.f32 0.0, %v5843
        %v5845 = vpop.f32.mrf.mxu0
        %v5846 = vadd.f32 0.0, %v5845
        %5847 = vmatmul.bf16.gmra.mxu0 %v4109
        %v5848 = vpop.f32.mrf.mxu0
        %v5849 = vadd.f32 0.0, %v5848
        %v5850 = vpop.f32.mrf.mxu0
        %v5851 = vadd.f32 0.0, %v5850
        %5852 = vmatmul.bf16.gmra.mxu0 %v4112
        %v5853 = vpop.f32.mrf.mxu0
        %v5854 = vadd.f32 0.0, %v5853
        %v5855 = vpop.f32.mrf.mxu0
        %v5856 = vadd.f32 0.0, %v5855
        %5857 = vmatmul.bf16.gmra.mxu0 %v4115
        %v5858 = vpop.f32.mrf.mxu0
        %v5859 = vadd.f32 0.0, %v5858
        %v5860 = vpop.f32.mrf.mxu0
        %v5861 = vadd.f32 0.0, %v5860
        %5862 = vmatmul.bf16.gmra.mxu0 %v4118
        %v5863 = vpop.f32.mrf.mxu0
        %v5864 = vadd.f32 0.0, %v5863
        %v5865 = vpop.f32.mrf.mxu0
        %v5866 = vadd.f32 0.0, %v5865
        %5867 = vmatmul.bf16.gmra.mxu0 %v4121
        %v5868 = vpop.f32.mrf.mxu0
        %v5869 = vadd.f32 0.0, %v5868
        %v5870 = vpop.f32.mrf.mxu0
        %v5871 = vadd.f32 0.0, %v5870
        %5872 = vmatmul.bf16.gmra.mxu0 %v4124
        %v5873 = vpop.f32.mrf.mxu0
        %v5874 = vadd.f32 0.0, %v5873
        %v5875 = vpop.f32.mrf.mxu0
        %v5876 = vadd.f32 0.0, %v5875
        %5877 = vmatmul.bf16.gmra.mxu0 %v4127
        %v5878 = vpop.f32.mrf.mxu0
        %v5879 = vadd.f32 0.0, %v5878
        %v5880 = vpop.f32.mrf.mxu0
        %v5881 = vadd.f32 0.0, %v5880
        %5882 = vmatmul.bf16.gmra.mxu0 %v4130
        %v5883 = vpop.f32.mrf.mxu0
        %v5884 = vadd.f32 0.0, %v5883
        %v5885 = vpop.f32.mrf.mxu0
        %v5886 = vadd.f32 0.0, %v5885
        %5887 = vmatmul.bf16.gmra.mxu0 %v4133
        %v5888 = vpop.f32.mrf.mxu0
        %v5889 = vadd.f32 0.0, %v5888
        %v5890 = vpop.f32.mrf.mxu0
        %v5891 = vadd.f32 0.0, %v5890
        %5892 = vmatmul.bf16.gmra.mxu0 %v4136
        %v5893 = vpop.f32.mrf.mxu0
        %v5894 = vadd.f32 0.0, %v5893
        %v5895 = vpop.f32.mrf.mxu0
        %v5896 = vadd.f32 0.0, %v5895
        %5897 = vmatmul.bf16.gmra.mxu0 %v4139
        %v5898 = vpop.f32.mrf.mxu0
        %v5899 = vadd.f32 0.0, %v5898
        %v5900 = vpop.f32.mrf.mxu0
        %v5901 = vadd.f32 0.0, %v5900
        %5902 = vmatmul.bf16.gmra.mxu0 %v4142
        %v5903 = vpop.f32.mrf.mxu0
        %v5904 = vadd.f32 0.0, %v5903
        %v5905 = vpop.f32.mrf.mxu0
        %v5906 = vadd.f32 0.0, %v5905
        %5907 = vmatmul.bf16.gmra.mxu0 %v4145
        %v5908 = vpop.f32.mrf.mxu0
        %v5909 = vadd.f32 0.0, %v5908
        %v5910 = vpop.f32.mrf.mxu0
        %v5911 = vadd.f32 0.0, %v5910
        %5912 = vmatmul.bf16.gmra.mxu0 %v4148
        %v5913 = vpop.f32.mrf.mxu0
        %v5914 = vadd.f32 0.0, %v5913
        %v5915 = vpop.f32.mrf.mxu0
        %v5916 = vadd.f32 0.0, %v5915
        %5917 = vmatmul.bf16.gmra.mxu0 %v4151
        %v5918 = vpop.f32.mrf.mxu0
        %v5919 = vadd.f32 0.0, %v5918
        %v5920 = vpop.f32.mrf.mxu0
        %v5921 = vadd.f32 0.0, %v5920
        %5922 = vmatmul.bf16.gmra.mxu0 %v4154
        %v5923 = vpop.f32.mrf.mxu0
        %v5924 = vadd.f32 0.0, %v5923
        %v5925 = vpop.f32.mrf.mxu0
        %v5926 = vadd.f32 0.0, %v5925
        %5927 = vmatmul.bf16.gmra.mxu0 %v4157
        %v5928 = vpop.f32.mrf.mxu0
        %v5929 = vadd.f32 0.0, %v5928
        %v5930 = vpop.f32.mrf.mxu0
        %v5931 = vadd.f32 0.0, %v5930
        %5932 = vmatmul.bf16.gmra.mxu0 %v4160
        %v5933 = vpop.f32.mrf.mxu0
        %v5934 = vadd.f32 0.0, %v5933
        %v5935 = vpop.f32.mrf.mxu0
        %v5936 = vadd.f32 0.0, %v5935
        %5937 = vmatmul.bf16.gmra.mxu0 %v4163
        %v5938 = vpop.f32.mrf.mxu0
        %v5939 = vadd.f32 0.0, %v5938
        %v5940 = vpop.f32.mrf.mxu0
        %v5941 = vadd.f32 0.0, %v5940
        %5942 = vmatmul.bf16.gmra.mxu0 %v4166
        %v5943 = vpop.f32.mrf.mxu0
        %v5944 = vadd.f32 0.0, %v5943
        %v5945 = vpop.f32.mrf.mxu0
        %v5946 = vadd.f32 0.0, %v5945
        %5947 = vmatmul.bf16.gmra.mxu0 %v4169
        %v5948 = vpop.f32.mrf.mxu0
        %v5949 = vadd.f32 0.0, %v5948
        %v5950 = vpop.f32.mrf.mxu0
        %v5951 = vadd.f32 0.0, %v5950
        %5952 = vmatmul.bf16.gmra.mxu0 %v4172
        %v5953 = vpop.f32.mrf.mxu0
        %v5954 = vadd.f32 0.0, %v5953
        %v5955 = vpop.f32.mrf.mxu0
        %v5956 = vadd.f32 0.0, %v5955
        %5957 = vmatmul.bf16.gmra.mxu0 %v4175
        %v5958 = vpop.f32.mrf.mxu0
        %v5959 = vadd.f32 0.0, %v5958
        %v5960 = vpop.f32.mrf.mxu0
        %v5961 = vadd.f32 0.0, %v5960
        %5962 = vmatmul.bf16.gmra.mxu0 %v4178
        %v5963 = vpop.f32.mrf.mxu0
        %v5964 = vadd.f32 0.0, %v5963
        %v5965 = vpop.f32.mrf.mxu0
        %v5966 = vadd.f32 0.0, %v5965
        %5967 = vmatmul.bf16.gmra.mxu0 %v4181
        %v5968 = vpop.f32.mrf.mxu0
        %v5969 = vadd.f32 0.0, %v5968
        %v5970 = vpop.f32.mrf.mxu0
        %v5971 = vadd.f32 0.0, %v5970
        %5972 = vmatmul.bf16.gmra.mxu0 %v4184
        %v5973 = vpop.f32.mrf.mxu0
        %v5974 = vadd.f32 0.0, %v5973
        %v5975 = vpop.f32.mrf.mxu0
        %v5976 = vadd.f32 0.0, %v5975
        %5977 = vmatmul.bf16.gmra.mxu0 %v4187
        %v5978 = vpop.f32.mrf.mxu0
        %v5979 = vadd.f32 0.0, %v5978
        %v5980 = vpop.f32.mrf.mxu0
        %v5981 = vadd.f32 0.0, %v5980
        %5982 = vmatmul.bf16.gmra.mxu0 %v4190
        %v5983 = vpop.f32.mrf.mxu0
        %v5984 = vadd.f32 0.0, %v5983
        %v5985 = vpop.f32.mrf.mxu0
        %v5986 = vadd.f32 0.0, %v5985
        %5987 = vmatmul.bf16.gmra.mxu0 %v4193
        %v5988 = vpop.f32.mrf.mxu0
        %v5989 = vadd.f32 0.0, %v5988
        %v5990 = vpop.f32.mrf.mxu0
        %v5991 = vadd.f32 0.0, %v5990
        %5992 = vmatmul.bf16.gmra.mxu0 %v4196
        %v5993 = vpop.f32.mrf.mxu0
        %v5994 = vadd.f32 0.0, %v5993
        %v5995 = vpop.f32.mrf.mxu0
        %v5996 = vadd.f32 0.0, %v5995
        %5997 = vmatmul.bf16.gmra.mxu0 %v4199
        %v5998 = vpop.f32.mrf.mxu0
        %v5999 = vadd.f32 0.0, %v5998
        %v6000 = vpop.f32.mrf.mxu0
        %v6001 = vadd.f32 0.0, %v6000
        %6002 = vmatmul.bf16.gmra.mxu0 %v4202
        %v6003 = vpop.f32.mrf.mxu0
        %v6004 = vadd.f32 0.0, %v6003
        %v6005 = vpop.f32.mrf.mxu0
        %v6006 = vadd.f32 0.0, %v6005
        %6007 = vmatmul.bf16.gmra.mxu0 %v4205
        %v6008 = vpop.f32.mrf.mxu0
        %v6009 = vadd.f32 0.0, %v6008
        %v6010 = vpop.f32.mrf.mxu0
        %v6011 = vadd.f32 0.0, %v6010
        %6012 = vmatmul.bf16.gmra.mxu0 %v5686
        %v6013 = vpop.f32.mrf.mxu0
        %v6014 = vadd.f32 0.0, %v6013
        %v6015 = vpop.f32.mrf.mxu0
        %v6016 = vadd.f32 0.0, %v6015
        %6017 = vmatmul.bf16.gmra.mxu0 %v5689
        %v6018 = vpop.f32.mrf.mxu0
        %v6019 = vadd.f32 0.0, %v6018
        %v6020 = vpop.f32.mrf.mxu0
        %v6021 = vadd.f32 0.0, %v6020
        %6022 = vdwg.mxu0
        %v6023 = vadd.f32 %v5535, %v5704
        %v6024 = vadd.f32 %v5536, %v5706
        %v6025 = vadd.f32 %v5537, %v5709
        %v6026 = vadd.f32 %v5538, %v5711
        %v6027 = vadd.f32 %v5539, %v5714
        %v6028 = vadd.f32 %v5540, %v5716
        %v6029 = vadd.f32 %v5541, %v5719
        %v6030 = vadd.f32 %v5542, %v5721
        %v6031 = vadd.f32 %v5543, %v5724
        %v6032 = vadd.f32 %v5544, %v5726
        %v6033 = vadd.f32 %v5545, %v5729
        %v6034 = vadd.f32 %v5546, %v5731
        %v6035 = vadd.f32 %v5547, %v5734
        %v6036 = vadd.f32 %v5548, %v5736
        %v6037 = vadd.f32 %v5549, %v5739
        %v6038 = vadd.f32 %v5550, %v5741
        %v6039 = vadd.f32 %v5551, %v5744
        %v6040 = vadd.f32 %v5552, %v5746
        %v6041 = vadd.f32 %v5553, %v5749
        %v6042 = vadd.f32 %v5554, %v5751
        %v6043 = vadd.f32 %v5555, %v5754
        %v6044 = vadd.f32 %v5556, %v5756
        %v6045 = vadd.f32 %v5557, %v5759
        %v6046 = vadd.f32 %v5558, %v5761
        %v6047 = vadd.f32 %v5559, %v5764
        %v6048 = vadd.f32 %v5560, %v5766
        %v6049 = vadd.f32 %v5561, %v5769
        %v6050 = vadd.f32 %v5562, %v5771
        %v6051 = vadd.f32 %v5563, %v5774
        %v6052 = vadd.f32 %v5564, %v5776
        %v6053 = vadd.f32 %v5565, %v5779
        %v6054 = vadd.f32 %v5566, %v5781
        %v6055 = vadd.f32 %v5567, %v5784
        %v6056 = vadd.f32 %v5568, %v5786
        %v6057 = vadd.f32 %v5569, %v5789
        %v6058 = vadd.f32 %v5570, %v5791
        %v6059 = vadd.f32 %v5571, %v5794
        %v6060 = vadd.f32 %v5572, %v5796
        %v6061 = vadd.f32 %v5573, %v5799
        %v6062 = vadd.f32 %v5574, %v5801
        %v6063 = vadd.f32 %v5575, %v5804
        %v6064 = vadd.f32 %v5576, %v5806
        %v6065 = vadd.f32 %v5577, %v5809
        %v6066 = vadd.f32 %v5578, %v5811
        %v6067 = vadd.f32 %v5579, %v5814
        %v6068 = vadd.f32 %v5580, %v5816
        %v6069 = vadd.f32 %v5581, %v5819
        %v6070 = vadd.f32 %v5582, %v5821
        %v6071 = vadd.f32 %v5583, %v5824
        %v6072 = vadd.f32 %v5584, %v5826
        %v6073 = vadd.f32 %v5585, %v5829
        %v6074 = vadd.f32 %v5586, %v5831
        %v6075 = vadd.f32 %v5587, %v5834
        %v6076 = vadd.f32 %v5588, %v5836
        %v6077 = vadd.f32 %v5589, %v5839
        %v6078 = vadd.f32 %v5590, %v5841
        %v6079 = vadd.f32 %v5591, %v5844
        %v6080 = vadd.f32 %v5592, %v5846
        %v6081 = vadd.f32 %v5593, %v5849
        %v6082 = vadd.f32 %v5594, %v5851
        %v6083 = vadd.f32 %v5595, %v5854
        %v6084 = vadd.f32 %v5596, %v5856
        %v6085 = vadd.f32 %v5597, %v5859
        %v6086 = vadd.f32 %v5598, %v5861
        %v6087 = vadd.f32 %v5599, %v5864
        %v6088 = vadd.f32 %v5600, %v5866
        %v6089 = vadd.f32 %v5601, %v5869
        %v6090 = vadd.f32 %v5602, %v5871
        %v6091 = vadd.f32 %v5603, %v5874
        %v6092 = vadd.f32 %v5604, %v5876
        %v6093 = vadd.f32 %v5605, %v5879
        %v6094 = vadd.f32 %v5606, %v5881
        %v6095 = vadd.f32 %v5607, %v5884
        %v6096 = vadd.f32 %v5608, %v5886
        %v6097 = vadd.f32 %v5609, %v5889
        %v6098 = vadd.f32 %v5610, %v5891
        %v6099 = vadd.f32 %v5611, %v5894
        %v6100 = vadd.f32 %v5612, %v5896
        %v6101 = vadd.f32 %v5613, %v5899
        %v6102 = vadd.f32 %v5614, %v5901
        %v6103 = vadd.f32 %v5615, %v5904
        %v6104 = vadd.f32 %v5616, %v5906
        %v6105 = vadd.f32 %v5617, %v5909
        %v6106 = vadd.f32 %v5618, %v5911
        %v6107 = vadd.f32 %v5619, %v5914
        %v6108 = vadd.f32 %v5620, %v5916
        %v6109 = vadd.f32 %v5621, %v5919
        %v6110 = vadd.f32 %v5622, %v5921
        %v6111 = vadd.f32 %v5623, %v5924
        %v6112 = vadd.f32 %v5624, %v5926
        %v6113 = vadd.f32 %v5625, %v5929
        %v6114 = vadd.f32 %v5626, %v5931
        %v6115 = vadd.f32 %v5627, %v5934
        %v6116 = vadd.f32 %v5628, %v5936
        %v6117 = vadd.f32 %v5629, %v5939
        %v6118 = vadd.f32 %v5630, %v5941
        %v6119 = vadd.f32 %v5631, %v5944
        %v6120 = vadd.f32 %v5632, %v5946
        %v6121 = vadd.f32 %v5633, %v5949
        %v6122 = vadd.f32 %v5634, %v5951
        %v6123 = vadd.f32 %v5635, %v5954
        %v6124 = vadd.f32 %v5636, %v5956
        %v6125 = vadd.f32 %v5637, %v5959
        %v6126 = vadd.f32 %v5638, %v5961
        %v6127 = vadd.f32 %v5639, %v5964
        %v6128 = vadd.f32 %v5640, %v5966
        %v6129 = vadd.f32 %v5641, %v5969
        %v6130 = vadd.f32 %v5642, %v5971
        %v6131 = vadd.f32 %v5643, %v5974
        %v6132 = vadd.f32 %v5644, %v5976
        %v6133 = vadd.f32 %v5645, %v5979
        %v6134 = vadd.f32 %v5646, %v5981
        %v6135 = vadd.f32 %v5647, %v5984
        %v6136 = vadd.f32 %v5648, %v5986
        %v6137 = vadd.f32 %v5649, %v5989
        %v6138 = vadd.f32 %v5650, %v5991
        %v6139 = vadd.f32 %v5651, %v5994
        %v6140 = vadd.f32 %v5652, %v5996
        %v6141 = vadd.f32 %v5653, %v5999
        %v6142 = vadd.f32 %v5654, %v6001
        %v6143 = vadd.f32 %v5655, %v6004
        %v6144 = vadd.f32 %v5656, %v6006
        %v6145 = vadd.f32 %v5657, %v6009
        %v6146 = vadd.f32 %v5658, %v6011
        %v6147 = vadd.f32 %v5659, %v6014
        %v6148 = vadd.f32 %v5660, %v6016
        %v6149 = vadd.f32 %v5661, %v6019
        %v6150 = vadd.f32 %v5662, %v6021
        %s6151 = scalar_lea.vmem %s215, 12
        %v6152 = vld [vmem:[%s6151] sm:$0x3]
        %v6157 = vunpack.c.l.b16 %v386
        %v6158 = vunpack.c.l.b16 %v387
        %v6159 = vunpack.c.l.b16 %v388
        %v6160 = vunpack.c.l.b16 %v389
        %v6161 = vpack.c.b16 %v6158, %v6157
        %v6162 = vpack.c.b16 %v6160, %v6159
        %v6164 = vsel %vm1997, %v6161, 0
        %v6167 = vsel %vm1997, %v6162, 0
        %v6170 = vand.u32 %v6152, %v2193
        %6172 = vmatpush.bf16.msra.mxu0 0
        %6173 = vmatpush.bf16.msra.mxu0 0
        %6174 = vmatpush.bf16.msra.mxu0 0
        %6175 = vmatpush.bf16.msra.mxu0 0
        %6176 = vmatpush.bf16.msra.mxu0 0
        %6177 = vmatpush.bf16.msra.mxu0 0
        %6178 = vmatpush.bf16.msra.mxu0 0
        %6179 = vmatpush.bf16.msra.mxu0 %v6170
        %6180 = vmatmul.bf16.gmra.mxu0 %v2859
        %v6181 = vpop.f32.mrf.mxu0
        %v6182 = vadd.f32 0.0, %v6181
        %v6183 = vpop.f32.mrf.mxu0
        %v6184 = vadd.f32 0.0, %v6183
        %6185 = vmatmul.bf16.gmra.mxu0 %v2862
        %v6186 = vpop.f32.mrf.mxu0
        %v6187 = vadd.f32 0.0, %v6186
        %v6188 = vpop.f32.mrf.mxu0
        %v6189 = vadd.f32 0.0, %v6188
        %6190 = vmatmul.bf16.gmra.mxu0 %v2865
        %v6191 = vpop.f32.mrf.mxu0
        %v6192 = vadd.f32 0.0, %v6191
        %v6193 = vpop.f32.mrf.mxu0
        %v6194 = vadd.f32 0.0, %v6193
        %6195 = vmatmul.bf16.gmra.mxu0 %v2868
        %v6196 = vpop.f32.mrf.mxu0
        %v6197 = vadd.f32 0.0, %v6196
        %v6198 = vpop.f32.mrf.mxu0
        %v6199 = vadd.f32 0.0, %v6198
        %6200 = vmatmul.bf16.gmra.mxu0 %v2871
        %v6201 = vpop.f32.mrf.mxu0
        %v6202 = vadd.f32 0.0, %v6201
        %v6203 = vpop.f32.mrf.mxu0
        %v6204 = vadd.f32 0.0, %v6203
        %6205 = vmatmul.bf16.gmra.mxu0 %v2874
        %v6206 = vpop.f32.mrf.mxu0
        %v6207 = vadd.f32 0.0, %v6206
        %v6208 = vpop.f32.mrf.mxu0
        %v6209 = vadd.f32 0.0, %v6208
        %6210 = vmatmul.bf16.gmra.mxu0 %v2877
        %v6211 = vpop.f32.mrf.mxu0
        %v6212 = vadd.f32 0.0, %v6211
        %v6213 = vpop.f32.mrf.mxu0
        %v6214 = vadd.f32 0.0, %v6213
        %6215 = vmatmul.bf16.gmra.mxu0 %v2880
        %v6216 = vpop.f32.mrf.mxu0
        %v6217 = vadd.f32 0.0, %v6216
        %v6218 = vpop.f32.mrf.mxu0
        %v6219 = vadd.f32 0.0, %v6218
        %6220 = vmatmul.bf16.gmra.mxu0 %v2883
        %v6221 = vpop.f32.mrf.mxu0
        %v6222 = vadd.f32 0.0, %v6221
        %v6223 = vpop.f32.mrf.mxu0
        %v6224 = vadd.f32 0.0, %v6223
        %6225 = vmatmul.bf16.gmra.mxu0 %v2886
        %v6226 = vpop.f32.mrf.mxu0
        %v6227 = vadd.f32 0.0, %v6226
        %v6228 = vpop.f32.mrf.mxu0
        %v6229 = vadd.f32 0.0, %v6228
        %6230 = vmatmul.bf16.gmra.mxu0 %v2889
        %v6231 = vpop.f32.mrf.mxu0
        %v6232 = vadd.f32 0.0, %v6231
        %v6233 = vpop.f32.mrf.mxu0
        %v6234 = vadd.f32 0.0, %v6233
        %6235 = vmatmul.bf16.gmra.mxu0 %v2892
        %v6236 = vpop.f32.mrf.mxu0
        %v6237 = vadd.f32 0.0, %v6236
        %v6238 = vpop.f32.mrf.mxu0
        %v6239 = vadd.f32 0.0, %v6238
        %6240 = vmatmul.bf16.gmra.mxu0 %v2895
        %v6241 = vpop.f32.mrf.mxu0
        %v6242 = vadd.f32 0.0, %v6241
        %v6243 = vpop.f32.mrf.mxu0
        %v6244 = vadd.f32 0.0, %v6243
        %6245 = vmatmul.bf16.gmra.mxu0 %v2898
        %v6246 = vpop.f32.mrf.mxu0
        %v6247 = vadd.f32 0.0, %v6246
        %v6248 = vpop.f32.mrf.mxu0
        %v6249 = vadd.f32 0.0, %v6248
        %6250 = vmatmul.bf16.gmra.mxu0 %v2901
        %v6251 = vpop.f32.mrf.mxu0
        %v6252 = vadd.f32 0.0, %v6251
        %v6253 = vpop.f32.mrf.mxu0
        %v6254 = vadd.f32 0.0, %v6253
        %6255 = vmatmul.bf16.gmra.mxu0 %v2904
        %v6256 = vpop.f32.mrf.mxu0
        %v6257 = vadd.f32 0.0, %v6256
        %v6258 = vpop.f32.mrf.mxu0
        %v6259 = vadd.f32 0.0, %v6258
        %6260 = vmatmul.bf16.gmra.mxu0 %v2907
        %v6261 = vpop.f32.mrf.mxu0
        %v6262 = vadd.f32 0.0, %v6261
        %v6263 = vpop.f32.mrf.mxu0
        %v6264 = vadd.f32 0.0, %v6263
        %6265 = vmatmul.bf16.gmra.mxu0 %v2910
        %v6266 = vpop.f32.mrf.mxu0
        %v6267 = vadd.f32 0.0, %v6266
        %v6268 = vpop.f32.mrf.mxu0
        %v6269 = vadd.f32 0.0, %v6268
        %6270 = vmatmul.bf16.gmra.mxu0 %v2913
        %v6271 = vpop.f32.mrf.mxu0
        %v6272 = vadd.f32 0.0, %v6271
        %v6273 = vpop.f32.mrf.mxu0
        %v6274 = vadd.f32 0.0, %v6273
        %6275 = vmatmul.bf16.gmra.mxu0 %v2916
        %v6276 = vpop.f32.mrf.mxu0
        %v6277 = vadd.f32 0.0, %v6276
        %v6278 = vpop.f32.mrf.mxu0
        %v6279 = vadd.f32 0.0, %v6278
        %6280 = vmatmul.bf16.gmra.mxu0 %v2919
        %v6281 = vpop.f32.mrf.mxu0
        %v6282 = vadd.f32 0.0, %v6281
        %v6283 = vpop.f32.mrf.mxu0
        %v6284 = vadd.f32 0.0, %v6283
        %6285 = vmatmul.bf16.gmra.mxu0 %v2922
        %v6286 = vpop.f32.mrf.mxu0
        %v6287 = vadd.f32 0.0, %v6286
        %v6288 = vpop.f32.mrf.mxu0
        %v6289 = vadd.f32 0.0, %v6288
        %6290 = vmatmul.bf16.gmra.mxu0 %v2925
        %v6291 = vpop.f32.mrf.mxu0
        %v6292 = vadd.f32 0.0, %v6291
        %v6293 = vpop.f32.mrf.mxu0
        %v6294 = vadd.f32 0.0, %v6293
        %6295 = vmatmul.bf16.gmra.mxu0 %v2928
        %v6296 = vpop.f32.mrf.mxu0
        %v6297 = vadd.f32 0.0, %v6296
        %v6298 = vpop.f32.mrf.mxu0
        %v6299 = vadd.f32 0.0, %v6298
        %6300 = vmatmul.bf16.gmra.mxu0 %v2931
        %v6301 = vpop.f32.mrf.mxu0
        %v6302 = vadd.f32 0.0, %v6301
        %v6303 = vpop.f32.mrf.mxu0
        %v6304 = vadd.f32 0.0, %v6303
        %6305 = vmatmul.bf16.gmra.mxu0 %v2934
        %v6306 = vpop.f32.mrf.mxu0
        %v6307 = vadd.f32 0.0, %v6306
        %v6308 = vpop.f32.mrf.mxu0
        %v6309 = vadd.f32 0.0, %v6308
        %6310 = vmatmul.bf16.gmra.mxu0 %v2937
        %v6311 = vpop.f32.mrf.mxu0
        %v6312 = vadd.f32 0.0, %v6311
        %v6313 = vpop.f32.mrf.mxu0
        %v6314 = vadd.f32 0.0, %v6313
        %6315 = vmatmul.bf16.gmra.mxu0 %v2940
        %v6316 = vpop.f32.mrf.mxu0
        %v6317 = vadd.f32 0.0, %v6316
        %v6318 = vpop.f32.mrf.mxu0
        %v6319 = vadd.f32 0.0, %v6318
        %6320 = vmatmul.bf16.gmra.mxu0 %v2943
        %v6321 = vpop.f32.mrf.mxu0
        %v6322 = vadd.f32 0.0, %v6321
        %v6323 = vpop.f32.mrf.mxu0
        %v6324 = vadd.f32 0.0, %v6323
        %6325 = vmatmul.bf16.gmra.mxu0 %v2946
        %v6326 = vpop.f32.mrf.mxu0
        %v6327 = vadd.f32 0.0, %v6326
        %v6328 = vpop.f32.mrf.mxu0
        %v6329 = vadd.f32 0.0, %v6328
        %6330 = vmatmul.bf16.gmra.mxu0 %v2949
        %v6331 = vpop.f32.mrf.mxu0
        %v6332 = vadd.f32 0.0, %v6331
        %v6333 = vpop.f32.mrf.mxu0
        %v6334 = vadd.f32 0.0, %v6333
        %6335 = vmatmul.bf16.gmra.mxu0 %v2952
        %v6336 = vpop.f32.mrf.mxu0
        %v6337 = vadd.f32 0.0, %v6336
        %v6338 = vpop.f32.mrf.mxu0
        %v6339 = vadd.f32 0.0, %v6338
        %6340 = vmatmul.bf16.gmra.mxu0 %v2955
        %v6341 = vpop.f32.mrf.mxu0
        %v6342 = vadd.f32 0.0, %v6341
        %v6343 = vpop.f32.mrf.mxu0
        %v6344 = vadd.f32 0.0, %v6343
        %6345 = vmatmul.bf16.gmra.mxu0 %v2958
        %v6346 = vpop.f32.mrf.mxu0
        %v6347 = vadd.f32 0.0, %v6346
        %v6348 = vpop.f32.mrf.mxu0
        %v6349 = vadd.f32 0.0, %v6348
        %6350 = vmatmul.bf16.gmra.mxu0 %v2961
        %v6351 = vpop.f32.mrf.mxu0
        %v6352 = vadd.f32 0.0, %v6351
        %v6353 = vpop.f32.mrf.mxu0
        %v6354 = vadd.f32 0.0, %v6353
        %6355 = vmatmul.bf16.gmra.mxu0 %v2964
        %v6356 = vpop.f32.mrf.mxu0
        %v6357 = vadd.f32 0.0, %v6356
        %v6358 = vpop.f32.mrf.mxu0
        %v6359 = vadd.f32 0.0, %v6358
        %6360 = vmatmul.bf16.gmra.mxu0 %v2967
        %v6361 = vpop.f32.mrf.mxu0
        %v6362 = vadd.f32 0.0, %v6361
        %v6363 = vpop.f32.mrf.mxu0
        %v6364 = vadd.f32 0.0, %v6363
        %6365 = vmatmul.bf16.gmra.mxu0 %v2970
        %v6366 = vpop.f32.mrf.mxu0
        %v6367 = vadd.f32 0.0, %v6366
        %v6368 = vpop.f32.mrf.mxu0
        %v6369 = vadd.f32 0.0, %v6368
        %6370 = vmatmul.bf16.gmra.mxu0 %v2973
        %v6371 = vpop.f32.mrf.mxu0
        %v6372 = vadd.f32 0.0, %v6371
        %v6373 = vpop.f32.mrf.mxu0
        %v6374 = vadd.f32 0.0, %v6373
        %6375 = vmatmul.bf16.gmra.mxu0 %v2976
        %v6376 = vpop.f32.mrf.mxu0
        %v6377 = vadd.f32 0.0, %v6376
        %v6378 = vpop.f32.mrf.mxu0
        %v6379 = vadd.f32 0.0, %v6378
        %6380 = vmatmul.bf16.gmra.mxu0 %v2979
        %v6381 = vpop.f32.mrf.mxu0
        %v6382 = vadd.f32 0.0, %v6381
        %v6383 = vpop.f32.mrf.mxu0
        %v6384 = vadd.f32 0.0, %v6383
        %6385 = vmatmul.bf16.gmra.mxu0 %v2982
        %v6386 = vpop.f32.mrf.mxu0
        %v6387 = vadd.f32 0.0, %v6386
        %v6388 = vpop.f32.mrf.mxu0
        %v6389 = vadd.f32 0.0, %v6388
        %6390 = vmatmul.bf16.gmra.mxu0 %v2985
        %v6391 = vpop.f32.mrf.mxu0
        %v6392 = vadd.f32 0.0, %v6391
        %v6393 = vpop.f32.mrf.mxu0
        %v6394 = vadd.f32 0.0, %v6393
        %6395 = vmatmul.bf16.gmra.mxu0 %v2988
        %v6396 = vpop.f32.mrf.mxu0
        %v6397 = vadd.f32 0.0, %v6396
        %v6398 = vpop.f32.mrf.mxu0
        %v6399 = vadd.f32 0.0, %v6398
        %6400 = vmatmul.bf16.gmra.mxu0 %v2991
        %v6401 = vpop.f32.mrf.mxu0
        %v6402 = vadd.f32 0.0, %v6401
        %v6403 = vpop.f32.mrf.mxu0
        %v6404 = vadd.f32 0.0, %v6403
        %6405 = vmatmul.bf16.gmra.mxu0 %v2994
        %v6406 = vpop.f32.mrf.mxu0
        %v6407 = vadd.f32 0.0, %v6406
        %v6408 = vpop.f32.mrf.mxu0
        %v6409 = vadd.f32 0.0, %v6408
        %6410 = vmatmul.bf16.gmra.mxu0 %v2997
        %v6411 = vpop.f32.mrf.mxu0
        %v6412 = vadd.f32 0.0, %v6411
        %v6413 = vpop.f32.mrf.mxu0
        %v6414 = vadd.f32 0.0, %v6413
        %6415 = vmatmul.bf16.gmra.mxu0 %v3000
        %v6416 = vpop.f32.mrf.mxu0
        %v6417 = vadd.f32 0.0, %v6416
        %v6418 = vpop.f32.mrf.mxu0
        %v6419 = vadd.f32 0.0, %v6418
        %6420 = vmatmul.bf16.gmra.mxu0 %v3003
        %v6421 = vpop.f32.mrf.mxu0
        %v6422 = vadd.f32 0.0, %v6421
        %v6423 = vpop.f32.mrf.mxu0
        %v6424 = vadd.f32 0.0, %v6423
        %6425 = vmatmul.bf16.gmra.mxu0 %v3006
        %v6426 = vpop.f32.mrf.mxu0
        %v6427 = vadd.f32 0.0, %v6426
        %v6428 = vpop.f32.mrf.mxu0
        %v6429 = vadd.f32 0.0, %v6428
        %6430 = vmatmul.bf16.gmra.mxu0 %v3009
        %v6431 = vpop.f32.mrf.mxu0
        %v6432 = vadd.f32 0.0, %v6431
        %v6433 = vpop.f32.mrf.mxu0
        %v6434 = vadd.f32 0.0, %v6433
        %6435 = vmatmul.bf16.gmra.mxu0 %v3012
        %v6436 = vpop.f32.mrf.mxu0
        %v6437 = vadd.f32 0.0, %v6436
        %v6438 = vpop.f32.mrf.mxu0
        %v6439 = vadd.f32 0.0, %v6438
        %6440 = vmatmul.bf16.gmra.mxu0 %v3015
        %v6441 = vpop.f32.mrf.mxu0
        %v6442 = vadd.f32 0.0, %v6441
        %v6443 = vpop.f32.mrf.mxu0
        %v6444 = vadd.f32 0.0, %v6443
        %6445 = vmatmul.bf16.gmra.mxu0 %v3018
        %v6446 = vpop.f32.mrf.mxu0
        %v6447 = vadd.f32 0.0, %v6446
        %v6448 = vpop.f32.mrf.mxu0
        %v6449 = vadd.f32 0.0, %v6448
        %6450 = vmatmul.bf16.gmra.mxu0 %v3021
        %v6451 = vpop.f32.mrf.mxu0
        %v6452 = vadd.f32 0.0, %v6451
        %v6453 = vpop.f32.mrf.mxu0
        %v6454 = vadd.f32 0.0, %v6453
        %6455 = vmatmul.bf16.gmra.mxu0 %v3024
        %v6456 = vpop.f32.mrf.mxu0
        %v6457 = vadd.f32 0.0, %v6456
        %v6458 = vpop.f32.mrf.mxu0
        %v6459 = vadd.f32 0.0, %v6458
        %6460 = vmatmul.bf16.gmra.mxu0 %v3027
        %v6461 = vpop.f32.mrf.mxu0
        %v6462 = vadd.f32 0.0, %v6461
        %v6463 = vpop.f32.mrf.mxu0
        %v6464 = vadd.f32 0.0, %v6463
        %6465 = vmatmul.bf16.gmra.mxu0 %v3030
        %v6466 = vpop.f32.mrf.mxu0
        %v6467 = vadd.f32 0.0, %v6466
        %v6468 = vpop.f32.mrf.mxu0
        %v6469 = vadd.f32 0.0, %v6468
        %6470 = vmatmul.bf16.gmra.mxu0 %v3033
        %v6471 = vpop.f32.mrf.mxu0
        %v6472 = vadd.f32 0.0, %v6471
        %v6473 = vpop.f32.mrf.mxu0
        %v6474 = vadd.f32 0.0, %v6473
        %6475 = vmatmul.bf16.gmra.mxu0 %v3036
        %v6476 = vpop.f32.mrf.mxu0
        %v6477 = vadd.f32 0.0, %v6476
        %v6478 = vpop.f32.mrf.mxu0
        %v6479 = vadd.f32 0.0, %v6478
        %6480 = vmatmul.bf16.gmra.mxu0 %v4680
        %v6481 = vpop.f32.mrf.mxu0
        %v6482 = vadd.f32 0.0, %v6481
        %v6483 = vpop.f32.mrf.mxu0
        %v6484 = vadd.f32 0.0, %v6483
        %6485 = vmatmul.bf16.gmra.mxu0 %v4683
        %v6486 = vpop.f32.mrf.mxu0
        %v6487 = vadd.f32 0.0, %v6486
        %v6488 = vpop.f32.mrf.mxu0
        %v6489 = vadd.f32 0.0, %v6488
        %6490 = vmatmul.bf16.gmra.mxu0 %v6164
        %v6491 = vpop.f32.mrf.mxu0
        %v6492 = vadd.f32 0.0, %v6491
        %v6493 = vpop.f32.mrf.mxu0
        %v6494 = vadd.f32 0.0, %v6493
        %6495 = vmatmul.bf16.gmra.mxu0 %v6167
        %v6496 = vpop.f32.mrf.mxu0
        %v6497 = vadd.f32 0.0, %v6496
        %v6498 = vpop.f32.mrf.mxu0
        %v6499 = vadd.f32 0.0, %v6498
        %6500 = vdwg.mxu0
        %v6501 = vadd.f32 %v6023, %v6182
        %v6502 = vadd.f32 %v6024, %v6184
        %v6503 = vadd.f32 %v6025, %v6187
        %v6504 = vadd.f32 %v6026, %v6189
        %v6505 = vadd.f32 %v6027, %v6192
        %v6506 = vadd.f32 %v6028, %v6194
        %v6507 = vadd.f32 %v6029, %v6197
        %v6508 = vadd.f32 %v6030, %v6199
        %v6509 = vadd.f32 %v6031, %v6202
        %v6510 = vadd.f32 %v6032, %v6204
        %v6511 = vadd.f32 %v6033, %v6207
        %v6512 = vadd.f32 %v6034, %v6209
        %v6513 = vadd.f32 %v6035, %v6212
        %v6514 = vadd.f32 %v6036, %v6214
        %v6515 = vadd.f32 %v6037, %v6217
        %v6516 = vadd.f32 %v6038, %v6219
        %v6517 = vadd.f32 %v6039, %v6222
        %v6518 = vadd.f32 %v6040, %v6224
        %v6519 = vadd.f32 %v6041, %v6227
        %v6520 = vadd.f32 %v6042, %v6229
        %v6521 = vadd.f32 %v6043, %v6232
        %v6522 = vadd.f32 %v6044, %v6234
        %v6523 = vadd.f32 %v6045, %v6237
        %v6524 = vadd.f32 %v6046, %v6239
        %v6525 = vadd.f32 %v6047, %v6242
        %v6526 = vadd.f32 %v6048, %v6244
        %v6527 = vadd.f32 %v6049, %v6247
        %v6528 = vadd.f32 %v6050, %v6249
        %v6529 = vadd.f32 %v6051, %v6252
        %v6530 = vadd.f32 %v6052, %v6254
        %v6531 = vadd.f32 %v6053, %v6257
        %v6532 = vadd.f32 %v6054, %v6259
        %v6533 = vadd.f32 %v6055, %v6262
        %v6534 = vadd.f32 %v6056, %v6264
        %v6535 = vadd.f32 %v6057, %v6267
        %v6536 = vadd.f32 %v6058, %v6269
        %v6537 = vadd.f32 %v6059, %v6272
        %v6538 = vadd.f32 %v6060, %v6274
        %v6539 = vadd.f32 %v6061, %v6277
        %v6540 = vadd.f32 %v6062, %v6279
        %v6541 = vadd.f32 %v6063, %v6282
        %v6542 = vadd.f32 %v6064, %v6284
        %v6543 = vadd.f32 %v6065, %v6287
        %v6544 = vadd.f32 %v6066, %v6289
        %v6545 = vadd.f32 %v6067, %v6292
        %v6546 = vadd.f32 %v6068, %v6294
        %v6547 = vadd.f32 %v6069, %v6297
        %v6548 = vadd.f32 %v6070, %v6299
        %v6549 = vadd.f32 %v6071, %v6302
        %v6550 = vadd.f32 %v6072, %v6304
        %v6551 = vadd.f32 %v6073, %v6307
        %v6552 = vadd.f32 %v6074, %v6309
        %v6553 = vadd.f32 %v6075, %v6312
        %v6554 = vadd.f32 %v6076, %v6314
        %v6555 = vadd.f32 %v6077, %v6317
        %v6556 = vadd.f32 %v6078, %v6319
        %v6557 = vadd.f32 %v6079, %v6322
        %v6558 = vadd.f32 %v6080, %v6324
        %v6559 = vadd.f32 %v6081, %v6327
        %v6560 = vadd.f32 %v6082, %v6329
        %v6561 = vadd.f32 %v6083, %v6332
        %v6562 = vadd.f32 %v6084, %v6334
        %v6563 = vadd.f32 %v6085, %v6337
        %v6564 = vadd.f32 %v6086, %v6339
        %v6565 = vadd.f32 %v6087, %v6342
        %v6566 = vadd.f32 %v6088, %v6344
        %v6567 = vadd.f32 %v6089, %v6347
        %v6568 = vadd.f32 %v6090, %v6349
        %v6569 = vadd.f32 %v6091, %v6352
        %v6570 = vadd.f32 %v6092, %v6354
        %v6571 = vadd.f32 %v6093, %v6357
        %v6572 = vadd.f32 %v6094, %v6359
        %v6573 = vadd.f32 %v6095, %v6362
        %v6574 = vadd.f32 %v6096, %v6364
        %v6575 = vadd.f32 %v6097, %v6367
        %v6576 = vadd.f32 %v6098, %v6369
        %v6577 = vadd.f32 %v6099, %v6372
        %v6578 = vadd.f32 %v6100, %v6374
        %v6579 = vadd.f32 %v6101, %v6377
        %v6580 = vadd.f32 %v6102, %v6379
        %v6581 = vadd.f32 %v6103, %v6382
        %v6582 = vadd.f32 %v6104, %v6384
        %v6583 = vadd.f32 %v6105, %v6387
        %v6584 = vadd.f32 %v6106, %v6389
        %v6585 = vadd.f32 %v6107, %v6392
        %v6586 = vadd.f32 %v6108, %v6394
        %v6587 = vadd.f32 %v6109, %v6397
        %v6588 = vadd.f32 %v6110, %v6399
        %v6589 = vadd.f32 %v6111, %v6402
        %v6590 = vadd.f32 %v6112, %v6404
        %v6591 = vadd.f32 %v6113, %v6407
        %v6592 = vadd.f32 %v6114, %v6409
        %v6593 = vadd.f32 %v6115, %v6412
        %v6594 = vadd.f32 %v6116, %v6414
        %v6595 = vadd.f32 %v6117, %v6417
        %v6596 = vadd.f32 %v6118, %v6419
        %v6597 = vadd.f32 %v6119, %v6422
        %v6598 = vadd.f32 %v6120, %v6424
        %v6599 = vadd.f32 %v6121, %v6427
        %v6600 = vadd.f32 %v6122, %v6429
        %v6601 = vadd.f32 %v6123, %v6432
        %v6602 = vadd.f32 %v6124, %v6434
        %v6603 = vadd.f32 %v6125, %v6437
        %v6604 = vadd.f32 %v6126, %v6439
        %v6605 = vadd.f32 %v6127, %v6442
        %v6606 = vadd.f32 %v6128, %v6444
        %v6607 = vadd.f32 %v6129, %v6447
        %v6608 = vadd.f32 %v6130, %v6449
        %v6609 = vadd.f32 %v6131, %v6452
        %v6610 = vadd.f32 %v6132, %v6454
        %v6611 = vadd.f32 %v6133, %v6457
        %v6612 = vadd.f32 %v6134, %v6459
        %v6613 = vadd.f32 %v6135, %v6462
        %v6614 = vadd.f32 %v6136, %v6464
        %v6615 = vadd.f32 %v6137, %v6467
        %v6616 = vadd.f32 %v6138, %v6469
        %v6617 = vadd.f32 %v6139, %v6472
        %v6618 = vadd.f32 %v6140, %v6474
        %v6619 = vadd.f32 %v6141, %v6477
        %v6620 = vadd.f32 %v6142, %v6479
        %v6621 = vadd.f32 %v6143, %v6482
        %v6622 = vadd.f32 %v6144, %v6484
        %v6623 = vadd.f32 %v6145, %v6487
        %v6624 = vadd.f32 %v6146, %v6489
        %v6625 = vadd.f32 %v6147, %v6492
        %v6626 = vadd.f32 %v6148, %v6494
        %v6627 = vadd.f32 %v6149, %v6497
        %v6628 = vadd.f32 %v6150, %v6499
        %v6630 = vshrl.u32 %v386, 16
        %v6632 = vrot.slane %v6630, 4
        %v6633 = vshll.u32 %v386, 16
        %v6635 = vrot.slane %v6633, 5
        %v6636 = vor.u32 %v6632, %v6635
        %v6637 = vrot.slane %v6636, 4
        %v6639 = vshll.u32 %v387, 16
        %v6641 = vrot.slane %v6639, 5
        %v6642 = vsel %vm394, %v6637, %v6641
        %v6643 = vshrl.u32 %v387, 16
        %v6645 = vrot.slane %v6643, 4
        %v6646 = vor.u32 %v6645, %v6641
        %v6647 = vrot.slane %v6646, 4
        %v6649 = vshll.u32 %v388, 16
        %v6651 = vrot.slane %v6649, 5
        %v6652 = vsel %vm394, %v6647, %v6651
        %v6653 = vshrl.u32 %v388, 16
        %v6655 = vrot.slane %v6653, 4
        %v6656 = vor.u32 %v6655, %v6651
        %v6657 = vrot.slane %v6656, 4
        %v6659 = vshll.u32 %v389, 16
        %v6661 = vrot.slane %v6659, 5
        %v6662 = vsel %vm394, %v6657, %v6661
        %v6663 = vshrl.u32 %v389, 16
        %v6665 = vrot.slane %v6663, 4
        %v6666 = vor.u32 %v6665, %v6661
        %v6667 = vrot.slane %v6666, 4
        %v6669 = vshll.u32 %v390, 16
        %v6671 = vrot.slane %v6669, 5
        %v6672 = vsel %vm394, %v6667, %v6671
        %s6673 = scalar_lea.vmem %s215, 14
        %v6674 = vld [vmem:[%s6673] sm:$0x3]
        %v6675 = vunpack.c.l.b16 %v6642
        %v6676 = vunpack.c.l.b16 %v6652
        %v6677 = vunpack.c.l.b16 %v6662
        %v6678 = vunpack.c.l.b16 %v6672
        %v6679 = vpack.c.b16 %v6676, %v6675
        %v6680 = vpack.c.b16 %v6678, %v6677
        %v6682 = vsel %vm1997, %v6679, 0
        %v6685 = vsel %vm1997, %v6680, 0
        %v6688 = vand.u32 %v6674, %v2193
        %6690 = vmatpush.bf16.msra.mxu0 0
        %6691 = vmatpush.bf16.msra.mxu0 0
        %6692 = vmatpush.bf16.msra.mxu0 0
        %6693 = vmatpush.bf16.msra.mxu0 0
        %6694 = vmatpush.bf16.msra.mxu0 0
        %6695 = vmatpush.bf16.msra.mxu0 0
        %6696 = vmatpush.bf16.msra.mxu0 0
        %6697 = vmatpush.bf16.msra.mxu0 %v6688
        %6698 = vmatmul.bf16.gmra.mxu0 %v2011
        %v6699 = vpop.f32.mrf.mxu0
        %v6700 = vadd.f32 0.0, %v6699
        %v6701 = vpop.f32.mrf.mxu0
        %v6702 = vadd.f32 0.0, %v6701
        %6703 = vmatmul.bf16.gmra.mxu0 %v2014
        %v6704 = vpop.f32.mrf.mxu0
        %v6705 = vadd.f32 0.0, %v6704
        %v6706 = vpop.f32.mrf.mxu0
        %v6707 = vadd.f32 0.0, %v6706
        %6708 = vmatmul.bf16.gmra.mxu0 %v2017
        %v6709 = vpop.f32.mrf.mxu0
        %v6710 = vadd.f32 0.0, %v6709
        %v6711 = vpop.f32.mrf.mxu0
        %v6712 = vadd.f32 0.0, %v6711
        %6713 = vmatmul.bf16.gmra.mxu0 %v2020
        %v6714 = vpop.f32.mrf.mxu0
        %v6715 = vadd.f32 0.0, %v6714
        %v6716 = vpop.f32.mrf.mxu0
        %v6717 = vadd.f32 0.0, %v6716
        %6718 = vmatmul.bf16.gmra.mxu0 %v2023
        %v6719 = vpop.f32.mrf.mxu0
        %v6720 = vadd.f32 0.0, %v6719
        %v6721 = vpop.f32.mrf.mxu0
        %v6722 = vadd.f32 0.0, %v6721
        %6723 = vmatmul.bf16.gmra.mxu0 %v2026
        %v6724 = vpop.f32.mrf.mxu0
        %v6725 = vadd.f32 0.0, %v6724
        %v6726 = vpop.f32.mrf.mxu0
        %v6727 = vadd.f32 0.0, %v6726
        %6728 = vmatmul.bf16.gmra.mxu0 %v2029
        %v6729 = vpop.f32.mrf.mxu0
        %v6730 = vadd.f32 0.0, %v6729
        %v6731 = vpop.f32.mrf.mxu0
        %v6732 = vadd.f32 0.0, %v6731
        %6733 = vmatmul.bf16.gmra.mxu0 %v2032
        %v6734 = vpop.f32.mrf.mxu0
        %v6735 = vadd.f32 0.0, %v6734
        %v6736 = vpop.f32.mrf.mxu0
        %v6737 = vadd.f32 0.0, %v6736
        %6738 = vmatmul.bf16.gmra.mxu0 %v2035
        %v6739 = vpop.f32.mrf.mxu0
        %v6740 = vadd.f32 0.0, %v6739
        %v6741 = vpop.f32.mrf.mxu0
        %v6742 = vadd.f32 0.0, %v6741
        %6743 = vmatmul.bf16.gmra.mxu0 %v2038
        %v6744 = vpop.f32.mrf.mxu0
        %v6745 = vadd.f32 0.0, %v6744
        %v6746 = vpop.f32.mrf.mxu0
        %v6747 = vadd.f32 0.0, %v6746
        %6748 = vmatmul.bf16.gmra.mxu0 %v2041
        %v6749 = vpop.f32.mrf.mxu0
        %v6750 = vadd.f32 0.0, %v6749
        %v6751 = vpop.f32.mrf.mxu0
        %v6752 = vadd.f32 0.0, %v6751
        %6753 = vmatmul.bf16.gmra.mxu0 %v2044
        %v6754 = vpop.f32.mrf.mxu0
        %v6755 = vadd.f32 0.0, %v6754
        %v6756 = vpop.f32.mrf.mxu0
        %v6757 = vadd.f32 0.0, %v6756
        %6758 = vmatmul.bf16.gmra.mxu0 %v2047
        %v6759 = vpop.f32.mrf.mxu0
        %v6760 = vadd.f32 0.0, %v6759
        %v6761 = vpop.f32.mrf.mxu0
        %v6762 = vadd.f32 0.0, %v6761
        %6763 = vmatmul.bf16.gmra.mxu0 %v2050
        %v6764 = vpop.f32.mrf.mxu0
        %v6765 = vadd.f32 0.0, %v6764
        %v6766 = vpop.f32.mrf.mxu0
        %v6767 = vadd.f32 0.0, %v6766
        %6768 = vmatmul.bf16.gmra.mxu0 %v2053
        %v6769 = vpop.f32.mrf.mxu0
        %v6770 = vadd.f32 0.0, %v6769
        %v6771 = vpop.f32.mrf.mxu0
        %v6772 = vadd.f32 0.0, %v6771
        %6773 = vmatmul.bf16.gmra.mxu0 %v2056
        %v6774 = vpop.f32.mrf.mxu0
        %v6775 = vadd.f32 0.0, %v6774
        %v6776 = vpop.f32.mrf.mxu0
        %v6777 = vadd.f32 0.0, %v6776
        %6778 = vmatmul.bf16.gmra.mxu0 %v2059
        %v6779 = vpop.f32.mrf.mxu0
        %v6780 = vadd.f32 0.0, %v6779
        %v6781 = vpop.f32.mrf.mxu0
        %v6782 = vadd.f32 0.0, %v6781
        %6783 = vmatmul.bf16.gmra.mxu0 %v2062
        %v6784 = vpop.f32.mrf.mxu0
        %v6785 = vadd.f32 0.0, %v6784
        %v6786 = vpop.f32.mrf.mxu0
        %v6787 = vadd.f32 0.0, %v6786
        %6788 = vmatmul.bf16.gmra.mxu0 %v2065
        %v6789 = vpop.f32.mrf.mxu0
        %v6790 = vadd.f32 0.0, %v6789
        %v6791 = vpop.f32.mrf.mxu0
        %v6792 = vadd.f32 0.0, %v6791
        %6793 = vmatmul.bf16.gmra.mxu0 %v2068
        %v6794 = vpop.f32.mrf.mxu0
        %v6795 = vadd.f32 0.0, %v6794
        %v6796 = vpop.f32.mrf.mxu0
        %v6797 = vadd.f32 0.0, %v6796
        %6798 = vmatmul.bf16.gmra.mxu0 %v2071
        %v6799 = vpop.f32.mrf.mxu0
        %v6800 = vadd.f32 0.0, %v6799
        %v6801 = vpop.f32.mrf.mxu0
        %v6802 = vadd.f32 0.0, %v6801
        %6803 = vmatmul.bf16.gmra.mxu0 %v2074
        %v6804 = vpop.f32.mrf.mxu0
        %v6805 = vadd.f32 0.0, %v6804
        %v6806 = vpop.f32.mrf.mxu0
        %v6807 = vadd.f32 0.0, %v6806
        %6808 = vmatmul.bf16.gmra.mxu0 %v2077
        %v6809 = vpop.f32.mrf.mxu0
        %v6810 = vadd.f32 0.0, %v6809
        %v6811 = vpop.f32.mrf.mxu0
        %v6812 = vadd.f32 0.0, %v6811
        %6813 = vmatmul.bf16.gmra.mxu0 %v2080
        %v6814 = vpop.f32.mrf.mxu0
        %v6815 = vadd.f32 0.0, %v6814
        %v6816 = vpop.f32.mrf.mxu0
        %v6817 = vadd.f32 0.0, %v6816
        %6818 = vmatmul.bf16.gmra.mxu0 %v2083
        %v6819 = vpop.f32.mrf.mxu0
        %v6820 = vadd.f32 0.0, %v6819
        %v6821 = vpop.f32.mrf.mxu0
        %v6822 = vadd.f32 0.0, %v6821
        %6823 = vmatmul.bf16.gmra.mxu0 %v2086
        %v6824 = vpop.f32.mrf.mxu0
        %v6825 = vadd.f32 0.0, %v6824
        %v6826 = vpop.f32.mrf.mxu0
        %v6827 = vadd.f32 0.0, %v6826
        %6828 = vmatmul.bf16.gmra.mxu0 %v2089
        %v6829 = vpop.f32.mrf.mxu0
        %v6830 = vadd.f32 0.0, %v6829
        %v6831 = vpop.f32.mrf.mxu0
        %v6832 = vadd.f32 0.0, %v6831
        %6833 = vmatmul.bf16.gmra.mxu0 %v2092
        %v6834 = vpop.f32.mrf.mxu0
        %v6835 = vadd.f32 0.0, %v6834
        %v6836 = vpop.f32.mrf.mxu0
        %v6837 = vadd.f32 0.0, %v6836
        %6838 = vmatmul.bf16.gmra.mxu0 %v2095
        %v6839 = vpop.f32.mrf.mxu0
        %v6840 = vadd.f32 0.0, %v6839
        %v6841 = vpop.f32.mrf.mxu0
        %v6842 = vadd.f32 0.0, %v6841
        %6843 = vmatmul.bf16.gmra.mxu0 %v2098
        %v6844 = vpop.f32.mrf.mxu0
        %v6845 = vadd.f32 0.0, %v6844
        %v6846 = vpop.f32.mrf.mxu0
        %v6847 = vadd.f32 0.0, %v6846
        %6848 = vmatmul.bf16.gmra.mxu0 %v2101
        %v6849 = vpop.f32.mrf.mxu0
        %v6850 = vadd.f32 0.0, %v6849
        %v6851 = vpop.f32.mrf.mxu0
        %v6852 = vadd.f32 0.0, %v6851
        %6853 = vmatmul.bf16.gmra.mxu0 %v2104
        %v6854 = vpop.f32.mrf.mxu0
        %v6855 = vadd.f32 0.0, %v6854
        %v6856 = vpop.f32.mrf.mxu0
        %v6857 = vadd.f32 0.0, %v6856
        %6858 = vmatmul.bf16.gmra.mxu0 %v2107
        %v6859 = vpop.f32.mrf.mxu0
        %v6860 = vadd.f32 0.0, %v6859
        %v6861 = vpop.f32.mrf.mxu0
        %v6862 = vadd.f32 0.0, %v6861
        %6863 = vmatmul.bf16.gmra.mxu0 %v2110
        %v6864 = vpop.f32.mrf.mxu0
        %v6865 = vadd.f32 0.0, %v6864
        %v6866 = vpop.f32.mrf.mxu0
        %v6867 = vadd.f32 0.0, %v6866
        %6868 = vmatmul.bf16.gmra.mxu0 %v2113
        %v6869 = vpop.f32.mrf.mxu0
        %v6870 = vadd.f32 0.0, %v6869
        %v6871 = vpop.f32.mrf.mxu0
        %v6872 = vadd.f32 0.0, %v6871
        %6873 = vmatmul.bf16.gmra.mxu0 %v2116
        %v6874 = vpop.f32.mrf.mxu0
        %v6875 = vadd.f32 0.0, %v6874
        %v6876 = vpop.f32.mrf.mxu0
        %v6877 = vadd.f32 0.0, %v6876
        %6878 = vmatmul.bf16.gmra.mxu0 %v2119
        %v6879 = vpop.f32.mrf.mxu0
        %v6880 = vadd.f32 0.0, %v6879
        %v6881 = vpop.f32.mrf.mxu0
        %v6882 = vadd.f32 0.0, %v6881
        %6883 = vmatmul.bf16.gmra.mxu0 %v2122
        %v6884 = vpop.f32.mrf.mxu0
        %v6885 = vadd.f32 0.0, %v6884
        %v6886 = vpop.f32.mrf.mxu0
        %v6887 = vadd.f32 0.0, %v6886
        %6888 = vmatmul.bf16.gmra.mxu0 %v2125
        %v6889 = vpop.f32.mrf.mxu0
        %v6890 = vadd.f32 0.0, %v6889
        %v6891 = vpop.f32.mrf.mxu0
        %v6892 = vadd.f32 0.0, %v6891
        %6893 = vmatmul.bf16.gmra.mxu0 %v2128
        %v6894 = vpop.f32.mrf.mxu0
        %v6895 = vadd.f32 0.0, %v6894
        %v6896 = vpop.f32.mrf.mxu0
        %v6897 = vadd.f32 0.0, %v6896
        %6898 = vmatmul.bf16.gmra.mxu0 %v2131
        %v6899 = vpop.f32.mrf.mxu0
        %v6900 = vadd.f32 0.0, %v6899
        %v6901 = vpop.f32.mrf.mxu0
        %v6902 = vadd.f32 0.0, %v6901
        %6903 = vmatmul.bf16.gmra.mxu0 %v2134
        %v6904 = vpop.f32.mrf.mxu0
        %v6905 = vadd.f32 0.0, %v6904
        %v6906 = vpop.f32.mrf.mxu0
        %v6907 = vadd.f32 0.0, %v6906
        %6908 = vmatmul.bf16.gmra.mxu0 %v2137
        %v6909 = vpop.f32.mrf.mxu0
        %v6910 = vadd.f32 0.0, %v6909
        %v6911 = vpop.f32.mrf.mxu0
        %v6912 = vadd.f32 0.0, %v6911
        %6913 = vmatmul.bf16.gmra.mxu0 %v2140
        %v6914 = vpop.f32.mrf.mxu0
        %v6915 = vadd.f32 0.0, %v6914
        %v6916 = vpop.f32.mrf.mxu0
        %v6917 = vadd.f32 0.0, %v6916
        %6918 = vmatmul.bf16.gmra.mxu0 %v2143
        %v6919 = vpop.f32.mrf.mxu0
        %v6920 = vadd.f32 0.0, %v6919
        %v6921 = vpop.f32.mrf.mxu0
        %v6922 = vadd.f32 0.0, %v6921
        %6923 = vmatmul.bf16.gmra.mxu0 %v2146
        %v6924 = vpop.f32.mrf.mxu0
        %v6925 = vadd.f32 0.0, %v6924
        %v6926 = vpop.f32.mrf.mxu0
        %v6927 = vadd.f32 0.0, %v6926
        %6928 = vmatmul.bf16.gmra.mxu0 %v2149
        %v6929 = vpop.f32.mrf.mxu0
        %v6930 = vadd.f32 0.0, %v6929
        %v6931 = vpop.f32.mrf.mxu0
        %v6932 = vadd.f32 0.0, %v6931
        %6933 = vmatmul.bf16.gmra.mxu0 %v2152
        %v6934 = vpop.f32.mrf.mxu0
        %v6935 = vadd.f32 0.0, %v6934
        %v6936 = vpop.f32.mrf.mxu0
        %v6937 = vadd.f32 0.0, %v6936
        %6938 = vmatmul.bf16.gmra.mxu0 %v2155
        %v6939 = vpop.f32.mrf.mxu0
        %v6940 = vadd.f32 0.0, %v6939
        %v6941 = vpop.f32.mrf.mxu0
        %v6942 = vadd.f32 0.0, %v6941
        %6943 = vmatmul.bf16.gmra.mxu0 %v2158
        %v6944 = vpop.f32.mrf.mxu0
        %v6945 = vadd.f32 0.0, %v6944
        %v6946 = vpop.f32.mrf.mxu0
        %v6947 = vadd.f32 0.0, %v6946
        %6948 = vmatmul.bf16.gmra.mxu0 %v2161
        %v6949 = vpop.f32.mrf.mxu0
        %v6950 = vadd.f32 0.0, %v6949
        %v6951 = vpop.f32.mrf.mxu0
        %v6952 = vadd.f32 0.0, %v6951
        %6953 = vmatmul.bf16.gmra.mxu0 %v2164
        %v6954 = vpop.f32.mrf.mxu0
        %v6955 = vadd.f32 0.0, %v6954
        %v6956 = vpop.f32.mrf.mxu0
        %v6957 = vadd.f32 0.0, %v6956
        %6958 = vmatmul.bf16.gmra.mxu0 %v2167
        %v6959 = vpop.f32.mrf.mxu0
        %v6960 = vadd.f32 0.0, %v6959
        %v6961 = vpop.f32.mrf.mxu0
        %v6962 = vadd.f32 0.0, %v6961
        %6963 = vmatmul.bf16.gmra.mxu0 %v2170
        %v6964 = vpop.f32.mrf.mxu0
        %v6965 = vadd.f32 0.0, %v6964
        %v6966 = vpop.f32.mrf.mxu0
        %v6967 = vadd.f32 0.0, %v6966
        %6968 = vmatmul.bf16.gmra.mxu0 %v2173
        %v6969 = vpop.f32.mrf.mxu0
        %v6970 = vadd.f32 0.0, %v6969
        %v6971 = vpop.f32.mrf.mxu0
        %v6972 = vadd.f32 0.0, %v6971
        %6973 = vmatmul.bf16.gmra.mxu0 %v2176
        %v6974 = vpop.f32.mrf.mxu0
        %v6975 = vadd.f32 0.0, %v6974
        %v6976 = vpop.f32.mrf.mxu0
        %v6977 = vadd.f32 0.0, %v6976
        %6978 = vmatmul.bf16.gmra.mxu0 %v2179
        %v6979 = vpop.f32.mrf.mxu0
        %v6980 = vadd.f32 0.0, %v6979
        %v6981 = vpop.f32.mrf.mxu0
        %v6982 = vadd.f32 0.0, %v6981
        %6983 = vmatmul.bf16.gmra.mxu0 %v2182
        %v6984 = vpop.f32.mrf.mxu0
        %v6985 = vadd.f32 0.0, %v6984
        %v6986 = vpop.f32.mrf.mxu0
        %v6987 = vadd.f32 0.0, %v6986
        %6988 = vmatmul.bf16.gmra.mxu0 %v2185
        %v6989 = vpop.f32.mrf.mxu0
        %v6990 = vadd.f32 0.0, %v6989
        %v6991 = vpop.f32.mrf.mxu0
        %v6992 = vadd.f32 0.0, %v6991
        %6993 = vmatmul.bf16.gmra.mxu0 %v2188
        %v6994 = vpop.f32.mrf.mxu0
        %v6995 = vadd.f32 0.0, %v6994
        %v6996 = vpop.f32.mrf.mxu0
        %v6997 = vadd.f32 0.0, %v6996
        %6998 = vmatmul.bf16.gmra.mxu0 %v5198
        %v6999 = vpop.f32.mrf.mxu0
        %v7000 = vadd.f32 0.0, %v6999
        %v7001 = vpop.f32.mrf.mxu0
        %v7002 = vadd.f32 0.0, %v7001
        %7003 = vmatmul.bf16.gmra.mxu0 %v5201
        %v7004 = vpop.f32.mrf.mxu0
        %v7005 = vadd.f32 0.0, %v7004
        %v7006 = vpop.f32.mrf.mxu0
        %v7007 = vadd.f32 0.0, %v7006
        %7008 = vmatmul.bf16.gmra.mxu0 %v6682
        %v7009 = vpop.f32.mrf.mxu0
        %v7010 = vadd.f32 0.0, %v7009
        %v7011 = vpop.f32.mrf.mxu0
        %v7012 = vadd.f32 0.0, %v7011
        %7013 = vmatmul.bf16.gmra.mxu0 %v6685
        %v7014 = vpop.f32.mrf.mxu0
        %v7015 = vadd.f32 0.0, %v7014
        %v7016 = vpop.f32.mrf.mxu0
        %v7017 = vadd.f32 0.0, %v7016
        %7018 = vdwg.mxu0
        %v7019 = vadd.f32 %v6501, %v6700
        %v7020 = vadd.f32 %v6502, %v6702
        %v7021 = vadd.f32 %v6503, %v6705
        %v7022 = vadd.f32 %v6504, %v6707
        %v7023 = vadd.f32 %v6505, %v6710
        %v7024 = vadd.f32 %v6506, %v6712
        %v7025 = vadd.f32 %v6507, %v6715
        %v7026 = vadd.f32 %v6508, %v6717
        %v7027 = vadd.f32 %v6509, %v6720
        %v7028 = vadd.f32 %v6510, %v6722
        %v7029 = vadd.f32 %v6511, %v6725
        %v7030 = vadd.f32 %v6512, %v6727
        %v7031 = vadd.f32 %v6513, %v6730
        %v7032 = vadd.f32 %v6514, %v6732
        %v7033 = vadd.f32 %v6515, %v6735
        %v7034 = vadd.f32 %v6516, %v6737
        %v7035 = vadd.f32 %v6517, %v6740
        %v7036 = vadd.f32 %v6518, %v6742
        %v7037 = vadd.f32 %v6519, %v6745
        %v7038 = vadd.f32 %v6520, %v6747
        %v7039 = vadd.f32 %v6521, %v6750
        %v7040 = vadd.f32 %v6522, %v6752
        %v7041 = vadd.f32 %v6523, %v6755
        %v7042 = vadd.f32 %v6524, %v6757
        %v7043 = vadd.f32 %v6525, %v6760
        %v7044 = vadd.f32 %v6526, %v6762
        %v7045 = vadd.f32 %v6527, %v6765
        %v7046 = vadd.f32 %v6528, %v6767
        %v7047 = vadd.f32 %v6529, %v6770
        %v7048 = vadd.f32 %v6530, %v6772
        %v7049 = vadd.f32 %v6531, %v6775
        %v7050 = vadd.f32 %v6532, %v6777
        %v7051 = vadd.f32 %v6533, %v6780
        %v7052 = vadd.f32 %v6534, %v6782
        %v7053 = vadd.f32 %v6535, %v6785
        %v7054 = vadd.f32 %v6536, %v6787
        %v7055 = vadd.f32 %v6537, %v6790
        %v7056 = vadd.f32 %v6538, %v6792
        %v7057 = vadd.f32 %v6539, %v6795
        %v7058 = vadd.f32 %v6540, %v6797
        %v7059 = vadd.f32 %v6541, %v6800
        %v7060 = vadd.f32 %v6542, %v6802
        %v7061 = vadd.f32 %v6543, %v6805
        %v7062 = vadd.f32 %v6544, %v6807
        %v7063 = vadd.f32 %v6545, %v6810
        %v7064 = vadd.f32 %v6546, %v6812
        %v7065 = vadd.f32 %v6547, %v6815
        %v7066 = vadd.f32 %v6548, %v6817
        %v7067 = vadd.f32 %v6549, %v6820
        %v7068 = vadd.f32 %v6550, %v6822
        %v7069 = vadd.f32 %v6551, %v6825
        %v7070 = vadd.f32 %v6552, %v6827
        %v7071 = vadd.f32 %v6553, %v6830
        %v7072 = vadd.f32 %v6554, %v6832
        %v7073 = vadd.f32 %v6555, %v6835
        %v7074 = vadd.f32 %v6556, %v6837
        %v7075 = vadd.f32 %v6557, %v6840
        %v7076 = vadd.f32 %v6558, %v6842
        %v7077 = vadd.f32 %v6559, %v6845
        %v7078 = vadd.f32 %v6560, %v6847
        %v7079 = vadd.f32 %v6561, %v6850
        %v7080 = vadd.f32 %v6562, %v6852
        %v7081 = vadd.f32 %v6563, %v6855
        %v7082 = vadd.f32 %v6564, %v6857
        %v7083 = vadd.f32 %v6565, %v6860
        %v7084 = vadd.f32 %v6566, %v6862
        %v7085 = vadd.f32 %v6567, %v6865
        %v7086 = vadd.f32 %v6568, %v6867
        %v7087 = vadd.f32 %v6569, %v6870
        %v7088 = vadd.f32 %v6570, %v6872
        %v7089 = vadd.f32 %v6571, %v6875
        %v7090 = vadd.f32 %v6572, %v6877
        %v7091 = vadd.f32 %v6573, %v6880
        %v7092 = vadd.f32 %v6574, %v6882
        %v7093 = vadd.f32 %v6575, %v6885
        %v7094 = vadd.f32 %v6576, %v6887
        %v7095 = vadd.f32 %v6577, %v6890
        %v7096 = vadd.f32 %v6578, %v6892
        %v7097 = vadd.f32 %v6579, %v6895
        %v7098 = vadd.f32 %v6580, %v6897
        %v7099 = vadd.f32 %v6581, %v6900
        %v7100 = vadd.f32 %v6582, %v6902
        %v7101 = vadd.f32 %v6583, %v6905
        %v7102 = vadd.f32 %v6584, %v6907
        %v7103 = vadd.f32 %v6585, %v6910
        %v7104 = vadd.f32 %v6586, %v6912
        %v7105 = vadd.f32 %v6587, %v6915
        %v7106 = vadd.f32 %v6588, %v6917
        %v7107 = vadd.f32 %v6589, %v6920
        %v7108 = vadd.f32 %v6590, %v6922
        %v7109 = vadd.f32 %v6591, %v6925
        %v7110 = vadd.f32 %v6592, %v6927
        %v7111 = vadd.f32 %v6593, %v6930
        %v7112 = vadd.f32 %v6594, %v6932
        %v7113 = vadd.f32 %v6595, %v6935
        %v7114 = vadd.f32 %v6596, %v6937
        %v7115 = vadd.f32 %v6597, %v6940
        %v7116 = vadd.f32 %v6598, %v6942
        %v7117 = vadd.f32 %v6599, %v6945
        %v7118 = vadd.f32 %v6600, %v6947
        %v7119 = vadd.f32 %v6601, %v6950
        %v7120 = vadd.f32 %v6602, %v6952
        %v7121 = vadd.f32 %v6603, %v6955
        %v7122 = vadd.f32 %v6604, %v6957
        %v7123 = vadd.f32 %v6605, %v6960
        %v7124 = vadd.f32 %v6606, %v6962
        %v7125 = vadd.f32 %v6607, %v6965
        %v7126 = vadd.f32 %v6608, %v6967
        %v7127 = vadd.f32 %v6609, %v6970
        %v7128 = vadd.f32 %v6610, %v6972
        %v7129 = vadd.f32 %v6611, %v6975
        %v7130 = vadd.f32 %v6612, %v6977
        %v7131 = vadd.f32 %v6613, %v6980
        %v7132 = vadd.f32 %v6614, %v6982
        %v7133 = vadd.f32 %v6615, %v6985
        %v7134 = vadd.f32 %v6616, %v6987
        %v7135 = vadd.f32 %v6617, %v6990
        %v7136 = vadd.f32 %v6618, %v6992
        %v7137 = vadd.f32 %v6619, %v6995
        %v7138 = vadd.f32 %v6620, %v6997
        %v7139 = vadd.f32 %v6621, %v7000
        %v7140 = vadd.f32 %v6622, %v7002
        %v7141 = vadd.f32 %v6623, %v7005
        %v7142 = vadd.f32 %v6624, %v7007
        %v7143 = vadd.f32 %v6625, %v7010
        %v7144 = vadd.f32 %v6626, %v7012
        %v7145 = vadd.f32 %v6627, %v7015
        %v7146 = vadd.f32 %v6628, %v7017
        %v7148 = vrot.slane %v386, 5
        %v7149 = vrot.slane %v7148, 4
        %v7150 = vrot.slane %v387, 5
        %v7151 = vsel %vm3404, %v7149, %v7150
        %v7152 = vrot.slane %v7150, 4
        %v7153 = vrot.slane %v388, 5
        %v7154 = vsel %vm3404, %v7152, %v7153
        %v7155 = vrot.slane %v7153, 4
        %v7156 = vrot.slane %v389, 5
        %v7157 = vsel %vm3404, %v7155, %v7156
        %v7158 = vrot.slane %v7156, 4
        %v7159 = vrot.slane %v390, 5
        %v7160 = vsel %vm3404, %v7158, %v7159
        %s7161 = scalar_lea.vmem %s215, 16
        %v7162 = vld [vmem:[%s7161] sm:$0x3]
        %v7163 = vunpack.c.l.b16 %v7151
        %v7164 = vunpack.c.l.b16 %v7154
        %v7165 = vunpack.c.l.b16 %v7157
        %v7166 = vunpack.c.l.b16 %v7160
        %v7167 = vpack.c.b16 %v7164, %v7163
        %v7168 = vpack.c.b16 %v7166, %v7165
        %v7170 = vsel %vm1997, %v7167, 0
        %v7173 = vsel %vm1997, %v7168, 0
        %v7176 = vand.u32 %v7162, %v2193
        %7178 = vmatpush.bf16.msra.mxu0 0
        %7179 = vmatpush.bf16.msra.mxu0 0
        %7180 = vmatpush.bf16.msra.mxu0 0
        %7181 = vmatpush.bf16.msra.mxu0 0
        %7182 = vmatpush.bf16.msra.mxu0 0
        %7183 = vmatpush.bf16.msra.mxu0 0
        %7184 = vmatpush.bf16.msra.mxu0 0
        %7185 = vmatpush.bf16.msra.mxu0 %v7176
        %7186 = vmatmul.bf16.gmra.mxu0 %v4028
        %v7187 = vpop.f32.mrf.mxu0
        %v7188 = vadd.f32 0.0, %v7187
        %v7189 = vpop.f32.mrf.mxu0
        %v7190 = vadd.f32 0.0, %v7189
        %7191 = vmatmul.bf16.gmra.mxu0 %v4031
        %v7192 = vpop.f32.mrf.mxu0
        %v7193 = vadd.f32 0.0, %v7192
        %v7194 = vpop.f32.mrf.mxu0
        %v7195 = vadd.f32 0.0, %v7194
        %7196 = vmatmul.bf16.gmra.mxu0 %v4034
        %v7197 = vpop.f32.mrf.mxu0
        %v7198 = vadd.f32 0.0, %v7197
        %v7199 = vpop.f32.mrf.mxu0
        %v7200 = vadd.f32 0.0, %v7199
        %7201 = vmatmul.bf16.gmra.mxu0 %v4037
        %v7202 = vpop.f32.mrf.mxu0
        %v7203 = vadd.f32 0.0, %v7202
        %v7204 = vpop.f32.mrf.mxu0
        %v7205 = vadd.f32 0.0, %v7204
        %7206 = vmatmul.bf16.gmra.mxu0 %v4040
        %v7207 = vpop.f32.mrf.mxu0
        %v7208 = vadd.f32 0.0, %v7207
        %v7209 = vpop.f32.mrf.mxu0
        %v7210 = vadd.f32 0.0, %v7209
        %7211 = vmatmul.bf16.gmra.mxu0 %v4043
        %v7212 = vpop.f32.mrf.mxu0
        %v7213 = vadd.f32 0.0, %v7212
        %v7214 = vpop.f32.mrf.mxu0
        %v7215 = vadd.f32 0.0, %v7214
        %7216 = vmatmul.bf16.gmra.mxu0 %v4046
        %v7217 = vpop.f32.mrf.mxu0
        %v7218 = vadd.f32 0.0, %v7217
        %v7219 = vpop.f32.mrf.mxu0
        %v7220 = vadd.f32 0.0, %v7219
        %7221 = vmatmul.bf16.gmra.mxu0 %v4049
        %v7222 = vpop.f32.mrf.mxu0
        %v7223 = vadd.f32 0.0, %v7222
        %v7224 = vpop.f32.mrf.mxu0
        %v7225 = vadd.f32 0.0, %v7224
        %7226 = vmatmul.bf16.gmra.mxu0 %v4052
        %v7227 = vpop.f32.mrf.mxu0
        %v7228 = vadd.f32 0.0, %v7227
        %v7229 = vpop.f32.mrf.mxu0
        %v7230 = vadd.f32 0.0, %v7229
        %7231 = vmatmul.bf16.gmra.mxu0 %v4055
        %v7232 = vpop.f32.mrf.mxu0
        %v7233 = vadd.f32 0.0, %v7232
        %v7234 = vpop.f32.mrf.mxu0
        %v7235 = vadd.f32 0.0, %v7234
        %7236 = vmatmul.bf16.gmra.mxu0 %v4058
        %v7237 = vpop.f32.mrf.mxu0
        %v7238 = vadd.f32 0.0, %v7237
        %v7239 = vpop.f32.mrf.mxu0
        %v7240 = vadd.f32 0.0, %v7239
        %7241 = vmatmul.bf16.gmra.mxu0 %v4061
        %v7242 = vpop.f32.mrf.mxu0
        %v7243 = vadd.f32 0.0, %v7242
        %v7244 = vpop.f32.mrf.mxu0
        %v7245 = vadd.f32 0.0, %v7244
        %7246 = vmatmul.bf16.gmra.mxu0 %v4064
        %v7247 = vpop.f32.mrf.mxu0
        %v7248 = vadd.f32 0.0, %v7247
        %v7249 = vpop.f32.mrf.mxu0
        %v7250 = vadd.f32 0.0, %v7249
        %7251 = vmatmul.bf16.gmra.mxu0 %v4067
        %v7252 = vpop.f32.mrf.mxu0
        %v7253 = vadd.f32 0.0, %v7252
        %v7254 = vpop.f32.mrf.mxu0
        %v7255 = vadd.f32 0.0, %v7254
        %7256 = vmatmul.bf16.gmra.mxu0 %v4070
        %v7257 = vpop.f32.mrf.mxu0
        %v7258 = vadd.f32 0.0, %v7257
        %v7259 = vpop.f32.mrf.mxu0
        %v7260 = vadd.f32 0.0, %v7259
        %7261 = vmatmul.bf16.gmra.mxu0 %v4073
        %v7262 = vpop.f32.mrf.mxu0
        %v7263 = vadd.f32 0.0, %v7262
        %v7264 = vpop.f32.mrf.mxu0
        %v7265 = vadd.f32 0.0, %v7264
        %7266 = vmatmul.bf16.gmra.mxu0 %v4076
        %v7267 = vpop.f32.mrf.mxu0
        %v7268 = vadd.f32 0.0, %v7267
        %v7269 = vpop.f32.mrf.mxu0
        %v7270 = vadd.f32 0.0, %v7269
        %7271 = vmatmul.bf16.gmra.mxu0 %v4079
        %v7272 = vpop.f32.mrf.mxu0
        %v7273 = vadd.f32 0.0, %v7272
        %v7274 = vpop.f32.mrf.mxu0
        %v7275 = vadd.f32 0.0, %v7274
        %7276 = vmatmul.bf16.gmra.mxu0 %v4082
        %v7277 = vpop.f32.mrf.mxu0
        %v7278 = vadd.f32 0.0, %v7277
        %v7279 = vpop.f32.mrf.mxu0
        %v7280 = vadd.f32 0.0, %v7279
        %7281 = vmatmul.bf16.gmra.mxu0 %v4085
        %v7282 = vpop.f32.mrf.mxu0
        %v7283 = vadd.f32 0.0, %v7282
        %v7284 = vpop.f32.mrf.mxu0
        %v7285 = vadd.f32 0.0, %v7284
        %7286 = vmatmul.bf16.gmra.mxu0 %v4088
        %v7287 = vpop.f32.mrf.mxu0
        %v7288 = vadd.f32 0.0, %v7287
        %v7289 = vpop.f32.mrf.mxu0
        %v7290 = vadd.f32 0.0, %v7289
        %7291 = vmatmul.bf16.gmra.mxu0 %v4091
        %v7292 = vpop.f32.mrf.mxu0
        %v7293 = vadd.f32 0.0, %v7292
        %v7294 = vpop.f32.mrf.mxu0
        %v7295 = vadd.f32 0.0, %v7294
        %7296 = vmatmul.bf16.gmra.mxu0 %v4094
        %v7297 = vpop.f32.mrf.mxu0
        %v7298 = vadd.f32 0.0, %v7297
        %v7299 = vpop.f32.mrf.mxu0
        %v7300 = vadd.f32 0.0, %v7299
        %7301 = vmatmul.bf16.gmra.mxu0 %v4097
        %v7302 = vpop.f32.mrf.mxu0
        %v7303 = vadd.f32 0.0, %v7302
        %v7304 = vpop.f32.mrf.mxu0
        %v7305 = vadd.f32 0.0, %v7304
        %7306 = vmatmul.bf16.gmra.mxu0 %v4100
        %v7307 = vpop.f32.mrf.mxu0
        %v7308 = vadd.f32 0.0, %v7307
        %v7309 = vpop.f32.mrf.mxu0
        %v7310 = vadd.f32 0.0, %v7309
        %7311 = vmatmul.bf16.gmra.mxu0 %v4103
        %v7312 = vpop.f32.mrf.mxu0
        %v7313 = vadd.f32 0.0, %v7312
        %v7314 = vpop.f32.mrf.mxu0
        %v7315 = vadd.f32 0.0, %v7314
        %7316 = vmatmul.bf16.gmra.mxu0 %v4106
        %v7317 = vpop.f32.mrf.mxu0
        %v7318 = vadd.f32 0.0, %v7317
        %v7319 = vpop.f32.mrf.mxu0
        %v7320 = vadd.f32 0.0, %v7319
        %7321 = vmatmul.bf16.gmra.mxu0 %v4109
        %v7322 = vpop.f32.mrf.mxu0
        %v7323 = vadd.f32 0.0, %v7322
        %v7324 = vpop.f32.mrf.mxu0
        %v7325 = vadd.f32 0.0, %v7324
        %7326 = vmatmul.bf16.gmra.mxu0 %v4112
        %v7327 = vpop.f32.mrf.mxu0
        %v7328 = vadd.f32 0.0, %v7327
        %v7329 = vpop.f32.mrf.mxu0
        %v7330 = vadd.f32 0.0, %v7329
        %7331 = vmatmul.bf16.gmra.mxu0 %v4115
        %v7332 = vpop.f32.mrf.mxu0
        %v7333 = vadd.f32 0.0, %v7332
        %v7334 = vpop.f32.mrf.mxu0
        %v7335 = vadd.f32 0.0, %v7334
        %7336 = vmatmul.bf16.gmra.mxu0 %v4118
        %v7337 = vpop.f32.mrf.mxu0
        %v7338 = vadd.f32 0.0, %v7337
        %v7339 = vpop.f32.mrf.mxu0
        %v7340 = vadd.f32 0.0, %v7339
        %7341 = vmatmul.bf16.gmra.mxu0 %v4121
        %v7342 = vpop.f32.mrf.mxu0
        %v7343 = vadd.f32 0.0, %v7342
        %v7344 = vpop.f32.mrf.mxu0
        %v7345 = vadd.f32 0.0, %v7344
        %7346 = vmatmul.bf16.gmra.mxu0 %v4124
        %v7347 = vpop.f32.mrf.mxu0
        %v7348 = vadd.f32 0.0, %v7347
        %v7349 = vpop.f32.mrf.mxu0
        %v7350 = vadd.f32 0.0, %v7349
        %7351 = vmatmul.bf16.gmra.mxu0 %v4127
        %v7352 = vpop.f32.mrf.mxu0
        %v7353 = vadd.f32 0.0, %v7352
        %v7354 = vpop.f32.mrf.mxu0
        %v7355 = vadd.f32 0.0, %v7354
        %7356 = vmatmul.bf16.gmra.mxu0 %v4130
        %v7357 = vpop.f32.mrf.mxu0
        %v7358 = vadd.f32 0.0, %v7357
        %v7359 = vpop.f32.mrf.mxu0
        %v7360 = vadd.f32 0.0, %v7359
        %7361 = vmatmul.bf16.gmra.mxu0 %v4133
        %v7362 = vpop.f32.mrf.mxu0
        %v7363 = vadd.f32 0.0, %v7362
        %v7364 = vpop.f32.mrf.mxu0
        %v7365 = vadd.f32 0.0, %v7364
        %7366 = vmatmul.bf16.gmra.mxu0 %v4136
        %v7367 = vpop.f32.mrf.mxu0
        %v7368 = vadd.f32 0.0, %v7367
        %v7369 = vpop.f32.mrf.mxu0
        %v7370 = vadd.f32 0.0, %v7369
        %7371 = vmatmul.bf16.gmra.mxu0 %v4139
        %v7372 = vpop.f32.mrf.mxu0
        %v7373 = vadd.f32 0.0, %v7372
        %v7374 = vpop.f32.mrf.mxu0
        %v7375 = vadd.f32 0.0, %v7374
        %7376 = vmatmul.bf16.gmra.mxu0 %v4142
        %v7377 = vpop.f32.mrf.mxu0
        %v7378 = vadd.f32 0.0, %v7377
        %v7379 = vpop.f32.mrf.mxu0
        %v7380 = vadd.f32 0.0, %v7379
        %7381 = vmatmul.bf16.gmra.mxu0 %v4145
        %v7382 = vpop.f32.mrf.mxu0
        %v7383 = vadd.f32 0.0, %v7382
        %v7384 = vpop.f32.mrf.mxu0
        %v7385 = vadd.f32 0.0, %v7384
        %7386 = vmatmul.bf16.gmra.mxu0 %v4148
        %v7387 = vpop.f32.mrf.mxu0
        %v7388 = vadd.f32 0.0, %v7387
        %v7389 = vpop.f32.mrf.mxu0
        %v7390 = vadd.f32 0.0, %v7389
        %7391 = vmatmul.bf16.gmra.mxu0 %v4151
        %v7392 = vpop.f32.mrf.mxu0
        %v7393 = vadd.f32 0.0, %v7392
        %v7394 = vpop.f32.mrf.mxu0
        %v7395 = vadd.f32 0.0, %v7394
        %7396 = vmatmul.bf16.gmra.mxu0 %v4154
        %v7397 = vpop.f32.mrf.mxu0
        %v7398 = vadd.f32 0.0, %v7397
        %v7399 = vpop.f32.mrf.mxu0
        %v7400 = vadd.f32 0.0, %v7399
        %7401 = vmatmul.bf16.gmra.mxu0 %v4157
        %v7402 = vpop.f32.mrf.mxu0
        %v7403 = vadd.f32 0.0, %v7402
        %v7404 = vpop.f32.mrf.mxu0
        %v7405 = vadd.f32 0.0, %v7404
        %7406 = vmatmul.bf16.gmra.mxu0 %v4160
        %v7407 = vpop.f32.mrf.mxu0
        %v7408 = vadd.f32 0.0, %v7407
        %v7409 = vpop.f32.mrf.mxu0
        %v7410 = vadd.f32 0.0, %v7409
        %7411 = vmatmul.bf16.gmra.mxu0 %v4163
        %v7412 = vpop.f32.mrf.mxu0
        %v7413 = vadd.f32 0.0, %v7412
        %v7414 = vpop.f32.mrf.mxu0
        %v7415 = vadd.f32 0.0, %v7414
        %7416 = vmatmul.bf16.gmra.mxu0 %v4166
        %v7417 = vpop.f32.mrf.mxu0
        %v7418 = vadd.f32 0.0, %v7417
        %v7419 = vpop.f32.mrf.mxu0
        %v7420 = vadd.f32 0.0, %v7419
        %7421 = vmatmul.bf16.gmra.mxu0 %v4169
        %v7422 = vpop.f32.mrf.mxu0
        %v7423 = vadd.f32 0.0, %v7422
        %v7424 = vpop.f32.mrf.mxu0
        %v7425 = vadd.f32 0.0, %v7424
        %7426 = vmatmul.bf16.gmra.mxu0 %v4172
        %v7427 = vpop.f32.mrf.mxu0
        %v7428 = vadd.f32 0.0, %v7427
        %v7429 = vpop.f32.mrf.mxu0
        %v7430 = vadd.f32 0.0, %v7429
        %7431 = vmatmul.bf16.gmra.mxu0 %v4175
        %v7432 = vpop.f32.mrf.mxu0
        %v7433 = vadd.f32 0.0, %v7432
        %v7434 = vpop.f32.mrf.mxu0
        %v7435 = vadd.f32 0.0, %v7434
        %7436 = vmatmul.bf16.gmra.mxu0 %v4178
        %v7437 = vpop.f32.mrf.mxu0
        %v7438 = vadd.f32 0.0, %v7437
        %v7439 = vpop.f32.mrf.mxu0
        %v7440 = vadd.f32 0.0, %v7439
        %7441 = vmatmul.bf16.gmra.mxu0 %v4181
        %v7442 = vpop.f32.mrf.mxu0
        %v7443 = vadd.f32 0.0, %v7442
        %v7444 = vpop.f32.mrf.mxu0
        %v7445 = vadd.f32 0.0, %v7444
        %7446 = vmatmul.bf16.gmra.mxu0 %v4184
        %v7447 = vpop.f32.mrf.mxu0
        %v7448 = vadd.f32 0.0, %v7447
        %v7449 = vpop.f32.mrf.mxu0
        %v7450 = vadd.f32 0.0, %v7449
        %7451 = vmatmul.bf16.gmra.mxu0 %v4187
        %v7452 = vpop.f32.mrf.mxu0
        %v7453 = vadd.f32 0.0, %v7452
        %v7454 = vpop.f32.mrf.mxu0
        %v7455 = vadd.f32 0.0, %v7454
        %7456 = vmatmul.bf16.gmra.mxu0 %v4190
        %v7457 = vpop.f32.mrf.mxu0
        %v7458 = vadd.f32 0.0, %v7457
        %v7459 = vpop.f32.mrf.mxu0
        %v7460 = vadd.f32 0.0, %v7459
        %7461 = vmatmul.bf16.gmra.mxu0 %v4193
        %v7462 = vpop.f32.mrf.mxu0
        %v7463 = vadd.f32 0.0, %v7462
        %v7464 = vpop.f32.mrf.mxu0
        %v7465 = vadd.f32 0.0, %v7464
        %7466 = vmatmul.bf16.gmra.mxu0 %v4196
        %v7467 = vpop.f32.mrf.mxu0
        %v7468 = vadd.f32 0.0, %v7467
        %v7469 = vpop.f32.mrf.mxu0
        %v7470 = vadd.f32 0.0, %v7469
        %7471 = vmatmul.bf16.gmra.mxu0 %v4199
        %v7472 = vpop.f32.mrf.mxu0
        %v7473 = vadd.f32 0.0, %v7472
        %v7474 = vpop.f32.mrf.mxu0
        %v7475 = vadd.f32 0.0, %v7474
        %7476 = vmatmul.bf16.gmra.mxu0 %v4202
        %v7477 = vpop.f32.mrf.mxu0
        %v7478 = vadd.f32 0.0, %v7477
        %v7479 = vpop.f32.mrf.mxu0
        %v7480 = vadd.f32 0.0, %v7479
        %7481 = vmatmul.bf16.gmra.mxu0 %v4205
        %v7482 = vpop.f32.mrf.mxu0
        %v7483 = vadd.f32 0.0, %v7482
        %v7484 = vpop.f32.mrf.mxu0
        %v7485 = vadd.f32 0.0, %v7484
        %7486 = vmatmul.bf16.gmra.mxu0 %v5686
        %v7487 = vpop.f32.mrf.mxu0
        %v7488 = vadd.f32 0.0, %v7487
        %v7489 = vpop.f32.mrf.mxu0
        %v7490 = vadd.f32 0.0, %v7489
        %7491 = vmatmul.bf16.gmra.mxu0 %v5689
        %v7492 = vpop.f32.mrf.mxu0
        %v7493 = vadd.f32 0.0, %v7492
        %v7494 = vpop.f32.mrf.mxu0
        %v7495 = vadd.f32 0.0, %v7494
        %7496 = vmatmul.bf16.gmra.mxu0 %v7170
        %v7497 = vpop.f32.mrf.mxu0
        %v7498 = vadd.f32 0.0, %v7497
        %v7499 = vpop.f32.mrf.mxu0
        %v7500 = vadd.f32 0.0, %v7499
        %7501 = vmatmul.bf16.gmra.mxu0 %v7173
        %v7502 = vpop.f32.mrf.mxu0
        %v7503 = vadd.f32 0.0, %v7502
        %v7504 = vpop.f32.mrf.mxu0
        %v7505 = vadd.f32 0.0, %v7504
        %7506 = vdwg.mxu0
        %v7507 = vadd.f32 %v7019, %v7188
        %v7508 = vadd.f32 %v7020, %v7190
        %v7509 = vadd.f32 %v7021, %v7193
        %v7510 = vadd.f32 %v7022, %v7195
        %v7511 = vadd.f32 %v7023, %v7198
        %v7512 = vadd.f32 %v7024, %v7200
        %v7513 = vadd.f32 %v7025, %v7203
        %v7514 = vadd.f32 %v7026, %v7205
        %v7515 = vadd.f32 %v7027, %v7208
        %v7516 = vadd.f32 %v7028, %v7210
        %v7517 = vadd.f32 %v7029, %v7213
        %v7518 = vadd.f32 %v7030, %v7215
        %v7519 = vadd.f32 %v7031, %v7218
        %v7520 = vadd.f32 %v7032, %v7220
        %v7521 = vadd.f32 %v7033, %v7223
        %v7522 = vadd.f32 %v7034, %v7225
        %v7523 = vadd.f32 %v7035, %v7228
        %v7524 = vadd.f32 %v7036, %v7230
        %v7525 = vadd.f32 %v7037, %v7233
        %v7526 = vadd.f32 %v7038, %v7235
        %v7527 = vadd.f32 %v7039, %v7238
        %v7528 = vadd.f32 %v7040, %v7240
        %v7529 = vadd.f32 %v7041, %v7243
        %v7530 = vadd.f32 %v7042, %v7245
        %v7531 = vadd.f32 %v7043, %v7248
        %v7532 = vadd.f32 %v7044, %v7250
        %v7533 = vadd.f32 %v7045, %v7253
        %v7534 = vadd.f32 %v7046, %v7255
        %v7535 = vadd.f32 %v7047, %v7258
        %v7536 = vadd.f32 %v7048, %v7260
        %v7537 = vadd.f32 %v7049, %v7263
        %v7538 = vadd.f32 %v7050, %v7265
        %v7539 = vadd.f32 %v7051, %v7268
        %v7540 = vadd.f32 %v7052, %v7270
        %v7541 = vadd.f32 %v7053, %v7273
        %v7542 = vadd.f32 %v7054, %v7275
        %v7543 = vadd.f32 %v7055, %v7278
        %v7544 = vadd.f32 %v7056, %v7280
        %v7545 = vadd.f32 %v7057, %v7283
        %v7546 = vadd.f32 %v7058, %v7285
        %v7547 = vadd.f32 %v7059, %v7288
        %v7548 = vadd.f32 %v7060, %v7290
        %v7549 = vadd.f32 %v7061, %v7293
        %v7550 = vadd.f32 %v7062, %v7295
        %v7551 = vadd.f32 %v7063, %v7298
        %v7552 = vadd.f32 %v7064, %v7300
        %v7553 = vadd.f32 %v7065, %v7303
        %v7554 = vadd.f32 %v7066, %v7305
        %v7555 = vadd.f32 %v7067, %v7308
        %v7556 = vadd.f32 %v7068, %v7310
        %v7557 = vadd.f32 %v7069, %v7313
        %v7558 = vadd.f32 %v7070, %v7315
        %v7559 = vadd.f32 %v7071, %v7318
        %v7560 = vadd.f32 %v7072, %v7320
        %v7561 = vadd.f32 %v7073, %v7323
        %v7562 = vadd.f32 %v7074, %v7325
        %v7563 = vadd.f32 %v7075, %v7328
        %v7564 = vadd.f32 %v7076, %v7330
        %v7565 = vadd.f32 %v7077, %v7333
        %v7566 = vadd.f32 %v7078, %v7335
        %v7567 = vadd.f32 %v7079, %v7338
        %v7568 = vadd.f32 %v7080, %v7340
        %v7569 = vadd.f32 %v7081, %v7343
        %v7570 = vadd.f32 %v7082, %v7345
        %v7571 = vadd.f32 %v7083, %v7348
        %v7572 = vadd.f32 %v7084, %v7350
        %v7573 = vadd.f32 %v7085, %v7353
        %v7574 = vadd.f32 %v7086, %v7355
        %v7575 = vadd.f32 %v7087, %v7358
        %v7576 = vadd.f32 %v7088, %v7360
        %v7577 = vadd.f32 %v7089, %v7363
        %v7578 = vadd.f32 %v7090, %v7365
        %v7579 = vadd.f32 %v7091, %v7368
        %v7580 = vadd.f32 %v7092, %v7370
        %v7581 = vadd.f32 %v7093, %v7373
        %v7582 = vadd.f32 %v7094, %v7375
        %v7583 = vadd.f32 %v7095, %v7378
        %v7584 = vadd.f32 %v7096, %v7380
        %v7585 = vadd.f32 %v7097, %v7383
        %v7586 = vadd.f32 %v7098, %v7385
        %v7587 = vadd.f32 %v7099, %v7388
        %v7588 = vadd.f32 %v7100, %v7390
        %v7589 = vadd.f32 %v7101, %v7393
        %v7590 = vadd.f32 %v7102, %v7395
        %v7591 = vadd.f32 %v7103, %v7398
        %v7592 = vadd.f32 %v7104, %v7400
        %v7593 = vadd.f32 %v7105, %v7403
        %v7594 = vadd.f32 %v7106, %v7405
        %v7595 = vadd.f32 %v7107, %v7408
        %v7596 = vadd.f32 %v7108, %v7410
        %v7597 = vadd.f32 %v7109, %v7413
        %v7598 = vadd.f32 %v7110, %v7415
        %v7599 = vadd.f32 %v7111, %v7418
        %v7600 = vadd.f32 %v7112, %v7420
        %v7601 = vadd.f32 %v7113, %v7423
        %v7602 = vadd.f32 %v7114, %v7425
        %v7603 = vadd.f32 %v7115, %v7428
        %v7604 = vadd.f32 %v7116, %v7430
        %v7605 = vadd.f32 %v7117, %v7433
        %v7606 = vadd.f32 %v7118, %v7435
        %v7607 = vadd.f32 %v7119, %v7438
        %v7608 = vadd.f32 %v7120, %v7440
        %v7609 = vadd.f32 %v7121, %v7443
        %v7610 = vadd.f32 %v7122, %v7445
        %v7611 = vadd.f32 %v7123, %v7448
        %v7612 = vadd.f32 %v7124, %v7450
        %v7613 = vadd.f32 %v7125, %v7453
        %v7614 = vadd.f32 %v7126, %v7455
        %v7615 = vadd.f32 %v7127, %v7458
        %v7616 = vadd.f32 %v7128, %v7460
        %v7617 = vadd.f32 %v7129, %v7463
        %v7618 = vadd.f32 %v7130, %v7465
        %v7619 = vadd.f32 %v7131, %v7468
        %v7620 = vadd.f32 %v7132, %v7470
        %v7621 = vadd.f32 %v7133, %v7473
        %v7622 = vadd.f32 %v7134, %v7475
        %v7623 = vadd.f32 %v7135, %v7478
        %v7624 = vadd.f32 %v7136, %v7480
        %v7625 = vadd.f32 %v7137, %v7483
        %v7626 = vadd.f32 %v7138, %v7485
        %v7627 = vadd.f32 %v7139, %v7488
        %v7628 = vadd.f32 %v7140, %v7490
        %v7629 = vadd.f32 %v7141, %v7493
        %v7630 = vadd.f32 %v7142, %v7495
        %v7631 = vadd.f32 %v7143, %v7498
        %v7632 = vadd.f32 %v7144, %v7500
        %v7633 = vadd.f32 %v7145, %v7503
        %v7634 = vadd.f32 %v7146, %v7505
        %v7635 = vld [vmem:[%s218] sm:$0x1]
        %v7637 = vperm.slane %v7635, 0
        %v7639 = vadd.f32 %v7507, %v7637
        %v7640 = vadd.f32 %v7508, %v7637
        %v7641 = vadd.f32 %v7509, %v7637
        %v7642 = vadd.f32 %v7510, %v7637
        %v7643 = vadd.f32 %v7511, %v7637
        %v7644 = vadd.f32 %v7512, %v7637
        %v7645 = vadd.f32 %v7513, %v7637
        %v7646 = vadd.f32 %v7514, %v7637
        %v7647 = vadd.f32 %v7515, %v7637
        %v7648 = vadd.f32 %v7516, %v7637
        %v7649 = vadd.f32 %v7517, %v7637
        %v7650 = vadd.f32 %v7518, %v7637
        %v7651 = vadd.f32 %v7519, %v7637
        %v7652 = vadd.f32 %v7520, %v7637
        %v7653 = vadd.f32 %v7521, %v7637
        %v7654 = vadd.f32 %v7522, %v7637
        %v7655 = vadd.f32 %v7523, %v7637
        %v7656 = vadd.f32 %v7524, %v7637
        %v7657 = vadd.f32 %v7525, %v7637
        %v7658 = vadd.f32 %v7526, %v7637
        %v7659 = vadd.f32 %v7527, %v7637
        %v7660 = vadd.f32 %v7528, %v7637
        %v7661 = vadd.f32 %v7529, %v7637
        %v7662 = vadd.f32 %v7530, %v7637
        %v7663 = vadd.f32 %v7531, %v7637
        %v7664 = vadd.f32 %v7532, %v7637
        %v7665 = vadd.f32 %v7533, %v7637
        %v7666 = vadd.f32 %v7534, %v7637
        %v7667 = vadd.f32 %v7535, %v7637
        %v7668 = vadd.f32 %v7536, %v7637
        %v7669 = vadd.f32 %v7537, %v7637
        %v7670 = vadd.f32 %v7538, %v7637
        %v7671 = vadd.f32 %v7539, %v7637
        %v7672 = vadd.f32 %v7540, %v7637
        %v7673 = vadd.f32 %v7541, %v7637
        %v7674 = vadd.f32 %v7542, %v7637
        %v7675 = vadd.f32 %v7543, %v7637
        %v7676 = vadd.f32 %v7544, %v7637
        %v7677 = vadd.f32 %v7545, %v7637
        %v7678 = vadd.f32 %v7546, %v7637
        %v7679 = vadd.f32 %v7547, %v7637
        %v7680 = vadd.f32 %v7548, %v7637
        %v7681 = vadd.f32 %v7549, %v7637
        %v7682 = vadd.f32 %v7550, %v7637
        %v7683 = vadd.f32 %v7551, %v7637
        %v7684 = vadd.f32 %v7552, %v7637
        %v7685 = vadd.f32 %v7553, %v7637
        %v7686 = vadd.f32 %v7554, %v7637
        %v7687 = vadd.f32 %v7555, %v7637
        %v7688 = vadd.f32 %v7556, %v7637
        %v7689 = vadd.f32 %v7557, %v7637
        %v7690 = vadd.f32 %v7558, %v7637
        %v7691 = vadd.f32 %v7559, %v7637
        %v7692 = vadd.f32 %v7560, %v7637
        %v7693 = vadd.f32 %v7561, %v7637
        %v7694 = vadd.f32 %v7562, %v7637
        %v7695 = vadd.f32 %v7563, %v7637
        %v7696 = vadd.f32 %v7564, %v7637
        %v7697 = vadd.f32 %v7565, %v7637
        %v7698 = vadd.f32 %v7566, %v7637
        %v7699 = vadd.f32 %v7567, %v7637
        %v7700 = vadd.f32 %v7568, %v7637
        %v7701 = vadd.f32 %v7569, %v7637
        %v7702 = vadd.f32 %v7570, %v7637
        %v7703 = vadd.f32 %v7571, %v7637
        %v7704 = vadd.f32 %v7572, %v7637
        %v7705 = vadd.f32 %v7573, %v7637
        %v7706 = vadd.f32 %v7574, %v7637
        %v7707 = vadd.f32 %v7575, %v7637
        %v7708 = vadd.f32 %v7576, %v7637
        %v7709 = vadd.f32 %v7577, %v7637
        %v7710 = vadd.f32 %v7578, %v7637
        %v7711 = vadd.f32 %v7579, %v7637
        %v7712 = vadd.f32 %v7580, %v7637
        %v7713 = vadd.f32 %v7581, %v7637
        %v7714 = vadd.f32 %v7582, %v7637
        %v7715 = vadd.f32 %v7583, %v7637
        %v7716 = vadd.f32 %v7584, %v7637
        %v7717 = vadd.f32 %v7585, %v7637
        %v7718 = vadd.f32 %v7586, %v7637
        %v7719 = vadd.f32 %v7587, %v7637
        %v7720 = vadd.f32 %v7588, %v7637
        %v7721 = vadd.f32 %v7589, %v7637
        %v7722 = vadd.f32 %v7590, %v7637
        %v7723 = vadd.f32 %v7591, %v7637
        %v7724 = vadd.f32 %v7592, %v7637
        %v7725 = vadd.f32 %v7593, %v7637
        %v7726 = vadd.f32 %v7594, %v7637
        %v7727 = vadd.f32 %v7595, %v7637
        %v7728 = vadd.f32 %v7596, %v7637
        %v7729 = vadd.f32 %v7597, %v7637
        %v7730 = vadd.f32 %v7598, %v7637
        %v7731 = vadd.f32 %v7599, %v7637
        %v7732 = vadd.f32 %v7600, %v7637
        %v7733 = vadd.f32 %v7601, %v7637
        %v7734 = vadd.f32 %v7602, %v7637
        %v7735 = vadd.f32 %v7603, %v7637
        %v7736 = vadd.f32 %v7604, %v7637
        %v7737 = vadd.f32 %v7605, %v7637
        %v7738 = vadd.f32 %v7606, %v7637
        %v7739 = vadd.f32 %v7607, %v7637
        %v7740 = vadd.f32 %v7608, %v7637
        %v7741 = vadd.f32 %v7609, %v7637
        %v7742 = vadd.f32 %v7610, %v7637
        %v7743 = vadd.f32 %v7611, %v7637
        %v7744 = vadd.f32 %v7612, %v7637
        %v7745 = vadd.f32 %v7613, %v7637
        %v7746 = vadd.f32 %v7614, %v7637
        %v7747 = vadd.f32 %v7615, %v7637
        %v7748 = vadd.f32 %v7616, %v7637
        %v7749 = vadd.f32 %v7617, %v7637
        %v7750 = vadd.f32 %v7618, %v7637
        %v7751 = vadd.f32 %v7619, %v7637
        %v7752 = vadd.f32 %v7620, %v7637
        %v7753 = vadd.f32 %v7621, %v7637
        %v7754 = vadd.f32 %v7622, %v7637
        %v7755 = vadd.f32 %v7623, %v7637
        %v7756 = vadd.f32 %v7624, %v7637
        %v7757 = vadd.f32 %v7625, %v7637
        %v7758 = vadd.f32 %v7626, %v7637
        %v7759 = vadd.f32 %v7627, %v7637
        %v7760 = vadd.f32 %v7628, %v7637
        %v7761 = vadd.f32 %v7629, %v7637
        %v7762 = vadd.f32 %v7630, %v7637
        %v7763 = vadd.f32 %v7631, %v7637
        %v7764 = vadd.f32 %v7632, %v7637
        %v7765 = vadd.f32 %v7633, %v7637
        %v7766 = vadd.f32 %v7634, %v7637
        %v7767 = vmax.f32 %v7639, 0.0
        %v7768 = vmax.f32 %v7640, 0.0
        %v7769 = vmax.f32 %v7641, 0.0
        %v7770 = vmax.f32 %v7642, 0.0
        %v7771 = vmax.f32 %v7643, 0.0
        %v7772 = vmax.f32 %v7644, 0.0
        %v7773 = vmax.f32 %v7645, 0.0
        %v7774 = vmax.f32 %v7646, 0.0
        %v7775 = vmax.f32 %v7647, 0.0
        %v7776 = vmax.f32 %v7648, 0.0
        %v7777 = vmax.f32 %v7649, 0.0
        %v7778 = vmax.f32 %v7650, 0.0
        %v7779 = vmax.f32 %v7651, 0.0
        %v7780 = vmax.f32 %v7652, 0.0
        %v7781 = vmax.f32 %v7653, 0.0
        %v7782 = vmax.f32 %v7654, 0.0
        %v7783 = vmax.f32 %v7655, 0.0
        %v7784 = vmax.f32 %v7656, 0.0
        %v7785 = vmax.f32 %v7657, 0.0
        %v7786 = vmax.f32 %v7658, 0.0
        %v7787 = vmax.f32 %v7659, 0.0
        %v7788 = vmax.f32 %v7660, 0.0
        %v7789 = vmax.f32 %v7661, 0.0
        %v7790 = vmax.f32 %v7662, 0.0
        %v7791 = vmax.f32 %v7663, 0.0
        %v7792 = vmax.f32 %v7664, 0.0
        %v7793 = vmax.f32 %v7665, 0.0
        %v7794 = vmax.f32 %v7666, 0.0
        %v7795 = vmax.f32 %v7667, 0.0
        %v7796 = vmax.f32 %v7668, 0.0
        %v7797 = vmax.f32 %v7669, 0.0
        %v7798 = vmax.f32 %v7670, 0.0
        %v7799 = vmax.f32 %v7671, 0.0
        %v7800 = vmax.f32 %v7672, 0.0
        %v7801 = vmax.f32 %v7673, 0.0
        %v7802 = vmax.f32 %v7674, 0.0
        %v7803 = vmax.f32 %v7675, 0.0
        %v7804 = vmax.f32 %v7676, 0.0
        %v7805 = vmax.f32 %v7677, 0.0
        %v7806 = vmax.f32 %v7678, 0.0
        %v7807 = vmax.f32 %v7679, 0.0
        %v7808 = vmax.f32 %v7680, 0.0
        %v7809 = vmax.f32 %v7681, 0.0
        %v7810 = vmax.f32 %v7682, 0.0
        %v7811 = vmax.f32 %v7683, 0.0
        %v7812 = vmax.f32 %v7684, 0.0
        %v7813 = vmax.f32 %v7685, 0.0
        %v7814 = vmax.f32 %v7686, 0.0
        %v7815 = vmax.f32 %v7687, 0.0
        %v7816 = vmax.f32 %v7688, 0.0
        %v7817 = vmax.f32 %v7689, 0.0
        %v7818 = vmax.f32 %v7690, 0.0
        %v7819 = vmax.f32 %v7691, 0.0
        %v7820 = vmax.f32 %v7692, 0.0
        %v7821 = vmax.f32 %v7693, 0.0
        %v7822 = vmax.f32 %v7694, 0.0
        %v7823 = vmax.f32 %v7695, 0.0
        %v7824 = vmax.f32 %v7696, 0.0
        %v7825 = vmax.f32 %v7697, 0.0
        %v7826 = vmax.f32 %v7698, 0.0
        %v7827 = vmax.f32 %v7699, 0.0
        %v7828 = vmax.f32 %v7700, 0.0
        %v7829 = vmax.f32 %v7701, 0.0
        %v7830 = vmax.f32 %v7702, 0.0
        %v7831 = vmax.f32 %v7703, 0.0
        %v7832 = vmax.f32 %v7704, 0.0
        %v7833 = vmax.f32 %v7705, 0.0
        %v7834 = vmax.f32 %v7706, 0.0
        %v7835 = vmax.f32 %v7707, 0.0
        %v7836 = vmax.f32 %v7708, 0.0
        %v7837 = vmax.f32 %v7709, 0.0
        %v7838 = vmax.f32 %v7710, 0.0
        %v7839 = vmax.f32 %v7711, 0.0
        %v7840 = vmax.f32 %v7712, 0.0
        %v7841 = vmax.f32 %v7713, 0.0
        %v7842 = vmax.f32 %v7714, 0.0
        %v7843 = vmax.f32 %v7715, 0.0
        %v7844 = vmax.f32 %v7716, 0.0
        %v7845 = vmax.f32 %v7717, 0.0
        %v7846 = vmax.f32 %v7718, 0.0
        %v7847 = vmax.f32 %v7719, 0.0
        %v7848 = vmax.f32 %v7720, 0.0
        %v7849 = vmax.f32 %v7721, 0.0
        %v7850 = vmax.f32 %v7722, 0.0
        %v7851 = vmax.f32 %v7723, 0.0
        %v7852 = vmax.f32 %v7724, 0.0
        %v7853 = vmax.f32 %v7725, 0.0
        %v7854 = vmax.f32 %v7726, 0.0
        %v7855 = vmax.f32 %v7727, 0.0
        %v7856 = vmax.f32 %v7728, 0.0
        %v7857 = vmax.f32 %v7729, 0.0
        %v7858 = vmax.f32 %v7730, 0.0
        %v7859 = vmax.f32 %v7731, 0.0
        %v7860 = vmax.f32 %v7732, 0.0
        %v7861 = vmax.f32 %v7733, 0.0
        %v7862 = vmax.f32 %v7734, 0.0
        %v7863 = vmax.f32 %v7735, 0.0
        %v7864 = vmax.f32 %v7736, 0.0
        %v7865 = vmax.f32 %v7737, 0.0
        %v7866 = vmax.f32 %v7738, 0.0
        %v7867 = vmax.f32 %v7739, 0.0
        %v7868 = vmax.f32 %v7740, 0.0
        %v7869 = vmax.f32 %v7741, 0.0
        %v7870 = vmax.f32 %v7742, 0.0
        %v7871 = vmax.f32 %v7743, 0.0
        %v7872 = vmax.f32 %v7744, 0.0
        %v7873 = vmax.f32 %v7745, 0.0
        %v7874 = vmax.f32 %v7746, 0.0
        %v7875 = vmax.f32 %v7747, 0.0
        %v7876 = vmax.f32 %v7748, 0.0
        %v7877 = vmax.f32 %v7749, 0.0
        %v7878 = vmax.f32 %v7750, 0.0
        %v7879 = vmax.f32 %v7751, 0.0
        %v7880 = vmax.f32 %v7752, 0.0
        %v7881 = vmax.f32 %v7753, 0.0
        %v7882 = vmax.f32 %v7754, 0.0
        %v7883 = vmax.f32 %v7755, 0.0
        %v7884 = vmax.f32 %v7756, 0.0
        %v7885 = vmax.f32 %v7757, 0.0
        %v7886 = vmax.f32 %v7758, 0.0
        %v7887 = vmax.f32 %v7759, 0.0
        %v7888 = vmax.f32 %v7760, 0.0
        %v7889 = vmax.f32 %v7761, 0.0
        %v7890 = vmax.f32 %v7762, 0.0
        %v7891 = vmax.f32 %v7763, 0.0
        %v7892 = vmax.f32 %v7764, 0.0
        %v7893 = vmax.f32 %v7765, 0.0
        %v7894 = vmax.f32 %v7766, 0.0
        %v7895 = vpack.c.bf16 %v7767, %v7767
        %v7896 = vpack.c.bf16 %v7768, %v7768
        %v7897 = vpack.c.bf16 %v7769, %v7769
        %v7898 = vpack.c.bf16 %v7770, %v7770
        %v7899 = vpack.c.bf16 %v7771, %v7771
        %v7900 = vpack.c.bf16 %v7772, %v7772
        %v7901 = vpack.c.bf16 %v7773, %v7773
        %v7902 = vpack.c.bf16 %v7774, %v7774
        %v7903 = vpack.c.bf16 %v7775, %v7775
        %v7904 = vpack.c.bf16 %v7776, %v7776
        %v7905 = vpack.c.bf16 %v7777, %v7777
        %v7906 = vpack.c.bf16 %v7778, %v7778
        %v7907 = vpack.c.bf16 %v7779, %v7779
        %v7908 = vpack.c.bf16 %v7780, %v7780
        %v7909 = vpack.c.bf16 %v7781, %v7781
        %v7910 = vpack.c.bf16 %v7782, %v7782
        %v7911 = vpack.c.bf16 %v7783, %v7783
        %v7912 = vpack.c.bf16 %v7784, %v7784
        %v7913 = vpack.c.bf16 %v7785, %v7785
        %v7914 = vpack.c.bf16 %v7786, %v7786
        %v7915 = vpack.c.bf16 %v7787, %v7787
        %v7916 = vpack.c.bf16 %v7788, %v7788
        %v7917 = vpack.c.bf16 %v7789, %v7789
        %v7918 = vpack.c.bf16 %v7790, %v7790
        %v7919 = vpack.c.bf16 %v7791, %v7791
        %v7920 = vpack.c.bf16 %v7792, %v7792
        %v7921 = vpack.c.bf16 %v7793, %v7793
        %v7922 = vpack.c.bf16 %v7794, %v7794
        %v7923 = vpack.c.bf16 %v7795, %v7795
        %v7924 = vpack.c.bf16 %v7796, %v7796
        %v7925 = vpack.c.bf16 %v7797, %v7797
        %v7926 = vpack.c.bf16 %v7798, %v7798
        %v7927 = vpack.c.bf16 %v7799, %v7799
        %v7928 = vpack.c.bf16 %v7800, %v7800
        %v7929 = vpack.c.bf16 %v7801, %v7801
        %v7930 = vpack.c.bf16 %v7802, %v7802
        %v7931 = vpack.c.bf16 %v7803, %v7803
        %v7932 = vpack.c.bf16 %v7804, %v7804
        %v7933 = vpack.c.bf16 %v7805, %v7805
        %v7934 = vpack.c.bf16 %v7806, %v7806
        %v7935 = vpack.c.bf16 %v7807, %v7807
        %v7936 = vpack.c.bf16 %v7808, %v7808
        %v7937 = vpack.c.bf16 %v7809, %v7809
        %v7938 = vpack.c.bf16 %v7810, %v7810
        %v7939 = vpack.c.bf16 %v7811, %v7811
        %v7940 = vpack.c.bf16 %v7812, %v7812
        %v7941 = vpack.c.bf16 %v7813, %v7813
        %v7942 = vpack.c.bf16 %v7814, %v7814
        %v7943 = vpack.c.bf16 %v7815, %v7815
        %v7944 = vpack.c.bf16 %v7816, %v7816
        %v7945 = vpack.c.bf16 %v7817, %v7817
        %v7946 = vpack.c.bf16 %v7818, %v7818
        %v7947 = vpack.c.bf16 %v7819, %v7819
        %v7948 = vpack.c.bf16 %v7820, %v7820
        %v7949 = vpack.c.bf16 %v7821, %v7821
        %v7950 = vpack.c.bf16 %v7822, %v7822
        %v7951 = vpack.c.bf16 %v7823, %v7823
        %v7952 = vpack.c.bf16 %v7824, %v7824
        %v7953 = vpack.c.bf16 %v7825, %v7825
        %v7954 = vpack.c.bf16 %v7826, %v7826
        %v7955 = vpack.c.bf16 %v7827, %v7827
        %v7956 = vpack.c.bf16 %v7828, %v7828
        %v7957 = vpack.c.bf16 %v7829, %v7829
        %v7958 = vpack.c.bf16 %v7830, %v7830
        %v7959 = vpack.c.bf16 %v7831, %v7831
        %v7960 = vpack.c.bf16 %v7832, %v7832
        %v7961 = vpack.c.bf16 %v7833, %v7833
        %v7962 = vpack.c.bf16 %v7834, %v7834
        %v7963 = vpack.c.bf16 %v7835, %v7835
        %v7964 = vpack.c.bf16 %v7836, %v7836
        %v7965 = vpack.c.bf16 %v7837, %v7837
        %v7966 = vpack.c.bf16 %v7838, %v7838
        %v7967 = vpack.c.bf16 %v7839, %v7839
        %v7968 = vpack.c.bf16 %v7840, %v7840
        %v7969 = vpack.c.bf16 %v7841, %v7841
        %v7970 = vpack.c.bf16 %v7842, %v7842
        %v7971 = vpack.c.bf16 %v7843, %v7843
        %v7972 = vpack.c.bf16 %v7844, %v7844
        %v7973 = vpack.c.bf16 %v7845, %v7845
        %v7974 = vpack.c.bf16 %v7846, %v7846
        %v7975 = vpack.c.bf16 %v7847, %v7847
        %v7976 = vpack.c.bf16 %v7848, %v7848
        %v7977 = vpack.c.bf16 %v7849, %v7849
        %v7978 = vpack.c.bf16 %v7850, %v7850
        %v7979 = vpack.c.bf16 %v7851, %v7851
        %v7980 = vpack.c.bf16 %v7852, %v7852
        %v7981 = vpack.c.bf16 %v7853, %v7853
        %v7982 = vpack.c.bf16 %v7854, %v7854
        %v7983 = vpack.c.bf16 %v7855, %v7855
        %v7984 = vpack.c.bf16 %v7856, %v7856
        %v7985 = vpack.c.bf16 %v7857, %v7857
        %v7986 = vpack.c.bf16 %v7858, %v7858
        %v7987 = vpack.c.bf16 %v7859, %v7859
        %v7988 = vpack.c.bf16 %v7860, %v7860
        %v7989 = vpack.c.bf16 %v7861, %v7861
        %v7990 = vpack.c.bf16 %v7862, %v7862
        %v7991 = vpack.c.bf16 %v7863, %v7863
        %v7992 = vpack.c.bf16 %v7864, %v7864
        %v7993 = vpack.c.bf16 %v7865, %v7865
        %v7994 = vpack.c.bf16 %v7866, %v7866
        %v7995 = vpack.c.bf16 %v7867, %v7867
        %v7996 = vpack.c.bf16 %v7868, %v7868
        %v7997 = vpack.c.bf16 %v7869, %v7869
        %v7998 = vpack.c.bf16 %v7870, %v7870
        %v7999 = vpack.c.bf16 %v7871, %v7871
        %v8000 = vpack.c.bf16 %v7872, %v7872
        %v8001 = vpack.c.bf16 %v7873, %v7873
        %v8002 = vpack.c.bf16 %v7874, %v7874
        %v8003 = vpack.c.bf16 %v7875, %v7875
        %v8004 = vpack.c.bf16 %v7876, %v7876
        %v8005 = vpack.c.bf16 %v7877, %v7877
        %v8006 = vpack.c.bf16 %v7878, %v7878
        %v8007 = vpack.c.bf16 %v7879, %v7879
        %v8008 = vpack.c.bf16 %v7880, %v7880
        %v8009 = vpack.c.bf16 %v7881, %v7881
        %v8010 = vpack.c.bf16 %v7882, %v7882
        %v8011 = vpack.c.bf16 %v7883, %v7883
        %v8012 = vpack.c.bf16 %v7884, %v7884
        %v8013 = vpack.c.bf16 %v7885, %v7885
        %v8014 = vpack.c.bf16 %v7886, %v7886
        %v8015 = vpack.c.bf16 %v7887, %v7887
        %v8016 = vpack.c.bf16 %v7888, %v7888
        %v8017 = vpack.c.bf16 %v7889, %v7889
        %v8018 = vpack.c.bf16 %v7890, %v7890
        %v8019 = vpack.c.bf16 %v7891, %v7891
        %v8020 = vpack.c.bf16 %v7892, %v7892
        %v8021 = vpack.c.bf16 %v7893, %v7893
        %v8022 = vpack.c.bf16 %v7894, %v7894
        %8023 = vst [vmem:[%s204] sm:$0xf] %v7895
        %8024 = vst [vmem:[%s204 + $0x4] sm:$0xf] %v7896
        %8025 = vst [vmem:[%s204 + $0x8] sm:$0xf] %v7897
        %8026 = vst [vmem:[%s204 + $0xc] sm:$0xf] %v7898
        %8027 = vst [vmem:[%s204 + $0x10] sm:$0xf] %v7899
        %8028 = vst [vmem:[%s204 + $0x14] sm:$0xf] %v7900
        %8029 = vst [vmem:[%s204 + $0x18] sm:$0xf] %v7901
        %8030 = vst [vmem:[%s204 + $0x1c] sm:$0xf] %v7902
        %8031 = vst [vmem:[%s204 + $0x20] sm:$0xf] %v7903
        %8032 = vst [vmem:[%s204 + $0x24] sm:$0xf] %v7904
        %8033 = vst [vmem:[%s204 + $0x28] sm:$0xf] %v7905
        %8034 = vst [vmem:[%s204 + $0x2c] sm:$0xf] %v7906
        %8035 = vst [vmem:[%s204 + $0x30] sm:$0xf] %v7907
        %8036 = vst [vmem:[%s204 + $0x34] sm:$0xf] %v7908
        %8037 = vst [vmem:[%s204 + $0x38] sm:$0xf] %v7909
        %8038 = vst [vmem:[%s204 + $0x3c] sm:$0xf] %v7910
        %8039 = vst [vmem:[%s204 + $0x40] sm:$0xf] %v7911
        %8040 = vst [vmem:[%s204 + $0x44] sm:$0xf] %v7912
        %8041 = vst [vmem:[%s204 + $0x48] sm:$0xf] %v7913
        %8042 = vst [vmem:[%s204 + $0x4c] sm:$0xf] %v7914
        %8043 = vst [vmem:[%s204 + $0x50] sm:$0xf] %v7915
        %8044 = vst [vmem:[%s204 + $0x54] sm:$0xf] %v7916
        %8045 = vst [vmem:[%s204 + $0x58] sm:$0xf] %v7917
        %8046 = vst [vmem:[%s204 + $0x5c] sm:$0xf] %v7918
        %8047 = vst [vmem:[%s204 + $0x60] sm:$0xf] %v7919
        %8048 = vst [vmem:[%s204 + $0x64] sm:$0xf] %v7920
        %8049 = vst [vmem:[%s204 + $0x68] sm:$0xf] %v7921
        %8050 = vst [vmem:[%s204 + $0x6c] sm:$0xf] %v7922
        %8051 = vst [vmem:[%s204 + $0x70] sm:$0xf] %v7923
        %8052 = vst [vmem:[%s204 + $0x74] sm:$0xf] %v7924
        %8053 = vst [vmem:[%s204 + $0x78] sm:$0xf] %v7925
        %8054 = vst [vmem:[%s204 + $0x7c] sm:$0xf] %v7926
        %8055 = vst [vmem:[%s204 + $0x80] sm:$0xf] %v7927
        %8056 = vst [vmem:[%s204 + $0x84] sm:$0xf] %v7928
        %8057 = vst [vmem:[%s204 + $0x88] sm:$0xf] %v7929
        %8058 = vst [vmem:[%s204 + $0x8c] sm:$0xf] %v7930
        %8059 = vst [vmem:[%s204 + $0x90] sm:$0xf] %v7931
        %8060 = vst [vmem:[%s204 + $0x94] sm:$0xf] %v7932
        %8061 = vst [vmem:[%s204 + $0x98] sm:$0xf] %v7933
        %8062 = vst [vmem:[%s204 + $0x9c] sm:$0xf] %v7934
        %8063 = vst [vmem:[%s204 + $0xa0] sm:$0xf] %v7935
        %8064 = vst [vmem:[%s204 + $0xa4] sm:$0xf] %v7936
        %8065 = vst [vmem:[%s204 + $0xa8] sm:$0xf] %v7937
        %8066 = vst [vmem:[%s204 + $0xac] sm:$0xf] %v7938
        %8067 = vst [vmem:[%s204 + $0xb0] sm:$0xf] %v7939
        %8068 = vst [vmem:[%s204 + $0xb4] sm:$0xf] %v7940
        %8069 = vst [vmem:[%s204 + $0xb8] sm:$0xf] %v7941
        %8070 = vst [vmem:[%s204 + $0xbc] sm:$0xf] %v7942
        %8071 = vst [vmem:[%s204 + $0xc0] sm:$0xf] %v7943
        %8072 = vst [vmem:[%s204 + $0xc4] sm:$0xf] %v7944
        %8073 = vst [vmem:[%s204 + $0xc8] sm:$0xf] %v7945
        %8074 = vst [vmem:[%s204 + $0xcc] sm:$0xf] %v7946
        %8075 = vst [vmem:[%s204 + $0xd0] sm:$0xf] %v7947
        %8076 = vst [vmem:[%s204 + $0xd4] sm:$0xf] %v7948
        %8077 = vst [vmem:[%s204 + $0xd8] sm:$0xf] %v7949
        %8078 = vst [vmem:[%s204 + $0xdc] sm:$0xf] %v7950
        %8079 = vst [vmem:[%s204 + $0xe0] sm:$0xf] %v7951
        %8080 = vst [vmem:[%s204 + $0xe4] sm:$0xf] %v7952
        %8081 = vst [vmem:[%s204 + $0xe8] sm:$0xf] %v7953
        %8082 = vst [vmem:[%s204 + $0xec] sm:$0xf] %v7954
        %8083 = vst [vmem:[%s204 + $0xf0] sm:$0xf] %v7955
        %8084 = vst [vmem:[%s204 + $0xf4] sm:$0xf] %v7956
        %8085 = vst [vmem:[%s204 + $0xf8] sm:$0xf] %v7957
        %8086 = vst [vmem:[%s204 + $0xfc] sm:$0xf] %v7958
        %8087 = vst [vmem:[%s204 + $0x100] sm:$0xf] %v7959
        %8088 = vst [vmem:[%s204 + $0x104] sm:$0xf] %v7960
        %8089 = vst [vmem:[%s204 + $0x108] sm:$0xf] %v7961
        %8090 = vst [vmem:[%s204 + $0x10c] sm:$0xf] %v7962
        %8091 = vst [vmem:[%s204 + $0x110] sm:$0xf] %v7963
        %8092 = vst [vmem:[%s204 + $0x114] sm:$0xf] %v7964
        %8093 = vst [vmem:[%s204 + $0x118] sm:$0xf] %v7965
        %8094 = vst [vmem:[%s204 + $0x11c] sm:$0xf] %v7966
        %8095 = vst [vmem:[%s204 + $0x120] sm:$0xf] %v7967
        %8096 = vst [vmem:[%s204 + $0x124] sm:$0xf] %v7968
        %8097 = vst [vmem:[%s204 + $0x128] sm:$0xf] %v7969
        %8098 = vst [vmem:[%s204 + $0x12c] sm:$0xf] %v7970
        %8099 = vst [vmem:[%s204 + $0x130] sm:$0xf] %v7971
        %8100 = vst [vmem:[%s204 + $0x134] sm:$0xf] %v7972
        %8101 = vst [vmem:[%s204 + $0x138] sm:$0xf] %v7973
        %8102 = vst [vmem:[%s204 + $0x13c] sm:$0xf] %v7974
        %8103 = vst [vmem:[%s204 + $0x140] sm:$0xf] %v7975
        %8104 = vst [vmem:[%s204 + $0x144] sm:$0xf] %v7976
        %8105 = vst [vmem:[%s204 + $0x148] sm:$0xf] %v7977
        %8106 = vst [vmem:[%s204 + $0x14c] sm:$0xf] %v7978
        %8107 = vst [vmem:[%s204 + $0x150] sm:$0xf] %v7979
        %8108 = vst [vmem:[%s204 + $0x154] sm:$0xf] %v7980
        %8109 = vst [vmem:[%s204 + $0x158] sm:$0xf] %v7981
        %8110 = vst [vmem:[%s204 + $0x15c] sm:$0xf] %v7982
        %8111 = vst [vmem:[%s204 + $0x160] sm:$0xf] %v7983
        %8112 = vst [vmem:[%s204 + $0x164] sm:$0xf] %v7984
        %8113 = vst [vmem:[%s204 + $0x168] sm:$0xf] %v7985
        %8114 = vst [vmem:[%s204 + $0x16c] sm:$0xf] %v7986
        %8115 = vst [vmem:[%s204 + $0x170] sm:$0xf] %v7987
        %8116 = vst [vmem:[%s204 + $0x174] sm:$0xf] %v7988
        %8117 = vst [vmem:[%s204 + $0x178] sm:$0xf] %v7989
        %8118 = vst [vmem:[%s204 + $0x17c] sm:$0xf] %v7990
        %8119 = vst [vmem:[%s204 + $0x180] sm:$0xf] %v7991
        %8120 = vst [vmem:[%s204 + $0x184] sm:$0xf] %v7992
        %8121 = vst [vmem:[%s204 + $0x188] sm:$0xf] %v7993
        %8122 = vst [vmem:[%s204 + $0x18c] sm:$0xf] %v7994
        %8123 = vst [vmem:[%s204 + $0x190] sm:$0xf] %v7995
        %8124 = vst [vmem:[%s204 + $0x194] sm:$0xf] %v7996
        %8125 = vst [vmem:[%s204 + $0x198] sm:$0xf] %v7997
        %8126 = vst [vmem:[%s204 + $0x19c] sm:$0xf] %v7998
        %8127 = vst [vmem:[%s204 + $0x1a0] sm:$0xf] %v7999
        %8128 = vst [vmem:[%s204 + $0x1a4] sm:$0xf] %v8000
        %8129 = vst [vmem:[%s204 + $0x1a8] sm:$0xf] %v8001
        %8130 = vst [vmem:[%s204 + $0x1ac] sm:$0xf] %v8002
        %8131 = vst [vmem:[%s204 + $0x1b0] sm:$0xf] %v8003
        %8132 = vst [vmem:[%s204 + $0x1b4] sm:$0xf] %v8004
        %8133 = vst [vmem:[%s204 + $0x1b8] sm:$0xf] %v8005
        %8134 = vst [vmem:[%s204 + $0x1bc] sm:$0xf] %v8006
        %8135 = vst [vmem:[%s204 + $0x1c0] sm:$0xf] %v8007
        %8136 = vst [vmem:[%s204 + $0x1c4] sm:$0xf] %v8008
        %8137 = vst [vmem:[%s204 + $0x1c8] sm:$0xf] %v8009
        %8138 = vst [vmem:[%s204 + $0x1cc] sm:$0xf] %v8010
        %8139 = vst [vmem:[%s204 + $0x1d0] sm:$0xf] %v8011
        %8140 = vst [vmem:[%s204 + $0x1d4] sm:$0xf] %v8012
        %8141 = vst [vmem:[%s204 + $0x1d8] sm:$0xf] %v8013
        %8142 = vst [vmem:[%s204 + $0x1dc] sm:$0xf] %v8014
        %8143 = vst [vmem:[%s204 + $0x1e0] sm:$0xf] %v8015
        %8144 = vst [vmem:[%s204 + $0x1e4] sm:$0xf] %v8016
        %8145 = vst [vmem:[%s204 + $0x1e8] sm:$0xf] %v8017
        %8146 = vst [vmem:[%s204 + $0x1ec] sm:$0xf] %v8018
        %8147 = vst [vmem:[%s204 + $0x1f0] sm:$0xf] %v8019
        %8148 = vst [vmem:[%s204 + $0x1f4] sm:$0xf] %v8020
        %8149 = vst [vmem:[%s204 + $0x1f8] sm:$0xf] %v8021
        %8150 = vst [vmem:[%s204 + $0x1fc] sm:$0xf] %v8022
        %s8151 = sand.u32 %s117, 1
        %s8152 = scalar_lea.sflag [#allocation3], %s8151
        %s8153 = sand.u32 %s117, 1
        %s8154 = smul.addr %s8153, 512
        %s8155 = scalar_lea.vmem [#allocation2], %s8154
        // Predicated region
        $region33: #{tpu_custom_call.1} parent=31 // pred_check
          %p8156 = pneg %p127
        $region34: #{tpu_custom_call.1} parent=31 // pred_check_branch
          %8158 = sbr.rel (%p8156) target = $region36
        $region35: #{tpu_custom_call.1} parent=31 // pred_region
          %s8159 = smul.u32 128, %s21
          %8161 = vsyncadd %s8152, 0
          %s8162 = sadd.s32 %s22, %s8159
          %s8163 = smul.addr %s8162, 4
          %s8164 = scalar_lea.hbm %s3, %s8163
          %s8165 = sshll.u32 %s8155, 4
          %s8166 = int_to_ptr.vmem [resolvable:$true] %s8165
          %s8167 = sshll.u32 %s8164, 4
          %s8168 = int_to_ptr.hbm [resolvable:$true] %s8167
          %8173 = dma.vmem_to_hbm [thread:$0]  %s8166, 8192, %s8168, %s8152, 64, 64, 4
        $region36: #{tpu_custom_call.1} parent=31 // pred_fallthru
          _
      $region32: #{tpu_custom_call.1} parent=5 // pred_fallthru
        _
      %p8174 = scmp.le.s32.totalorder 2, %s12
      // Predicated region
      $region37: #{tpu_custom_call.1} parent=5 // pred_check
        %p8175 = pneg %p8174
      $region38: #{tpu_custom_call.1} parent=5 // pred_check_branch
        %8177 = sbr.rel (%p8175) target = $region40
      $region39: #{tpu_custom_call.1} parent=5 // pred_region
        %s8178 = ssub.s32 %s12, 2
        // Predicated region
        $region41: #{tpu_custom_call.1} parent=39 // pred_check
          %p8179 = pneg %p133
        $region42: #{tpu_custom_call.1} parent=39 // pred_check_branch
          %8181 = sbr.rel (%p8179) target = $region44
        $region43: #{tpu_custom_call.1} parent=39 // pred_region
          %s8182 = sand.u32 %s118, 1
          %s8183 = scalar_lea.sflag [#allocation3], %s8182
          %s8184 = sand.u32 %s118, 1
          %s8185 = smul.addr %s8184, 512
          %s8186 = scalar_lea.vmem [#allocation2], %s8185
          %8188 = dma.done %s8183, 8192
        $region44: #{tpu_custom_call.1} parent=39 // pred_fallthru
          _
      $region40: #{tpu_custom_call.1} parent=5 // pred_fallthru
        _
    $region6: #{tpu_custom_call.1} parent=1 // loop_footer
      %s16 = sadd.s32 1, %s12
    $region7: #{tpu_custom_call.1} parent=1 // loop_footer_branch
      %11 = sbr.rel target = $region3
    $region8: #{tpu_custom_call.1} parent=1 // loop_exit
      _
    %8189 = vsyncpa [#allocation3], 1
    %s8190 = scalar_lea.sflag [#allocation3], 1
    %8191 = vsyncpa %s8190, 1

</llo_original>
